<compile_context>
chip_gen: v7x
topology: tpu7x:2x2x1
jax: 0.10.0
libtpu: 0.0.40
codegen_flags: <defaults>
</compile_context>

<pallas_src>
import functools

import numpy as np
import jax
import jax.numpy as jnp
from jax import lax
from jax.experimental import pallas as pl
from jax.experimental.pallas import tpu as pltpu

_TWO_PI = float(2.0 * np.pi)
_HALF_PI = float(np.pi / 2.0)
_VAR_EPS = 5e-6


def energy_kernel(scalars_ref,   # SMEM (1, 4): nhx, nhy, 2*pi*f, (unused)
                  xsum_ref,      # VMEM (B_pad, HW_pad) bf16, channel-summed stimulus (resident)
                  mesh_x_ref,    # VMEM (HW_pad, 1) f32 (resident)
                  mesh_y_ref,    # VMEM (HW_pad, 1) f32 (resident)
                  nparams_ref,   # VMEM (8, TN) f32: rows 0..4 = ori, px, py, scale*|fs|, bias
                  out_ref,       # VMEM (B_pad, TN) f32
                  *, t_hw, num_chunks):
    nhx = scalars_ref[0, 0]          # -0.5 / (sigma_x^2 + eps)
    nhy = scalars_ref[0, 1]          # -0.5 / (sigma_y^2 + eps)
    two_pi_f = scalars_ref[0, 2]

    ori = nparams_ref[0:1, :]        # [1, TN]
    px = nparams_ref[1:2, :]
    py = nparams_ref[2:3, :]
    scale = nparams_ref[3:4, :]      # final_scale * |filter_scale| (folded in wrapper)
    bias = nparams_ref[4:5, :]

    cos_o = jnp.cos(ori)
    sin_o = jnp.sin(ori)
    px_rot = cos_o * px - sin_o * py     # [1, TN]
    py_rot = sin_o * px + cos_o * py

    def gabor_contract(mx, my, xs):
        # mx/my: [rows, 1] f32 ; xs: [B_pad, rows] bf16
        mx_rot = mx * cos_o - my * sin_o          # [rows, TN]
        my_rot = mx * sin_o + my * cos_o
        dx = mx_rot - px_rot
        dy = my_rot - py_rot
        gauss = jnp.exp(dx * dx * nhx + dy * dy * nhy)          # EUP
        phase = two_pi_f * (mx_rot + px_rot)
        # f_odd is really -gauss*sin(phase); the sign cancels under the square.
        f_even = (gauss * jnp.cos(phase)).astype(jnp.bfloat16)
        f_odd = (gauss * jnp.sin(phase)).astype(jnp.bfloat16)
        xe = jnp.dot(xs, f_even, preferred_element_type=jnp.float32)   # MXU
        xo = jnp.dot(xs, f_odd, preferred_element_type=jnp.float32)
        return xe, xo

    if num_chunks == 1:
        x_even, x_odd = gabor_contract(mesh_x_ref[...], mesh_y_ref[...], xsum_ref[...])
    else:
        def body(c, carry):
            xe, xo = carry
            off = pl.multiple_of(c * t_hw, t_hw)
            dxe, dxo = gabor_contract(mesh_x_ref[pl.ds(off, t_hw), :],
                                      mesh_y_ref[pl.ds(off, t_hw), :],
                                      xsum_ref[:, pl.ds(off, t_hw)])
            return xe + dxe, xo + dxo

        zeros = jnp.zeros(out_ref.shape, jnp.float32)
        x_even, x_odd = lax.fori_loop(0, num_chunks, body, (zeros, zeros))

    energy = x_even * x_even + x_odd * x_odd
    resp = jnp.sqrt(energy)                      # nonlinearity == 'square_root'
    # TODO(synk): 'piecewise_nonlinearity' (PiecewiseLinearExpNonlinearity) not implemented.
    out_ref[...] = scale * resp + bias


def _round_up(v, m):
    return ((v + m - 1) // m) * m


def energy_model_forward(x_nchw, params, *, neuron_tile=None, hw_chunk_cap=2048):
    """Forward pass of EnergyModel (data_key / repeat_channel_dim are unused in the original)."""
    B, C, H, W = x_nchw.shape
    N = params["orientations"].shape[-1]
    HW = H * W

    # Neuron tile: 256 fills the v6e/v7x 256-wide MXU; 128 matches v5e (and small N).
    if neuron_tile is None:
        neuron_tile = 256 if N > 256 else 128
    tn = neuron_tile
    N_pad = _round_up(N, tn)

    # HW chunking: only a [t_hw, tn] slab of the filter build is live at once,
    # bounding VMEM/vreg pressure (critical on v7x's 64 MiB VMEM).
    HW128 = _round_up(HW, 128)
    t_hw = min(HW128, hw_chunk_cap)
    HW_pad = _round_up(HW, t_hw)
    num_chunks = HW_pad // t_hw

    B_pad = _round_up(max(B, 8), 8)

    # einsum('bixy,nxy->bn') == (sum over channels) then spatial contraction.
    # Channel sum is tiny glue traffic -> plain JAX.  bf16 for the MXU operand.
    x_sum = jnp.sum(x_nchw.astype(jnp.float32), axis=1).reshape(B, HW)
    x_sum = jnp.pad(x_sum, ((0, B_pad - B), (0, HW_pad - HW)))   # zero pads contribute 0
    x_sum = x_sum.astype(jnp.bfloat16)

    mesh_x = jnp.pad(params["mesh_x"].astype(jnp.float32).reshape(HW, 1),
                     ((0, HW_pad - HW), (0, 0)))
    mesh_y = jnp.pad(params["mesh_y"].astype(jnp.float32).reshape(HW, 1),
                     ((0, HW_pad - HW), (0, 0)))

    # Fold |filter_scale| into the output scale:
    #   sqrt((s*e)^2 + (s*o)^2) == |s| * sqrt(e^2 + o^2)  (exact).
    abs_fs = jnp.abs(params["filter_scale"].astype(jnp.float32).reshape(())[()])

    def flat(v):
        return v.astype(jnp.float32).reshape(-1)

    neuron_rows = jnp.stack([
        flat(params["orientations"]),
        flat(params["positions_x"]),
        flat(params["positions_y"]),
        flat(params["final_scale"]) * abs_fs,
        flat(params["final_bias"]),
    ], axis=0)                                                   # (5, N)
    nparams = jnp.pad(neuron_rows, ((0, 3), (0, N_pad - N)))     # (8, N_pad), rows 5-7 zero

    # Scalar hyper-params: pre-fold -0.5 into the inverse variances (scalar work
    # is free; removes one [HW,TN] multiply per element inside the kernel).
    sigma_x = params["sigma_x"].astype(jnp.float32).reshape(())
    sigma_y = params["sigma_y"].astype(jnp.float32).reshape(())
    f = params["f"].astype(jnp.float32).reshape(())
    nhx = -0.5 / (sigma_x * sigma_x + _VAR_EPS)
    nhy = -0.5 / (sigma_y * sigma_y + _VAR_EPS)
    scalars = jnp.stack([nhx, nhy, _TWO_PI * f, jnp.zeros((), jnp.float32)]).reshape(1, 4)

    grid = (N_pad // tn,)

    # VMEM budget: residents (+pipeline double buffers), one neuron-param tile,
    # the output tile, and ~10 live [t_hw, tn] f32 temporaries in the filter build.
    vmem_bytes = (2 * B_pad * HW_pad * 2                  # x_sum (bf16) x2 buffers
                  + 2 * 2 * HW_pad * 128 * 4              # mesh_x/y ([HW,1] lane-padded) x2
                  + 2 * 8 * tn * 4                        # neuron-param tile x2
                  + 2 * B_pad * tn * 4                    # output tile x2
                  + 10 * t_hw * tn * 4                    # live filter-build temporaries
                  + (2 << 20))                            # slack
    vmem_limit = int(min(max(vmem_bytes, 8 << 20), 48 << 20))

    cost = pl.CostEstimate(
        flops=int(4 * B_pad * HW_pad * N_pad + 16 * HW_pad * N_pad + 6 * B_pad * N_pad),
        transcendentals=int(3 * HW_pad * N_pad + B_pad * N_pad),
        bytes_accessed=int(2 * B_pad * HW_pad + 4 * (2 * HW_pad + 8 * N_pad
                                                     + B_pad * N_pad + 4)),
    )

    kernel = functools.partial(energy_kernel, t_hw=t_hw, num_chunks=num_chunks)

    # NOTE: x_sum / mesh_x / mesh_y have constant index_maps; single-buffering
    # them (pipeline_mode=pl.Buffered(1)) would save VMEM for large HW.
    out_padded = pl.pallas_call(
        kernel,
        out_shape=jax.ShapeDtypeStruct((B_pad, N_pad), jnp.float32),
        grid=grid,
        in_specs=[
            pl.BlockSpec(memory_space=pltpu.MemorySpace.SMEM),     # scalars (1,4)
            pl.BlockSpec((B_pad, HW_pad), lambda i: (0, 0)),       # x_sum (resident)
            pl.BlockSpec((HW_pad, 1), lambda i: (0, 0)),           # mesh_x (resident)
            pl.BlockSpec((HW_pad, 1), lambda i: (0, 0)),           # mesh_y (resident)
            pl.BlockSpec((8, tn), lambda i: (0, i)),               # packed per-neuron params
        ],
        out_specs=pl.BlockSpec((B_pad, tn), lambda i: (0, i)),
        compiler_params=pltpu.CompilerParams(
            dimension_semantics=("parallel",),
            vmem_limit_bytes=vmem_limit,
        ),
        cost_estimate=cost,
    )(scalars, x_sum, mesh_x, mesh_y, nparams)

    return out_padded[:B, :N]


def init_params(key, n_neurons, H, W, *, xlim=(-2.67, 2.67), ylim=(-2.67, 2.67),
                sigma_x_init=0.2, sigma_y_init=0.2, f_init=1.0,
                filter_scale_init=1.0, final_scale_init=1.0):
    k1, k2, k3, k4 = jax.random.split(key, 4)
    positions_x = jax.random.uniform(k1, (n_neurons,), jnp.float32, -1.5, 1.5)
    positions_y = jax.random.uniform(k2, (n_neurons,), jnp.float32, -1.5, 1.5)
    orientations = jax.random.uniform(k3, (n_neurons,), jnp.float32, 0.0, float(np.pi))

    # meshgrid('ij') over (H, W), flattened with W fastest (matches x.reshape(B, H*W)).
    lin_x = jnp.linspace(xlim[0], xlim[1], H)
    lin_y = jnp.linspace(ylim[0], ylim[1], W)
    mesh_x = jnp.broadcast_to(lin_x[:, None], (H, W)).reshape(H * W, 1)
    mesh_y = jnp.broadcast_to(lin_y[None, :], (H, W)).reshape(H * W, 1)

    return {
        "positions_x": positions_x,
        "positions_y": positions_y,
        "orientations": orientations,
        "mesh_x": mesh_x,
        "mesh_y": mesh_y,
        "sigma_x": jnp.full((1,), sigma_x_init, jnp.float32),
        "sigma_y": jnp.full((1,), sigma_y_init, jnp.float32),
        "f": jax.random.uniform(k4, (1,), jnp.float32) + f_init,   # torch.rand(1) + f_init
        "filter_scale": jnp.full((1,), filter_scale_init, jnp.float32),
        "final_scale": jnp.full((1, n_neurons), final_scale_init, jnp.float32),
        "final_bias": jnp.ones((1, n_neurons), jnp.float32),
    }


def energy_model_reference(x, params):
    """Pure-JAX mirror of EnergyModel.forward (square_root nonlinearity)."""
    B, C, H, W = x.shape
    mesh_x = params["mesh_x"].reshape(H, W)[None]
    mesh_y = params["mesh_y"].reshape(H, W)[None]
    ori = params["orientations"]
    cos_o, sin_o = jnp.cos(ori), jnp.sin(ori)
    mx_rot = mesh_x * cos_o[:, None, None] - mesh_y * sin_o[:, None, None]
    my_rot = mesh_x * sin_o[:, None, None] + mesh_y * cos_o[:, None, None]
    px, py = params["positions_x"], params["positions_y"]
    px_rot = cos_o * px - sin_o * py
    py_rot = sin_o * px + cos_o * py
    var_x = params["sigma_x"][0] ** 2 + _VAR_EPS
    var_y = params["sigma_y"][0] ** 2 + _VAR_EPS
    gauss = jnp.exp(-0.5 * ((mx_rot - px_rot[:, None, None]) ** 2 / var_x
                            + (my_rot - py_rot[:, None, None]) ** 2 / var_y))
    phase = _TWO_PI * params["f"][0] * (mx_rot + px_rot[:, None, None])
    f_even = params["filter_scale"][0] * gauss * jnp.cos(phase)
    f_odd = params["filter_scale"][0] * gauss * jnp.cos(phase + _HALF_PI)
    x_even = jnp.einsum("bixy,nxy->bn", x, f_even,
                        precision=jax.lax.Precision.HIGHEST)
    x_odd = jnp.einsum("bixy,nxy->bn", x, f_odd,
                       precision=jax.lax.Precision.HIGHEST)
    resp = jnp.sqrt(x_even ** 2 + x_odd ** 2)
    return params["final_scale"] * resp + params["final_bias"]


if __name__ == "__main__":
    B, C, H, W = 2, 4, 16, 16
    n_neurons = 10

    key = jax.random.PRNGKey(0)
    kx, kp = jax.random.split(key)
    x = jax.random.normal(kx, (B, C, H, W), jnp.float32)
    params = init_params(kp, n_neurons, H, W)

    fwd = jax.jit(energy_model_forward)
    out = jax.block_until_ready(fwd(x, params))

    assert out.shape == (B, n_neurons), out.shape
    assert bool(jnp.all(jnp.isfinite(out)))

    ref = energy_model_reference(x, params)
    err = float(jnp.max(jnp.abs(out - ref)))
    tol = 5e-2 * (float(jnp.max(jnp.abs(ref))) + 1.0)
    assert err < tol, (err, tol)

    print("KERNEL_OK")
</pallas_src>

<mosaic_0001>
module attributes {stable_mosaic.version = 11 : i64} {
  func.func @energy_kernel(%arg0: i32, %arg1: memref<1x4xf32, #tpu.memory_space<smem>>, %arg2: memref<8x256xbf16, #tpu.memory_space<vmem>>, %arg3: memref<256x1xf32, #tpu.memory_space<vmem>>, %arg4: memref<256x1xf32, #tpu.memory_space<vmem>>, %arg5: memref<8x128xf32, #tpu.memory_space<vmem>>, %arg6: memref<8x128xf32, #tpu.memory_space<vmem>>) attributes {dimension_semantics = [#tpu.dimension_semantics<parallel>], iteration_bounds = array<i64: 1>, scalar_prefetch = 0 : i64, scratch_operands = 0 : i64, tpu.core_type = #tpu.core_type<tc>, window_params = [{transform_indices = @transform_0, window_bounds = array<i64: 1, 4>}, {pipeline_mode = #tpu.pipeline_mode<synchronous>, transform_indices = @transform_1, window_bounds = array<i64: 8, 256>}, {pipeline_mode = #tpu.pipeline_mode<synchronous>, transform_indices = @transform_2, window_bounds = array<i64: 256, 1>}, {pipeline_mode = #tpu.pipeline_mode<synchronous>, transform_indices = @transform_3, window_bounds = array<i64: 256, 1>}, {transform_indices = @transform_4, window_bounds = array<i64: 8, 128>}, {transform_indices = @transform_5, window_bounds = array<i64: 8, 128>}]} {
    %c0 = arith.constant 0 : index
    %c0_0 = arith.constant 0 : index
    %0 = memref.load %arg1[%c0, %c0_0] : memref<1x4xf32, #tpu.memory_space<smem>>
    %c0_1 = arith.constant 0 : index
    %c1 = arith.constant 1 : index
    %1 = memref.load %arg1[%c0_1, %c1] : memref<1x4xf32, #tpu.memory_space<smem>>
    %c0_2 = arith.constant 0 : index
    %c2 = arith.constant 2 : index
    %2 = memref.load %arg1[%c0_2, %c2] : memref<1x4xf32, #tpu.memory_space<smem>>
    %c0_3 = arith.constant 0 : index
    %c0_4 = arith.constant 0 : index
    %3 = vector.load %arg5[%c0_3, %c0_4] : memref<8x128xf32, #tpu.memory_space<vmem>>, vector<1x128xf32>
    %c1_5 = arith.constant 1 : index
    %c0_6 = arith.constant 0 : index
    %4 = vector.load %arg5[%c1_5, %c0_6] : memref<8x128xf32, #tpu.memory_space<vmem>>, vector<1x128xf32>
    %c2_7 = arith.constant 2 : index
    %c0_8 = arith.constant 0 : index
    %5 = vector.load %arg5[%c2_7, %c0_8] : memref<8x128xf32, #tpu.memory_space<vmem>>, vector<1x128xf32>
    %c3 = arith.constant 3 : index
    %c0_9 = arith.constant 0 : index
    %6 = vector.load %arg5[%c3, %c0_9] : memref<8x128xf32, #tpu.memory_space<vmem>>, vector<1x128xf32>
    %c4 = arith.constant 4 : index
    %c0_10 = arith.constant 0 : index
    %7 = vector.load %arg5[%c4, %c0_10] : memref<8x128xf32, #tpu.memory_space<vmem>>, vector<1x128xf32>
    %8 = math.cos %3 : vector<1x128xf32>
    %9 = math.sin %3 : vector<1x128xf32>
    %10 = arith.mulf %8, %4 : vector<1x128xf32>
    %11 = arith.mulf %9, %5 : vector<1x128xf32>
    %12 = arith.subf %10, %11 : vector<1x128xf32>
    %13 = arith.mulf %9, %4 : vector<1x128xf32>
    %14 = arith.mulf %8, %5 : vector<1x128xf32>
    %15 = arith.addf %13, %14 : vector<1x128xf32>
    %c0_11 = arith.constant 0 : index
    %c0_12 = arith.constant 0 : index
    %16 = vector.load %arg3[%c0_11, %c0_12] : memref<256x1xf32, #tpu.memory_space<vmem>>, vector<256x1xf32>
    %c0_13 = arith.constant 0 : index
    %c0_14 = arith.constant 0 : index
    %17 = vector.load %arg4[%c0_13, %c0_14] : memref<256x1xf32, #tpu.memory_space<vmem>>, vector<256x1xf32>
    %c0_15 = arith.constant 0 : index
    %c0_16 = arith.constant 0 : index
    %18 = vector.load %arg2[%c0_15, %c0_16] : memref<8x256xbf16, #tpu.memory_space<vmem>>, vector<8x256xbf16>
    %19 = vector.broadcast %16 : vector<256x1xf32> to vector<256x128xf32>
    %20 = vector.broadcast %8 : vector<1x128xf32> to vector<256x128xf32>
    %21 = arith.mulf %19, %20 : vector<256x128xf32>
    %22 = vector.broadcast %17 : vector<256x1xf32> to vector<256x128xf32>
    %23 = vector.broadcast %9 : vector<1x128xf32> to vector<256x128xf32>
    %24 = arith.mulf %22, %23 : vector<256x128xf32>
    %25 = arith.subf %21, %24 : vector<256x128xf32>
    %26 = vector.broadcast %16 : vector<256x1xf32> to vector<256x128xf32>
    %27 = vector.broadcast %9 : vector<1x128xf32> to vector<256x128xf32>
    %28 = arith.mulf %26, %27 : vector<256x128xf32>
    %29 = vector.broadcast %17 : vector<256x1xf32> to vector<256x128xf32>
    %30 = vector.broadcast %8 : vector<1x128xf32> to vector<256x128xf32>
    %31 = arith.mulf %29, %30 : vector<256x128xf32>
    %32 = arith.addf %28, %31 : vector<256x128xf32>
    %33 = vector.broadcast %12 : vector<1x128xf32> to vector<256x128xf32>
    %34 = arith.subf %25, %33 : vector<256x128xf32>
    %35 = vector.broadcast %15 : vector<1x128xf32> to vector<256x128xf32>
    %36 = arith.subf %32, %35 : vector<256x128xf32>
    %37 = arith.mulf %34, %34 : vector<256x128xf32>
    %38 = vector.broadcast %0 : f32 to vector<256x128xf32>
    %39 = arith.mulf %37, %38 : vector<256x128xf32>
    %40 = arith.mulf %36, %36 : vector<256x128xf32>
    %41 = vector.broadcast %1 : f32 to vector<256x128xf32>
    %42 = arith.mulf %40, %41 : vector<256x128xf32>
    %43 = arith.addf %39, %42 : vector<256x128xf32>
    %44 = math.exp %43 : vector<256x128xf32>
    %45 = vector.broadcast %12 : vector<1x128xf32> to vector<256x128xf32>
    %46 = arith.addf %25, %45 : vector<256x128xf32>
    %47 = vector.broadcast %2 : f32 to vector<256x128xf32>
    %48 = arith.mulf %47, %46 : vector<256x128xf32>
    %49 = math.cos %48 : vector<256x128xf32>
    %50 = arith.mulf %44, %49 : vector<256x128xf32>
    %51 = arith.truncf %50 : vector<256x128xf32> to vector<256x128xbf16>
    %52 = math.sin %48 : vector<256x128xf32>
    %53 = arith.mulf %44, %52 : vector<256x128xf32>
    %54 = arith.truncf %53 : vector<256x128xf32> to vector<256x128xbf16>
    %cst = arith.constant dense<0.000000e+00> : vector<8x128xf32>
    %55 = tpu.matmul %18, %51, %cst {dimension_numbers = #tpu.dot_dimension_numbers<[1], [0], [0], [1], [0, 0, 1, 1], [], []>} : vector<8x256xbf16>, vector<256x128xbf16>, vector<8x128xf32> -> vector<8x128xf32>
    %cst_17 = arith.constant dense<0.000000e+00> : vector<8x128xf32>
    %56 = tpu.matmul %18, %54, %cst_17 {dimension_numbers = #tpu.dot_dimension_numbers<[1], [0], [0], [1], [0, 0, 1, 1], [], []>} : vector<8x256xbf16>, vector<256x128xbf16>, vector<8x128xf32> -> vector<8x128xf32>
    %57 = arith.mulf %55, %55 : vector<8x128xf32>
    %58 = arith.mulf %56, %56 : vector<8x128xf32>
    %59 = arith.addf %57, %58 : vector<8x128xf32>
    %60 = math.sqrt %59 : vector<8x128xf32>
    %61 = vector.broadcast %6 : vector<1x128xf32> to vector<8x128xf32>
    %62 = arith.mulf %61, %60 : vector<8x128xf32>
    %63 = vector.broadcast %7 : vector<1x128xf32> to vector<8x128xf32>
    %64 = arith.addf %62, %63 : vector<8x128xf32>
    %c0_18 = arith.constant 0 : index
    %c0_19 = arith.constant 0 : index
    %65 = vector.load %arg6[%c0_18, %c0_19] : memref<8x128xf32, #tpu.memory_space<vmem>>, vector<8x128xf32>
    tpu.vector_store %arg6[%c0_18, %c0_19], %64 {strides = array<i32>} : memref<8x128xf32, #tpu.memory_space<vmem>>, vector<8x128xf32>,
    return
  }
  func.func @transform_0(%arg0: i32) -> (i32, i32) {
    %c0_i32 = arith.constant 0 : i32
    %c0_i32_0 = arith.constant 0 : i32
    %c0_i32_1 = arith.constant 0 : i32
    return %c0_i32, %c0_i32_0 : i32, i32
  }
  func.func @transform_1(%arg0: i32) -> (i32, i32) {
    %c0_i32 = arith.constant 0 : i32
    %c0_i32_0 = arith.constant 0 : i32
    %c0_i32_1 = arith.constant 0 : i32
    return %c0_i32, %c0_i32_0 : i32, i32
  }
  func.func @transform_2(%arg0: i32) -> (i32, i32) {
    %c0_i32 = arith.constant 0 : i32
    %c0_i32_0 = arith.constant 0 : i32
    %c0_i32_1 = arith.constant 0 : i32
    return %c0_i32, %c0_i32_0 : i32, i32
  }
  func.func @transform_3(%arg0: i32) -> (i32, i32) {
    %c0_i32 = arith.constant 0 : i32
    %c0_i32_0 = arith.constant 0 : i32
    %c0_i32_1 = arith.constant 0 : i32
    return %c0_i32, %c0_i32_0 : i32, i32
  }
  func.func @transform_4(%arg0: i32) -> (i32, i32) {
    %c0_i32 = arith.constant 0 : i32
    %c0_i32_0 = arith.constant 0 : i32
    return %c0_i32, %arg0 : i32, i32
  }
  func.func @transform_5(%arg0: i32) -> (i32, i32) {
    %c0_i32 = arith.constant 0 : i32
    %c0_i32_0 = arith.constant 0 : i32
    return %c0_i32, %arg0 : i32, i32
  }
}

</mosaic_0001>

<llo_original>
// kernel: energy_model_forward.1
$region0: #{energy_model_forward.1}
  #allocation0 [shape = 'u32[]', space=smem, size = 0x4, offset = 0x4, fixed_abs, tag = 'smem constant byte address 0x4 - core index']
  #allocation1 [shape = 'u32[144,128]{1,0:T(1,128)}', space=vmem, size = 0x12000, scoped, tag = 'internal scratch']
  %s0 = inlined_call_operand.vmem [shape: f32[1,4], index: 0, kind: input, shape index: {}]
  %s1 = inlined_call_operand.vmem [shape: bf16[8,256], index: 1, kind: input, shape index: {}]
  %s2 = inlined_call_operand.vmem [shape: f32[256,1], index: 2, kind: input, shape index: {}]
  %s3 = inlined_call_operand.vmem [shape: f32[256,1], index: 3, kind: input, shape index: {}]
  %s4 = inlined_call_operand.vmem [shape: f32[8,128], index: 4, kind: input, shape index: {}]
  %s5 = inlined_call_operand.vmem [shape: f32[8,128], index: 5, kind: output, shape index: {}]
  %s6 = sld [smem:[#allocation0]]
  $region34: #{energy_model_forward.1} parent=0
    _
  %s8 = ssub.s32 1, %s6
  %s9 = scalar_select 0, %s8, %s6
  $region1: #{energy_model_forward.1} parent=0
    #allocation2 [shape = 'u8[512]{0}', space=smem, size = 0x200, scoped, tag = 'input window, operand 0, single buffered']
    #allocation3 [shape = 's32[1]{0}', space=sflag, size = 0x4, scoped, tag = 'scoped memory for energy_model_forward.1']
    %10 = vsyncpa [#allocation3], 0
    // Predicated region
    $region2: #{energy_model_forward.1} parent=1 // pred_check
      _
    $region3: #{energy_model_forward.1} parent=1 // pred_check_branch
      %12 = sbr.rel (0) target = $region5
    $region4: #{energy_model_forward.1} parent=1 // pred_region
      %s14 = ssub.s32 16, 16
      %15 = vsyncadd [#allocation3], %s14
      %s17 = sshll.u32 %s0, 4
      %s18 = int_to_ptr.vmem [resolvable:$true] %s17
      %20 = dma.vmem_to_smem %s18, 16, [#allocation2], [#allocation3]
    $region5: #{energy_model_forward.1} parent=1 // pred_fallthru
      _
    // Predicated region
    $region6: #{energy_model_forward.1} parent=1 // pred_check
      _
    $region7: #{energy_model_forward.1} parent=1 // pred_check_branch
      %22 = sbr.rel (0) target = $region9
    $region8: #{energy_model_forward.1} parent=1 // pred_region
      _
    $region9: #{energy_model_forward.1} parent=1 // pred_fallthru
      _
    // Predicated region
    $region10: #{energy_model_forward.1} parent=1 // pred_check
      _
    $region11: #{energy_model_forward.1} parent=1 // pred_check_branch
      %24 = sbr.rel (0) target = $region13
    $region12: #{energy_model_forward.1} parent=1 // pred_region
      _
    $region13: #{energy_model_forward.1} parent=1 // pred_fallthru
      _
    // Predicated region
    $region14: #{energy_model_forward.1} parent=1 // pred_check
      _
    $region15: #{energy_model_forward.1} parent=1 // pred_check_branch
      %26 = sbr.rel (0) target = $region17
    $region16: #{energy_model_forward.1} parent=1 // pred_region
      _
    $region17: #{energy_model_forward.1} parent=1 // pred_fallthru
      _
    // Predicated region
    $region18: #{energy_model_forward.1} parent=1 // pred_check
      _
    $region19: #{energy_model_forward.1} parent=1 // pred_check_branch
      %28 = sbr.rel (0) target = $region21
    $region20: #{energy_model_forward.1} parent=1 // pred_region
      _
    $region21: #{energy_model_forward.1} parent=1 // pred_fallthru
      _
    // Predicated region
    $region22: #{energy_model_forward.1} parent=1 // pred_check
      _
    $region23: #{energy_model_forward.1} parent=1 // pred_check_branch
      %30 = sbr.rel (0) target = $region25
    $region24: #{energy_model_forward.1} parent=1 // pred_region
      %31 = dma.done [#allocation3], 16
    $region25: #{energy_model_forward.1} parent=1 // pred_fallthru
      _
    %32 = sfence
    %s34 = sld [smem:[#allocation2]]
    %s35 = sld [smem:[#allocation2 + $0x1]]
    %s36 = sld [smem:[#allocation2 + $0x2]]
    %v37 = vld [vmem:[%s4] sm:$0x1]
    %v38 = vld [vmem:[%s4 + $0x1] sm:$0x1]
    %v39 = vld [vmem:[%s4 + $0x2] sm:$0x1]
    %v40 = vld [vmem:[%s4 + $0x3] sm:$0x1]
    %v41 = vld [vmem:[%s4 + $0x4] sm:$0x1]
    %v42 = vand.u32 2147483647, %v37
    %vm43 = vcmp.le.f32.partialorder %v42, 0.7853982
    %vm44 = vcmp.lt.s32.totalorder %v37, 0
    %v45 = vand.u32 %v37, 2139095040
    %v46 = vshrl.u32 %v45, 23
    %v47 = vsub.s32 %v46, 127
    %v48 = vand.u32 2147483647, %v37
    %v49 = vand.u32 %v48, 8388607
    %v50 = vor.u32 %v49, 8388608
    %v51 = vsub.s32 0, %v50
    %v52 = vadd.s32 %v47, 1
    %vm53 = vcmp.gt.s32.totalorder %v52, 0
    %v54 = vsel %vm53, %v52, 0
    %v55 = vshrl.u32 %v54, 5
    %v56 = vand.u32 %v54, 31
    %v57 = vsub.s32 32, %v56
    %v58 = vshrl.u32 683565275, %v57
    %v59 = vshll.u32 683565275, %v56
    %v60 = vshrl.u32 2475754826, %v57
    %v61 = vor.u32 %v59, %v60
    %v62 = vshll.u32 2475754826, %v56
    %v63 = vshrl.u32 2131351028, %v57
    %v64 = vor.u32 %v62, %v63
    %v65 = vshll.u32 2131351028, %v56
    %v66 = vshrl.u32 2102212464, %v57
    %v67 = vor.u32 %v65, %v66
    %v68 = vshll.u32 2102212464, %v56
    %v69 = vshrl.u32 920167782, %v57
    %v70 = vor.u32 %v68, %v69
    %v71 = vshll.u32 920167782, %v56
    %v72 = vshrl.u32 1326507024, %v57
    %v73 = vor.u32 %v71, %v72
    %vm74 = vcmp.lt.s32.totalorder %v55, 1
    %vm75 = vcmp.lt.s32.totalorder %v55, 2
    %vm76 = vcmp.lt.s32.totalorder %v55, 3
    %vm77 = vcmp.lt.s32.totalorder %v55, 4
    %v78 = vsel %vm74, %v58, %v61
    %v79 = vsel %vm77, %v67, 2102212464
    %v80 = vsel %vm76, %v64, %v79
    %v81 = vsel %vm75, %v78, %v80
    %v82 = vsel %vm74, %v61, %v64
    %v83 = vsel %vm77, %v70, 920167782
    %v84 = vsel %vm76, %v67, %v83
    %v85 = vsel %vm75, %v82, %v84
    %v86 = vsel %vm74, %v64, %v67
    %v87 = vsel %vm77, %v73, 1326507024
    %v88 = vsel %vm76, %v70, %v87
    %v89 = vsel %vm75, %v86, %v88
    %v90 = vshll.u32 %v50, 8
    %v91 = vmul.u32.u64.compose %v90, %v89
    %v92 = vextract.low.u32 %v91
    %v93 = vextract.high.u32 %v91
    %v94 = vmul.u32.u64.compose %v90, %v85
    %v95 = vextract.low.u32 %v94
    %v96 = vextract.high.u32 %v94
    %v97 = vmul.u32 %v90, %v81
    %v98 = vadd.s32 %v93, %v95
    %vm99 = vc.u32 %v93, %v95
    %v100 = vadd.s32 %v96, 1
    %v101 = vsel %vm99, %v100, %v96
    %v102 = vadd.s32 %v97, %v101
    %v103 = vadd.s32 %v102, 536870912
    %v104 = vshrl.u32 %v103, 30
    %v105 = vshll.u32 %v104, 30
    %v106 = vsub.s32 %v102, %v105
    %vm107 = vcmp.lt.s32.totalorder %v106, 0
    %v108 = vsub.s32 0, %v106
    %v109 = vsel %vm107, %v108, %v106
    %v110 = vclz %v109
    %v111 = vsub.s32 %v110, 2
    %vm112 = vcmp.gt.s32.totalorder 0, %v111
    %v113 = vsel %vm112, 0, %v111
    %v114 = vsub.s32 32, %v113
    %v115 = vshll.u32 %v106, %v113
    %v116 = vshrl.u32 %v98, %v114
    %v117 = vor.u32 %v115, %v116
    %v118 = vsub.s32 4294967266, %v113
    %v119 = vadd.s32 %v118, 127
    %v120 = vshll.u32 %v119, 23
    %v121 = vor.u32 4788187, %v120
    %v122 = vand.u32 2147483647, %v121
    %v124 = vcvt.s32.f32 %v117
    %v125 = vmul.f32 %v124, %v122
    %v126 = vxor.u32 %v125, 2147483648
    %v127 = vsel %vm44, %v126, %v125
    %v128 = vsub.s32 4, %v104
    %v129 = vsel %vm44, %v128, %v104
    %v130 = vsel %vm43, %v37, %v127
    %v131 = vsel %vm43, 0, %v129
    %v132 = vcosq.f32.pop %v130
    %v133 = vsinq.f32.pop %v130
    %vm134 = vweird.f32 %v37
    %v135 = vand.u32 %v131, 3
    %vm136 = vcmp.lt.s32.totalorder %v135, 2
    %vm137 = vcmp.eq.s32.totalorder %v135, 0
    %v138 = vxor.u32 %v133, 2147483648
    %v139 = vsel %vm137, %v132, %v138
    %vm140 = vcmp.eq.s32.totalorder %v135, 2
    %v141 = vxor.u32 %v132, 2147483648
    %v142 = vsel %vm140, %v141, %v133
    %v143 = vsel %vm136, %v139, %v142
    %v144 = vsel %vm134, nan, %v143
    %v145 = vand.u32 2147483647, %v37
    %vm146 = vcmp.le.f32.partialorder %v145, 0.7853982
    %vm147 = vcmp.lt.s32.totalorder %v37, 0
    %v148 = vand.u32 %v37, 2139095040
    %v149 = vshrl.u32 %v148, 23
    %v150 = vsub.s32 %v149, 127
    %v151 = vand.u32 2147483647, %v37
    %v152 = vand.u32 %v151, 8388607
    %v153 = vor.u32 %v152, 8388608
    %v154 = vsub.s32 0, %v153
    %v155 = vadd.s32 %v150, 1
    %vm156 = vcmp.gt.s32.totalorder %v155, 0
    %v157 = vsel %vm156, %v155, 0
    %v158 = vshrl.u32 %v157, 5
    %v159 = vand.u32 %v157, 31
    %v160 = vsub.s32 32, %v159
    %v161 = vshrl.u32 683565275, %v160
    %v162 = vshll.u32 683565275, %v159
    %v163 = vshrl.u32 2475754826, %v160
    %v164 = vor.u32 %v162, %v163
    %v165 = vshll.u32 2475754826, %v159
    %v166 = vshrl.u32 2131351028, %v160
    %v167 = vor.u32 %v165, %v166
    %v168 = vshll.u32 2131351028, %v159
    %v169 = vshrl.u32 2102212464, %v160
    %v170 = vor.u32 %v168, %v169
    %v171 = vshll.u32 2102212464, %v159
    %v172 = vshrl.u32 920167782, %v160
    %v173 = vor.u32 %v171, %v172
    %v174 = vshll.u32 920167782, %v159
    %v175 = vshrl.u32 1326507024, %v160
    %v176 = vor.u32 %v174, %v175
    %vm177 = vcmp.lt.s32.totalorder %v158, 1
    %vm178 = vcmp.lt.s32.totalorder %v158, 2
    %vm179 = vcmp.lt.s32.totalorder %v158, 3
    %vm180 = vcmp.lt.s32.totalorder %v158, 4
    %v181 = vsel %vm177, %v161, %v164
    %v182 = vsel %vm180, %v170, 2102212464
    %v183 = vsel %vm179, %v167, %v182
    %v184 = vsel %vm178, %v181, %v183
    %v185 = vsel %vm177, %v164, %v167
    %v186 = vsel %vm180, %v173, 920167782
    %v187 = vsel %vm179, %v170, %v186
    %v188 = vsel %vm178, %v185, %v187
    %v189 = vsel %vm177, %v167, %v170
    %v190 = vsel %vm180, %v176, 1326507024
    %v191 = vsel %vm179, %v173, %v190
    %v192 = vsel %vm178, %v189, %v191
    %v193 = vshll.u32 %v153, 8
    %v194 = vmul.u32.u64.compose %v193, %v192
    %v195 = vextract.low.u32 %v194
    %v196 = vextract.high.u32 %v194
    %v197 = vmul.u32.u64.compose %v193, %v188
    %v198 = vextract.low.u32 %v197
    %v199 = vextract.high.u32 %v197
    %v200 = vmul.u32 %v193, %v184
    %v201 = vadd.s32 %v196, %v198
    %vm202 = vc.u32 %v196, %v198
    %v203 = vadd.s32 %v199, 1
    %v204 = vsel %vm202, %v203, %v199
    %v205 = vadd.s32 %v200, %v204
    %v206 = vadd.s32 %v205, 536870912
    %v207 = vshrl.u32 %v206, 30
    %v208 = vshll.u32 %v207, 30
    %v209 = vsub.s32 %v205, %v208
    %vm210 = vcmp.lt.s32.totalorder %v209, 0
    %v211 = vsub.s32 0, %v209
    %v212 = vsel %vm210, %v211, %v209
    %v213 = vclz %v212
    %v214 = vsub.s32 %v213, 2
    %vm215 = vcmp.gt.s32.totalorder 0, %v214
    %v216 = vsel %vm215, 0, %v214
    %v217 = vsub.s32 32, %v216
    %v218 = vshll.u32 %v209, %v216
    %v219 = vshrl.u32 %v201, %v217
    %v220 = vor.u32 %v218, %v219
    %v221 = vsub.s32 4294967266, %v216
    %v222 = vadd.s32 %v221, 127
    %v223 = vshll.u32 %v222, 23
    %v224 = vor.u32 4788187, %v223
    %v225 = vand.u32 2147483647, %v224
    %v227 = vcvt.s32.f32 %v220
    %v228 = vmul.f32 %v227, %v225
    %v229 = vxor.u32 %v228, 2147483648
    %v230 = vsel %vm147, %v229, %v228
    %v231 = vsub.s32 4, %v207
    %v232 = vsel %vm147, %v231, %v207
    %v233 = vsel %vm146, %v37, %v230
    %v234 = vsel %vm146, 0, %v232
    %v235 = vcosq.f32.pop %v233
    %v236 = vsinq.f32.pop %v233
    %vm237 = vweird.f32 %v37
    %v238 = vadd.s32 %v234, 3
    %v239 = vand.u32 %v238, 3
    %vm240 = vcmp.lt.s32.totalorder %v239, 2
    %vm241 = vcmp.eq.s32.totalorder %v239, 0
    %v242 = vxor.u32 %v236, 2147483648
    %v243 = vsel %vm241, %v235, %v242
    %vm244 = vcmp.eq.s32.totalorder %v239, 2
    %v245 = vxor.u32 %v235, 2147483648
    %v246 = vsel %vm244, %v245, %v236
    %v247 = vsel %vm240, %v243, %v246
    %v248 = vsel %vm237, nan, %v247
    %v249 = vmul.f32 %v144, %v38
    %v250 = vmul.f32 %v248, %v39
    %v251 = vsub.f32 %v249, %v250
    %v252 = vmul.f32 %v248, %v38
    %v253 = vmul.f32 %v144, %v39
    %v254 = vadd.f32 %v252, %v253
    %v255 = vld [vmem:[%s2] sm:$0xff]
    %v256 = vld [vmem:[%s2 + $0x8] sm:$0xff]
    %v257 = vld [vmem:[%s2 + $0x10] sm:$0xff]
    %v258 = vld [vmem:[%s2 + $0x18] sm:$0xff]
    %v259 = vld [vmem:[%s2 + $0x20] sm:$0xff]
    %v260 = vld [vmem:[%s2 + $0x28] sm:$0xff]
    %v261 = vld [vmem:[%s2 + $0x30] sm:$0xff]
    %v262 = vld [vmem:[%s2 + $0x38] sm:$0xff]
    %v263 = vld [vmem:[%s2 + $0x40] sm:$0xff]
    %v264 = vld [vmem:[%s2 + $0x48] sm:$0xff]
    %v265 = vld [vmem:[%s2 + $0x50] sm:$0xff]
    %v266 = vld [vmem:[%s2 + $0x58] sm:$0xff]
    %v267 = vld [vmem:[%s2 + $0x60] sm:$0xff]
    %v268 = vld [vmem:[%s2 + $0x68] sm:$0xff]
    %v269 = vld [vmem:[%s2 + $0x70] sm:$0xff]
    %v270 = vld [vmem:[%s2 + $0x78] sm:$0xff]
    %v271 = vld [vmem:[%s2 + $0x80] sm:$0xff]
    %v272 = vld [vmem:[%s2 + $0x88] sm:$0xff]
    %v273 = vld [vmem:[%s2 + $0x90] sm:$0xff]
    %v274 = vld [vmem:[%s2 + $0x98] sm:$0xff]
    %v275 = vld [vmem:[%s2 + $0xa0] sm:$0xff]
    %v276 = vld [vmem:[%s2 + $0xa8] sm:$0xff]
    %v277 = vld [vmem:[%s2 + $0xb0] sm:$0xff]
    %v278 = vld [vmem:[%s2 + $0xb8] sm:$0xff]
    %v279 = vld [vmem:[%s2 + $0xc0] sm:$0xff]
    %v280 = vld [vmem:[%s2 + $0xc8] sm:$0xff]
    %v281 = vld [vmem:[%s2 + $0xd0] sm:$0xff]
    %v282 = vld [vmem:[%s2 + $0xd8] sm:$0xff]
    %v283 = vld [vmem:[%s2 + $0xe0] sm:$0xff]
    %v284 = vld [vmem:[%s2 + $0xe8] sm:$0xff]
    %v285 = vld [vmem:[%s2 + $0xf0] sm:$0xff]
    %v286 = vld [vmem:[%s2 + $0xf8] sm:$0xff]
    %v287 = vld [vmem:[%s3] sm:$0xff]
    %v288 = vld [vmem:[%s3 + $0x8] sm:$0xff]
    %v289 = vld [vmem:[%s3 + $0x10] sm:$0xff]
    %v290 = vld [vmem:[%s3 + $0x18] sm:$0xff]
    %v291 = vld [vmem:[%s3 + $0x20] sm:$0xff]
    %v292 = vld [vmem:[%s3 + $0x28] sm:$0xff]
    %v293 = vld [vmem:[%s3 + $0x30] sm:$0xff]
    %v294 = vld [vmem:[%s3 + $0x38] sm:$0xff]
    %v295 = vld [vmem:[%s3 + $0x40] sm:$0xff]
    %v296 = vld [vmem:[%s3 + $0x48] sm:$0xff]
    %v297 = vld [vmem:[%s3 + $0x50] sm:$0xff]
    %v298 = vld [vmem:[%s3 + $0x58] sm:$0xff]
    %v299 = vld [vmem:[%s3 + $0x60] sm:$0xff]
    %v300 = vld [vmem:[%s3 + $0x68] sm:$0xff]
    %v301 = vld [vmem:[%s3 + $0x70] sm:$0xff]
    %v302 = vld [vmem:[%s3 + $0x78] sm:$0xff]
    %v303 = vld [vmem:[%s3 + $0x80] sm:$0xff]
    %v304 = vld [vmem:[%s3 + $0x88] sm:$0xff]
    %v305 = vld [vmem:[%s3 + $0x90] sm:$0xff]
    %v306 = vld [vmem:[%s3 + $0x98] sm:$0xff]
    %v307 = vld [vmem:[%s3 + $0xa0] sm:$0xff]
    %v308 = vld [vmem:[%s3 + $0xa8] sm:$0xff]
    %v309 = vld [vmem:[%s3 + $0xb0] sm:$0xff]
    %v310 = vld [vmem:[%s3 + $0xb8] sm:$0xff]
    %v311 = vld [vmem:[%s3 + $0xc0] sm:$0xff]
    %v312 = vld [vmem:[%s3 + $0xc8] sm:$0xff]
    %v313 = vld [vmem:[%s3 + $0xd0] sm:$0xff]
    %v314 = vld [vmem:[%s3 + $0xd8] sm:$0xff]
    %v315 = vld [vmem:[%s3 + $0xe0] sm:$0xff]
    %v316 = vld [vmem:[%s3 + $0xe8] sm:$0xff]
    %v317 = vld [vmem:[%s3 + $0xf0] sm:$0xff]
    %v318 = vld [vmem:[%s3 + $0xf8] sm:$0xff]
    %v319 = vld [vmem:[%s1] sm:$0xff]
    %321 = vset.pattern.permute.xlu0 0
    %322 = vperm.xlu0 %321, %v255
    %v323 = vpop.permute.xlu0 %322
    %326 = vset.pattern.permute.xlu0 0
    %327 = vperm.xlu0 %326, %v256
    %v328 = vpop.permute.xlu0 %327
    %331 = vset.pattern.permute.xlu0 0
    %332 = vperm.xlu0 %331, %v257
    %v333 = vpop.permute.xlu0 %332
    %336 = vset.pattern.permute.xlu0 0
    %337 = vperm.xlu0 %336, %v258
    %v338 = vpop.permute.xlu0 %337
    %341 = vset.pattern.permute.xlu0 0
    %342 = vperm.xlu0 %341, %v259
    %v343 = vpop.permute.xlu0 %342
    %346 = vset.pattern.permute.xlu0 0
    %347 = vperm.xlu0 %346, %v260
    %v348 = vpop.permute.xlu0 %347
    %351 = vset.pattern.permute.xlu0 0
    %352 = vperm.xlu0 %351, %v261
    %v353 = vpop.permute.xlu0 %352
    %356 = vset.pattern.permute.xlu0 0
    %357 = vperm.xlu0 %356, %v262
    %v358 = vpop.permute.xlu0 %357
    %361 = vset.pattern.permute.xlu0 0
    %362 = vperm.xlu0 %361, %v263
    %v363 = vpop.permute.xlu0 %362
    %366 = vset.pattern.permute.xlu0 0
    %367 = vperm.xlu0 %366, %v264
    %v368 = vpop.permute.xlu0 %367
    %371 = vset.pattern.permute.xlu0 0
    %372 = vperm.xlu0 %371, %v265
    %v373 = vpop.permute.xlu0 %372
    %376 = vset.pattern.permute.xlu0 0
    %377 = vperm.xlu0 %376, %v266
    %v378 = vpop.permute.xlu0 %377
    %381 = vset.pattern.permute.xlu0 0
    %382 = vperm.xlu0 %381, %v267
    %v383 = vpop.permute.xlu0 %382
    %386 = vset.pattern.permute.xlu0 0
    %387 = vperm.xlu0 %386, %v268
    %v388 = vpop.permute.xlu0 %387
    %391 = vset.pattern.permute.xlu0 0
    %392 = vperm.xlu0 %391, %v269
    %v393 = vpop.permute.xlu0 %392
    %396 = vset.pattern.permute.xlu0 0
    %397 = vperm.xlu0 %396, %v270
    %v398 = vpop.permute.xlu0 %397
    %401 = vset.pattern.permute.xlu0 0
    %402 = vperm.xlu0 %401, %v271
    %v403 = vpop.permute.xlu0 %402
    %406 = vset.pattern.permute.xlu0 0
    %407 = vperm.xlu0 %406, %v272
    %v408 = vpop.permute.xlu0 %407
    %411 = vset.pattern.permute.xlu0 0
    %412 = vperm.xlu0 %411, %v273
    %v413 = vpop.permute.xlu0 %412
    %416 = vset.pattern.permute.xlu0 0
    %417 = vperm.xlu0 %416, %v274
    %v418 = vpop.permute.xlu0 %417
    %421 = vset.pattern.permute.xlu0 0
    %422 = vperm.xlu0 %421, %v275
    %v423 = vpop.permute.xlu0 %422
    %426 = vset.pattern.permute.xlu0 0
    %427 = vperm.xlu0 %426, %v276
    %v428 = vpop.permute.xlu0 %427
    %431 = vset.pattern.permute.xlu0 0
    %432 = vperm.xlu0 %431, %v277
    %v433 = vpop.permute.xlu0 %432
    %436 = vset.pattern.permute.xlu0 0
    %437 = vperm.xlu0 %436, %v278
    %v438 = vpop.permute.xlu0 %437
    %441 = vset.pattern.permute.xlu0 0
    %442 = vperm.xlu0 %441, %v279
    %v443 = vpop.permute.xlu0 %442
    %446 = vset.pattern.permute.xlu0 0
    %447 = vperm.xlu0 %446, %v280
    %v448 = vpop.permute.xlu0 %447
    %451 = vset.pattern.permute.xlu0 0
    %452 = vperm.xlu0 %451, %v281
    %v453 = vpop.permute.xlu0 %452
    %456 = vset.pattern.permute.xlu0 0
    %457 = vperm.xlu0 %456, %v282
    %v458 = vpop.permute.xlu0 %457
    %461 = vset.pattern.permute.xlu0 0
    %462 = vperm.xlu0 %461, %v283
    %v463 = vpop.permute.xlu0 %462
    %466 = vset.pattern.permute.xlu0 0
    %467 = vperm.xlu0 %466, %v284
    %v468 = vpop.permute.xlu0 %467
    %471 = vset.pattern.permute.xlu0 0
    %472 = vperm.xlu0 %471, %v285
    %v473 = vpop.permute.xlu0 %472
    %476 = vset.pattern.permute.xlu0 0
    %477 = vperm.xlu0 %476, %v286
    %v478 = vpop.permute.xlu0 %477
    %v480 = vlaneseq
    %v481 = vshrl.u32 %v480, 7
    %v482 = vsub.s32 0, %v481
    %v483 = vrot.slane %v144, %v482
    %v484 = vmul.f32 %v323, %v483
    %v485 = vmul.f32 %v328, %v483
    %v486 = vmul.f32 %v333, %v483
    %v487 = vmul.f32 %v338, %v483
    %v488 = vmul.f32 %v343, %v483
    %v489 = vmul.f32 %v348, %v483
    %v490 = vmul.f32 %v353, %v483
    %v491 = vmul.f32 %v358, %v483
    %v492 = vmul.f32 %v363, %v483
    %v493 = vmul.f32 %v368, %v483
    %v494 = vmul.f32 %v373, %v483
    %v495 = vmul.f32 %v378, %v483
    %v496 = vmul.f32 %v383, %v483
    %v497 = vmul.f32 %v388, %v483
    %v498 = vmul.f32 %v393, %v483
    %v499 = vmul.f32 %v398, %v483
    %v500 = vmul.f32 %v403, %v483
    %v501 = vmul.f32 %v408, %v483
    %v502 = vmul.f32 %v413, %v483
    %v503 = vmul.f32 %v418, %v483
    %v504 = vmul.f32 %v423, %v483
    %v505 = vmul.f32 %v428, %v483
    %v506 = vmul.f32 %v433, %v483
    %v507 = vmul.f32 %v438, %v483
    %v508 = vmul.f32 %v443, %v483
    %v509 = vmul.f32 %v448, %v483
    %v510 = vmul.f32 %v453, %v483
    %v511 = vmul.f32 %v458, %v483
    %v512 = vmul.f32 %v463, %v483
    %v513 = vmul.f32 %v468, %v483
    %v514 = vmul.f32 %v473, %v483
    %v515 = vmul.f32 %v478, %v483
    %517 = vset.pattern.permute.xlu0 0
    %518 = vperm.xlu0 %517, %v287
    %v519 = vpop.permute.xlu0 %518
    %522 = vset.pattern.permute.xlu0 0
    %523 = vperm.xlu0 %522, %v288
    %v524 = vpop.permute.xlu0 %523
    %527 = vset.pattern.permute.xlu0 0
    %528 = vperm.xlu0 %527, %v289
    %v529 = vpop.permute.xlu0 %528
    %532 = vset.pattern.permute.xlu0 0
    %533 = vperm.xlu0 %532, %v290
    %v534 = vpop.permute.xlu0 %533
    %537 = vset.pattern.permute.xlu0 0
    %538 = vperm.xlu0 %537, %v291
    %v539 = vpop.permute.xlu0 %538
    %542 = vset.pattern.permute.xlu0 0
    %543 = vperm.xlu0 %542, %v292
    %v544 = vpop.permute.xlu0 %543
    %547 = vset.pattern.permute.xlu0 0
    %548 = vperm.xlu0 %547, %v293
    %v549 = vpop.permute.xlu0 %548
    %552 = vset.pattern.permute.xlu0 0
    %553 = vperm.xlu0 %552, %v294
    %v554 = vpop.permute.xlu0 %553
    %557 = vset.pattern.permute.xlu0 0
    %558 = vperm.xlu0 %557, %v295
    %v559 = vpop.permute.xlu0 %558
    %562 = vset.pattern.permute.xlu0 0
    %563 = vperm.xlu0 %562, %v296
    %v564 = vpop.permute.xlu0 %563
    %567 = vset.pattern.permute.xlu0 0
    %568 = vperm.xlu0 %567, %v297
    %v569 = vpop.permute.xlu0 %568
    %572 = vset.pattern.permute.xlu0 0
    %573 = vperm.xlu0 %572, %v298
    %v574 = vpop.permute.xlu0 %573
    %577 = vset.pattern.permute.xlu0 0
    %578 = vperm.xlu0 %577, %v299
    %v579 = vpop.permute.xlu0 %578
    %582 = vset.pattern.permute.xlu0 0
    %583 = vperm.xlu0 %582, %v300
    %v584 = vpop.permute.xlu0 %583
    %587 = vset.pattern.permute.xlu0 0
    %588 = vperm.xlu0 %587, %v301
    %v589 = vpop.permute.xlu0 %588
    %592 = vset.pattern.permute.xlu0 0
    %593 = vperm.xlu0 %592, %v302
    %v594 = vpop.permute.xlu0 %593
    %597 = vset.pattern.permute.xlu0 0
    %598 = vperm.xlu0 %597, %v303
    %v599 = vpop.permute.xlu0 %598
    %602 = vset.pattern.permute.xlu0 0
    %603 = vperm.xlu0 %602, %v304
    %v604 = vpop.permute.xlu0 %603
    %607 = vset.pattern.permute.xlu0 0
    %608 = vperm.xlu0 %607, %v305
    %v609 = vpop.permute.xlu0 %608
    %612 = vset.pattern.permute.xlu0 0
    %613 = vperm.xlu0 %612, %v306
    %v614 = vpop.permute.xlu0 %613
    %617 = vset.pattern.permute.xlu0 0
    %618 = vperm.xlu0 %617, %v307
    %v619 = vpop.permute.xlu0 %618
    %622 = vset.pattern.permute.xlu0 0
    %623 = vperm.xlu0 %622, %v308
    %v624 = vpop.permute.xlu0 %623
    %627 = vset.pattern.permute.xlu0 0
    %628 = vperm.xlu0 %627, %v309
    %v629 = vpop.permute.xlu0 %628
    %632 = vset.pattern.permute.xlu0 0
    %633 = vperm.xlu0 %632, %v310
    %v634 = vpop.permute.xlu0 %633
    %637 = vset.pattern.permute.xlu0 0
    %638 = vperm.xlu0 %637, %v311
    %v639 = vpop.permute.xlu0 %638
    %642 = vset.pattern.permute.xlu0 0
    %643 = vperm.xlu0 %642, %v312
    %v644 = vpop.permute.xlu0 %643
    %647 = vset.pattern.permute.xlu0 0
    %648 = vperm.xlu0 %647, %v313
    %v649 = vpop.permute.xlu0 %648
    %652 = vset.pattern.permute.xlu0 0
    %653 = vperm.xlu0 %652, %v314
    %v654 = vpop.permute.xlu0 %653
    %657 = vset.pattern.permute.xlu0 0
    %658 = vperm.xlu0 %657, %v315
    %v659 = vpop.permute.xlu0 %658
    %662 = vset.pattern.permute.xlu0 0
    %663 = vperm.xlu0 %662, %v316
    %v664 = vpop.permute.xlu0 %663
    %667 = vset.pattern.permute.xlu0 0
    %668 = vperm.xlu0 %667, %v317
    %v669 = vpop.permute.xlu0 %668
    %672 = vset.pattern.permute.xlu0 0
    %673 = vperm.xlu0 %672, %v318
    %v674 = vpop.permute.xlu0 %673
    %v676 = vlaneseq
    %v677 = vshrl.u32 %v676, 7
    %v678 = vsub.s32 0, %v677
    %v679 = vrot.slane %v248, %v678
    %v680 = vmul.f32 %v519, %v679
    %v681 = vmul.f32 %v524, %v679
    %v682 = vmul.f32 %v529, %v679
    %v683 = vmul.f32 %v534, %v679
    %v684 = vmul.f32 %v539, %v679
    %v685 = vmul.f32 %v544, %v679
    %v686 = vmul.f32 %v549, %v679
    %v687 = vmul.f32 %v554, %v679
    %v688 = vmul.f32 %v559, %v679
    %v689 = vmul.f32 %v564, %v679
    %v690 = vmul.f32 %v569, %v679
    %v691 = vmul.f32 %v574, %v679
    %v692 = vmul.f32 %v579, %v679
    %v693 = vmul.f32 %v584, %v679
    %v694 = vmul.f32 %v589, %v679
    %v695 = vmul.f32 %v594, %v679
    %v696 = vmul.f32 %v599, %v679
    %v697 = vmul.f32 %v604, %v679
    %v698 = vmul.f32 %v609, %v679
    %v699 = vmul.f32 %v614, %v679
    %v700 = vmul.f32 %v619, %v679
    %v701 = vmul.f32 %v624, %v679
    %v702 = vmul.f32 %v629, %v679
    %v703 = vmul.f32 %v634, %v679
    %v704 = vmul.f32 %v639, %v679
    %v705 = vmul.f32 %v644, %v679
    %v706 = vmul.f32 %v649, %v679
    %v707 = vmul.f32 %v654, %v679
    %v708 = vmul.f32 %v659, %v679
    %v709 = vmul.f32 %v664, %v679
    %v710 = vmul.f32 %v669, %v679
    %v711 = vmul.f32 %v674, %v679
    %v712 = vsub.f32 %v484, %v680
    %v713 = vsub.f32 %v485, %v681
    %v714 = vsub.f32 %v486, %v682
    %v715 = vsub.f32 %v487, %v683
    %v716 = vsub.f32 %v488, %v684
    %v717 = vsub.f32 %v489, %v685
    %v718 = vsub.f32 %v490, %v686
    %v719 = vsub.f32 %v491, %v687
    %v720 = vsub.f32 %v492, %v688
    %v721 = vsub.f32 %v493, %v689
    %v722 = vsub.f32 %v494, %v690
    %v723 = vsub.f32 %v495, %v691
    %v724 = vsub.f32 %v496, %v692
    %v725 = vsub.f32 %v497, %v693
    %v726 = vsub.f32 %v498, %v694
    %v727 = vsub.f32 %v499, %v695
    %v728 = vsub.f32 %v500, %v696
    %v729 = vsub.f32 %v501, %v697
    %v730 = vsub.f32 %v502, %v698
    %v731 = vsub.f32 %v503, %v699
    %v732 = vsub.f32 %v504, %v700
    %v733 = vsub.f32 %v505, %v701
    %v734 = vsub.f32 %v506, %v702
    %v735 = vsub.f32 %v507, %v703
    %v736 = vsub.f32 %v508, %v704
    %v737 = vsub.f32 %v509, %v705
    %v738 = vsub.f32 %v510, %v706
    %v739 = vsub.f32 %v511, %v707
    %v740 = vsub.f32 %v512, %v708
    %v741 = vsub.f32 %v513, %v709
    %v742 = vsub.f32 %v514, %v710
    %v743 = vsub.f32 %v515, %v711
    %v744 = vmul.f32 %v323, %v679
    %v745 = vmul.f32 %v328, %v679
    %v746 = vmul.f32 %v333, %v679
    %v747 = vmul.f32 %v338, %v679
    %v748 = vmul.f32 %v343, %v679
    %v749 = vmul.f32 %v348, %v679
    %v750 = vmul.f32 %v353, %v679
    %v751 = vmul.f32 %v358, %v679
    %v752 = vmul.f32 %v363, %v679
    %v753 = vmul.f32 %v368, %v679
    %v754 = vmul.f32 %v373, %v679
    %v755 = vmul.f32 %v378, %v679
    %v756 = vmul.f32 %v383, %v679
    %v757 = vmul.f32 %v388, %v679
    %v758 = vmul.f32 %v393, %v679
    %v759 = vmul.f32 %v398, %v679
    %v760 = vmul.f32 %v403, %v679
    %v761 = vmul.f32 %v408, %v679
    %v762 = vmul.f32 %v413, %v679
    %v763 = vmul.f32 %v418, %v679
    %v764 = vmul.f32 %v423, %v679
    %v765 = vmul.f32 %v428, %v679
    %v766 = vmul.f32 %v433, %v679
    %v767 = vmul.f32 %v438, %v679
    %v768 = vmul.f32 %v443, %v679
    %v769 = vmul.f32 %v448, %v679
    %v770 = vmul.f32 %v453, %v679
    %v771 = vmul.f32 %v458, %v679
    %v772 = vmul.f32 %v463, %v679
    %v773 = vmul.f32 %v468, %v679
    %v774 = vmul.f32 %v473, %v679
    %v775 = vmul.f32 %v478, %v679
    %v776 = vmul.f32 %v519, %v483
    %v777 = vmul.f32 %v524, %v483
    %v778 = vmul.f32 %v529, %v483
    %v779 = vmul.f32 %v534, %v483
    %v780 = vmul.f32 %v539, %v483
    %v781 = vmul.f32 %v544, %v483
    %v782 = vmul.f32 %v549, %v483
    %v783 = vmul.f32 %v554, %v483
    %v784 = vmul.f32 %v559, %v483
    %v785 = vmul.f32 %v564, %v483
    %v786 = vmul.f32 %v569, %v483
    %v787 = vmul.f32 %v574, %v483
    %v788 = vmul.f32 %v579, %v483
    %v789 = vmul.f32 %v584, %v483
    %v790 = vmul.f32 %v589, %v483
    %v791 = vmul.f32 %v594, %v483
    %v792 = vmul.f32 %v599, %v483
    %v793 = vmul.f32 %v604, %v483
    %v794 = vmul.f32 %v609, %v483
    %v795 = vmul.f32 %v614, %v483
    %v796 = vmul.f32 %v619, %v483
    %v797 = vmul.f32 %v624, %v483
    %v798 = vmul.f32 %v629, %v483
    %v799 = vmul.f32 %v634, %v483
    %v800 = vmul.f32 %v639, %v483
    %v801 = vmul.f32 %v644, %v483
    %v802 = vmul.f32 %v649, %v483
    %v803 = vmul.f32 %v654, %v483
    %v804 = vmul.f32 %v659, %v483
    %v805 = vmul.f32 %v664, %v483
    %v806 = vmul.f32 %v669, %v483
    %v807 = vmul.f32 %v674, %v483
    %v808 = vadd.f32 %v744, %v776
    %v809 = vadd.f32 %v745, %v777
    %v810 = vadd.f32 %v746, %v778
    %v811 = vadd.f32 %v747, %v779
    %v812 = vadd.f32 %v748, %v780
    %v813 = vadd.f32 %v749, %v781
    %v814 = vadd.f32 %v750, %v782
    %v815 = vadd.f32 %v751, %v783
    %v816 = vadd.f32 %v752, %v784
    %v817 = vadd.f32 %v753, %v785
    %v818 = vadd.f32 %v754, %v786
    %v819 = vadd.f32 %v755, %v787
    %v820 = vadd.f32 %v756, %v788
    %v821 = vadd.f32 %v757, %v789
    %v822 = vadd.f32 %v758, %v790
    %v823 = vadd.f32 %v759, %v791
    %v824 = vadd.f32 %v760, %v792
    %v825 = vadd.f32 %v761, %v793
    %v826 = vadd.f32 %v762, %v794
    %v827 = vadd.f32 %v763, %v795
    %v828 = vadd.f32 %v764, %v796
    %v829 = vadd.f32 %v765, %v797
    %v830 = vadd.f32 %v766, %v798
    %v831 = vadd.f32 %v767, %v799
    %v832 = vadd.f32 %v768, %v800
    %v833 = vadd.f32 %v769, %v801
    %v834 = vadd.f32 %v770, %v802
    %v835 = vadd.f32 %v771, %v803
    %v836 = vadd.f32 %v772, %v804
    %v837 = vadd.f32 %v773, %v805
    %v838 = vadd.f32 %v774, %v806
    %v839 = vadd.f32 %v775, %v807
    %v840 = vlaneseq
    %v841 = vshrl.u32 %v840, 7
    %v842 = vsub.s32 0, %v841
    %v843 = vrot.slane %v251, %v842
    %v844 = vsub.f32 %v712, %v843
    %v845 = vsub.f32 %v713, %v843
    %v846 = vsub.f32 %v714, %v843
    %v847 = vsub.f32 %v715, %v843
    %v848 = vsub.f32 %v716, %v843
    %v849 = vsub.f32 %v717, %v843
    %v850 = vsub.f32 %v718, %v843
    %v851 = vsub.f32 %v719, %v843
    %v852 = vsub.f32 %v720, %v843
    %v853 = vsub.f32 %v721, %v843
    %v854 = vsub.f32 %v722, %v843
    %v855 = vsub.f32 %v723, %v843
    %v856 = vsub.f32 %v724, %v843
    %v857 = vsub.f32 %v725, %v843
    %v858 = vsub.f32 %v726, %v843
    %v859 = vsub.f32 %v727, %v843
    %v860 = vsub.f32 %v728, %v843
    %v861 = vsub.f32 %v729, %v843
    %v862 = vsub.f32 %v730, %v843
    %v863 = vsub.f32 %v731, %v843
    %v864 = vsub.f32 %v732, %v843
    %v865 = vsub.f32 %v733, %v843
    %v866 = vsub.f32 %v734, %v843
    %v867 = vsub.f32 %v735, %v843
    %v868 = vsub.f32 %v736, %v843
    %v869 = vsub.f32 %v737, %v843
    %v870 = vsub.f32 %v738, %v843
    %v871 = vsub.f32 %v739, %v843
    %v872 = vsub.f32 %v740, %v843
    %v873 = vsub.f32 %v741, %v843
    %v874 = vsub.f32 %v742, %v843
    %v875 = vsub.f32 %v743, %v843
    %v876 = vlaneseq
    %v877 = vshrl.u32 %v876, 7
    %v878 = vsub.s32 0, %v877
    %v879 = vrot.slane %v254, %v878
    %v880 = vsub.f32 %v808, %v879
    %v881 = vsub.f32 %v809, %v879
    %v882 = vsub.f32 %v810, %v879
    %v883 = vsub.f32 %v811, %v879
    %v884 = vsub.f32 %v812, %v879
    %v885 = vsub.f32 %v813, %v879
    %v886 = vsub.f32 %v814, %v879
    %v887 = vsub.f32 %v815, %v879
    %v888 = vsub.f32 %v816, %v879
    %v889 = vsub.f32 %v817, %v879
    %v890 = vsub.f32 %v818, %v879
    %v891 = vsub.f32 %v819, %v879
    %v892 = vsub.f32 %v820, %v879
    %v893 = vsub.f32 %v821, %v879
    %v894 = vsub.f32 %v822, %v879
    %v895 = vsub.f32 %v823, %v879
    %v896 = vsub.f32 %v824, %v879
    %v897 = vsub.f32 %v825, %v879
    %v898 = vsub.f32 %v826, %v879
    %v899 = vsub.f32 %v827, %v879
    %v900 = vsub.f32 %v828, %v879
    %v901 = vsub.f32 %v829, %v879
    %v902 = vsub.f32 %v830, %v879
    %v903 = vsub.f32 %v831, %v879
    %v904 = vsub.f32 %v832, %v879
    %v905 = vsub.f32 %v833, %v879
    %v906 = vsub.f32 %v834, %v879
    %v907 = vsub.f32 %v835, %v879
    %v908 = vsub.f32 %v836, %v879
    %v909 = vsub.f32 %v837, %v879
    %v910 = vsub.f32 %v838, %v879
    %v911 = vsub.f32 %v839, %v879
    %v912 = vmul.f32 %v844, %v844
    %v913 = vmul.f32 %v845, %v845
    %v914 = vmul.f32 %v846, %v846
    %v915 = vmul.f32 %v847, %v847
    %v916 = vmul.f32 %v848, %v848
    %v917 = vmul.f32 %v849, %v849
    %v918 = vmul.f32 %v850, %v850
    %v919 = vmul.f32 %v851, %v851
    %v920 = vmul.f32 %v852, %v852
    %v921 = vmul.f32 %v853, %v853
    %v922 = vmul.f32 %v854, %v854
    %v923 = vmul.f32 %v855, %v855
    %v924 = vmul.f32 %v856, %v856
    %v925 = vmul.f32 %v857, %v857
    %v926 = vmul.f32 %v858, %v858
    %v927 = vmul.f32 %v859, %v859
    %v928 = vmul.f32 %v860, %v860
    %v929 = vmul.f32 %v861, %v861
    %v930 = vmul.f32 %v862, %v862
    %v931 = vmul.f32 %v863, %v863
    %v932 = vmul.f32 %v864, %v864
    %v933 = vmul.f32 %v865, %v865
    %v934 = vmul.f32 %v866, %v866
    %v935 = vmul.f32 %v867, %v867
    %v936 = vmul.f32 %v868, %v868
    %v937 = vmul.f32 %v869, %v869
    %v938 = vmul.f32 %v870, %v870
    %v939 = vmul.f32 %v871, %v871
    %v940 = vmul.f32 %v872, %v872
    %v941 = vmul.f32 %v873, %v873
    %v942 = vmul.f32 %v874, %v874
    %v943 = vmul.f32 %v875, %v875
    %v944 = vstv %s34
    %v945 = vmul.f32 %v912, %v944
    %v946 = vmul.f32 %v913, %v944
    %v947 = vmul.f32 %v914, %v944
    %v948 = vmul.f32 %v915, %v944
    %v949 = vmul.f32 %v916, %v944
    %v950 = vmul.f32 %v917, %v944
    %v951 = vmul.f32 %v918, %v944
    %v952 = vmul.f32 %v919, %v944
    %v953 = vmul.f32 %v920, %v944
    %v954 = vmul.f32 %v921, %v944
    %v955 = vmul.f32 %v922, %v944
    %v956 = vmul.f32 %v923, %v944
    %v957 = vmul.f32 %v924, %v944
    %v958 = vmul.f32 %v925, %v944
    %v959 = vmul.f32 %v926, %v944
    %v960 = vmul.f32 %v927, %v944
    %v961 = vmul.f32 %v928, %v944
    %v962 = vmul.f32 %v929, %v944
    %v963 = vmul.f32 %v930, %v944
    %v964 = vmul.f32 %v931, %v944
    %v965 = vmul.f32 %v932, %v944
    %v966 = vmul.f32 %v933, %v944
    %v967 = vmul.f32 %v934, %v944
    %v968 = vmul.f32 %v935, %v944
    %v969 = vmul.f32 %v936, %v944
    %v970 = vmul.f32 %v937, %v944
    %v971 = vmul.f32 %v938, %v944
    %v972 = vmul.f32 %v939, %v944
    %v973 = vmul.f32 %v940, %v944
    %v974 = vmul.f32 %v941, %v944
    %v975 = vmul.f32 %v942, %v944
    %v976 = vmul.f32 %v943, %v944
    %v977 = vmul.f32 %v880, %v880
    %v978 = vmul.f32 %v881, %v881
    %v979 = vmul.f32 %v882, %v882
    %v980 = vmul.f32 %v883, %v883
    %v981 = vmul.f32 %v884, %v884
    %v982 = vmul.f32 %v885, %v885
    %v983 = vmul.f32 %v886, %v886
    %v984 = vmul.f32 %v887, %v887
    %v985 = vmul.f32 %v888, %v888
    %v986 = vmul.f32 %v889, %v889
    %v987 = vmul.f32 %v890, %v890
    %v988 = vmul.f32 %v891, %v891
    %v989 = vmul.f32 %v892, %v892
    %v990 = vmul.f32 %v893, %v893
    %v991 = vmul.f32 %v894, %v894
    %v992 = vmul.f32 %v895, %v895
    %v993 = vmul.f32 %v896, %v896
    %v994 = vmul.f32 %v897, %v897
    %v995 = vmul.f32 %v898, %v898
    %v996 = vmul.f32 %v899, %v899
    %v997 = vmul.f32 %v900, %v900
    %v998 = vmul.f32 %v901, %v901
    %v999 = vmul.f32 %v902, %v902
    %v1000 = vmul.f32 %v903, %v903
    %v1001 = vmul.f32 %v904, %v904
    %v1002 = vmul.f32 %v905, %v905
    %v1003 = vmul.f32 %v906, %v906
    %v1004 = vmul.f32 %v907, %v907
    %v1005 = vmul.f32 %v908, %v908
    %v1006 = vmul.f32 %v909, %v909
    %v1007 = vmul.f32 %v910, %v910
    %v1008 = vmul.f32 %v911, %v911
    %v1009 = vstv %s35
    %v1010 = vmul.f32 %v977, %v1009
    %v1011 = vmul.f32 %v978, %v1009
    %v1012 = vmul.f32 %v979, %v1009
    %v1013 = vmul.f32 %v980, %v1009
    %v1014 = vmul.f32 %v981, %v1009
    %v1015 = vmul.f32 %v982, %v1009
    %v1016 = vmul.f32 %v983, %v1009
    %v1017 = vmul.f32 %v984, %v1009
    %v1018 = vmul.f32 %v985, %v1009
    %v1019 = vmul.f32 %v986, %v1009
    %v1020 = vmul.f32 %v987, %v1009
    %v1021 = vmul.f32 %v988, %v1009
    %v1022 = vmul.f32 %v989, %v1009
    %v1023 = vmul.f32 %v990, %v1009
    %v1024 = vmul.f32 %v991, %v1009
    %v1025 = vmul.f32 %v992, %v1009
    %v1026 = vmul.f32 %v993, %v1009
    %v1027 = vmul.f32 %v994, %v1009
    %v1028 = vmul.f32 %v995, %v1009
    %v1029 = vmul.f32 %v996, %v1009
    %v1030 = vmul.f32 %v997, %v1009
    %v1031 = vmul.f32 %v998, %v1009
    %v1032 = vmul.f32 %v999, %v1009
    %v1033 = vmul.f32 %v1000, %v1009
    %v1034 = vmul.f32 %v1001, %v1009
    %v1035 = vmul.f32 %v1002, %v1009
    %v1036 = vmul.f32 %v1003, %v1009
    %v1037 = vmul.f32 %v1004, %v1009
    %v1038 = vmul.f32 %v1005, %v1009
    %v1039 = vmul.f32 %v1006, %v1009
    %v1040 = vmul.f32 %v1007, %v1009
    %v1041 = vmul.f32 %v1008, %v1009
    %v1042 = vadd.f32 %v945, %v1010
    %v1043 = vadd.f32 %v946, %v1011
    %v1044 = vadd.f32 %v947, %v1012
    %v1045 = vadd.f32 %v948, %v1013
    %v1046 = vadd.f32 %v949, %v1014
    %v1047 = vadd.f32 %v950, %v1015
    %v1048 = vadd.f32 %v951, %v1016
    %v1049 = vadd.f32 %v952, %v1017
    %v1050 = vadd.f32 %v953, %v1018
    %v1051 = vadd.f32 %v954, %v1019
    %v1052 = vadd.f32 %v955, %v1020
    %v1053 = vadd.f32 %v956, %v1021
    %v1054 = vadd.f32 %v957, %v1022
    %v1055 = vadd.f32 %v958, %v1023
    %v1056 = vadd.f32 %v959, %v1024
    %v1057 = vadd.f32 %v960, %v1025
    %v1058 = vadd.f32 %v961, %v1026
    %v1059 = vadd.f32 %v962, %v1027
    %v1060 = vadd.f32 %v963, %v1028
    %v1061 = vadd.f32 %v964, %v1029
    %v1062 = vadd.f32 %v965, %v1030
    %v1063 = vadd.f32 %v966, %v1031
    %v1064 = vadd.f32 %v967, %v1032
    %v1065 = vadd.f32 %v968, %v1033
    %v1066 = vadd.f32 %v969, %v1034
    %v1067 = vadd.f32 %v970, %v1035
    %v1068 = vadd.f32 %v971, %v1036
    %v1069 = vadd.f32 %v972, %v1037
    %v1070 = vadd.f32 %v973, %v1038
    %v1071 = vadd.f32 %v974, %v1039
    %v1072 = vadd.f32 %v975, %v1040
    %v1073 = vadd.f32 %v976, %v1041
    %v1074 = vmul.f32 %v1042, 1.442695
    %v1075 = vpow.pop %v1074
    %v1076 = vmul.f32 %v1043, 1.442695
    %v1077 = vpow.pop %v1076
    %v1078 = vmul.f32 %v1044, 1.442695
    %v1079 = vpow.pop %v1078
    %v1080 = vmul.f32 %v1045, 1.442695
    %v1081 = vpow.pop %v1080
    %v1082 = vmul.f32 %v1046, 1.442695
    %v1083 = vpow.pop %v1082
    %v1084 = vmul.f32 %v1047, 1.442695
    %v1085 = vpow.pop %v1084
    %v1086 = vmul.f32 %v1048, 1.442695
    %v1087 = vpow.pop %v1086
    %v1088 = vmul.f32 %v1049, 1.442695
    %v1089 = vpow.pop %v1088
    %v1090 = vmul.f32 %v1050, 1.442695
    %v1091 = vpow.pop %v1090
    %v1092 = vmul.f32 %v1051, 1.442695
    %v1093 = vpow.pop %v1092
    %v1094 = vmul.f32 %v1052, 1.442695
    %v1095 = vpow.pop %v1094
    %v1096 = vmul.f32 %v1053, 1.442695
    %v1097 = vpow.pop %v1096
    %v1098 = vmul.f32 %v1054, 1.442695
    %v1099 = vpow.pop %v1098
    %v1100 = vmul.f32 %v1055, 1.442695
    %v1101 = vpow.pop %v1100
    %v1102 = vmul.f32 %v1056, 1.442695
    %v1103 = vpow.pop %v1102
    %v1104 = vmul.f32 %v1057, 1.442695
    %v1105 = vpow.pop %v1104
    %v1106 = vmul.f32 %v1058, 1.442695
    %v1107 = vpow.pop %v1106
    %v1108 = vmul.f32 %v1059, 1.442695
    %v1109 = vpow.pop %v1108
    %v1110 = vmul.f32 %v1060, 1.442695
    %v1111 = vpow.pop %v1110
    %v1112 = vmul.f32 %v1061, 1.442695
    %v1113 = vpow.pop %v1112
    %v1114 = vmul.f32 %v1062, 1.442695
    %v1115 = vpow.pop %v1114
    %v1116 = vmul.f32 %v1063, 1.442695
    %v1117 = vpow.pop %v1116
    %v1118 = vmul.f32 %v1064, 1.442695
    %v1119 = vpow.pop %v1118
    %v1120 = vmul.f32 %v1065, 1.442695
    %v1121 = vpow.pop %v1120
    %v1122 = vmul.f32 %v1066, 1.442695
    %v1123 = vpow.pop %v1122
    %v1124 = vmul.f32 %v1067, 1.442695
    %v1125 = vpow.pop %v1124
    %v1126 = vmul.f32 %v1068, 1.442695
    %v1127 = vpow.pop %v1126
    %v1128 = vmul.f32 %v1069, 1.442695
    %v1129 = vpow.pop %v1128
    %v1130 = vmul.f32 %v1070, 1.442695
    %v1131 = vpow.pop %v1130
    %v1132 = vmul.f32 %v1071, 1.442695
    %v1133 = vpow.pop %v1132
    %v1134 = vmul.f32 %v1072, 1.442695
    %v1135 = vpow.pop %v1134
    %v1136 = vmul.f32 %v1073, 1.442695
    %v1137 = vpow.pop %v1136
    %v1138 = vadd.f32 %v712, %v843
    %v1139 = vadd.f32 %v713, %v843
    %v1140 = vadd.f32 %v714, %v843
    %v1141 = vadd.f32 %v715, %v843
    %v1142 = vadd.f32 %v716, %v843
    %v1143 = vadd.f32 %v717, %v843
    %v1144 = vadd.f32 %v718, %v843
    %v1145 = vadd.f32 %v719, %v843
    %v1146 = vadd.f32 %v720, %v843
    %v1147 = vadd.f32 %v721, %v843
    %v1148 = vadd.f32 %v722, %v843
    %v1149 = vadd.f32 %v723, %v843
    %v1150 = vadd.f32 %v724, %v843
    %v1151 = vadd.f32 %v725, %v843
    %v1152 = vadd.f32 %v726, %v843
    %v1153 = vadd.f32 %v727, %v843
    %v1154 = vadd.f32 %v728, %v843
    %v1155 = vadd.f32 %v729, %v843
    %v1156 = vadd.f32 %v730, %v843
    %v1157 = vadd.f32 %v731, %v843
    %v1158 = vadd.f32 %v732, %v843
    %v1159 = vadd.f32 %v733, %v843
    %v1160 = vadd.f32 %v734, %v843
    %v1161 = vadd.f32 %v735, %v843
    %v1162 = vadd.f32 %v736, %v843
    %v1163 = vadd.f32 %v737, %v843
    %v1164 = vadd.f32 %v738, %v843
    %v1165 = vadd.f32 %v739, %v843
    %v1166 = vadd.f32 %v740, %v843
    %v1167 = vadd.f32 %v741, %v843
    %v1168 = vadd.f32 %v742, %v843
    %v1169 = vadd.f32 %v743, %v843
    %v1170 = vstv %s36
    %v1171 = vmul.f32 %v1170, %v1138
    %v1172 = vmul.f32 %v1170, %v1139
    %v1173 = vmul.f32 %v1170, %v1140
    %v1174 = vmul.f32 %v1170, %v1141
    %v1175 = vmul.f32 %v1170, %v1142
    %v1176 = vmul.f32 %v1170, %v1143
    %v1177 = vmul.f32 %v1170, %v1144
    %v1178 = vmul.f32 %v1170, %v1145
    %v1179 = vmul.f32 %v1170, %v1146
    %v1180 = vmul.f32 %v1170, %v1147
    %v1181 = vmul.f32 %v1170, %v1148
    %v1182 = vmul.f32 %v1170, %v1149
    %v1183 = vmul.f32 %v1170, %v1150
    %v1184 = vmul.f32 %v1170, %v1151
    %v1185 = vmul.f32 %v1170, %v1152
    %v1186 = vmul.f32 %v1170, %v1153
    %v1187 = vmul.f32 %v1170, %v1154
    %v1188 = vmul.f32 %v1170, %v1155
    %v1189 = vmul.f32 %v1170, %v1156
    %v1190 = vmul.f32 %v1170, %v1157
    %v1191 = vmul.f32 %v1170, %v1158
    %v1192 = vmul.f32 %v1170, %v1159
    %v1193 = vmul.f32 %v1170, %v1160
    %v1194 = vmul.f32 %v1170, %v1161
    %v1195 = vmul.f32 %v1170, %v1162
    %v1196 = vmul.f32 %v1170, %v1163
    %v1197 = vmul.f32 %v1170, %v1164
    %v1198 = vmul.f32 %v1170, %v1165
    %v1199 = vmul.f32 %v1170, %v1166
    %v1200 = vmul.f32 %v1170, %v1167
    %v1201 = vmul.f32 %v1170, %v1168
    %v1202 = vmul.f32 %v1170, %v1169
    %v1203 = vand.u32 2147483647, %v1171
    %vm1204 = vcmp.le.f32.partialorder %v1203, 0.7853982
    %vm1205 = vcmp.lt.s32.totalorder %v1171, 0
    %v1206 = vand.u32 %v1171, 2139095040
    %v1207 = vshrl.u32 %v1206, 23
    %v1208 = vsub.s32 %v1207, 127
    %v1209 = vand.u32 2147483647, %v1171
    %v1210 = vand.u32 %v1209, 8388607
    %v1211 = vor.u32 %v1210, 8388608
    %v1212 = vsub.s32 0, %v1211
    %v1213 = vadd.s32 %v1208, 1
    %vm1214 = vcmp.gt.s32.totalorder %v1213, 0
    %v1215 = vsel %vm1214, %v1213, 0
    %v1216 = vshrl.u32 %v1215, 5
    %v1217 = vand.u32 %v1215, 31
    %v1218 = vsub.s32 32, %v1217
    %v1219 = vshrl.u32 683565275, %v1218
    %v1220 = vshll.u32 683565275, %v1217
    %v1221 = vshrl.u32 2475754826, %v1218
    %v1222 = vor.u32 %v1220, %v1221
    %v1223 = vshll.u32 2475754826, %v1217
    %v1224 = vshrl.u32 2131351028, %v1218
    %v1225 = vor.u32 %v1223, %v1224
    %v1226 = vshll.u32 2131351028, %v1217
    %v1227 = vshrl.u32 2102212464, %v1218
    %v1228 = vor.u32 %v1226, %v1227
    %v1229 = vshll.u32 2102212464, %v1217
    %v1230 = vshrl.u32 920167782, %v1218
    %v1231 = vor.u32 %v1229, %v1230
    %v1232 = vshll.u32 920167782, %v1217
    %v1233 = vshrl.u32 1326507024, %v1218
    %v1234 = vor.u32 %v1232, %v1233
    %vm1235 = vcmp.lt.s32.totalorder %v1216, 1
    %vm1236 = vcmp.lt.s32.totalorder %v1216, 2
    %vm1237 = vcmp.lt.s32.totalorder %v1216, 3
    %vm1238 = vcmp.lt.s32.totalorder %v1216, 4
    %v1239 = vsel %vm1235, %v1219, %v1222
    %v1240 = vsel %vm1238, %v1228, 2102212464
    %v1241 = vsel %vm1237, %v1225, %v1240
    %v1242 = vsel %vm1236, %v1239, %v1241
    %v1243 = vsel %vm1235, %v1222, %v1225
    %v1244 = vsel %vm1238, %v1231, 920167782
    %v1245 = vsel %vm1237, %v1228, %v1244
    %v1246 = vsel %vm1236, %v1243, %v1245
    %v1247 = vsel %vm1235, %v1225, %v1228
    %v1248 = vsel %vm1238, %v1234, 1326507024
    %v1249 = vsel %vm1237, %v1231, %v1248
    %v1250 = vsel %vm1236, %v1247, %v1249
    %v1251 = vshll.u32 %v1211, 8
    %v1252 = vmul.u32.u64.compose %v1251, %v1250
    %v1253 = vextract.low.u32 %v1252
    %v1254 = vextract.high.u32 %v1252
    %v1255 = vmul.u32.u64.compose %v1251, %v1246
    %v1256 = vextract.low.u32 %v1255
    %v1257 = vextract.high.u32 %v1255
    %v1258 = vmul.u32 %v1251, %v1242
    %v1259 = vadd.s32 %v1254, %v1256
    %vm1260 = vc.u32 %v1254, %v1256
    %v1261 = vadd.s32 %v1257, 1
    %v1262 = vsel %vm1260, %v1261, %v1257
    %v1263 = vadd.s32 %v1258, %v1262
    %v1264 = vadd.s32 %v1263, 536870912
    %v1265 = vshrl.u32 %v1264, 30
    %v1266 = vshll.u32 %v1265, 30
    %v1267 = vsub.s32 %v1263, %v1266
    %vm1268 = vcmp.lt.s32.totalorder %v1267, 0
    %v1269 = vsub.s32 0, %v1267
    %v1270 = vsel %vm1268, %v1269, %v1267
    %v1271 = vclz %v1270
    %v1272 = vsub.s32 %v1271, 2
    %vm1273 = vcmp.gt.s32.totalorder 0, %v1272
    %v1274 = vsel %vm1273, 0, %v1272
    %v1275 = vsub.s32 32, %v1274
    %v1276 = vshll.u32 %v1267, %v1274
    %v1277 = vshrl.u32 %v1259, %v1275
    %v1278 = vor.u32 %v1276, %v1277
    %v1279 = vsub.s32 4294967266, %v1274
    %v1280 = vadd.s32 %v1279, 127
    %v1281 = vshll.u32 %v1280, 23
    %v1282 = vor.u32 4788187, %v1281
    %v1283 = vand.u32 2147483647, %v1282
    %v1285 = vcvt.s32.f32 %v1278
    %v1286 = vmul.f32 %v1285, %v1283
    %v1287 = vxor.u32 %v1286, 2147483648
    %v1288 = vsel %vm1205, %v1287, %v1286
    %v1289 = vsub.s32 4, %v1265
    %v1290 = vsel %vm1205, %v1289, %v1265
    %v1291 = vsel %vm1204, %v1171, %v1288
    %v1292 = vsel %vm1204, 0, %v1290
    %v1293 = vcosq.f32.pop %v1291
    %v1294 = vsinq.f32.pop %v1291
    %vm1295 = vweird.f32 %v1171
    %v1296 = vand.u32 %v1292, 3
    %vm1297 = vcmp.lt.s32.totalorder %v1296, 2
    %vm1298 = vcmp.eq.s32.totalorder %v1296, 0
    %v1299 = vxor.u32 %v1294, 2147483648
    %v1300 = vsel %vm1298, %v1293, %v1299
    %vm1301 = vcmp.eq.s32.totalorder %v1296, 2
    %v1302 = vxor.u32 %v1293, 2147483648
    %v1303 = vsel %vm1301, %v1302, %v1294
    %v1304 = vsel %vm1297, %v1300, %v1303
    %v1305 = vsel %vm1295, nan, %v1304
    %v1306 = vand.u32 2147483647, %v1172
    %vm1307 = vcmp.le.f32.partialorder %v1306, 0.7853982
    %vm1308 = vcmp.lt.s32.totalorder %v1172, 0
    %v1309 = vand.u32 %v1172, 2139095040
    %v1310 = vshrl.u32 %v1309, 23
    %v1311 = vsub.s32 %v1310, 127
    %v1312 = vand.u32 2147483647, %v1172
    %v1313 = vand.u32 %v1312, 8388607
    %v1314 = vor.u32 %v1313, 8388608
    %v1315 = vsub.s32 0, %v1314
    %v1316 = vadd.s32 %v1311, 1
    %vm1317 = vcmp.gt.s32.totalorder %v1316, 0
    %v1318 = vsel %vm1317, %v1316, 0
    %v1319 = vshrl.u32 %v1318, 5
    %v1320 = vand.u32 %v1318, 31
    %v1321 = vsub.s32 32, %v1320
    %v1322 = vshrl.u32 683565275, %v1321
    %v1323 = vshll.u32 683565275, %v1320
    %v1324 = vshrl.u32 2475754826, %v1321
    %v1325 = vor.u32 %v1323, %v1324
    %v1326 = vshll.u32 2475754826, %v1320
    %v1327 = vshrl.u32 2131351028, %v1321
    %v1328 = vor.u32 %v1326, %v1327
    %v1329 = vshll.u32 2131351028, %v1320
    %v1330 = vshrl.u32 2102212464, %v1321
    %v1331 = vor.u32 %v1329, %v1330
    %v1332 = vshll.u32 2102212464, %v1320
    %v1333 = vshrl.u32 920167782, %v1321
    %v1334 = vor.u32 %v1332, %v1333
    %v1335 = vshll.u32 920167782, %v1320
    %v1336 = vshrl.u32 1326507024, %v1321
    %v1337 = vor.u32 %v1335, %v1336
    %vm1338 = vcmp.lt.s32.totalorder %v1319, 1
    %vm1339 = vcmp.lt.s32.totalorder %v1319, 2
    %vm1340 = vcmp.lt.s32.totalorder %v1319, 3
    %vm1341 = vcmp.lt.s32.totalorder %v1319, 4
    %v1342 = vsel %vm1338, %v1322, %v1325
    %v1343 = vsel %vm1341, %v1331, 2102212464
    %v1344 = vsel %vm1340, %v1328, %v1343
    %v1345 = vsel %vm1339, %v1342, %v1344
    %v1346 = vsel %vm1338, %v1325, %v1328
    %v1347 = vsel %vm1341, %v1334, 920167782
    %v1348 = vsel %vm1340, %v1331, %v1347
    %v1349 = vsel %vm1339, %v1346, %v1348
    %v1350 = vsel %vm1338, %v1328, %v1331
    %v1351 = vsel %vm1341, %v1337, 1326507024
    %v1352 = vsel %vm1340, %v1334, %v1351
    %v1353 = vsel %vm1339, %v1350, %v1352
    %v1354 = vshll.u32 %v1314, 8
    %v1355 = vmul.u32.u64.compose %v1354, %v1353
    %v1356 = vextract.low.u32 %v1355
    %v1357 = vextract.high.u32 %v1355
    %v1358 = vmul.u32.u64.compose %v1354, %v1349
    %v1359 = vextract.low.u32 %v1358
    %v1360 = vextract.high.u32 %v1358
    %v1361 = vmul.u32 %v1354, %v1345
    %v1362 = vadd.s32 %v1357, %v1359
    %vm1363 = vc.u32 %v1357, %v1359
    %v1364 = vadd.s32 %v1360, 1
    %v1365 = vsel %vm1363, %v1364, %v1360
    %v1366 = vadd.s32 %v1361, %v1365
    %v1367 = vadd.s32 %v1366, 536870912
    %v1368 = vshrl.u32 %v1367, 30
    %v1369 = vshll.u32 %v1368, 30
    %v1370 = vsub.s32 %v1366, %v1369
    %vm1371 = vcmp.lt.s32.totalorder %v1370, 0
    %v1372 = vsub.s32 0, %v1370
    %v1373 = vsel %vm1371, %v1372, %v1370
    %v1374 = vclz %v1373
    %v1375 = vsub.s32 %v1374, 2
    %vm1376 = vcmp.gt.s32.totalorder 0, %v1375
    %v1377 = vsel %vm1376, 0, %v1375
    %v1378 = vsub.s32 32, %v1377
    %v1379 = vshll.u32 %v1370, %v1377
    %v1380 = vshrl.u32 %v1362, %v1378
    %v1381 = vor.u32 %v1379, %v1380
    %v1382 = vsub.s32 4294967266, %v1377
    %v1383 = vadd.s32 %v1382, 127
    %v1384 = vshll.u32 %v1383, 23
    %v1385 = vor.u32 4788187, %v1384
    %v1386 = vand.u32 2147483647, %v1385
    %v1388 = vcvt.s32.f32 %v1381
    %v1389 = vmul.f32 %v1388, %v1386
    %v1390 = vxor.u32 %v1389, 2147483648
    %v1391 = vsel %vm1308, %v1390, %v1389
    %v1392 = vsub.s32 4, %v1368
    %v1393 = vsel %vm1308, %v1392, %v1368
    %v1394 = vsel %vm1307, %v1172, %v1391
    %v1395 = vsel %vm1307, 0, %v1393
    %v1396 = vcosq.f32.pop %v1394
    %v1397 = vsinq.f32.pop %v1394
    %vm1398 = vweird.f32 %v1172
    %v1399 = vand.u32 %v1395, 3
    %vm1400 = vcmp.lt.s32.totalorder %v1399, 2
    %vm1401 = vcmp.eq.s32.totalorder %v1399, 0
    %v1402 = vxor.u32 %v1397, 2147483648
    %v1403 = vsel %vm1401, %v1396, %v1402
    %vm1404 = vcmp.eq.s32.totalorder %v1399, 2
    %v1405 = vxor.u32 %v1396, 2147483648
    %v1406 = vsel %vm1404, %v1405, %v1397
    %v1407 = vsel %vm1400, %v1403, %v1406
    %v1408 = vsel %vm1398, nan, %v1407
    %v1409 = vand.u32 2147483647, %v1173
    %vm1410 = vcmp.le.f32.partialorder %v1409, 0.7853982
    %vm1411 = vcmp.lt.s32.totalorder %v1173, 0
    %v1412 = vand.u32 %v1173, 2139095040
    %v1413 = vshrl.u32 %v1412, 23
    %v1414 = vsub.s32 %v1413, 127
    %v1415 = vand.u32 2147483647, %v1173
    %v1416 = vand.u32 %v1415, 8388607
    %v1417 = vor.u32 %v1416, 8388608
    %v1418 = vsub.s32 0, %v1417
    %v1419 = vadd.s32 %v1414, 1
    %vm1420 = vcmp.gt.s32.totalorder %v1419, 0
    %v1421 = vsel %vm1420, %v1419, 0
    %v1422 = vshrl.u32 %v1421, 5
    %v1423 = vand.u32 %v1421, 31
    %v1424 = vsub.s32 32, %v1423
    %v1425 = vshrl.u32 683565275, %v1424
    %v1426 = vshll.u32 683565275, %v1423
    %v1427 = vshrl.u32 2475754826, %v1424
    %v1428 = vor.u32 %v1426, %v1427
    %v1429 = vshll.u32 2475754826, %v1423
    %v1430 = vshrl.u32 2131351028, %v1424
    %v1431 = vor.u32 %v1429, %v1430
    %v1432 = vshll.u32 2131351028, %v1423
    %v1433 = vshrl.u32 2102212464, %v1424
    %v1434 = vor.u32 %v1432, %v1433
    %v1435 = vshll.u32 2102212464, %v1423
    %v1436 = vshrl.u32 920167782, %v1424
    %v1437 = vor.u32 %v1435, %v1436
    %v1438 = vshll.u32 920167782, %v1423
    %v1439 = vshrl.u32 1326507024, %v1424
    %v1440 = vor.u32 %v1438, %v1439
    %vm1441 = vcmp.lt.s32.totalorder %v1422, 1
    %vm1442 = vcmp.lt.s32.totalorder %v1422, 2
    %vm1443 = vcmp.lt.s32.totalorder %v1422, 3
    %vm1444 = vcmp.lt.s32.totalorder %v1422, 4
    %v1445 = vsel %vm1441, %v1425, %v1428
    %v1446 = vsel %vm1444, %v1434, 2102212464
    %v1447 = vsel %vm1443, %v1431, %v1446
    %v1448 = vsel %vm1442, %v1445, %v1447
    %v1449 = vsel %vm1441, %v1428, %v1431
    %v1450 = vsel %vm1444, %v1437, 920167782
    %v1451 = vsel %vm1443, %v1434, %v1450
    %v1452 = vsel %vm1442, %v1449, %v1451
    %v1453 = vsel %vm1441, %v1431, %v1434
    %v1454 = vsel %vm1444, %v1440, 1326507024
    %v1455 = vsel %vm1443, %v1437, %v1454
    %v1456 = vsel %vm1442, %v1453, %v1455
    %v1457 = vshll.u32 %v1417, 8
    %v1458 = vmul.u32.u64.compose %v1457, %v1456
    %v1459 = vextract.low.u32 %v1458
    %v1460 = vextract.high.u32 %v1458
    %v1461 = vmul.u32.u64.compose %v1457, %v1452
    %v1462 = vextract.low.u32 %v1461
    %v1463 = vextract.high.u32 %v1461
    %v1464 = vmul.u32 %v1457, %v1448
    %v1465 = vadd.s32 %v1460, %v1462
    %vm1466 = vc.u32 %v1460, %v1462
    %v1467 = vadd.s32 %v1463, 1
    %v1468 = vsel %vm1466, %v1467, %v1463
    %v1469 = vadd.s32 %v1464, %v1468
    %v1470 = vadd.s32 %v1469, 536870912
    %v1471 = vshrl.u32 %v1470, 30
    %v1472 = vshll.u32 %v1471, 30
    %v1473 = vsub.s32 %v1469, %v1472
    %vm1474 = vcmp.lt.s32.totalorder %v1473, 0
    %v1475 = vsub.s32 0, %v1473
    %v1476 = vsel %vm1474, %v1475, %v1473
    %v1477 = vclz %v1476
    %v1478 = vsub.s32 %v1477, 2
    %vm1479 = vcmp.gt.s32.totalorder 0, %v1478
    %v1480 = vsel %vm1479, 0, %v1478
    %v1481 = vsub.s32 32, %v1480
    %v1482 = vshll.u32 %v1473, %v1480
    %v1483 = vshrl.u32 %v1465, %v1481
    %v1484 = vor.u32 %v1482, %v1483
    %v1485 = vsub.s32 4294967266, %v1480
    %v1486 = vadd.s32 %v1485, 127
    %v1487 = vshll.u32 %v1486, 23
    %v1488 = vor.u32 4788187, %v1487
    %v1489 = vand.u32 2147483647, %v1488
    %v1491 = vcvt.s32.f32 %v1484
    %v1492 = vmul.f32 %v1491, %v1489
    %v1493 = vxor.u32 %v1492, 2147483648
    %v1494 = vsel %vm1411, %v1493, %v1492
    %v1495 = vsub.s32 4, %v1471
    %v1496 = vsel %vm1411, %v1495, %v1471
    %v1497 = vsel %vm1410, %v1173, %v1494
    %v1498 = vsel %vm1410, 0, %v1496
    %v1499 = vcosq.f32.pop %v1497
    %v1500 = vsinq.f32.pop %v1497
    %vm1501 = vweird.f32 %v1173
    %v1502 = vand.u32 %v1498, 3
    %vm1503 = vcmp.lt.s32.totalorder %v1502, 2
    %vm1504 = vcmp.eq.s32.totalorder %v1502, 0
    %v1505 = vxor.u32 %v1500, 2147483648
    %v1506 = vsel %vm1504, %v1499, %v1505
    %vm1507 = vcmp.eq.s32.totalorder %v1502, 2
    %v1508 = vxor.u32 %v1499, 2147483648
    %v1509 = vsel %vm1507, %v1508, %v1500
    %v1510 = vsel %vm1503, %v1506, %v1509
    %v1511 = vsel %vm1501, nan, %v1510
    %v1512 = vand.u32 2147483647, %v1174
    %vm1513 = vcmp.le.f32.partialorder %v1512, 0.7853982
    %vm1514 = vcmp.lt.s32.totalorder %v1174, 0
    %v1515 = vand.u32 %v1174, 2139095040
    %v1516 = vshrl.u32 %v1515, 23
    %v1517 = vsub.s32 %v1516, 127
    %v1518 = vand.u32 2147483647, %v1174
    %v1519 = vand.u32 %v1518, 8388607
    %v1520 = vor.u32 %v1519, 8388608
    %v1521 = vsub.s32 0, %v1520
    %v1522 = vadd.s32 %v1517, 1
    %vm1523 = vcmp.gt.s32.totalorder %v1522, 0
    %v1524 = vsel %vm1523, %v1522, 0
    %v1525 = vshrl.u32 %v1524, 5
    %v1526 = vand.u32 %v1524, 31
    %v1527 = vsub.s32 32, %v1526
    %v1528 = vshrl.u32 683565275, %v1527
    %v1529 = vshll.u32 683565275, %v1526
    %v1530 = vshrl.u32 2475754826, %v1527
    %v1531 = vor.u32 %v1529, %v1530
    %v1532 = vshll.u32 2475754826, %v1526
    %v1533 = vshrl.u32 2131351028, %v1527
    %v1534 = vor.u32 %v1532, %v1533
    %v1535 = vshll.u32 2131351028, %v1526
    %v1536 = vshrl.u32 2102212464, %v1527
    %v1537 = vor.u32 %v1535, %v1536
    %v1538 = vshll.u32 2102212464, %v1526
    %v1539 = vshrl.u32 920167782, %v1527
    %v1540 = vor.u32 %v1538, %v1539
    %v1541 = vshll.u32 920167782, %v1526
    %v1542 = vshrl.u32 1326507024, %v1527
    %v1543 = vor.u32 %v1541, %v1542
    %vm1544 = vcmp.lt.s32.totalorder %v1525, 1
    %vm1545 = vcmp.lt.s32.totalorder %v1525, 2
    %vm1546 = vcmp.lt.s32.totalorder %v1525, 3
    %vm1547 = vcmp.lt.s32.totalorder %v1525, 4
    %v1548 = vsel %vm1544, %v1528, %v1531
    %v1549 = vsel %vm1547, %v1537, 2102212464
    %v1550 = vsel %vm1546, %v1534, %v1549
    %v1551 = vsel %vm1545, %v1548, %v1550
    %v1552 = vsel %vm1544, %v1531, %v1534
    %v1553 = vsel %vm1547, %v1540, 920167782
    %v1554 = vsel %vm1546, %v1537, %v1553
    %v1555 = vsel %vm1545, %v1552, %v1554
    %v1556 = vsel %vm1544, %v1534, %v1537
    %v1557 = vsel %vm1547, %v1543, 1326507024
    %v1558 = vsel %vm1546, %v1540, %v1557
    %v1559 = vsel %vm1545, %v1556, %v1558
    %v1560 = vshll.u32 %v1520, 8
    %v1561 = vmul.u32.u64.compose %v1560, %v1559
    %v1562 = vextract.low.u32 %v1561
    %v1563 = vextract.high.u32 %v1561
    %v1564 = vmul.u32.u64.compose %v1560, %v1555
    %v1565 = vextract.low.u32 %v1564
    %v1566 = vextract.high.u32 %v1564
    %v1567 = vmul.u32 %v1560, %v1551
    %v1568 = vadd.s32 %v1563, %v1565
    %vm1569 = vc.u32 %v1563, %v1565
    %v1570 = vadd.s32 %v1566, 1
    %v1571 = vsel %vm1569, %v1570, %v1566
    %v1572 = vadd.s32 %v1567, %v1571
    %v1573 = vadd.s32 %v1572, 536870912
    %v1574 = vshrl.u32 %v1573, 30
    %v1575 = vshll.u32 %v1574, 30
    %v1576 = vsub.s32 %v1572, %v1575
    %vm1577 = vcmp.lt.s32.totalorder %v1576, 0
    %v1578 = vsub.s32 0, %v1576
    %v1579 = vsel %vm1577, %v1578, %v1576
    %v1580 = vclz %v1579
    %v1581 = vsub.s32 %v1580, 2
    %vm1582 = vcmp.gt.s32.totalorder 0, %v1581
    %v1583 = vsel %vm1582, 0, %v1581
    %v1584 = vsub.s32 32, %v1583
    %v1585 = vshll.u32 %v1576, %v1583
    %v1586 = vshrl.u32 %v1568, %v1584
    %v1587 = vor.u32 %v1585, %v1586
    %v1588 = vsub.s32 4294967266, %v1583
    %v1589 = vadd.s32 %v1588, 127
    %v1590 = vshll.u32 %v1589, 23
    %v1591 = vor.u32 4788187, %v1590
    %v1592 = vand.u32 2147483647, %v1591
    %v1594 = vcvt.s32.f32 %v1587
    %v1595 = vmul.f32 %v1594, %v1592
    %v1596 = vxor.u32 %v1595, 2147483648
    %v1597 = vsel %vm1514, %v1596, %v1595
    %v1598 = vsub.s32 4, %v1574
    %v1599 = vsel %vm1514, %v1598, %v1574
    %v1600 = vsel %vm1513, %v1174, %v1597
    %v1601 = vsel %vm1513, 0, %v1599
    %v1602 = vcosq.f32.pop %v1600
    %v1603 = vsinq.f32.pop %v1600
    %vm1604 = vweird.f32 %v1174
    %v1605 = vand.u32 %v1601, 3
    %vm1606 = vcmp.lt.s32.totalorder %v1605, 2
    %vm1607 = vcmp.eq.s32.totalorder %v1605, 0
    %v1608 = vxor.u32 %v1603, 2147483648
    %v1609 = vsel %vm1607, %v1602, %v1608
    %vm1610 = vcmp.eq.s32.totalorder %v1605, 2
    %v1611 = vxor.u32 %v1602, 2147483648
    %v1612 = vsel %vm1610, %v1611, %v1603
    %v1613 = vsel %vm1606, %v1609, %v1612
    %v1614 = vsel %vm1604, nan, %v1613
    %v1615 = vand.u32 2147483647, %v1175
    %vm1616 = vcmp.le.f32.partialorder %v1615, 0.7853982
    %vm1617 = vcmp.lt.s32.totalorder %v1175, 0
    %v1618 = vand.u32 %v1175, 2139095040
    %v1619 = vshrl.u32 %v1618, 23
    %v1620 = vsub.s32 %v1619, 127
    %v1621 = vand.u32 2147483647, %v1175
    %v1622 = vand.u32 %v1621, 8388607
    %v1623 = vor.u32 %v1622, 8388608
    %v1624 = vsub.s32 0, %v1623
    %v1625 = vadd.s32 %v1620, 1
    %vm1626 = vcmp.gt.s32.totalorder %v1625, 0
    %v1627 = vsel %vm1626, %v1625, 0
    %v1628 = vshrl.u32 %v1627, 5
    %v1629 = vand.u32 %v1627, 31
    %v1630 = vsub.s32 32, %v1629
    %v1631 = vshrl.u32 683565275, %v1630
    %v1632 = vshll.u32 683565275, %v1629
    %v1633 = vshrl.u32 2475754826, %v1630
    %v1634 = vor.u32 %v1632, %v1633
    %v1635 = vshll.u32 2475754826, %v1629
    %v1636 = vshrl.u32 2131351028, %v1630
    %v1637 = vor.u32 %v1635, %v1636
    %v1638 = vshll.u32 2131351028, %v1629
    %v1639 = vshrl.u32 2102212464, %v1630
    %v1640 = vor.u32 %v1638, %v1639
    %v1641 = vshll.u32 2102212464, %v1629
    %v1642 = vshrl.u32 920167782, %v1630
    %v1643 = vor.u32 %v1641, %v1642
    %v1644 = vshll.u32 920167782, %v1629
    %v1645 = vshrl.u32 1326507024, %v1630
    %v1646 = vor.u32 %v1644, %v1645
    %vm1647 = vcmp.lt.s32.totalorder %v1628, 1
    %vm1648 = vcmp.lt.s32.totalorder %v1628, 2
    %vm1649 = vcmp.lt.s32.totalorder %v1628, 3
    %vm1650 = vcmp.lt.s32.totalorder %v1628, 4
    %v1651 = vsel %vm1647, %v1631, %v1634
    %v1652 = vsel %vm1650, %v1640, 2102212464
    %v1653 = vsel %vm1649, %v1637, %v1652
    %v1654 = vsel %vm1648, %v1651, %v1653
    %v1655 = vsel %vm1647, %v1634, %v1637
    %v1656 = vsel %vm1650, %v1643, 920167782
    %v1657 = vsel %vm1649, %v1640, %v1656
    %v1658 = vsel %vm1648, %v1655, %v1657
    %v1659 = vsel %vm1647, %v1637, %v1640
    %v1660 = vsel %vm1650, %v1646, 1326507024
    %v1661 = vsel %vm1649, %v1643, %v1660
    %v1662 = vsel %vm1648, %v1659, %v1661
    %v1663 = vshll.u32 %v1623, 8
    %v1664 = vmul.u32.u64.compose %v1663, %v1662
    %v1665 = vextract.low.u32 %v1664
    %v1666 = vextract.high.u32 %v1664
    %v1667 = vmul.u32.u64.compose %v1663, %v1658
    %v1668 = vextract.low.u32 %v1667
    %v1669 = vextract.high.u32 %v1667
    %v1670 = vmul.u32 %v1663, %v1654
    %v1671 = vadd.s32 %v1666, %v1668
    %vm1672 = vc.u32 %v1666, %v1668
    %v1673 = vadd.s32 %v1669, 1
    %v1674 = vsel %vm1672, %v1673, %v1669
    %v1675 = vadd.s32 %v1670, %v1674
    %v1676 = vadd.s32 %v1675, 536870912
    %v1677 = vshrl.u32 %v1676, 30
    %v1678 = vshll.u32 %v1677, 30
    %v1679 = vsub.s32 %v1675, %v1678
    %vm1680 = vcmp.lt.s32.totalorder %v1679, 0
    %v1681 = vsub.s32 0, %v1679
    %v1682 = vsel %vm1680, %v1681, %v1679
    %v1683 = vclz %v1682
    %v1684 = vsub.s32 %v1683, 2
    %vm1685 = vcmp.gt.s32.totalorder 0, %v1684
    %v1686 = vsel %vm1685, 0, %v1684
    %v1687 = vsub.s32 32, %v1686
    %v1688 = vshll.u32 %v1679, %v1686
    %v1689 = vshrl.u32 %v1671, %v1687
    %v1690 = vor.u32 %v1688, %v1689
    %v1691 = vsub.s32 4294967266, %v1686
    %v1692 = vadd.s32 %v1691, 127
    %v1693 = vshll.u32 %v1692, 23
    %v1694 = vor.u32 4788187, %v1693
    %v1695 = vand.u32 2147483647, %v1694
    %v1697 = vcvt.s32.f32 %v1690
    %v1698 = vmul.f32 %v1697, %v1695
    %v1699 = vxor.u32 %v1698, 2147483648
    %v1700 = vsel %vm1617, %v1699, %v1698
    %v1701 = vsub.s32 4, %v1677
    %v1702 = vsel %vm1617, %v1701, %v1677
    %v1703 = vsel %vm1616, %v1175, %v1700
    %v1704 = vsel %vm1616, 0, %v1702
    %v1705 = vcosq.f32.pop %v1703
    %v1706 = vsinq.f32.pop %v1703
    %vm1707 = vweird.f32 %v1175
    %v1708 = vand.u32 %v1704, 3
    %vm1709 = vcmp.lt.s32.totalorder %v1708, 2
    %vm1710 = vcmp.eq.s32.totalorder %v1708, 0
    %v1711 = vxor.u32 %v1706, 2147483648
    %v1712 = vsel %vm1710, %v1705, %v1711
    %vm1713 = vcmp.eq.s32.totalorder %v1708, 2
    %v1714 = vxor.u32 %v1705, 2147483648
    %v1715 = vsel %vm1713, %v1714, %v1706
    %v1716 = vsel %vm1709, %v1712, %v1715
    %v1717 = vsel %vm1707, nan, %v1716
    %v1718 = vand.u32 2147483647, %v1176
    %vm1719 = vcmp.le.f32.partialorder %v1718, 0.7853982
    %vm1720 = vcmp.lt.s32.totalorder %v1176, 0
    %v1721 = vand.u32 %v1176, 2139095040
    %v1722 = vshrl.u32 %v1721, 23
    %v1723 = vsub.s32 %v1722, 127
    %v1724 = vand.u32 2147483647, %v1176
    %v1725 = vand.u32 %v1724, 8388607
    %v1726 = vor.u32 %v1725, 8388608
    %v1727 = vsub.s32 0, %v1726
    %v1728 = vadd.s32 %v1723, 1
    %vm1729 = vcmp.gt.s32.totalorder %v1728, 0
    %v1730 = vsel %vm1729, %v1728, 0
    %v1731 = vshrl.u32 %v1730, 5
    %v1732 = vand.u32 %v1730, 31
    %v1733 = vsub.s32 32, %v1732
    %v1734 = vshrl.u32 683565275, %v1733
    %v1735 = vshll.u32 683565275, %v1732
    %v1736 = vshrl.u32 2475754826, %v1733
    %v1737 = vor.u32 %v1735, %v1736
    %v1738 = vshll.u32 2475754826, %v1732
    %v1739 = vshrl.u32 2131351028, %v1733
    %v1740 = vor.u32 %v1738, %v1739
    %v1741 = vshll.u32 2131351028, %v1732
    %v1742 = vshrl.u32 2102212464, %v1733
    %v1743 = vor.u32 %v1741, %v1742
    %v1744 = vshll.u32 2102212464, %v1732
    %v1745 = vshrl.u32 920167782, %v1733
    %v1746 = vor.u32 %v1744, %v1745
    %v1747 = vshll.u32 920167782, %v1732
    %v1748 = vshrl.u32 1326507024, %v1733
    %v1749 = vor.u32 %v1747, %v1748
    %vm1750 = vcmp.lt.s32.totalorder %v1731, 1
    %vm1751 = vcmp.lt.s32.totalorder %v1731, 2
    %vm1752 = vcmp.lt.s32.totalorder %v1731, 3
    %vm1753 = vcmp.lt.s32.totalorder %v1731, 4
    %v1754 = vsel %vm1750, %v1734, %v1737
    %v1755 = vsel %vm1753, %v1743, 2102212464
    %v1756 = vsel %vm1752, %v1740, %v1755
    %v1757 = vsel %vm1751, %v1754, %v1756
    %v1758 = vsel %vm1750, %v1737, %v1740
    %v1759 = vsel %vm1753, %v1746, 920167782
    %v1760 = vsel %vm1752, %v1743, %v1759
    %v1761 = vsel %vm1751, %v1758, %v1760
    %v1762 = vsel %vm1750, %v1740, %v1743
    %v1763 = vsel %vm1753, %v1749, 1326507024
    %v1764 = vsel %vm1752, %v1746, %v1763
    %v1765 = vsel %vm1751, %v1762, %v1764
    %v1766 = vshll.u32 %v1726, 8
    %v1767 = vmul.u32.u64.compose %v1766, %v1765
    %v1768 = vextract.low.u32 %v1767
    %v1769 = vextract.high.u32 %v1767
    %v1770 = vmul.u32.u64.compose %v1766, %v1761
    %v1771 = vextract.low.u32 %v1770
    %v1772 = vextract.high.u32 %v1770
    %v1773 = vmul.u32 %v1766, %v1757
    %v1774 = vadd.s32 %v1769, %v1771
    %vm1775 = vc.u32 %v1769, %v1771
    %v1776 = vadd.s32 %v1772, 1
    %v1777 = vsel %vm1775, %v1776, %v1772
    %v1778 = vadd.s32 %v1773, %v1777
    %v1779 = vadd.s32 %v1778, 536870912
    %v1780 = vshrl.u32 %v1779, 30
    %v1781 = vshll.u32 %v1780, 30
    %v1782 = vsub.s32 %v1778, %v1781
    %vm1783 = vcmp.lt.s32.totalorder %v1782, 0
    %v1784 = vsub.s32 0, %v1782
    %v1785 = vsel %vm1783, %v1784, %v1782
    %v1786 = vclz %v1785
    %v1787 = vsub.s32 %v1786, 2
    %vm1788 = vcmp.gt.s32.totalorder 0, %v1787
    %v1789 = vsel %vm1788, 0, %v1787
    %v1790 = vsub.s32 32, %v1789
    %v1791 = vshll.u32 %v1782, %v1789
    %v1792 = vshrl.u32 %v1774, %v1790
    %v1793 = vor.u32 %v1791, %v1792
    %v1794 = vsub.s32 4294967266, %v1789
    %v1795 = vadd.s32 %v1794, 127
    %v1796 = vshll.u32 %v1795, 23
    %v1797 = vor.u32 4788187, %v1796
    %v1798 = vand.u32 2147483647, %v1797
    %v1800 = vcvt.s32.f32 %v1793
    %v1801 = vmul.f32 %v1800, %v1798
    %v1802 = vxor.u32 %v1801, 2147483648
    %v1803 = vsel %vm1720, %v1802, %v1801
    %v1804 = vsub.s32 4, %v1780
    %v1805 = vsel %vm1720, %v1804, %v1780
    %v1806 = vsel %vm1719, %v1176, %v1803
    %v1807 = vsel %vm1719, 0, %v1805
    %v1808 = vcosq.f32.pop %v1806
    %v1809 = vsinq.f32.pop %v1806
    %vm1810 = vweird.f32 %v1176
    %v1811 = vand.u32 %v1807, 3
    %vm1812 = vcmp.lt.s32.totalorder %v1811, 2
    %vm1813 = vcmp.eq.s32.totalorder %v1811, 0
    %v1814 = vxor.u32 %v1809, 2147483648
    %v1815 = vsel %vm1813, %v1808, %v1814
    %vm1816 = vcmp.eq.s32.totalorder %v1811, 2
    %v1817 = vxor.u32 %v1808, 2147483648
    %v1818 = vsel %vm1816, %v1817, %v1809
    %v1819 = vsel %vm1812, %v1815, %v1818
    %v1820 = vsel %vm1810, nan, %v1819
    %v1821 = vand.u32 2147483647, %v1177
    %vm1822 = vcmp.le.f32.partialorder %v1821, 0.7853982
    %vm1823 = vcmp.lt.s32.totalorder %v1177, 0
    %v1824 = vand.u32 %v1177, 2139095040
    %v1825 = vshrl.u32 %v1824, 23
    %v1826 = vsub.s32 %v1825, 127
    %v1827 = vand.u32 2147483647, %v1177
    %v1828 = vand.u32 %v1827, 8388607
    %v1829 = vor.u32 %v1828, 8388608
    %v1830 = vsub.s32 0, %v1829
    %v1831 = vadd.s32 %v1826, 1
    %vm1832 = vcmp.gt.s32.totalorder %v1831, 0
    %v1833 = vsel %vm1832, %v1831, 0
    %v1834 = vshrl.u32 %v1833, 5
    %v1835 = vand.u32 %v1833, 31
    %v1836 = vsub.s32 32, %v1835
    %v1837 = vshrl.u32 683565275, %v1836
    %v1838 = vshll.u32 683565275, %v1835
    %v1839 = vshrl.u32 2475754826, %v1836
    %v1840 = vor.u32 %v1838, %v1839
    %v1841 = vshll.u32 2475754826, %v1835
    %v1842 = vshrl.u32 2131351028, %v1836
    %v1843 = vor.u32 %v1841, %v1842
    %v1844 = vshll.u32 2131351028, %v1835
    %v1845 = vshrl.u32 2102212464, %v1836
    %v1846 = vor.u32 %v1844, %v1845
    %v1847 = vshll.u32 2102212464, %v1835
    %v1848 = vshrl.u32 920167782, %v1836
    %v1849 = vor.u32 %v1847, %v1848
    %v1850 = vshll.u32 920167782, %v1835
    %v1851 = vshrl.u32 1326507024, %v1836
    %v1852 = vor.u32 %v1850, %v1851
    %vm1853 = vcmp.lt.s32.totalorder %v1834, 1
    %vm1854 = vcmp.lt.s32.totalorder %v1834, 2
    %vm1855 = vcmp.lt.s32.totalorder %v1834, 3
    %vm1856 = vcmp.lt.s32.totalorder %v1834, 4
    %v1857 = vsel %vm1853, %v1837, %v1840
    %v1858 = vsel %vm1856, %v1846, 2102212464
    %v1859 = vsel %vm1855, %v1843, %v1858
    %v1860 = vsel %vm1854, %v1857, %v1859
    %v1861 = vsel %vm1853, %v1840, %v1843
    %v1862 = vsel %vm1856, %v1849, 920167782
    %v1863 = vsel %vm1855, %v1846, %v1862
    %v1864 = vsel %vm1854, %v1861, %v1863
    %v1865 = vsel %vm1853, %v1843, %v1846
    %v1866 = vsel %vm1856, %v1852, 1326507024
    %v1867 = vsel %vm1855, %v1849, %v1866
    %v1868 = vsel %vm1854, %v1865, %v1867
    %v1869 = vshll.u32 %v1829, 8
    %v1870 = vmul.u32.u64.compose %v1869, %v1868
    %v1871 = vextract.low.u32 %v1870
    %v1872 = vextract.high.u32 %v1870
    %v1873 = vmul.u32.u64.compose %v1869, %v1864
    %v1874 = vextract.low.u32 %v1873
    %v1875 = vextract.high.u32 %v1873
    %v1876 = vmul.u32 %v1869, %v1860
    %v1877 = vadd.s32 %v1872, %v1874
    %vm1878 = vc.u32 %v1872, %v1874
    %v1879 = vadd.s32 %v1875, 1
    %v1880 = vsel %vm1878, %v1879, %v1875
    %v1881 = vadd.s32 %v1876, %v1880
    %v1882 = vadd.s32 %v1881, 536870912
    %v1883 = vshrl.u32 %v1882, 30
    %v1884 = vshll.u32 %v1883, 30
    %v1885 = vsub.s32 %v1881, %v1884
    %vm1886 = vcmp.lt.s32.totalorder %v1885, 0
    %v1887 = vsub.s32 0, %v1885
    %v1888 = vsel %vm1886, %v1887, %v1885
    %v1889 = vclz %v1888
    %v1890 = vsub.s32 %v1889, 2
    %vm1891 = vcmp.gt.s32.totalorder 0, %v1890
    %v1892 = vsel %vm1891, 0, %v1890
    %v1893 = vsub.s32 32, %v1892
    %v1894 = vshll.u32 %v1885, %v1892
    %v1895 = vshrl.u32 %v1877, %v1893
    %v1896 = vor.u32 %v1894, %v1895
    %v1897 = vsub.s32 4294967266, %v1892
    %v1898 = vadd.s32 %v1897, 127
    %v1899 = vshll.u32 %v1898, 23
    %v1900 = vor.u32 4788187, %v1899
    %v1901 = vand.u32 2147483647, %v1900
    %v1903 = vcvt.s32.f32 %v1896
    %v1904 = vmul.f32 %v1903, %v1901
    %v1905 = vxor.u32 %v1904, 2147483648
    %v1906 = vsel %vm1823, %v1905, %v1904
    %v1907 = vsub.s32 4, %v1883
    %v1908 = vsel %vm1823, %v1907, %v1883
    %v1909 = vsel %vm1822, %v1177, %v1906
    %v1910 = vsel %vm1822, 0, %v1908
    %v1911 = vcosq.f32.pop %v1909
    %v1912 = vsinq.f32.pop %v1909
    %vm1913 = vweird.f32 %v1177
    %v1914 = vand.u32 %v1910, 3
    %vm1915 = vcmp.lt.s32.totalorder %v1914, 2
    %vm1916 = vcmp.eq.s32.totalorder %v1914, 0
    %v1917 = vxor.u32 %v1912, 2147483648
    %v1918 = vsel %vm1916, %v1911, %v1917
    %vm1919 = vcmp.eq.s32.totalorder %v1914, 2
    %v1920 = vxor.u32 %v1911, 2147483648
    %v1921 = vsel %vm1919, %v1920, %v1912
    %v1922 = vsel %vm1915, %v1918, %v1921
    %v1923 = vsel %vm1913, nan, %v1922
    %v1924 = vand.u32 2147483647, %v1178
    %vm1925 = vcmp.le.f32.partialorder %v1924, 0.7853982
    %vm1926 = vcmp.lt.s32.totalorder %v1178, 0
    %v1927 = vand.u32 %v1178, 2139095040
    %v1928 = vshrl.u32 %v1927, 23
    %v1929 = vsub.s32 %v1928, 127
    %v1930 = vand.u32 2147483647, %v1178
    %v1931 = vand.u32 %v1930, 8388607
    %v1932 = vor.u32 %v1931, 8388608
    %v1933 = vsub.s32 0, %v1932
    %v1934 = vadd.s32 %v1929, 1
    %vm1935 = vcmp.gt.s32.totalorder %v1934, 0
    %v1936 = vsel %vm1935, %v1934, 0
    %v1937 = vshrl.u32 %v1936, 5
    %v1938 = vand.u32 %v1936, 31
    %v1939 = vsub.s32 32, %v1938
    %v1940 = vshrl.u32 683565275, %v1939
    %v1941 = vshll.u32 683565275, %v1938
    %v1942 = vshrl.u32 2475754826, %v1939
    %v1943 = vor.u32 %v1941, %v1942
    %v1944 = vshll.u32 2475754826, %v1938
    %v1945 = vshrl.u32 2131351028, %v1939
    %v1946 = vor.u32 %v1944, %v1945
    %v1947 = vshll.u32 2131351028, %v1938
    %v1948 = vshrl.u32 2102212464, %v1939
    %v1949 = vor.u32 %v1947, %v1948
    %v1950 = vshll.u32 2102212464, %v1938
    %v1951 = vshrl.u32 920167782, %v1939
    %v1952 = vor.u32 %v1950, %v1951
    %v1953 = vshll.u32 920167782, %v1938
    %v1954 = vshrl.u32 1326507024, %v1939
    %v1955 = vor.u32 %v1953, %v1954
    %vm1956 = vcmp.lt.s32.totalorder %v1937, 1
    %vm1957 = vcmp.lt.s32.totalorder %v1937, 2
    %vm1958 = vcmp.lt.s32.totalorder %v1937, 3
    %vm1959 = vcmp.lt.s32.totalorder %v1937, 4
    %v1960 = vsel %vm1956, %v1940, %v1943
    %v1961 = vsel %vm1959, %v1949, 2102212464
    %v1962 = vsel %vm1958, %v1946, %v1961
    %v1963 = vsel %vm1957, %v1960, %v1962
    %v1964 = vsel %vm1956, %v1943, %v1946
    %v1965 = vsel %vm1959, %v1952, 920167782
    %v1966 = vsel %vm1958, %v1949, %v1965
    %v1967 = vsel %vm1957, %v1964, %v1966
    %v1968 = vsel %vm1956, %v1946, %v1949
    %v1969 = vsel %vm1959, %v1955, 1326507024
    %v1970 = vsel %vm1958, %v1952, %v1969
    %v1971 = vsel %vm1957, %v1968, %v1970
    %v1972 = vshll.u32 %v1932, 8
    %v1973 = vmul.u32.u64.compose %v1972, %v1971
    %v1974 = vextract.low.u32 %v1973
    %v1975 = vextract.high.u32 %v1973
    %v1976 = vmul.u32.u64.compose %v1972, %v1967
    %v1977 = vextract.low.u32 %v1976
    %v1978 = vextract.high.u32 %v1976
    %v1979 = vmul.u32 %v1972, %v1963
    %v1980 = vadd.s32 %v1975, %v1977
    %vm1981 = vc.u32 %v1975, %v1977
    %v1982 = vadd.s32 %v1978, 1
    %v1983 = vsel %vm1981, %v1982, %v1978
    %v1984 = vadd.s32 %v1979, %v1983
    %v1985 = vadd.s32 %v1984, 536870912
    %v1986 = vshrl.u32 %v1985, 30
    %v1987 = vshll.u32 %v1986, 30
    %v1988 = vsub.s32 %v1984, %v1987
    %vm1989 = vcmp.lt.s32.totalorder %v1988, 0
    %v1990 = vsub.s32 0, %v1988
    %v1991 = vsel %vm1989, %v1990, %v1988
    %v1992 = vclz %v1991
    %v1993 = vsub.s32 %v1992, 2
    %vm1994 = vcmp.gt.s32.totalorder 0, %v1993
    %v1995 = vsel %vm1994, 0, %v1993
    %v1996 = vsub.s32 32, %v1995
    %v1997 = vshll.u32 %v1988, %v1995
    %v1998 = vshrl.u32 %v1980, %v1996
    %v1999 = vor.u32 %v1997, %v1998
    %v2000 = vsub.s32 4294967266, %v1995
    %v2001 = vadd.s32 %v2000, 127
    %v2002 = vshll.u32 %v2001, 23
    %v2003 = vor.u32 4788187, %v2002
    %v2004 = vand.u32 2147483647, %v2003
    %v2006 = vcvt.s32.f32 %v1999
    %v2007 = vmul.f32 %v2006, %v2004
    %v2008 = vxor.u32 %v2007, 2147483648
    %v2009 = vsel %vm1926, %v2008, %v2007
    %v2010 = vsub.s32 4, %v1986
    %v2011 = vsel %vm1926, %v2010, %v1986
    %v2012 = vsel %vm1925, %v1178, %v2009
    %v2013 = vsel %vm1925, 0, %v2011
    %v2014 = vcosq.f32.pop %v2012
    %v2015 = vsinq.f32.pop %v2012
    %vm2016 = vweird.f32 %v1178
    %v2017 = vand.u32 %v2013, 3
    %vm2018 = vcmp.lt.s32.totalorder %v2017, 2
    %vm2019 = vcmp.eq.s32.totalorder %v2017, 0
    %v2020 = vxor.u32 %v2015, 2147483648
    %v2021 = vsel %vm2019, %v2014, %v2020
    %vm2022 = vcmp.eq.s32.totalorder %v2017, 2
    %v2023 = vxor.u32 %v2014, 2147483648
    %v2024 = vsel %vm2022, %v2023, %v2015
    %v2025 = vsel %vm2018, %v2021, %v2024
    %v2026 = vsel %vm2016, nan, %v2025
    %v2027 = vand.u32 2147483647, %v1179
    %vm2028 = vcmp.le.f32.partialorder %v2027, 0.7853982
    %vm2029 = vcmp.lt.s32.totalorder %v1179, 0
    %v2030 = vand.u32 %v1179, 2139095040
    %v2031 = vshrl.u32 %v2030, 23
    %v2032 = vsub.s32 %v2031, 127
    %v2033 = vand.u32 2147483647, %v1179
    %v2034 = vand.u32 %v2033, 8388607
    %v2035 = vor.u32 %v2034, 8388608
    %v2036 = vsub.s32 0, %v2035
    %v2037 = vadd.s32 %v2032, 1
    %vm2038 = vcmp.gt.s32.totalorder %v2037, 0
    %v2039 = vsel %vm2038, %v2037, 0
    %v2040 = vshrl.u32 %v2039, 5
    %v2041 = vand.u32 %v2039, 31
    %v2042 = vsub.s32 32, %v2041
    %v2043 = vshrl.u32 683565275, %v2042
    %v2044 = vshll.u32 683565275, %v2041
    %v2045 = vshrl.u32 2475754826, %v2042
    %v2046 = vor.u32 %v2044, %v2045
    %v2047 = vshll.u32 2475754826, %v2041
    %v2048 = vshrl.u32 2131351028, %v2042
    %v2049 = vor.u32 %v2047, %v2048
    %v2050 = vshll.u32 2131351028, %v2041
    %v2051 = vshrl.u32 2102212464, %v2042
    %v2052 = vor.u32 %v2050, %v2051
    %v2053 = vshll.u32 2102212464, %v2041
    %v2054 = vshrl.u32 920167782, %v2042
    %v2055 = vor.u32 %v2053, %v2054
    %v2056 = vshll.u32 920167782, %v2041
    %v2057 = vshrl.u32 1326507024, %v2042
    %v2058 = vor.u32 %v2056, %v2057
    %vm2059 = vcmp.lt.s32.totalorder %v2040, 1
    %vm2060 = vcmp.lt.s32.totalorder %v2040, 2
    %vm2061 = vcmp.lt.s32.totalorder %v2040, 3
    %vm2062 = vcmp.lt.s32.totalorder %v2040, 4
    %v2063 = vsel %vm2059, %v2043, %v2046
    %v2064 = vsel %vm2062, %v2052, 2102212464
    %v2065 = vsel %vm2061, %v2049, %v2064
    %v2066 = vsel %vm2060, %v2063, %v2065
    %v2067 = vsel %vm2059, %v2046, %v2049
    %v2068 = vsel %vm2062, %v2055, 920167782
    %v2069 = vsel %vm2061, %v2052, %v2068
    %v2070 = vsel %vm2060, %v2067, %v2069
    %v2071 = vsel %vm2059, %v2049, %v2052
    %v2072 = vsel %vm2062, %v2058, 1326507024
    %v2073 = vsel %vm2061, %v2055, %v2072
    %v2074 = vsel %vm2060, %v2071, %v2073
    %v2075 = vshll.u32 %v2035, 8
    %v2076 = vmul.u32.u64.compose %v2075, %v2074
    %v2077 = vextract.low.u32 %v2076
    %v2078 = vextract.high.u32 %v2076
    %v2079 = vmul.u32.u64.compose %v2075, %v2070
    %v2080 = vextract.low.u32 %v2079
    %v2081 = vextract.high.u32 %v2079
    %v2082 = vmul.u32 %v2075, %v2066
    %v2083 = vadd.s32 %v2078, %v2080
    %vm2084 = vc.u32 %v2078, %v2080
    %v2085 = vadd.s32 %v2081, 1
    %v2086 = vsel %vm2084, %v2085, %v2081
    %v2087 = vadd.s32 %v2082, %v2086
    %v2088 = vadd.s32 %v2087, 536870912
    %v2089 = vshrl.u32 %v2088, 30
    %v2090 = vshll.u32 %v2089, 30
    %v2091 = vsub.s32 %v2087, %v2090
    %vm2092 = vcmp.lt.s32.totalorder %v2091, 0
    %v2093 = vsub.s32 0, %v2091
    %v2094 = vsel %vm2092, %v2093, %v2091
    %v2095 = vclz %v2094
    %v2096 = vsub.s32 %v2095, 2
    %vm2097 = vcmp.gt.s32.totalorder 0, %v2096
    %v2098 = vsel %vm2097, 0, %v2096
    %v2099 = vsub.s32 32, %v2098
    %v2100 = vshll.u32 %v2091, %v2098
    %v2101 = vshrl.u32 %v2083, %v2099
    %v2102 = vor.u32 %v2100, %v2101
    %v2103 = vsub.s32 4294967266, %v2098
    %v2104 = vadd.s32 %v2103, 127
    %v2105 = vshll.u32 %v2104, 23
    %v2106 = vor.u32 4788187, %v2105
    %v2107 = vand.u32 2147483647, %v2106
    %v2109 = vcvt.s32.f32 %v2102
    %v2110 = vmul.f32 %v2109, %v2107
    %v2111 = vxor.u32 %v2110, 2147483648
    %v2112 = vsel %vm2029, %v2111, %v2110
    %v2113 = vsub.s32 4, %v2089
    %v2114 = vsel %vm2029, %v2113, %v2089
    %v2115 = vsel %vm2028, %v1179, %v2112
    %v2116 = vsel %vm2028, 0, %v2114
    %v2117 = vcosq.f32.pop %v2115
    %v2118 = vsinq.f32.pop %v2115
    %vm2119 = vweird.f32 %v1179
    %v2120 = vand.u32 %v2116, 3
    %vm2121 = vcmp.lt.s32.totalorder %v2120, 2
    %vm2122 = vcmp.eq.s32.totalorder %v2120, 0
    %v2123 = vxor.u32 %v2118, 2147483648
    %v2124 = vsel %vm2122, %v2117, %v2123
    %vm2125 = vcmp.eq.s32.totalorder %v2120, 2
    %v2126 = vxor.u32 %v2117, 2147483648
    %v2127 = vsel %vm2125, %v2126, %v2118
    %v2128 = vsel %vm2121, %v2124, %v2127
    %v2129 = vsel %vm2119, nan, %v2128
    %v2130 = vand.u32 2147483647, %v1180
    %vm2131 = vcmp.le.f32.partialorder %v2130, 0.7853982
    %vm2132 = vcmp.lt.s32.totalorder %v1180, 0
    %v2133 = vand.u32 %v1180, 2139095040
    %v2134 = vshrl.u32 %v2133, 23
    %v2135 = vsub.s32 %v2134, 127
    %v2136 = vand.u32 2147483647, %v1180
    %v2137 = vand.u32 %v2136, 8388607
    %v2138 = vor.u32 %v2137, 8388608
    %v2139 = vsub.s32 0, %v2138
    %v2140 = vadd.s32 %v2135, 1
    %vm2141 = vcmp.gt.s32.totalorder %v2140, 0
    %v2142 = vsel %vm2141, %v2140, 0
    %v2143 = vshrl.u32 %v2142, 5
    %v2144 = vand.u32 %v2142, 31
    %v2145 = vsub.s32 32, %v2144
    %v2146 = vshrl.u32 683565275, %v2145
    %v2147 = vshll.u32 683565275, %v2144
    %v2148 = vshrl.u32 2475754826, %v2145
    %v2149 = vor.u32 %v2147, %v2148
    %v2150 = vshll.u32 2475754826, %v2144
    %v2151 = vshrl.u32 2131351028, %v2145
    %v2152 = vor.u32 %v2150, %v2151
    %v2153 = vshll.u32 2131351028, %v2144
    %v2154 = vshrl.u32 2102212464, %v2145
    %v2155 = vor.u32 %v2153, %v2154
    %v2156 = vshll.u32 2102212464, %v2144
    %v2157 = vshrl.u32 920167782, %v2145
    %v2158 = vor.u32 %v2156, %v2157
    %v2159 = vshll.u32 920167782, %v2144
    %v2160 = vshrl.u32 1326507024, %v2145
    %v2161 = vor.u32 %v2159, %v2160
    %vm2162 = vcmp.lt.s32.totalorder %v2143, 1
    %vm2163 = vcmp.lt.s32.totalorder %v2143, 2
    %vm2164 = vcmp.lt.s32.totalorder %v2143, 3
    %vm2165 = vcmp.lt.s32.totalorder %v2143, 4
    %v2166 = vsel %vm2162, %v2146, %v2149
    %v2167 = vsel %vm2165, %v2155, 2102212464
    %v2168 = vsel %vm2164, %v2152, %v2167
    %v2169 = vsel %vm2163, %v2166, %v2168
    %v2170 = vsel %vm2162, %v2149, %v2152
    %v2171 = vsel %vm2165, %v2158, 920167782
    %v2172 = vsel %vm2164, %v2155, %v2171
    %v2173 = vsel %vm2163, %v2170, %v2172
    %v2174 = vsel %vm2162, %v2152, %v2155
    %v2175 = vsel %vm2165, %v2161, 1326507024
    %v2176 = vsel %vm2164, %v2158, %v2175
    %v2177 = vsel %vm2163, %v2174, %v2176
    %v2178 = vshll.u32 %v2138, 8
    %v2179 = vmul.u32.u64.compose %v2178, %v2177
    %v2180 = vextract.low.u32 %v2179
    %v2181 = vextract.high.u32 %v2179
    %v2182 = vmul.u32.u64.compose %v2178, %v2173
    %v2183 = vextract.low.u32 %v2182
    %v2184 = vextract.high.u32 %v2182
    %v2185 = vmul.u32 %v2178, %v2169
    %v2186 = vadd.s32 %v2181, %v2183
    %vm2187 = vc.u32 %v2181, %v2183
    %v2188 = vadd.s32 %v2184, 1
    %v2189 = vsel %vm2187, %v2188, %v2184
    %v2190 = vadd.s32 %v2185, %v2189
    %v2191 = vadd.s32 %v2190, 536870912
    %v2192 = vshrl.u32 %v2191, 30
    %v2193 = vshll.u32 %v2192, 30
    %v2194 = vsub.s32 %v2190, %v2193
    %vm2195 = vcmp.lt.s32.totalorder %v2194, 0
    %v2196 = vsub.s32 0, %v2194
    %v2197 = vsel %vm2195, %v2196, %v2194
    %v2198 = vclz %v2197
    %v2199 = vsub.s32 %v2198, 2
    %vm2200 = vcmp.gt.s32.totalorder 0, %v2199
    %v2201 = vsel %vm2200, 0, %v2199
    %v2202 = vsub.s32 32, %v2201
    %v2203 = vshll.u32 %v2194, %v2201
    %v2204 = vshrl.u32 %v2186, %v2202
    %v2205 = vor.u32 %v2203, %v2204
    %v2206 = vsub.s32 4294967266, %v2201
    %v2207 = vadd.s32 %v2206, 127
    %v2208 = vshll.u32 %v2207, 23
    %v2209 = vor.u32 4788187, %v2208
    %v2210 = vand.u32 2147483647, %v2209
    %v2212 = vcvt.s32.f32 %v2205
    %v2213 = vmul.f32 %v2212, %v2210
    %v2214 = vxor.u32 %v2213, 2147483648
    %v2215 = vsel %vm2132, %v2214, %v2213
    %v2216 = vsub.s32 4, %v2192
    %v2217 = vsel %vm2132, %v2216, %v2192
    %v2218 = vsel %vm2131, %v1180, %v2215
    %v2219 = vsel %vm2131, 0, %v2217
    %v2220 = vcosq.f32.pop %v2218
    %v2221 = vsinq.f32.pop %v2218
    %vm2222 = vweird.f32 %v1180
    %v2223 = vand.u32 %v2219, 3
    %vm2224 = vcmp.lt.s32.totalorder %v2223, 2
    %vm2225 = vcmp.eq.s32.totalorder %v2223, 0
    %v2226 = vxor.u32 %v2221, 2147483648
    %v2227 = vsel %vm2225, %v2220, %v2226
    %vm2228 = vcmp.eq.s32.totalorder %v2223, 2
    %v2229 = vxor.u32 %v2220, 2147483648
    %v2230 = vsel %vm2228, %v2229, %v2221
    %v2231 = vsel %vm2224, %v2227, %v2230
    %v2232 = vsel %vm2222, nan, %v2231
    %v2233 = vand.u32 2147483647, %v1181
    %vm2234 = vcmp.le.f32.partialorder %v2233, 0.7853982
    %vm2235 = vcmp.lt.s32.totalorder %v1181, 0
    %v2236 = vand.u32 %v1181, 2139095040
    %v2237 = vshrl.u32 %v2236, 23
    %v2238 = vsub.s32 %v2237, 127
    %v2239 = vand.u32 2147483647, %v1181
    %v2240 = vand.u32 %v2239, 8388607
    %v2241 = vor.u32 %v2240, 8388608
    %v2242 = vsub.s32 0, %v2241
    %v2243 = vadd.s32 %v2238, 1
    %vm2244 = vcmp.gt.s32.totalorder %v2243, 0
    %v2245 = vsel %vm2244, %v2243, 0
    %v2246 = vshrl.u32 %v2245, 5
    %v2247 = vand.u32 %v2245, 31
    %v2248 = vsub.s32 32, %v2247
    %v2249 = vshrl.u32 683565275, %v2248
    %v2250 = vshll.u32 683565275, %v2247
    %v2251 = vshrl.u32 2475754826, %v2248
    %v2252 = vor.u32 %v2250, %v2251
    %v2253 = vshll.u32 2475754826, %v2247
    %v2254 = vshrl.u32 2131351028, %v2248
    %v2255 = vor.u32 %v2253, %v2254
    %v2256 = vshll.u32 2131351028, %v2247
    %v2257 = vshrl.u32 2102212464, %v2248
    %v2258 = vor.u32 %v2256, %v2257
    %v2259 = vshll.u32 2102212464, %v2247
    %v2260 = vshrl.u32 920167782, %v2248
    %v2261 = vor.u32 %v2259, %v2260
    %v2262 = vshll.u32 920167782, %v2247
    %v2263 = vshrl.u32 1326507024, %v2248
    %v2264 = vor.u32 %v2262, %v2263
    %vm2265 = vcmp.lt.s32.totalorder %v2246, 1
    %vm2266 = vcmp.lt.s32.totalorder %v2246, 2
    %vm2267 = vcmp.lt.s32.totalorder %v2246, 3
    %vm2268 = vcmp.lt.s32.totalorder %v2246, 4
    %v2269 = vsel %vm2265, %v2249, %v2252
    %v2270 = vsel %vm2268, %v2258, 2102212464
    %v2271 = vsel %vm2267, %v2255, %v2270
    %v2272 = vsel %vm2266, %v2269, %v2271
    %v2273 = vsel %vm2265, %v2252, %v2255
    %v2274 = vsel %vm2268, %v2261, 920167782
    %v2275 = vsel %vm2267, %v2258, %v2274
    %v2276 = vsel %vm2266, %v2273, %v2275
    %v2277 = vsel %vm2265, %v2255, %v2258
    %v2278 = vsel %vm2268, %v2264, 1326507024
    %v2279 = vsel %vm2267, %v2261, %v2278
    %v2280 = vsel %vm2266, %v2277, %v2279
    %v2281 = vshll.u32 %v2241, 8
    %v2282 = vmul.u32.u64.compose %v2281, %v2280
    %v2283 = vextract.low.u32 %v2282
    %v2284 = vextract.high.u32 %v2282
    %v2285 = vmul.u32.u64.compose %v2281, %v2276
    %v2286 = vextract.low.u32 %v2285
    %v2287 = vextract.high.u32 %v2285
    %v2288 = vmul.u32 %v2281, %v2272
    %v2289 = vadd.s32 %v2284, %v2286
    %vm2290 = vc.u32 %v2284, %v2286
    %v2291 = vadd.s32 %v2287, 1
    %v2292 = vsel %vm2290, %v2291, %v2287
    %v2293 = vadd.s32 %v2288, %v2292
    %v2294 = vadd.s32 %v2293, 536870912
    %v2295 = vshrl.u32 %v2294, 30
    %v2296 = vshll.u32 %v2295, 30
    %v2297 = vsub.s32 %v2293, %v2296
    %vm2298 = vcmp.lt.s32.totalorder %v2297, 0
    %v2299 = vsub.s32 0, %v2297
    %v2300 = vsel %vm2298, %v2299, %v2297
    %v2301 = vclz %v2300
    %v2302 = vsub.s32 %v2301, 2
    %vm2303 = vcmp.gt.s32.totalorder 0, %v2302
    %v2304 = vsel %vm2303, 0, %v2302
    %v2305 = vsub.s32 32, %v2304
    %v2306 = vshll.u32 %v2297, %v2304
    %v2307 = vshrl.u32 %v2289, %v2305
    %v2308 = vor.u32 %v2306, %v2307
    %v2309 = vsub.s32 4294967266, %v2304
    %v2310 = vadd.s32 %v2309, 127
    %v2311 = vshll.u32 %v2310, 23
    %v2312 = vor.u32 4788187, %v2311
    %v2313 = vand.u32 2147483647, %v2312
    %v2315 = vcvt.s32.f32 %v2308
    %v2316 = vmul.f32 %v2315, %v2313
    %v2317 = vxor.u32 %v2316, 2147483648
    %v2318 = vsel %vm2235, %v2317, %v2316
    %v2319 = vsub.s32 4, %v2295
    %v2320 = vsel %vm2235, %v2319, %v2295
    %v2321 = vsel %vm2234, %v1181, %v2318
    %v2322 = vsel %vm2234, 0, %v2320
    %v2323 = vcosq.f32.pop %v2321
    %v2324 = vsinq.f32.pop %v2321
    %vm2325 = vweird.f32 %v1181
    %v2326 = vand.u32 %v2322, 3
    %vm2327 = vcmp.lt.s32.totalorder %v2326, 2
    %vm2328 = vcmp.eq.s32.totalorder %v2326, 0
    %v2329 = vxor.u32 %v2324, 2147483648
    %v2330 = vsel %vm2328, %v2323, %v2329
    %vm2331 = vcmp.eq.s32.totalorder %v2326, 2
    %v2332 = vxor.u32 %v2323, 2147483648
    %v2333 = vsel %vm2331, %v2332, %v2324
    %v2334 = vsel %vm2327, %v2330, %v2333
    %v2335 = vsel %vm2325, nan, %v2334
    %v2336 = vand.u32 2147483647, %v1182
    %vm2337 = vcmp.le.f32.partialorder %v2336, 0.7853982
    %vm2338 = vcmp.lt.s32.totalorder %v1182, 0
    %v2339 = vand.u32 %v1182, 2139095040
    %v2340 = vshrl.u32 %v2339, 23
    %v2341 = vsub.s32 %v2340, 127
    %v2342 = vand.u32 2147483647, %v1182
    %v2343 = vand.u32 %v2342, 8388607
    %v2344 = vor.u32 %v2343, 8388608
    %v2345 = vsub.s32 0, %v2344
    %v2346 = vadd.s32 %v2341, 1
    %vm2347 = vcmp.gt.s32.totalorder %v2346, 0
    %v2348 = vsel %vm2347, %v2346, 0
    %v2349 = vshrl.u32 %v2348, 5
    %v2350 = vand.u32 %v2348, 31
    %v2351 = vsub.s32 32, %v2350
    %v2352 = vshrl.u32 683565275, %v2351
    %v2353 = vshll.u32 683565275, %v2350
    %v2354 = vshrl.u32 2475754826, %v2351
    %v2355 = vor.u32 %v2353, %v2354
    %v2356 = vshll.u32 2475754826, %v2350
    %v2357 = vshrl.u32 2131351028, %v2351
    %v2358 = vor.u32 %v2356, %v2357
    %v2359 = vshll.u32 2131351028, %v2350
    %v2360 = vshrl.u32 2102212464, %v2351
    %v2361 = vor.u32 %v2359, %v2360
    %v2362 = vshll.u32 2102212464, %v2350
    %v2363 = vshrl.u32 920167782, %v2351
    %v2364 = vor.u32 %v2362, %v2363
    %v2365 = vshll.u32 920167782, %v2350
    %v2366 = vshrl.u32 1326507024, %v2351
    %v2367 = vor.u32 %v2365, %v2366
    %vm2368 = vcmp.lt.s32.totalorder %v2349, 1
    %vm2369 = vcmp.lt.s32.totalorder %v2349, 2
    %vm2370 = vcmp.lt.s32.totalorder %v2349, 3
    %vm2371 = vcmp.lt.s32.totalorder %v2349, 4
    %v2372 = vsel %vm2368, %v2352, %v2355
    %v2373 = vsel %vm2371, %v2361, 2102212464
    %v2374 = vsel %vm2370, %v2358, %v2373
    %v2375 = vsel %vm2369, %v2372, %v2374
    %v2376 = vsel %vm2368, %v2355, %v2358
    %v2377 = vsel %vm2371, %v2364, 920167782
    %v2378 = vsel %vm2370, %v2361, %v2377
    %v2379 = vsel %vm2369, %v2376, %v2378
    %v2380 = vsel %vm2368, %v2358, %v2361
    %v2381 = vsel %vm2371, %v2367, 1326507024
    %v2382 = vsel %vm2370, %v2364, %v2381
    %v2383 = vsel %vm2369, %v2380, %v2382
    %v2384 = vshll.u32 %v2344, 8
    %v2385 = vmul.u32.u64.compose %v2384, %v2383
    %v2386 = vextract.low.u32 %v2385
    %v2387 = vextract.high.u32 %v2385
    %v2388 = vmul.u32.u64.compose %v2384, %v2379
    %v2389 = vextract.low.u32 %v2388
    %v2390 = vextract.high.u32 %v2388
    %v2391 = vmul.u32 %v2384, %v2375
    %v2392 = vadd.s32 %v2387, %v2389
    %vm2393 = vc.u32 %v2387, %v2389
    %v2394 = vadd.s32 %v2390, 1
    %v2395 = vsel %vm2393, %v2394, %v2390
    %v2396 = vadd.s32 %v2391, %v2395
    %v2397 = vadd.s32 %v2396, 536870912
    %v2398 = vshrl.u32 %v2397, 30
    %v2399 = vshll.u32 %v2398, 30
    %v2400 = vsub.s32 %v2396, %v2399
    %vm2401 = vcmp.lt.s32.totalorder %v2400, 0
    %v2402 = vsub.s32 0, %v2400
    %v2403 = vsel %vm2401, %v2402, %v2400
    %v2404 = vclz %v2403
    %v2405 = vsub.s32 %v2404, 2
    %vm2406 = vcmp.gt.s32.totalorder 0, %v2405
    %v2407 = vsel %vm2406, 0, %v2405
    %v2408 = vsub.s32 32, %v2407
    %v2409 = vshll.u32 %v2400, %v2407
    %v2410 = vshrl.u32 %v2392, %v2408
    %v2411 = vor.u32 %v2409, %v2410
    %v2412 = vsub.s32 4294967266, %v2407
    %v2413 = vadd.s32 %v2412, 127
    %v2414 = vshll.u32 %v2413, 23
    %v2415 = vor.u32 4788187, %v2414
    %v2416 = vand.u32 2147483647, %v2415
    %v2418 = vcvt.s32.f32 %v2411
    %v2419 = vmul.f32 %v2418, %v2416
    %v2420 = vxor.u32 %v2419, 2147483648
    %v2421 = vsel %vm2338, %v2420, %v2419
    %v2422 = vsub.s32 4, %v2398
    %v2423 = vsel %vm2338, %v2422, %v2398
    %v2424 = vsel %vm2337, %v1182, %v2421
    %v2425 = vsel %vm2337, 0, %v2423
    %v2426 = vcosq.f32.pop %v2424
    %v2427 = vsinq.f32.pop %v2424
    %vm2428 = vweird.f32 %v1182
    %v2429 = vand.u32 %v2425, 3
    %vm2430 = vcmp.lt.s32.totalorder %v2429, 2
    %vm2431 = vcmp.eq.s32.totalorder %v2429, 0
    %v2432 = vxor.u32 %v2427, 2147483648
    %v2433 = vsel %vm2431, %v2426, %v2432
    %vm2434 = vcmp.eq.s32.totalorder %v2429, 2
    %v2435 = vxor.u32 %v2426, 2147483648
    %v2436 = vsel %vm2434, %v2435, %v2427
    %v2437 = vsel %vm2430, %v2433, %v2436
    %v2438 = vsel %vm2428, nan, %v2437
    %v2439 = vand.u32 2147483647, %v1183
    %vm2440 = vcmp.le.f32.partialorder %v2439, 0.7853982
    %vm2441 = vcmp.lt.s32.totalorder %v1183, 0
    %v2442 = vand.u32 %v1183, 2139095040
    %v2443 = vshrl.u32 %v2442, 23
    %v2444 = vsub.s32 %v2443, 127
    %v2445 = vand.u32 2147483647, %v1183
    %v2446 = vand.u32 %v2445, 8388607
    %v2447 = vor.u32 %v2446, 8388608
    %v2448 = vsub.s32 0, %v2447
    %v2449 = vadd.s32 %v2444, 1
    %vm2450 = vcmp.gt.s32.totalorder %v2449, 0
    %v2451 = vsel %vm2450, %v2449, 0
    %v2452 = vshrl.u32 %v2451, 5
    %v2453 = vand.u32 %v2451, 31
    %v2454 = vsub.s32 32, %v2453
    %v2455 = vshrl.u32 683565275, %v2454
    %v2456 = vshll.u32 683565275, %v2453
    %v2457 = vshrl.u32 2475754826, %v2454
    %v2458 = vor.u32 %v2456, %v2457
    %v2459 = vshll.u32 2475754826, %v2453
    %v2460 = vshrl.u32 2131351028, %v2454
    %v2461 = vor.u32 %v2459, %v2460
    %v2462 = vshll.u32 2131351028, %v2453
    %v2463 = vshrl.u32 2102212464, %v2454
    %v2464 = vor.u32 %v2462, %v2463
    %v2465 = vshll.u32 2102212464, %v2453
    %v2466 = vshrl.u32 920167782, %v2454
    %v2467 = vor.u32 %v2465, %v2466
    %v2468 = vshll.u32 920167782, %v2453
    %v2469 = vshrl.u32 1326507024, %v2454
    %v2470 = vor.u32 %v2468, %v2469
    %vm2471 = vcmp.lt.s32.totalorder %v2452, 1
    %vm2472 = vcmp.lt.s32.totalorder %v2452, 2
    %vm2473 = vcmp.lt.s32.totalorder %v2452, 3
    %vm2474 = vcmp.lt.s32.totalorder %v2452, 4
    %v2475 = vsel %vm2471, %v2455, %v2458
    %v2476 = vsel %vm2474, %v2464, 2102212464
    %v2477 = vsel %vm2473, %v2461, %v2476
    %v2478 = vsel %vm2472, %v2475, %v2477
    %v2479 = vsel %vm2471, %v2458, %v2461
    %v2480 = vsel %vm2474, %v2467, 920167782
    %v2481 = vsel %vm2473, %v2464, %v2480
    %v2482 = vsel %vm2472, %v2479, %v2481
    %v2483 = vsel %vm2471, %v2461, %v2464
    %v2484 = vsel %vm2474, %v2470, 1326507024
    %v2485 = vsel %vm2473, %v2467, %v2484
    %v2486 = vsel %vm2472, %v2483, %v2485
    %v2487 = vshll.u32 %v2447, 8
    %v2488 = vmul.u32.u64.compose %v2487, %v2486
    %v2489 = vextract.low.u32 %v2488
    %v2490 = vextract.high.u32 %v2488
    %v2491 = vmul.u32.u64.compose %v2487, %v2482
    %v2492 = vextract.low.u32 %v2491
    %v2493 = vextract.high.u32 %v2491
    %v2494 = vmul.u32 %v2487, %v2478
    %v2495 = vadd.s32 %v2490, %v2492
    %vm2496 = vc.u32 %v2490, %v2492
    %v2497 = vadd.s32 %v2493, 1
    %v2498 = vsel %vm2496, %v2497, %v2493
    %v2499 = vadd.s32 %v2494, %v2498
    %v2500 = vadd.s32 %v2499, 536870912
    %v2501 = vshrl.u32 %v2500, 30
    %v2502 = vshll.u32 %v2501, 30
    %v2503 = vsub.s32 %v2499, %v2502
    %vm2504 = vcmp.lt.s32.totalorder %v2503, 0
    %v2505 = vsub.s32 0, %v2503
    %v2506 = vsel %vm2504, %v2505, %v2503
    %v2507 = vclz %v2506
    %v2508 = vsub.s32 %v2507, 2
    %vm2509 = vcmp.gt.s32.totalorder 0, %v2508
    %v2510 = vsel %vm2509, 0, %v2508
    %v2511 = vsub.s32 32, %v2510
    %v2512 = vshll.u32 %v2503, %v2510
    %v2513 = vshrl.u32 %v2495, %v2511
    %v2514 = vor.u32 %v2512, %v2513
    %v2515 = vsub.s32 4294967266, %v2510
    %v2516 = vadd.s32 %v2515, 127
    %v2517 = vshll.u32 %v2516, 23
    %v2518 = vor.u32 4788187, %v2517
    %v2519 = vand.u32 2147483647, %v2518
    %v2521 = vcvt.s32.f32 %v2514
    %v2522 = vmul.f32 %v2521, %v2519
    %v2523 = vxor.u32 %v2522, 2147483648
    %v2524 = vsel %vm2441, %v2523, %v2522
    %v2525 = vsub.s32 4, %v2501
    %v2526 = vsel %vm2441, %v2525, %v2501
    %v2527 = vsel %vm2440, %v1183, %v2524
    %v2528 = vsel %vm2440, 0, %v2526
    %v2529 = vcosq.f32.pop %v2527
    %v2530 = vsinq.f32.pop %v2527
    %vm2531 = vweird.f32 %v1183
    %v2532 = vand.u32 %v2528, 3
    %vm2533 = vcmp.lt.s32.totalorder %v2532, 2
    %vm2534 = vcmp.eq.s32.totalorder %v2532, 0
    %v2535 = vxor.u32 %v2530, 2147483648
    %v2536 = vsel %vm2534, %v2529, %v2535
    %vm2537 = vcmp.eq.s32.totalorder %v2532, 2
    %v2538 = vxor.u32 %v2529, 2147483648
    %v2539 = vsel %vm2537, %v2538, %v2530
    %v2540 = vsel %vm2533, %v2536, %v2539
    %v2541 = vsel %vm2531, nan, %v2540
    %v2542 = vand.u32 2147483647, %v1184
    %vm2543 = vcmp.le.f32.partialorder %v2542, 0.7853982
    %vm2544 = vcmp.lt.s32.totalorder %v1184, 0
    %v2545 = vand.u32 %v1184, 2139095040
    %v2546 = vshrl.u32 %v2545, 23
    %v2547 = vsub.s32 %v2546, 127
    %v2548 = vand.u32 2147483647, %v1184
    %v2549 = vand.u32 %v2548, 8388607
    %v2550 = vor.u32 %v2549, 8388608
    %v2551 = vsub.s32 0, %v2550
    %v2552 = vadd.s32 %v2547, 1
    %vm2553 = vcmp.gt.s32.totalorder %v2552, 0
    %v2554 = vsel %vm2553, %v2552, 0
    %v2555 = vshrl.u32 %v2554, 5
    %v2556 = vand.u32 %v2554, 31
    %v2557 = vsub.s32 32, %v2556
    %v2558 = vshrl.u32 683565275, %v2557
    %v2559 = vshll.u32 683565275, %v2556
    %v2560 = vshrl.u32 2475754826, %v2557
    %v2561 = vor.u32 %v2559, %v2560
    %v2562 = vshll.u32 2475754826, %v2556
    %v2563 = vshrl.u32 2131351028, %v2557
    %v2564 = vor.u32 %v2562, %v2563
    %v2565 = vshll.u32 2131351028, %v2556
    %v2566 = vshrl.u32 2102212464, %v2557
    %v2567 = vor.u32 %v2565, %v2566
    %v2568 = vshll.u32 2102212464, %v2556
    %v2569 = vshrl.u32 920167782, %v2557
    %v2570 = vor.u32 %v2568, %v2569
    %v2571 = vshll.u32 920167782, %v2556
    %v2572 = vshrl.u32 1326507024, %v2557
    %v2573 = vor.u32 %v2571, %v2572
    %vm2574 = vcmp.lt.s32.totalorder %v2555, 1
    %vm2575 = vcmp.lt.s32.totalorder %v2555, 2
    %vm2576 = vcmp.lt.s32.totalorder %v2555, 3
    %vm2577 = vcmp.lt.s32.totalorder %v2555, 4
    %v2578 = vsel %vm2574, %v2558, %v2561
    %v2579 = vsel %vm2577, %v2567, 2102212464
    %v2580 = vsel %vm2576, %v2564, %v2579
    %v2581 = vsel %vm2575, %v2578, %v2580
    %v2582 = vsel %vm2574, %v2561, %v2564
    %v2583 = vsel %vm2577, %v2570, 920167782
    %v2584 = vsel %vm2576, %v2567, %v2583
    %v2585 = vsel %vm2575, %v2582, %v2584
    %v2586 = vsel %vm2574, %v2564, %v2567
    %v2587 = vsel %vm2577, %v2573, 1326507024
    %v2588 = vsel %vm2576, %v2570, %v2587
    %v2589 = vsel %vm2575, %v2586, %v2588
    %v2590 = vshll.u32 %v2550, 8
    %v2591 = vmul.u32.u64.compose %v2590, %v2589
    %v2592 = vextract.low.u32 %v2591
    %v2593 = vextract.high.u32 %v2591
    %v2594 = vmul.u32.u64.compose %v2590, %v2585
    %v2595 = vextract.low.u32 %v2594
    %v2596 = vextract.high.u32 %v2594
    %v2597 = vmul.u32 %v2590, %v2581
    %v2598 = vadd.s32 %v2593, %v2595
    %vm2599 = vc.u32 %v2593, %v2595
    %v2600 = vadd.s32 %v2596, 1
    %v2601 = vsel %vm2599, %v2600, %v2596
    %v2602 = vadd.s32 %v2597, %v2601
    %v2603 = vadd.s32 %v2602, 536870912
    %v2604 = vshrl.u32 %v2603, 30
    %v2605 = vshll.u32 %v2604, 30
    %v2606 = vsub.s32 %v2602, %v2605
    %vm2607 = vcmp.lt.s32.totalorder %v2606, 0
    %v2608 = vsub.s32 0, %v2606
    %v2609 = vsel %vm2607, %v2608, %v2606
    %v2610 = vclz %v2609
    %v2611 = vsub.s32 %v2610, 2
    %vm2612 = vcmp.gt.s32.totalorder 0, %v2611
    %v2613 = vsel %vm2612, 0, %v2611
    %v2614 = vsub.s32 32, %v2613
    %v2615 = vshll.u32 %v2606, %v2613
    %v2616 = vshrl.u32 %v2598, %v2614
    %v2617 = vor.u32 %v2615, %v2616
    %v2618 = vsub.s32 4294967266, %v2613
    %v2619 = vadd.s32 %v2618, 127
    %v2620 = vshll.u32 %v2619, 23
    %v2621 = vor.u32 4788187, %v2620
    %v2622 = vand.u32 2147483647, %v2621
    %v2624 = vcvt.s32.f32 %v2617
    %v2625 = vmul.f32 %v2624, %v2622
    %v2626 = vxor.u32 %v2625, 2147483648
    %v2627 = vsel %vm2544, %v2626, %v2625
    %v2628 = vsub.s32 4, %v2604
    %v2629 = vsel %vm2544, %v2628, %v2604
    %v2630 = vsel %vm2543, %v1184, %v2627
    %v2631 = vsel %vm2543, 0, %v2629
    %v2632 = vcosq.f32.pop %v2630
    %v2633 = vsinq.f32.pop %v2630
    %vm2634 = vweird.f32 %v1184
    %v2635 = vand.u32 %v2631, 3
    %vm2636 = vcmp.lt.s32.totalorder %v2635, 2
    %vm2637 = vcmp.eq.s32.totalorder %v2635, 0
    %v2638 = vxor.u32 %v2633, 2147483648
    %v2639 = vsel %vm2637, %v2632, %v2638
    %vm2640 = vcmp.eq.s32.totalorder %v2635, 2
    %v2641 = vxor.u32 %v2632, 2147483648
    %v2642 = vsel %vm2640, %v2641, %v2633
    %v2643 = vsel %vm2636, %v2639, %v2642
    %v2644 = vsel %vm2634, nan, %v2643
    %v2645 = vand.u32 2147483647, %v1185
    %vm2646 = vcmp.le.f32.partialorder %v2645, 0.7853982
    %vm2647 = vcmp.lt.s32.totalorder %v1185, 0
    %v2648 = vand.u32 %v1185, 2139095040
    %v2649 = vshrl.u32 %v2648, 23
    %v2650 = vsub.s32 %v2649, 127
    %v2651 = vand.u32 2147483647, %v1185
    %v2652 = vand.u32 %v2651, 8388607
    %v2653 = vor.u32 %v2652, 8388608
    %v2654 = vsub.s32 0, %v2653
    %v2655 = vadd.s32 %v2650, 1
    %vm2656 = vcmp.gt.s32.totalorder %v2655, 0
    %v2657 = vsel %vm2656, %v2655, 0
    %v2658 = vshrl.u32 %v2657, 5
    %v2659 = vand.u32 %v2657, 31
    %v2660 = vsub.s32 32, %v2659
    %v2661 = vshrl.u32 683565275, %v2660
    %v2662 = vshll.u32 683565275, %v2659
    %v2663 = vshrl.u32 2475754826, %v2660
    %v2664 = vor.u32 %v2662, %v2663
    %v2665 = vshll.u32 2475754826, %v2659
    %v2666 = vshrl.u32 2131351028, %v2660
    %v2667 = vor.u32 %v2665, %v2666
    %v2668 = vshll.u32 2131351028, %v2659
    %v2669 = vshrl.u32 2102212464, %v2660
    %v2670 = vor.u32 %v2668, %v2669
    %v2671 = vshll.u32 2102212464, %v2659
    %v2672 = vshrl.u32 920167782, %v2660
    %v2673 = vor.u32 %v2671, %v2672
    %v2674 = vshll.u32 920167782, %v2659
    %v2675 = vshrl.u32 1326507024, %v2660
    %v2676 = vor.u32 %v2674, %v2675
    %vm2677 = vcmp.lt.s32.totalorder %v2658, 1
    %vm2678 = vcmp.lt.s32.totalorder %v2658, 2
    %vm2679 = vcmp.lt.s32.totalorder %v2658, 3
    %vm2680 = vcmp.lt.s32.totalorder %v2658, 4
    %v2681 = vsel %vm2677, %v2661, %v2664
    %v2682 = vsel %vm2680, %v2670, 2102212464
    %v2683 = vsel %vm2679, %v2667, %v2682
    %v2684 = vsel %vm2678, %v2681, %v2683
    %v2685 = vsel %vm2677, %v2664, %v2667
    %v2686 = vsel %vm2680, %v2673, 920167782
    %v2687 = vsel %vm2679, %v2670, %v2686
    %v2688 = vsel %vm2678, %v2685, %v2687
    %v2689 = vsel %vm2677, %v2667, %v2670
    %v2690 = vsel %vm2680, %v2676, 1326507024
    %v2691 = vsel %vm2679, %v2673, %v2690
    %v2692 = vsel %vm2678, %v2689, %v2691
    %v2693 = vshll.u32 %v2653, 8
    %v2694 = vmul.u32.u64.compose %v2693, %v2692
    %v2695 = vextract.low.u32 %v2694
    %v2696 = vextract.high.u32 %v2694
    %v2697 = vmul.u32.u64.compose %v2693, %v2688
    %v2698 = vextract.low.u32 %v2697
    %v2699 = vextract.high.u32 %v2697
    %v2700 = vmul.u32 %v2693, %v2684
    %v2701 = vadd.s32 %v2696, %v2698
    %vm2702 = vc.u32 %v2696, %v2698
    %v2703 = vadd.s32 %v2699, 1
    %v2704 = vsel %vm2702, %v2703, %v2699
    %v2705 = vadd.s32 %v2700, %v2704
    %v2706 = vadd.s32 %v2705, 536870912
    %v2707 = vshrl.u32 %v2706, 30
    %v2708 = vshll.u32 %v2707, 30
    %v2709 = vsub.s32 %v2705, %v2708
    %vm2710 = vcmp.lt.s32.totalorder %v2709, 0
    %v2711 = vsub.s32 0, %v2709
    %v2712 = vsel %vm2710, %v2711, %v2709
    %v2713 = vclz %v2712
    %v2714 = vsub.s32 %v2713, 2
    %vm2715 = vcmp.gt.s32.totalorder 0, %v2714
    %v2716 = vsel %vm2715, 0, %v2714
    %v2717 = vsub.s32 32, %v2716
    %v2718 = vshll.u32 %v2709, %v2716
    %v2719 = vshrl.u32 %v2701, %v2717
    %v2720 = vor.u32 %v2718, %v2719
    %v2721 = vsub.s32 4294967266, %v2716
    %v2722 = vadd.s32 %v2721, 127
    %v2723 = vshll.u32 %v2722, 23
    %v2724 = vor.u32 4788187, %v2723
    %v2725 = vand.u32 2147483647, %v2724
    %v2727 = vcvt.s32.f32 %v2720
    %v2728 = vmul.f32 %v2727, %v2725
    %v2729 = vxor.u32 %v2728, 2147483648
    %v2730 = vsel %vm2647, %v2729, %v2728
    %v2731 = vsub.s32 4, %v2707
    %v2732 = vsel %vm2647, %v2731, %v2707
    %v2733 = vsel %vm2646, %v1185, %v2730
    %v2734 = vsel %vm2646, 0, %v2732
    %v2735 = vcosq.f32.pop %v2733
    %v2736 = vsinq.f32.pop %v2733
    %vm2737 = vweird.f32 %v1185
    %v2738 = vand.u32 %v2734, 3
    %vm2739 = vcmp.lt.s32.totalorder %v2738, 2
    %vm2740 = vcmp.eq.s32.totalorder %v2738, 0
    %v2741 = vxor.u32 %v2736, 2147483648
    %v2742 = vsel %vm2740, %v2735, %v2741
    %vm2743 = vcmp.eq.s32.totalorder %v2738, 2
    %v2744 = vxor.u32 %v2735, 2147483648
    %v2745 = vsel %vm2743, %v2744, %v2736
    %v2746 = vsel %vm2739, %v2742, %v2745
    %v2747 = vsel %vm2737, nan, %v2746
    %v2748 = vand.u32 2147483647, %v1186
    %vm2749 = vcmp.le.f32.partialorder %v2748, 0.7853982
    %vm2750 = vcmp.lt.s32.totalorder %v1186, 0
    %v2751 = vand.u32 %v1186, 2139095040
    %v2752 = vshrl.u32 %v2751, 23
    %v2753 = vsub.s32 %v2752, 127
    %v2754 = vand.u32 2147483647, %v1186
    %v2755 = vand.u32 %v2754, 8388607
    %v2756 = vor.u32 %v2755, 8388608
    %v2757 = vsub.s32 0, %v2756
    %v2758 = vadd.s32 %v2753, 1
    %vm2759 = vcmp.gt.s32.totalorder %v2758, 0
    %v2760 = vsel %vm2759, %v2758, 0
    %v2761 = vshrl.u32 %v2760, 5
    %v2762 = vand.u32 %v2760, 31
    %v2763 = vsub.s32 32, %v2762
    %v2764 = vshrl.u32 683565275, %v2763
    %v2765 = vshll.u32 683565275, %v2762
    %v2766 = vshrl.u32 2475754826, %v2763
    %v2767 = vor.u32 %v2765, %v2766
    %v2768 = vshll.u32 2475754826, %v2762
    %v2769 = vshrl.u32 2131351028, %v2763
    %v2770 = vor.u32 %v2768, %v2769
    %v2771 = vshll.u32 2131351028, %v2762
    %v2772 = vshrl.u32 2102212464, %v2763
    %v2773 = vor.u32 %v2771, %v2772
    %v2774 = vshll.u32 2102212464, %v2762
    %v2775 = vshrl.u32 920167782, %v2763
    %v2776 = vor.u32 %v2774, %v2775
    %v2777 = vshll.u32 920167782, %v2762
    %v2778 = vshrl.u32 1326507024, %v2763
    %v2779 = vor.u32 %v2777, %v2778
    %vm2780 = vcmp.lt.s32.totalorder %v2761, 1
    %vm2781 = vcmp.lt.s32.totalorder %v2761, 2
    %vm2782 = vcmp.lt.s32.totalorder %v2761, 3
    %vm2783 = vcmp.lt.s32.totalorder %v2761, 4
    %v2784 = vsel %vm2780, %v2764, %v2767
    %v2785 = vsel %vm2783, %v2773, 2102212464
    %v2786 = vsel %vm2782, %v2770, %v2785
    %v2787 = vsel %vm2781, %v2784, %v2786
    %v2788 = vsel %vm2780, %v2767, %v2770
    %v2789 = vsel %vm2783, %v2776, 920167782
    %v2790 = vsel %vm2782, %v2773, %v2789
    %v2791 = vsel %vm2781, %v2788, %v2790
    %v2792 = vsel %vm2780, %v2770, %v2773
    %v2793 = vsel %vm2783, %v2779, 1326507024
    %v2794 = vsel %vm2782, %v2776, %v2793
    %v2795 = vsel %vm2781, %v2792, %v2794
    %v2796 = vshll.u32 %v2756, 8
    %v2797 = vmul.u32.u64.compose %v2796, %v2795
    %v2798 = vextract.low.u32 %v2797
    %v2799 = vextract.high.u32 %v2797
    %v2800 = vmul.u32.u64.compose %v2796, %v2791
    %v2801 = vextract.low.u32 %v2800
    %v2802 = vextract.high.u32 %v2800
    %v2803 = vmul.u32 %v2796, %v2787
    %v2804 = vadd.s32 %v2799, %v2801
    %vm2805 = vc.u32 %v2799, %v2801
    %v2806 = vadd.s32 %v2802, 1
    %v2807 = vsel %vm2805, %v2806, %v2802
    %v2808 = vadd.s32 %v2803, %v2807
    %v2809 = vadd.s32 %v2808, 536870912
    %v2810 = vshrl.u32 %v2809, 30
    %v2811 = vshll.u32 %v2810, 30
    %v2812 = vsub.s32 %v2808, %v2811
    %vm2813 = vcmp.lt.s32.totalorder %v2812, 0
    %v2814 = vsub.s32 0, %v2812
    %v2815 = vsel %vm2813, %v2814, %v2812
    %v2816 = vclz %v2815
    %v2817 = vsub.s32 %v2816, 2
    %vm2818 = vcmp.gt.s32.totalorder 0, %v2817
    %v2819 = vsel %vm2818, 0, %v2817
    %v2820 = vsub.s32 32, %v2819
    %v2821 = vshll.u32 %v2812, %v2819
    %v2822 = vshrl.u32 %v2804, %v2820
    %v2823 = vor.u32 %v2821, %v2822
    %v2824 = vsub.s32 4294967266, %v2819
    %v2825 = vadd.s32 %v2824, 127
    %v2826 = vshll.u32 %v2825, 23
    %v2827 = vor.u32 4788187, %v2826
    %v2828 = vand.u32 2147483647, %v2827
    %v2830 = vcvt.s32.f32 %v2823
    %v2831 = vmul.f32 %v2830, %v2828
    %v2832 = vxor.u32 %v2831, 2147483648
    %v2833 = vsel %vm2750, %v2832, %v2831
    %v2834 = vsub.s32 4, %v2810
    %v2835 = vsel %vm2750, %v2834, %v2810
    %v2836 = vsel %vm2749, %v1186, %v2833
    %v2837 = vsel %vm2749, 0, %v2835
    %v2838 = vcosq.f32.pop %v2836
    %v2839 = vsinq.f32.pop %v2836
    %vm2840 = vweird.f32 %v1186
    %v2841 = vand.u32 %v2837, 3
    %vm2842 = vcmp.lt.s32.totalorder %v2841, 2
    %vm2843 = vcmp.eq.s32.totalorder %v2841, 0
    %v2844 = vxor.u32 %v2839, 2147483648
    %v2845 = vsel %vm2843, %v2838, %v2844
    %vm2846 = vcmp.eq.s32.totalorder %v2841, 2
    %v2847 = vxor.u32 %v2838, 2147483648
    %v2848 = vsel %vm2846, %v2847, %v2839
    %v2849 = vsel %vm2842, %v2845, %v2848
    %v2850 = vsel %vm2840, nan, %v2849
    %v2851 = vand.u32 2147483647, %v1187
    %vm2852 = vcmp.le.f32.partialorder %v2851, 0.7853982
    %vm2853 = vcmp.lt.s32.totalorder %v1187, 0
    %v2854 = vand.u32 %v1187, 2139095040
    %v2855 = vshrl.u32 %v2854, 23
    %v2856 = vsub.s32 %v2855, 127
    %v2857 = vand.u32 2147483647, %v1187
    %v2858 = vand.u32 %v2857, 8388607
    %v2859 = vor.u32 %v2858, 8388608
    %v2860 = vsub.s32 0, %v2859
    %v2861 = vadd.s32 %v2856, 1
    %vm2862 = vcmp.gt.s32.totalorder %v2861, 0
    %v2863 = vsel %vm2862, %v2861, 0
    %v2864 = vshrl.u32 %v2863, 5
    %v2865 = vand.u32 %v2863, 31
    %v2866 = vsub.s32 32, %v2865
    %v2867 = vshrl.u32 683565275, %v2866
    %v2868 = vshll.u32 683565275, %v2865
    %v2869 = vshrl.u32 2475754826, %v2866
    %v2870 = vor.u32 %v2868, %v2869
    %v2871 = vshll.u32 2475754826, %v2865
    %v2872 = vshrl.u32 2131351028, %v2866
    %v2873 = vor.u32 %v2871, %v2872
    %v2874 = vshll.u32 2131351028, %v2865
    %v2875 = vshrl.u32 2102212464, %v2866
    %v2876 = vor.u32 %v2874, %v2875
    %v2877 = vshll.u32 2102212464, %v2865
    %v2878 = vshrl.u32 920167782, %v2866
    %v2879 = vor.u32 %v2877, %v2878
    %v2880 = vshll.u32 920167782, %v2865
    %v2881 = vshrl.u32 1326507024, %v2866
    %v2882 = vor.u32 %v2880, %v2881
    %vm2883 = vcmp.lt.s32.totalorder %v2864, 1
    %vm2884 = vcmp.lt.s32.totalorder %v2864, 2
    %vm2885 = vcmp.lt.s32.totalorder %v2864, 3
    %vm2886 = vcmp.lt.s32.totalorder %v2864, 4
    %v2887 = vsel %vm2883, %v2867, %v2870
    %v2888 = vsel %vm2886, %v2876, 2102212464
    %v2889 = vsel %vm2885, %v2873, %v2888
    %v2890 = vsel %vm2884, %v2887, %v2889
    %v2891 = vsel %vm2883, %v2870, %v2873
    %v2892 = vsel %vm2886, %v2879, 920167782
    %v2893 = vsel %vm2885, %v2876, %v2892
    %v2894 = vsel %vm2884, %v2891, %v2893
    %v2895 = vsel %vm2883, %v2873, %v2876
    %v2896 = vsel %vm2886, %v2882, 1326507024
    %v2897 = vsel %vm2885, %v2879, %v2896
    %v2898 = vsel %vm2884, %v2895, %v2897
    %v2899 = vshll.u32 %v2859, 8
    %v2900 = vmul.u32.u64.compose %v2899, %v2898
    %v2901 = vextract.low.u32 %v2900
    %v2902 = vextract.high.u32 %v2900
    %v2903 = vmul.u32.u64.compose %v2899, %v2894
    %v2904 = vextract.low.u32 %v2903
    %v2905 = vextract.high.u32 %v2903
    %v2906 = vmul.u32 %v2899, %v2890
    %v2907 = vadd.s32 %v2902, %v2904
    %vm2908 = vc.u32 %v2902, %v2904
    %v2909 = vadd.s32 %v2905, 1
    %v2910 = vsel %vm2908, %v2909, %v2905
    %v2911 = vadd.s32 %v2906, %v2910
    %v2912 = vadd.s32 %v2911, 536870912
    %v2913 = vshrl.u32 %v2912, 30
    %v2914 = vshll.u32 %v2913, 30
    %v2915 = vsub.s32 %v2911, %v2914
    %vm2916 = vcmp.lt.s32.totalorder %v2915, 0
    %v2917 = vsub.s32 0, %v2915
    %v2918 = vsel %vm2916, %v2917, %v2915
    %v2919 = vclz %v2918
    %v2920 = vsub.s32 %v2919, 2
    %vm2921 = vcmp.gt.s32.totalorder 0, %v2920
    %v2922 = vsel %vm2921, 0, %v2920
    %v2923 = vsub.s32 32, %v2922
    %v2924 = vshll.u32 %v2915, %v2922
    %v2925 = vshrl.u32 %v2907, %v2923
    %v2926 = vor.u32 %v2924, %v2925
    %v2927 = vsub.s32 4294967266, %v2922
    %v2928 = vadd.s32 %v2927, 127
    %v2929 = vshll.u32 %v2928, 23
    %v2930 = vor.u32 4788187, %v2929
    %v2931 = vand.u32 2147483647, %v2930
    %v2933 = vcvt.s32.f32 %v2926
    %v2934 = vmul.f32 %v2933, %v2931
    %v2935 = vxor.u32 %v2934, 2147483648
    %v2936 = vsel %vm2853, %v2935, %v2934
    %v2937 = vsub.s32 4, %v2913
    %v2938 = vsel %vm2853, %v2937, %v2913
    %v2939 = vsel %vm2852, %v1187, %v2936
    %v2940 = vsel %vm2852, 0, %v2938
    %v2941 = vcosq.f32.pop %v2939
    %v2942 = vsinq.f32.pop %v2939
    %vm2943 = vweird.f32 %v1187
    %v2944 = vand.u32 %v2940, 3
    %vm2945 = vcmp.lt.s32.totalorder %v2944, 2
    %vm2946 = vcmp.eq.s32.totalorder %v2944, 0
    %v2947 = vxor.u32 %v2942, 2147483648
    %v2948 = vsel %vm2946, %v2941, %v2947
    %vm2949 = vcmp.eq.s32.totalorder %v2944, 2
    %v2950 = vxor.u32 %v2941, 2147483648
    %v2951 = vsel %vm2949, %v2950, %v2942
    %v2952 = vsel %vm2945, %v2948, %v2951
    %v2953 = vsel %vm2943, nan, %v2952
    %v2954 = vand.u32 2147483647, %v1188
    %vm2955 = vcmp.le.f32.partialorder %v2954, 0.7853982
    %vm2956 = vcmp.lt.s32.totalorder %v1188, 0
    %v2957 = vand.u32 %v1188, 2139095040
    %v2958 = vshrl.u32 %v2957, 23
    %v2959 = vsub.s32 %v2958, 127
    %v2960 = vand.u32 2147483647, %v1188
    %v2961 = vand.u32 %v2960, 8388607
    %v2962 = vor.u32 %v2961, 8388608
    %v2963 = vsub.s32 0, %v2962
    %v2964 = vadd.s32 %v2959, 1
    %vm2965 = vcmp.gt.s32.totalorder %v2964, 0
    %v2966 = vsel %vm2965, %v2964, 0
    %v2967 = vshrl.u32 %v2966, 5
    %v2968 = vand.u32 %v2966, 31
    %v2969 = vsub.s32 32, %v2968
    %v2970 = vshrl.u32 683565275, %v2969
    %v2971 = vshll.u32 683565275, %v2968
    %v2972 = vshrl.u32 2475754826, %v2969
    %v2973 = vor.u32 %v2971, %v2972
    %v2974 = vshll.u32 2475754826, %v2968
    %v2975 = vshrl.u32 2131351028, %v2969
    %v2976 = vor.u32 %v2974, %v2975
    %v2977 = vshll.u32 2131351028, %v2968
    %v2978 = vshrl.u32 2102212464, %v2969
    %v2979 = vor.u32 %v2977, %v2978
    %v2980 = vshll.u32 2102212464, %v2968
    %v2981 = vshrl.u32 920167782, %v2969
    %v2982 = vor.u32 %v2980, %v2981
    %v2983 = vshll.u32 920167782, %v2968
    %v2984 = vshrl.u32 1326507024, %v2969
    %v2985 = vor.u32 %v2983, %v2984
    %vm2986 = vcmp.lt.s32.totalorder %v2967, 1
    %vm2987 = vcmp.lt.s32.totalorder %v2967, 2
    %vm2988 = vcmp.lt.s32.totalorder %v2967, 3
    %vm2989 = vcmp.lt.s32.totalorder %v2967, 4
    %v2990 = vsel %vm2986, %v2970, %v2973
    %v2991 = vsel %vm2989, %v2979, 2102212464
    %v2992 = vsel %vm2988, %v2976, %v2991
    %v2993 = vsel %vm2987, %v2990, %v2992
    %v2994 = vsel %vm2986, %v2973, %v2976
    %v2995 = vsel %vm2989, %v2982, 920167782
    %v2996 = vsel %vm2988, %v2979, %v2995
    %v2997 = vsel %vm2987, %v2994, %v2996
    %v2998 = vsel %vm2986, %v2976, %v2979
    %v2999 = vsel %vm2989, %v2985, 1326507024
    %v3000 = vsel %vm2988, %v2982, %v2999
    %v3001 = vsel %vm2987, %v2998, %v3000
    %v3002 = vshll.u32 %v2962, 8
    %v3003 = vmul.u32.u64.compose %v3002, %v3001
    %v3004 = vextract.low.u32 %v3003
    %v3005 = vextract.high.u32 %v3003
    %v3006 = vmul.u32.u64.compose %v3002, %v2997
    %v3007 = vextract.low.u32 %v3006
    %v3008 = vextract.high.u32 %v3006
    %v3009 = vmul.u32 %v3002, %v2993
    %v3010 = vadd.s32 %v3005, %v3007
    %vm3011 = vc.u32 %v3005, %v3007
    %v3012 = vadd.s32 %v3008, 1
    %v3013 = vsel %vm3011, %v3012, %v3008
    %v3014 = vadd.s32 %v3009, %v3013
    %v3015 = vadd.s32 %v3014, 536870912
    %v3016 = vshrl.u32 %v3015, 30
    %v3017 = vshll.u32 %v3016, 30
    %v3018 = vsub.s32 %v3014, %v3017
    %vm3019 = vcmp.lt.s32.totalorder %v3018, 0
    %v3020 = vsub.s32 0, %v3018
    %v3021 = vsel %vm3019, %v3020, %v3018
    %v3022 = vclz %v3021
    %v3023 = vsub.s32 %v3022, 2
    %vm3024 = vcmp.gt.s32.totalorder 0, %v3023
    %v3025 = vsel %vm3024, 0, %v3023
    %v3026 = vsub.s32 32, %v3025
    %v3027 = vshll.u32 %v3018, %v3025
    %v3028 = vshrl.u32 %v3010, %v3026
    %v3029 = vor.u32 %v3027, %v3028
    %v3030 = vsub.s32 4294967266, %v3025
    %v3031 = vadd.s32 %v3030, 127
    %v3032 = vshll.u32 %v3031, 23
    %v3033 = vor.u32 4788187, %v3032
    %v3034 = vand.u32 2147483647, %v3033
    %v3036 = vcvt.s32.f32 %v3029
    %v3037 = vmul.f32 %v3036, %v3034
    %v3038 = vxor.u32 %v3037, 2147483648
    %v3039 = vsel %vm2956, %v3038, %v3037
    %v3040 = vsub.s32 4, %v3016
    %v3041 = vsel %vm2956, %v3040, %v3016
    %v3042 = vsel %vm2955, %v1188, %v3039
    %v3043 = vsel %vm2955, 0, %v3041
    %v3044 = vcosq.f32.pop %v3042
    %v3045 = vsinq.f32.pop %v3042
    %vm3046 = vweird.f32 %v1188
    %v3047 = vand.u32 %v3043, 3
    %vm3048 = vcmp.lt.s32.totalorder %v3047, 2
    %vm3049 = vcmp.eq.s32.totalorder %v3047, 0
    %v3050 = vxor.u32 %v3045, 2147483648
    %v3051 = vsel %vm3049, %v3044, %v3050
    %vm3052 = vcmp.eq.s32.totalorder %v3047, 2
    %v3053 = vxor.u32 %v3044, 2147483648
    %v3054 = vsel %vm3052, %v3053, %v3045
    %v3055 = vsel %vm3048, %v3051, %v3054
    %v3056 = vsel %vm3046, nan, %v3055
    %v3057 = vand.u32 2147483647, %v1189
    %vm3058 = vcmp.le.f32.partialorder %v3057, 0.7853982
    %vm3059 = vcmp.lt.s32.totalorder %v1189, 0
    %v3060 = vand.u32 %v1189, 2139095040
    %v3061 = vshrl.u32 %v3060, 23
    %v3062 = vsub.s32 %v3061, 127
    %v3063 = vand.u32 2147483647, %v1189
    %v3064 = vand.u32 %v3063, 8388607
    %v3065 = vor.u32 %v3064, 8388608
    %v3066 = vsub.s32 0, %v3065
    %v3067 = vadd.s32 %v3062, 1
    %vm3068 = vcmp.gt.s32.totalorder %v3067, 0
    %v3069 = vsel %vm3068, %v3067, 0
    %v3070 = vshrl.u32 %v3069, 5
    %v3071 = vand.u32 %v3069, 31
    %v3072 = vsub.s32 32, %v3071
    %v3073 = vshrl.u32 683565275, %v3072
    %v3074 = vshll.u32 683565275, %v3071
    %v3075 = vshrl.u32 2475754826, %v3072
    %v3076 = vor.u32 %v3074, %v3075
    %v3077 = vshll.u32 2475754826, %v3071
    %v3078 = vshrl.u32 2131351028, %v3072
    %v3079 = vor.u32 %v3077, %v3078
    %v3080 = vshll.u32 2131351028, %v3071
    %v3081 = vshrl.u32 2102212464, %v3072
    %v3082 = vor.u32 %v3080, %v3081
    %v3083 = vshll.u32 2102212464, %v3071
    %v3084 = vshrl.u32 920167782, %v3072
    %v3085 = vor.u32 %v3083, %v3084
    %v3086 = vshll.u32 920167782, %v3071
    %v3087 = vshrl.u32 1326507024, %v3072
    %v3088 = vor.u32 %v3086, %v3087
    %vm3089 = vcmp.lt.s32.totalorder %v3070, 1
    %vm3090 = vcmp.lt.s32.totalorder %v3070, 2
    %vm3091 = vcmp.lt.s32.totalorder %v3070, 3
    %vm3092 = vcmp.lt.s32.totalorder %v3070, 4
    %v3093 = vsel %vm3089, %v3073, %v3076
    %v3094 = vsel %vm3092, %v3082, 2102212464
    %v3095 = vsel %vm3091, %v3079, %v3094
    %v3096 = vsel %vm3090, %v3093, %v3095
    %v3097 = vsel %vm3089, %v3076, %v3079
    %v3098 = vsel %vm3092, %v3085, 920167782
    %v3099 = vsel %vm3091, %v3082, %v3098
    %v3100 = vsel %vm3090, %v3097, %v3099
    %v3101 = vsel %vm3089, %v3079, %v3082
    %v3102 = vsel %vm3092, %v3088, 1326507024
    %v3103 = vsel %vm3091, %v3085, %v3102
    %v3104 = vsel %vm3090, %v3101, %v3103
    %v3105 = vshll.u32 %v3065, 8
    %v3106 = vmul.u32.u64.compose %v3105, %v3104
    %v3107 = vextract.low.u32 %v3106
    %v3108 = vextract.high.u32 %v3106
    %v3109 = vmul.u32.u64.compose %v3105, %v3100
    %v3110 = vextract.low.u32 %v3109
    %v3111 = vextract.high.u32 %v3109
    %v3112 = vmul.u32 %v3105, %v3096
    %v3113 = vadd.s32 %v3108, %v3110
    %vm3114 = vc.u32 %v3108, %v3110
    %v3115 = vadd.s32 %v3111, 1
    %v3116 = vsel %vm3114, %v3115, %v3111
    %v3117 = vadd.s32 %v3112, %v3116
    %v3118 = vadd.s32 %v3117, 536870912
    %v3119 = vshrl.u32 %v3118, 30
    %v3120 = vshll.u32 %v3119, 30
    %v3121 = vsub.s32 %v3117, %v3120
    %vm3122 = vcmp.lt.s32.totalorder %v3121, 0
    %v3123 = vsub.s32 0, %v3121
    %v3124 = vsel %vm3122, %v3123, %v3121
    %v3125 = vclz %v3124
    %v3126 = vsub.s32 %v3125, 2
    %vm3127 = vcmp.gt.s32.totalorder 0, %v3126
    %v3128 = vsel %vm3127, 0, %v3126
    %v3129 = vsub.s32 32, %v3128
    %v3130 = vshll.u32 %v3121, %v3128
    %v3131 = vshrl.u32 %v3113, %v3129
    %v3132 = vor.u32 %v3130, %v3131
    %v3133 = vsub.s32 4294967266, %v3128
    %v3134 = vadd.s32 %v3133, 127
    %v3135 = vshll.u32 %v3134, 23
    %v3136 = vor.u32 4788187, %v3135
    %v3137 = vand.u32 2147483647, %v3136
    %v3139 = vcvt.s32.f32 %v3132
    %v3140 = vmul.f32 %v3139, %v3137
    %v3141 = vxor.u32 %v3140, 2147483648
    %v3142 = vsel %vm3059, %v3141, %v3140
    %v3143 = vsub.s32 4, %v3119
    %v3144 = vsel %vm3059, %v3143, %v3119
    %v3145 = vsel %vm3058, %v1189, %v3142
    %v3146 = vsel %vm3058, 0, %v3144
    %v3147 = vcosq.f32.pop %v3145
    %v3148 = vsinq.f32.pop %v3145
    %vm3149 = vweird.f32 %v1189
    %v3150 = vand.u32 %v3146, 3
    %vm3151 = vcmp.lt.s32.totalorder %v3150, 2
    %vm3152 = vcmp.eq.s32.totalorder %v3150, 0
    %v3153 = vxor.u32 %v3148, 2147483648
    %v3154 = vsel %vm3152, %v3147, %v3153
    %vm3155 = vcmp.eq.s32.totalorder %v3150, 2
    %v3156 = vxor.u32 %v3147, 2147483648
    %v3157 = vsel %vm3155, %v3156, %v3148
    %v3158 = vsel %vm3151, %v3154, %v3157
    %v3159 = vsel %vm3149, nan, %v3158
    %v3160 = vand.u32 2147483647, %v1190
    %vm3161 = vcmp.le.f32.partialorder %v3160, 0.7853982
    %vm3162 = vcmp.lt.s32.totalorder %v1190, 0
    %v3163 = vand.u32 %v1190, 2139095040
    %v3164 = vshrl.u32 %v3163, 23
    %v3165 = vsub.s32 %v3164, 127
    %v3166 = vand.u32 2147483647, %v1190
    %v3167 = vand.u32 %v3166, 8388607
    %v3168 = vor.u32 %v3167, 8388608
    %v3169 = vsub.s32 0, %v3168
    %v3170 = vadd.s32 %v3165, 1
    %vm3171 = vcmp.gt.s32.totalorder %v3170, 0
    %v3172 = vsel %vm3171, %v3170, 0
    %v3173 = vshrl.u32 %v3172, 5
    %v3174 = vand.u32 %v3172, 31
    %v3175 = vsub.s32 32, %v3174
    %v3176 = vshrl.u32 683565275, %v3175
    %v3177 = vshll.u32 683565275, %v3174
    %v3178 = vshrl.u32 2475754826, %v3175
    %v3179 = vor.u32 %v3177, %v3178
    %v3180 = vshll.u32 2475754826, %v3174
    %v3181 = vshrl.u32 2131351028, %v3175
    %v3182 = vor.u32 %v3180, %v3181
    %v3183 = vshll.u32 2131351028, %v3174
    %v3184 = vshrl.u32 2102212464, %v3175
    %v3185 = vor.u32 %v3183, %v3184
    %v3186 = vshll.u32 2102212464, %v3174
    %v3187 = vshrl.u32 920167782, %v3175
    %v3188 = vor.u32 %v3186, %v3187
    %v3189 = vshll.u32 920167782, %v3174
    %v3190 = vshrl.u32 1326507024, %v3175
    %v3191 = vor.u32 %v3189, %v3190
    %vm3192 = vcmp.lt.s32.totalorder %v3173, 1
    %vm3193 = vcmp.lt.s32.totalorder %v3173, 2
    %vm3194 = vcmp.lt.s32.totalorder %v3173, 3
    %vm3195 = vcmp.lt.s32.totalorder %v3173, 4
    %v3196 = vsel %vm3192, %v3176, %v3179
    %v3197 = vsel %vm3195, %v3185, 2102212464
    %v3198 = vsel %vm3194, %v3182, %v3197
    %v3199 = vsel %vm3193, %v3196, %v3198
    %v3200 = vsel %vm3192, %v3179, %v3182
    %v3201 = vsel %vm3195, %v3188, 920167782
    %v3202 = vsel %vm3194, %v3185, %v3201
    %v3203 = vsel %vm3193, %v3200, %v3202
    %v3204 = vsel %vm3192, %v3182, %v3185
    %v3205 = vsel %vm3195, %v3191, 1326507024
    %v3206 = vsel %vm3194, %v3188, %v3205
    %v3207 = vsel %vm3193, %v3204, %v3206
    %v3208 = vshll.u32 %v3168, 8
    %v3209 = vmul.u32.u64.compose %v3208, %v3207
    %v3210 = vextract.low.u32 %v3209
    %v3211 = vextract.high.u32 %v3209
    %v3212 = vmul.u32.u64.compose %v3208, %v3203
    %v3213 = vextract.low.u32 %v3212
    %v3214 = vextract.high.u32 %v3212
    %v3215 = vmul.u32 %v3208, %v3199
    %v3216 = vadd.s32 %v3211, %v3213
    %vm3217 = vc.u32 %v3211, %v3213
    %v3218 = vadd.s32 %v3214, 1
    %v3219 = vsel %vm3217, %v3218, %v3214
    %v3220 = vadd.s32 %v3215, %v3219
    %v3221 = vadd.s32 %v3220, 536870912
    %v3222 = vshrl.u32 %v3221, 30
    %v3223 = vshll.u32 %v3222, 30
    %v3224 = vsub.s32 %v3220, %v3223
    %vm3225 = vcmp.lt.s32.totalorder %v3224, 0
    %v3226 = vsub.s32 0, %v3224
    %v3227 = vsel %vm3225, %v3226, %v3224
    %v3228 = vclz %v3227
    %v3229 = vsub.s32 %v3228, 2
    %vm3230 = vcmp.gt.s32.totalorder 0, %v3229
    %v3231 = vsel %vm3230, 0, %v3229
    %v3232 = vsub.s32 32, %v3231
    %v3233 = vshll.u32 %v3224, %v3231
    %v3234 = vshrl.u32 %v3216, %v3232
    %v3235 = vor.u32 %v3233, %v3234
    %v3236 = vsub.s32 4294967266, %v3231
    %v3237 = vadd.s32 %v3236, 127
    %v3238 = vshll.u32 %v3237, 23
    %v3239 = vor.u32 4788187, %v3238
    %v3240 = vand.u32 2147483647, %v3239
    %v3242 = vcvt.s32.f32 %v3235
    %v3243 = vmul.f32 %v3242, %v3240
    %v3244 = vxor.u32 %v3243, 2147483648
    %v3245 = vsel %vm3162, %v3244, %v3243
    %v3246 = vsub.s32 4, %v3222
    %v3247 = vsel %vm3162, %v3246, %v3222
    %v3248 = vsel %vm3161, %v1190, %v3245
    %v3249 = vsel %vm3161, 0, %v3247
    %v3250 = vcosq.f32.pop %v3248
    %v3251 = vsinq.f32.pop %v3248
    %vm3252 = vweird.f32 %v1190
    %v3253 = vand.u32 %v3249, 3
    %vm3254 = vcmp.lt.s32.totalorder %v3253, 2
    %vm3255 = vcmp.eq.s32.totalorder %v3253, 0
    %v3256 = vxor.u32 %v3251, 2147483648
    %v3257 = vsel %vm3255, %v3250, %v3256
    %vm3258 = vcmp.eq.s32.totalorder %v3253, 2
    %v3259 = vxor.u32 %v3250, 2147483648
    %v3260 = vsel %vm3258, %v3259, %v3251
    %v3261 = vsel %vm3254, %v3257, %v3260
    %v3262 = vsel %vm3252, nan, %v3261
    %v3263 = vand.u32 2147483647, %v1191
    %vm3264 = vcmp.le.f32.partialorder %v3263, 0.7853982
    %vm3265 = vcmp.lt.s32.totalorder %v1191, 0
    %v3266 = vand.u32 %v1191, 2139095040
    %v3267 = vshrl.u32 %v3266, 23
    %v3268 = vsub.s32 %v3267, 127
    %v3269 = vand.u32 2147483647, %v1191
    %v3270 = vand.u32 %v3269, 8388607
    %v3271 = vor.u32 %v3270, 8388608
    %v3272 = vsub.s32 0, %v3271
    %v3273 = vadd.s32 %v3268, 1
    %vm3274 = vcmp.gt.s32.totalorder %v3273, 0
    %v3275 = vsel %vm3274, %v3273, 0
    %v3276 = vshrl.u32 %v3275, 5
    %v3277 = vand.u32 %v3275, 31
    %v3278 = vsub.s32 32, %v3277
    %v3279 = vshrl.u32 683565275, %v3278
    %v3280 = vshll.u32 683565275, %v3277
    %v3281 = vshrl.u32 2475754826, %v3278
    %v3282 = vor.u32 %v3280, %v3281
    %v3283 = vshll.u32 2475754826, %v3277
    %v3284 = vshrl.u32 2131351028, %v3278
    %v3285 = vor.u32 %v3283, %v3284
    %v3286 = vshll.u32 2131351028, %v3277
    %v3287 = vshrl.u32 2102212464, %v3278
    %v3288 = vor.u32 %v3286, %v3287
    %v3289 = vshll.u32 2102212464, %v3277
    %v3290 = vshrl.u32 920167782, %v3278
    %v3291 = vor.u32 %v3289, %v3290
    %v3292 = vshll.u32 920167782, %v3277
    %v3293 = vshrl.u32 1326507024, %v3278
    %v3294 = vor.u32 %v3292, %v3293
    %vm3295 = vcmp.lt.s32.totalorder %v3276, 1
    %vm3296 = vcmp.lt.s32.totalorder %v3276, 2
    %vm3297 = vcmp.lt.s32.totalorder %v3276, 3
    %vm3298 = vcmp.lt.s32.totalorder %v3276, 4
    %v3299 = vsel %vm3295, %v3279, %v3282
    %v3300 = vsel %vm3298, %v3288, 2102212464
    %v3301 = vsel %vm3297, %v3285, %v3300
    %v3302 = vsel %vm3296, %v3299, %v3301
    %v3303 = vsel %vm3295, %v3282, %v3285
    %v3304 = vsel %vm3298, %v3291, 920167782
    %v3305 = vsel %vm3297, %v3288, %v3304
    %v3306 = vsel %vm3296, %v3303, %v3305
    %v3307 = vsel %vm3295, %v3285, %v3288
    %v3308 = vsel %vm3298, %v3294, 1326507024
    %v3309 = vsel %vm3297, %v3291, %v3308
    %v3310 = vsel %vm3296, %v3307, %v3309
    %v3311 = vshll.u32 %v3271, 8
    %v3312 = vmul.u32.u64.compose %v3311, %v3310
    %v3313 = vextract.low.u32 %v3312
    %v3314 = vextract.high.u32 %v3312
    %v3315 = vmul.u32.u64.compose %v3311, %v3306
    %v3316 = vextract.low.u32 %v3315
    %v3317 = vextract.high.u32 %v3315
    %v3318 = vmul.u32 %v3311, %v3302
    %v3319 = vadd.s32 %v3314, %v3316
    %vm3320 = vc.u32 %v3314, %v3316
    %v3321 = vadd.s32 %v3317, 1
    %v3322 = vsel %vm3320, %v3321, %v3317
    %v3323 = vadd.s32 %v3318, %v3322
    %v3324 = vadd.s32 %v3323, 536870912
    %v3325 = vshrl.u32 %v3324, 30
    %v3326 = vshll.u32 %v3325, 30
    %v3327 = vsub.s32 %v3323, %v3326
    %vm3328 = vcmp.lt.s32.totalorder %v3327, 0
    %v3329 = vsub.s32 0, %v3327
    %v3330 = vsel %vm3328, %v3329, %v3327
    %v3331 = vclz %v3330
    %v3332 = vsub.s32 %v3331, 2
    %vm3333 = vcmp.gt.s32.totalorder 0, %v3332
    %v3334 = vsel %vm3333, 0, %v3332
    %v3335 = vsub.s32 32, %v3334
    %v3336 = vshll.u32 %v3327, %v3334
    %v3337 = vshrl.u32 %v3319, %v3335
    %v3338 = vor.u32 %v3336, %v3337
    %v3339 = vsub.s32 4294967266, %v3334
    %v3340 = vadd.s32 %v3339, 127
    %v3341 = vshll.u32 %v3340, 23
    %v3342 = vor.u32 4788187, %v3341
    %v3343 = vand.u32 2147483647, %v3342
    %v3345 = vcvt.s32.f32 %v3338
    %v3346 = vmul.f32 %v3345, %v3343
    %v3347 = vxor.u32 %v3346, 2147483648
    %v3348 = vsel %vm3265, %v3347, %v3346
    %v3349 = vsub.s32 4, %v3325
    %v3350 = vsel %vm3265, %v3349, %v3325
    %v3351 = vsel %vm3264, %v1191, %v3348
    %v3352 = vsel %vm3264, 0, %v3350
    %v3353 = vcosq.f32.pop %v3351
    %v3354 = vsinq.f32.pop %v3351
    %vm3355 = vweird.f32 %v1191
    %v3356 = vand.u32 %v3352, 3
    %vm3357 = vcmp.lt.s32.totalorder %v3356, 2
    %vm3358 = vcmp.eq.s32.totalorder %v3356, 0
    %v3359 = vxor.u32 %v3354, 2147483648
    %v3360 = vsel %vm3358, %v3353, %v3359
    %vm3361 = vcmp.eq.s32.totalorder %v3356, 2
    %v3362 = vxor.u32 %v3353, 2147483648
    %v3363 = vsel %vm3361, %v3362, %v3354
    %v3364 = vsel %vm3357, %v3360, %v3363
    %v3365 = vsel %vm3355, nan, %v3364
    %v3366 = vand.u32 2147483647, %v1192
    %vm3367 = vcmp.le.f32.partialorder %v3366, 0.7853982
    %vm3368 = vcmp.lt.s32.totalorder %v1192, 0
    %v3369 = vand.u32 %v1192, 2139095040
    %v3370 = vshrl.u32 %v3369, 23
    %v3371 = vsub.s32 %v3370, 127
    %v3372 = vand.u32 2147483647, %v1192
    %v3373 = vand.u32 %v3372, 8388607
    %v3374 = vor.u32 %v3373, 8388608
    %v3375 = vsub.s32 0, %v3374
    %v3376 = vadd.s32 %v3371, 1
    %vm3377 = vcmp.gt.s32.totalorder %v3376, 0
    %v3378 = vsel %vm3377, %v3376, 0
    %v3379 = vshrl.u32 %v3378, 5
    %v3380 = vand.u32 %v3378, 31
    %v3381 = vsub.s32 32, %v3380
    %v3382 = vshrl.u32 683565275, %v3381
    %v3383 = vshll.u32 683565275, %v3380
    %v3384 = vshrl.u32 2475754826, %v3381
    %v3385 = vor.u32 %v3383, %v3384
    %v3386 = vshll.u32 2475754826, %v3380
    %v3387 = vshrl.u32 2131351028, %v3381
    %v3388 = vor.u32 %v3386, %v3387
    %v3389 = vshll.u32 2131351028, %v3380
    %v3390 = vshrl.u32 2102212464, %v3381
    %v3391 = vor.u32 %v3389, %v3390
    %v3392 = vshll.u32 2102212464, %v3380
    %v3393 = vshrl.u32 920167782, %v3381
    %v3394 = vor.u32 %v3392, %v3393
    %v3395 = vshll.u32 920167782, %v3380
    %v3396 = vshrl.u32 1326507024, %v3381
    %v3397 = vor.u32 %v3395, %v3396
    %vm3398 = vcmp.lt.s32.totalorder %v3379, 1
    %vm3399 = vcmp.lt.s32.totalorder %v3379, 2
    %vm3400 = vcmp.lt.s32.totalorder %v3379, 3
    %vm3401 = vcmp.lt.s32.totalorder %v3379, 4
    %v3402 = vsel %vm3398, %v3382, %v3385
    %v3403 = vsel %vm3401, %v3391, 2102212464
    %v3404 = vsel %vm3400, %v3388, %v3403
    %v3405 = vsel %vm3399, %v3402, %v3404
    %v3406 = vsel %vm3398, %v3385, %v3388
    %v3407 = vsel %vm3401, %v3394, 920167782
    %v3408 = vsel %vm3400, %v3391, %v3407
    %v3409 = vsel %vm3399, %v3406, %v3408
    %v3410 = vsel %vm3398, %v3388, %v3391
    %v3411 = vsel %vm3401, %v3397, 1326507024
    %v3412 = vsel %vm3400, %v3394, %v3411
    %v3413 = vsel %vm3399, %v3410, %v3412
    %v3414 = vshll.u32 %v3374, 8
    %v3415 = vmul.u32.u64.compose %v3414, %v3413
    %v3416 = vextract.low.u32 %v3415
    %v3417 = vextract.high.u32 %v3415
    %v3418 = vmul.u32.u64.compose %v3414, %v3409
    %v3419 = vextract.low.u32 %v3418
    %v3420 = vextract.high.u32 %v3418
    %v3421 = vmul.u32 %v3414, %v3405
    %v3422 = vadd.s32 %v3417, %v3419
    %vm3423 = vc.u32 %v3417, %v3419
    %v3424 = vadd.s32 %v3420, 1
    %v3425 = vsel %vm3423, %v3424, %v3420
    %v3426 = vadd.s32 %v3421, %v3425
    %v3427 = vadd.s32 %v3426, 536870912
    %v3428 = vshrl.u32 %v3427, 30
    %v3429 = vshll.u32 %v3428, 30
    %v3430 = vsub.s32 %v3426, %v3429
    %vm3431 = vcmp.lt.s32.totalorder %v3430, 0
    %v3432 = vsub.s32 0, %v3430
    %v3433 = vsel %vm3431, %v3432, %v3430
    %v3434 = vclz %v3433
    %v3435 = vsub.s32 %v3434, 2
    %vm3436 = vcmp.gt.s32.totalorder 0, %v3435
    %v3437 = vsel %vm3436, 0, %v3435
    %v3438 = vsub.s32 32, %v3437
    %v3439 = vshll.u32 %v3430, %v3437
    %v3440 = vshrl.u32 %v3422, %v3438
    %v3441 = vor.u32 %v3439, %v3440
    %v3442 = vsub.s32 4294967266, %v3437
    %v3443 = vadd.s32 %v3442, 127
    %v3444 = vshll.u32 %v3443, 23
    %v3445 = vor.u32 4788187, %v3444
    %v3446 = vand.u32 2147483647, %v3445
    %v3448 = vcvt.s32.f32 %v3441
    %v3449 = vmul.f32 %v3448, %v3446
    %v3450 = vxor.u32 %v3449, 2147483648
    %v3451 = vsel %vm3368, %v3450, %v3449
    %v3452 = vsub.s32 4, %v3428
    %v3453 = vsel %vm3368, %v3452, %v3428
    %v3454 = vsel %vm3367, %v1192, %v3451
    %v3455 = vsel %vm3367, 0, %v3453
    %v3456 = vcosq.f32.pop %v3454
    %v3457 = vsinq.f32.pop %v3454
    %vm3458 = vweird.f32 %v1192
    %v3459 = vand.u32 %v3455, 3
    %vm3460 = vcmp.lt.s32.totalorder %v3459, 2
    %vm3461 = vcmp.eq.s32.totalorder %v3459, 0
    %v3462 = vxor.u32 %v3457, 2147483648
    %v3463 = vsel %vm3461, %v3456, %v3462
    %vm3464 = vcmp.eq.s32.totalorder %v3459, 2
    %v3465 = vxor.u32 %v3456, 2147483648
    %v3466 = vsel %vm3464, %v3465, %v3457
    %v3467 = vsel %vm3460, %v3463, %v3466
    %v3468 = vsel %vm3458, nan, %v3467
    %v3469 = vand.u32 2147483647, %v1193
    %vm3470 = vcmp.le.f32.partialorder %v3469, 0.7853982
    %vm3471 = vcmp.lt.s32.totalorder %v1193, 0
    %v3472 = vand.u32 %v1193, 2139095040
    %v3473 = vshrl.u32 %v3472, 23
    %v3474 = vsub.s32 %v3473, 127
    %v3475 = vand.u32 2147483647, %v1193
    %v3476 = vand.u32 %v3475, 8388607
    %v3477 = vor.u32 %v3476, 8388608
    %v3478 = vsub.s32 0, %v3477
    %v3479 = vadd.s32 %v3474, 1
    %vm3480 = vcmp.gt.s32.totalorder %v3479, 0
    %v3481 = vsel %vm3480, %v3479, 0
    %v3482 = vshrl.u32 %v3481, 5
    %v3483 = vand.u32 %v3481, 31
    %v3484 = vsub.s32 32, %v3483
    %v3485 = vshrl.u32 683565275, %v3484
    %v3486 = vshll.u32 683565275, %v3483
    %v3487 = vshrl.u32 2475754826, %v3484
    %v3488 = vor.u32 %v3486, %v3487
    %v3489 = vshll.u32 2475754826, %v3483
    %v3490 = vshrl.u32 2131351028, %v3484
    %v3491 = vor.u32 %v3489, %v3490
    %v3492 = vshll.u32 2131351028, %v3483
    %v3493 = vshrl.u32 2102212464, %v3484
    %v3494 = vor.u32 %v3492, %v3493
    %v3495 = vshll.u32 2102212464, %v3483
    %v3496 = vshrl.u32 920167782, %v3484
    %v3497 = vor.u32 %v3495, %v3496
    %v3498 = vshll.u32 920167782, %v3483
    %v3499 = vshrl.u32 1326507024, %v3484
    %v3500 = vor.u32 %v3498, %v3499
    %vm3501 = vcmp.lt.s32.totalorder %v3482, 1
    %vm3502 = vcmp.lt.s32.totalorder %v3482, 2
    %vm3503 = vcmp.lt.s32.totalorder %v3482, 3
    %vm3504 = vcmp.lt.s32.totalorder %v3482, 4
    %v3505 = vsel %vm3501, %v3485, %v3488
    %v3506 = vsel %vm3504, %v3494, 2102212464
    %v3507 = vsel %vm3503, %v3491, %v3506
    %v3508 = vsel %vm3502, %v3505, %v3507
    %v3509 = vsel %vm3501, %v3488, %v3491
    %v3510 = vsel %vm3504, %v3497, 920167782
    %v3511 = vsel %vm3503, %v3494, %v3510
    %v3512 = vsel %vm3502, %v3509, %v3511
    %v3513 = vsel %vm3501, %v3491, %v3494
    %v3514 = vsel %vm3504, %v3500, 1326507024
    %v3515 = vsel %vm3503, %v3497, %v3514
    %v3516 = vsel %vm3502, %v3513, %v3515
    %v3517 = vshll.u32 %v3477, 8
    %v3518 = vmul.u32.u64.compose %v3517, %v3516
    %v3519 = vextract.low.u32 %v3518
    %v3520 = vextract.high.u32 %v3518
    %v3521 = vmul.u32.u64.compose %v3517, %v3512
    %v3522 = vextract.low.u32 %v3521
    %v3523 = vextract.high.u32 %v3521
    %v3524 = vmul.u32 %v3517, %v3508
    %v3525 = vadd.s32 %v3520, %v3522
    %vm3526 = vc.u32 %v3520, %v3522
    %v3527 = vadd.s32 %v3523, 1
    %v3528 = vsel %vm3526, %v3527, %v3523
    %v3529 = vadd.s32 %v3524, %v3528
    %v3530 = vadd.s32 %v3529, 536870912
    %v3531 = vshrl.u32 %v3530, 30
    %v3532 = vshll.u32 %v3531, 30
    %v3533 = vsub.s32 %v3529, %v3532
    %vm3534 = vcmp.lt.s32.totalorder %v3533, 0
    %v3535 = vsub.s32 0, %v3533
    %v3536 = vsel %vm3534, %v3535, %v3533
    %v3537 = vclz %v3536
    %v3538 = vsub.s32 %v3537, 2
    %vm3539 = vcmp.gt.s32.totalorder 0, %v3538
    %v3540 = vsel %vm3539, 0, %v3538
    %v3541 = vsub.s32 32, %v3540
    %v3542 = vshll.u32 %v3533, %v3540
    %v3543 = vshrl.u32 %v3525, %v3541
    %v3544 = vor.u32 %v3542, %v3543
    %v3545 = vsub.s32 4294967266, %v3540
    %v3546 = vadd.s32 %v3545, 127
    %v3547 = vshll.u32 %v3546, 23
    %v3548 = vor.u32 4788187, %v3547
    %v3549 = vand.u32 2147483647, %v3548
    %v3551 = vcvt.s32.f32 %v3544
    %v3552 = vmul.f32 %v3551, %v3549
    %v3553 = vxor.u32 %v3552, 2147483648
    %v3554 = vsel %vm3471, %v3553, %v3552
    %v3555 = vsub.s32 4, %v3531
    %v3556 = vsel %vm3471, %v3555, %v3531
    %v3557 = vsel %vm3470, %v1193, %v3554
    %v3558 = vsel %vm3470, 0, %v3556
    %v3559 = vcosq.f32.pop %v3557
    %v3560 = vsinq.f32.pop %v3557
    %vm3561 = vweird.f32 %v1193
    %v3562 = vand.u32 %v3558, 3
    %vm3563 = vcmp.lt.s32.totalorder %v3562, 2
    %vm3564 = vcmp.eq.s32.totalorder %v3562, 0
    %v3565 = vxor.u32 %v3560, 2147483648
    %v3566 = vsel %vm3564, %v3559, %v3565
    %vm3567 = vcmp.eq.s32.totalorder %v3562, 2
    %v3568 = vxor.u32 %v3559, 2147483648
    %v3569 = vsel %vm3567, %v3568, %v3560
    %v3570 = vsel %vm3563, %v3566, %v3569
    %v3571 = vsel %vm3561, nan, %v3570
    %v3572 = vand.u32 2147483647, %v1194
    %vm3573 = vcmp.le.f32.partialorder %v3572, 0.7853982
    %vm3574 = vcmp.lt.s32.totalorder %v1194, 0
    %v3575 = vand.u32 %v1194, 2139095040
    %v3576 = vshrl.u32 %v3575, 23
    %v3577 = vsub.s32 %v3576, 127
    %v3578 = vand.u32 2147483647, %v1194
    %v3579 = vand.u32 %v3578, 8388607
    %v3580 = vor.u32 %v3579, 8388608
    %v3581 = vsub.s32 0, %v3580
    %v3582 = vadd.s32 %v3577, 1
    %vm3583 = vcmp.gt.s32.totalorder %v3582, 0
    %v3584 = vsel %vm3583, %v3582, 0
    %v3585 = vshrl.u32 %v3584, 5
    %v3586 = vand.u32 %v3584, 31
    %v3587 = vsub.s32 32, %v3586
    %v3588 = vshrl.u32 683565275, %v3587
    %v3589 = vshll.u32 683565275, %v3586
    %v3590 = vshrl.u32 2475754826, %v3587
    %v3591 = vor.u32 %v3589, %v3590
    %v3592 = vshll.u32 2475754826, %v3586
    %v3593 = vshrl.u32 2131351028, %v3587
    %v3594 = vor.u32 %v3592, %v3593
    %v3595 = vshll.u32 2131351028, %v3586
    %v3596 = vshrl.u32 2102212464, %v3587
    %v3597 = vor.u32 %v3595, %v3596
    %v3598 = vshll.u32 2102212464, %v3586
    %v3599 = vshrl.u32 920167782, %v3587
    %v3600 = vor.u32 %v3598, %v3599
    %v3601 = vshll.u32 920167782, %v3586
    %v3602 = vshrl.u32 1326507024, %v3587
    %v3603 = vor.u32 %v3601, %v3602
    %vm3604 = vcmp.lt.s32.totalorder %v3585, 1
    %vm3605 = vcmp.lt.s32.totalorder %v3585, 2
    %vm3606 = vcmp.lt.s32.totalorder %v3585, 3
    %vm3607 = vcmp.lt.s32.totalorder %v3585, 4
    %v3608 = vsel %vm3604, %v3588, %v3591
    %v3609 = vsel %vm3607, %v3597, 2102212464
    %v3610 = vsel %vm3606, %v3594, %v3609
    %v3611 = vsel %vm3605, %v3608, %v3610
    %v3612 = vsel %vm3604, %v3591, %v3594
    %v3613 = vsel %vm3607, %v3600, 920167782
    %v3614 = vsel %vm3606, %v3597, %v3613
    %v3615 = vsel %vm3605, %v3612, %v3614
    %v3616 = vsel %vm3604, %v3594, %v3597
    %v3617 = vsel %vm3607, %v3603, 1326507024
    %v3618 = vsel %vm3606, %v3600, %v3617
    %v3619 = vsel %vm3605, %v3616, %v3618
    %v3620 = vshll.u32 %v3580, 8
    %v3621 = vmul.u32.u64.compose %v3620, %v3619
    %v3622 = vextract.low.u32 %v3621
    %v3623 = vextract.high.u32 %v3621
    %v3624 = vmul.u32.u64.compose %v3620, %v3615
    %v3625 = vextract.low.u32 %v3624
    %v3626 = vextract.high.u32 %v3624
    %v3627 = vmul.u32 %v3620, %v3611
    %v3628 = vadd.s32 %v3623, %v3625
    %vm3629 = vc.u32 %v3623, %v3625
    %v3630 = vadd.s32 %v3626, 1
    %v3631 = vsel %vm3629, %v3630, %v3626
    %v3632 = vadd.s32 %v3627, %v3631
    %v3633 = vadd.s32 %v3632, 536870912
    %v3634 = vshrl.u32 %v3633, 30
    %v3635 = vshll.u32 %v3634, 30
    %v3636 = vsub.s32 %v3632, %v3635
    %vm3637 = vcmp.lt.s32.totalorder %v3636, 0
    %v3638 = vsub.s32 0, %v3636
    %v3639 = vsel %vm3637, %v3638, %v3636
    %v3640 = vclz %v3639
    %v3641 = vsub.s32 %v3640, 2
    %vm3642 = vcmp.gt.s32.totalorder 0, %v3641
    %v3643 = vsel %vm3642, 0, %v3641
    %v3644 = vsub.s32 32, %v3643
    %v3645 = vshll.u32 %v3636, %v3643
    %v3646 = vshrl.u32 %v3628, %v3644
    %v3647 = vor.u32 %v3645, %v3646
    %v3648 = vsub.s32 4294967266, %v3643
    %v3649 = vadd.s32 %v3648, 127
    %v3650 = vshll.u32 %v3649, 23
    %v3651 = vor.u32 4788187, %v3650
    %v3652 = vand.u32 2147483647, %v3651
    %v3654 = vcvt.s32.f32 %v3647
    %v3655 = vmul.f32 %v3654, %v3652
    %v3656 = vxor.u32 %v3655, 2147483648
    %v3657 = vsel %vm3574, %v3656, %v3655
    %v3658 = vsub.s32 4, %v3634
    %v3659 = vsel %vm3574, %v3658, %v3634
    %v3660 = vsel %vm3573, %v1194, %v3657
    %v3661 = vsel %vm3573, 0, %v3659
    %v3662 = vcosq.f32.pop %v3660
    %v3663 = vsinq.f32.pop %v3660
    %vm3664 = vweird.f32 %v1194
    %v3665 = vand.u32 %v3661, 3
    %vm3666 = vcmp.lt.s32.totalorder %v3665, 2
    %vm3667 = vcmp.eq.s32.totalorder %v3665, 0
    %v3668 = vxor.u32 %v3663, 2147483648
    %v3669 = vsel %vm3667, %v3662, %v3668
    %vm3670 = vcmp.eq.s32.totalorder %v3665, 2
    %v3671 = vxor.u32 %v3662, 2147483648
    %v3672 = vsel %vm3670, %v3671, %v3663
    %v3673 = vsel %vm3666, %v3669, %v3672
    %v3674 = vsel %vm3664, nan, %v3673
    %v3675 = vand.u32 2147483647, %v1195
    %vm3676 = vcmp.le.f32.partialorder %v3675, 0.7853982
    %vm3677 = vcmp.lt.s32.totalorder %v1195, 0
    %v3678 = vand.u32 %v1195, 2139095040
    %v3679 = vshrl.u32 %v3678, 23
    %v3680 = vsub.s32 %v3679, 127
    %v3681 = vand.u32 2147483647, %v1195
    %v3682 = vand.u32 %v3681, 8388607
    %v3683 = vor.u32 %v3682, 8388608
    %v3684 = vsub.s32 0, %v3683
    %v3685 = vadd.s32 %v3680, 1
    %vm3686 = vcmp.gt.s32.totalorder %v3685, 0
    %v3687 = vsel %vm3686, %v3685, 0
    %v3688 = vshrl.u32 %v3687, 5
    %v3689 = vand.u32 %v3687, 31
    %v3690 = vsub.s32 32, %v3689
    %v3691 = vshrl.u32 683565275, %v3690
    %v3692 = vshll.u32 683565275, %v3689
    %v3693 = vshrl.u32 2475754826, %v3690
    %v3694 = vor.u32 %v3692, %v3693
    %v3695 = vshll.u32 2475754826, %v3689
    %v3696 = vshrl.u32 2131351028, %v3690
    %v3697 = vor.u32 %v3695, %v3696
    %v3698 = vshll.u32 2131351028, %v3689
    %v3699 = vshrl.u32 2102212464, %v3690
    %v3700 = vor.u32 %v3698, %v3699
    %v3701 = vshll.u32 2102212464, %v3689
    %v3702 = vshrl.u32 920167782, %v3690
    %v3703 = vor.u32 %v3701, %v3702
    %v3704 = vshll.u32 920167782, %v3689
    %v3705 = vshrl.u32 1326507024, %v3690
    %v3706 = vor.u32 %v3704, %v3705
    %vm3707 = vcmp.lt.s32.totalorder %v3688, 1
    %vm3708 = vcmp.lt.s32.totalorder %v3688, 2
    %vm3709 = vcmp.lt.s32.totalorder %v3688, 3
    %vm3710 = vcmp.lt.s32.totalorder %v3688, 4
    %v3711 = vsel %vm3707, %v3691, %v3694
    %v3712 = vsel %vm3710, %v3700, 2102212464
    %v3713 = vsel %vm3709, %v3697, %v3712
    %v3714 = vsel %vm3708, %v3711, %v3713
    %v3715 = vsel %vm3707, %v3694, %v3697
    %v3716 = vsel %vm3710, %v3703, 920167782
    %v3717 = vsel %vm3709, %v3700, %v3716
    %v3718 = vsel %vm3708, %v3715, %v3717
    %v3719 = vsel %vm3707, %v3697, %v3700
    %v3720 = vsel %vm3710, %v3706, 1326507024
    %v3721 = vsel %vm3709, %v3703, %v3720
    %v3722 = vsel %vm3708, %v3719, %v3721
    %v3723 = vshll.u32 %v3683, 8
    %v3724 = vmul.u32.u64.compose %v3723, %v3722
    %v3725 = vextract.low.u32 %v3724
    %v3726 = vextract.high.u32 %v3724
    %v3727 = vmul.u32.u64.compose %v3723, %v3718
    %v3728 = vextract.low.u32 %v3727
    %v3729 = vextract.high.u32 %v3727
    %v3730 = vmul.u32 %v3723, %v3714
    %v3731 = vadd.s32 %v3726, %v3728
    %vm3732 = vc.u32 %v3726, %v3728
    %v3733 = vadd.s32 %v3729, 1
    %v3734 = vsel %vm3732, %v3733, %v3729
    %v3735 = vadd.s32 %v3730, %v3734
    %v3736 = vadd.s32 %v3735, 536870912
    %v3737 = vshrl.u32 %v3736, 30
    %v3738 = vshll.u32 %v3737, 30
    %v3739 = vsub.s32 %v3735, %v3738
    %vm3740 = vcmp.lt.s32.totalorder %v3739, 0
    %v3741 = vsub.s32 0, %v3739
    %v3742 = vsel %vm3740, %v3741, %v3739
    %v3743 = vclz %v3742
    %v3744 = vsub.s32 %v3743, 2
    %vm3745 = vcmp.gt.s32.totalorder 0, %v3744
    %v3746 = vsel %vm3745, 0, %v3744
    %v3747 = vsub.s32 32, %v3746
    %v3748 = vshll.u32 %v3739, %v3746
    %v3749 = vshrl.u32 %v3731, %v3747
    %v3750 = vor.u32 %v3748, %v3749
    %v3751 = vsub.s32 4294967266, %v3746
    %v3752 = vadd.s32 %v3751, 127
    %v3753 = vshll.u32 %v3752, 23
    %v3754 = vor.u32 4788187, %v3753
    %v3755 = vand.u32 2147483647, %v3754
    %v3757 = vcvt.s32.f32 %v3750
    %v3758 = vmul.f32 %v3757, %v3755
    %v3759 = vxor.u32 %v3758, 2147483648
    %v3760 = vsel %vm3677, %v3759, %v3758
    %v3761 = vsub.s32 4, %v3737
    %v3762 = vsel %vm3677, %v3761, %v3737
    %v3763 = vsel %vm3676, %v1195, %v3760
    %v3764 = vsel %vm3676, 0, %v3762
    %v3765 = vcosq.f32.pop %v3763
    %v3766 = vsinq.f32.pop %v3763
    %vm3767 = vweird.f32 %v1195
    %v3768 = vand.u32 %v3764, 3
    %vm3769 = vcmp.lt.s32.totalorder %v3768, 2
    %vm3770 = vcmp.eq.s32.totalorder %v3768, 0
    %v3771 = vxor.u32 %v3766, 2147483648
    %v3772 = vsel %vm3770, %v3765, %v3771
    %vm3773 = vcmp.eq.s32.totalorder %v3768, 2
    %v3774 = vxor.u32 %v3765, 2147483648
    %v3775 = vsel %vm3773, %v3774, %v3766
    %v3776 = vsel %vm3769, %v3772, %v3775
    %v3777 = vsel %vm3767, nan, %v3776
    %v3778 = vand.u32 2147483647, %v1196
    %vm3779 = vcmp.le.f32.partialorder %v3778, 0.7853982
    %vm3780 = vcmp.lt.s32.totalorder %v1196, 0
    %v3781 = vand.u32 %v1196, 2139095040
    %v3782 = vshrl.u32 %v3781, 23
    %v3783 = vsub.s32 %v3782, 127
    %v3784 = vand.u32 2147483647, %v1196
    %v3785 = vand.u32 %v3784, 8388607
    %v3786 = vor.u32 %v3785, 8388608
    %v3787 = vsub.s32 0, %v3786
    %v3788 = vadd.s32 %v3783, 1
    %vm3789 = vcmp.gt.s32.totalorder %v3788, 0
    %v3790 = vsel %vm3789, %v3788, 0
    %v3791 = vshrl.u32 %v3790, 5
    %v3792 = vand.u32 %v3790, 31
    %v3793 = vsub.s32 32, %v3792
    %v3794 = vshrl.u32 683565275, %v3793
    %v3795 = vshll.u32 683565275, %v3792
    %v3796 = vshrl.u32 2475754826, %v3793
    %v3797 = vor.u32 %v3795, %v3796
    %v3798 = vshll.u32 2475754826, %v3792
    %v3799 = vshrl.u32 2131351028, %v3793
    %v3800 = vor.u32 %v3798, %v3799
    %v3801 = vshll.u32 2131351028, %v3792
    %v3802 = vshrl.u32 2102212464, %v3793
    %v3803 = vor.u32 %v3801, %v3802
    %v3804 = vshll.u32 2102212464, %v3792
    %v3805 = vshrl.u32 920167782, %v3793
    %v3806 = vor.u32 %v3804, %v3805
    %v3807 = vshll.u32 920167782, %v3792
    %v3808 = vshrl.u32 1326507024, %v3793
    %v3809 = vor.u32 %v3807, %v3808
    %vm3810 = vcmp.lt.s32.totalorder %v3791, 1
    %vm3811 = vcmp.lt.s32.totalorder %v3791, 2
    %vm3812 = vcmp.lt.s32.totalorder %v3791, 3
    %vm3813 = vcmp.lt.s32.totalorder %v3791, 4
    %v3814 = vsel %vm3810, %v3794, %v3797
    %v3815 = vsel %vm3813, %v3803, 2102212464
    %v3816 = vsel %vm3812, %v3800, %v3815
    %v3817 = vsel %vm3811, %v3814, %v3816
    %v3818 = vsel %vm3810, %v3797, %v3800
    %v3819 = vsel %vm3813, %v3806, 920167782
    %v3820 = vsel %vm3812, %v3803, %v3819
    %v3821 = vsel %vm3811, %v3818, %v3820
    %v3822 = vsel %vm3810, %v3800, %v3803
    %v3823 = vsel %vm3813, %v3809, 1326507024
    %v3824 = vsel %vm3812, %v3806, %v3823
    %v3825 = vsel %vm3811, %v3822, %v3824
    %v3826 = vshll.u32 %v3786, 8
    %v3827 = vmul.u32.u64.compose %v3826, %v3825
    %v3828 = vextract.low.u32 %v3827
    %v3829 = vextract.high.u32 %v3827
    %v3830 = vmul.u32.u64.compose %v3826, %v3821
    %v3831 = vextract.low.u32 %v3830
    %v3832 = vextract.high.u32 %v3830
    %v3833 = vmul.u32 %v3826, %v3817
    %v3834 = vadd.s32 %v3829, %v3831
    %vm3835 = vc.u32 %v3829, %v3831
    %v3836 = vadd.s32 %v3832, 1
    %v3837 = vsel %vm3835, %v3836, %v3832
    %v3838 = vadd.s32 %v3833, %v3837
    %v3839 = vadd.s32 %v3838, 536870912
    %v3840 = vshrl.u32 %v3839, 30
    %v3841 = vshll.u32 %v3840, 30
    %v3842 = vsub.s32 %v3838, %v3841
    %vm3843 = vcmp.lt.s32.totalorder %v3842, 0
    %v3844 = vsub.s32 0, %v3842
    %v3845 = vsel %vm3843, %v3844, %v3842
    %v3846 = vclz %v3845
    %v3847 = vsub.s32 %v3846, 2
    %vm3848 = vcmp.gt.s32.totalorder 0, %v3847
    %v3849 = vsel %vm3848, 0, %v3847
    %v3850 = vsub.s32 32, %v3849
    %v3851 = vshll.u32 %v3842, %v3849
    %v3852 = vshrl.u32 %v3834, %v3850
    %v3853 = vor.u32 %v3851, %v3852
    %v3854 = vsub.s32 4294967266, %v3849
    %v3855 = vadd.s32 %v3854, 127
    %v3856 = vshll.u32 %v3855, 23
    %v3857 = vor.u32 4788187, %v3856
    %v3858 = vand.u32 2147483647, %v3857
    %v3860 = vcvt.s32.f32 %v3853
    %v3861 = vmul.f32 %v3860, %v3858
    %v3862 = vxor.u32 %v3861, 2147483648
    %v3863 = vsel %vm3780, %v3862, %v3861
    %v3864 = vsub.s32 4, %v3840
    %v3865 = vsel %vm3780, %v3864, %v3840
    %v3866 = vsel %vm3779, %v1196, %v3863
    %v3867 = vsel %vm3779, 0, %v3865
    %v3868 = vcosq.f32.pop %v3866
    %v3869 = vsinq.f32.pop %v3866
    %vm3870 = vweird.f32 %v1196
    %v3871 = vand.u32 %v3867, 3
    %vm3872 = vcmp.lt.s32.totalorder %v3871, 2
    %vm3873 = vcmp.eq.s32.totalorder %v3871, 0
    %v3874 = vxor.u32 %v3869, 2147483648
    %v3875 = vsel %vm3873, %v3868, %v3874
    %vm3876 = vcmp.eq.s32.totalorder %v3871, 2
    %v3877 = vxor.u32 %v3868, 2147483648
    %v3878 = vsel %vm3876, %v3877, %v3869
    %v3879 = vsel %vm3872, %v3875, %v3878
    %v3880 = vsel %vm3870, nan, %v3879
    %v3881 = vand.u32 2147483647, %v1197
    %vm3882 = vcmp.le.f32.partialorder %v3881, 0.7853982
    %vm3883 = vcmp.lt.s32.totalorder %v1197, 0
    %v3884 = vand.u32 %v1197, 2139095040
    %v3885 = vshrl.u32 %v3884, 23
    %v3886 = vsub.s32 %v3885, 127
    %v3887 = vand.u32 2147483647, %v1197
    %v3888 = vand.u32 %v3887, 8388607
    %v3889 = vor.u32 %v3888, 8388608
    %v3890 = vsub.s32 0, %v3889
    %v3891 = vadd.s32 %v3886, 1
    %vm3892 = vcmp.gt.s32.totalorder %v3891, 0
    %v3893 = vsel %vm3892, %v3891, 0
    %v3894 = vshrl.u32 %v3893, 5
    %v3895 = vand.u32 %v3893, 31
    %v3896 = vsub.s32 32, %v3895
    %v3897 = vshrl.u32 683565275, %v3896
    %v3898 = vshll.u32 683565275, %v3895
    %v3899 = vshrl.u32 2475754826, %v3896
    %v3900 = vor.u32 %v3898, %v3899
    %v3901 = vshll.u32 2475754826, %v3895
    %v3902 = vshrl.u32 2131351028, %v3896
    %v3903 = vor.u32 %v3901, %v3902
    %v3904 = vshll.u32 2131351028, %v3895
    %v3905 = vshrl.u32 2102212464, %v3896
    %v3906 = vor.u32 %v3904, %v3905
    %v3907 = vshll.u32 2102212464, %v3895
    %v3908 = vshrl.u32 920167782, %v3896
    %v3909 = vor.u32 %v3907, %v3908
    %v3910 = vshll.u32 920167782, %v3895
    %v3911 = vshrl.u32 1326507024, %v3896
    %v3912 = vor.u32 %v3910, %v3911
    %vm3913 = vcmp.lt.s32.totalorder %v3894, 1
    %vm3914 = vcmp.lt.s32.totalorder %v3894, 2
    %vm3915 = vcmp.lt.s32.totalorder %v3894, 3
    %vm3916 = vcmp.lt.s32.totalorder %v3894, 4
    %v3917 = vsel %vm3913, %v3897, %v3900
    %v3918 = vsel %vm3916, %v3906, 2102212464
    %v3919 = vsel %vm3915, %v3903, %v3918
    %v3920 = vsel %vm3914, %v3917, %v3919
    %v3921 = vsel %vm3913, %v3900, %v3903
    %v3922 = vsel %vm3916, %v3909, 920167782
    %v3923 = vsel %vm3915, %v3906, %v3922
    %v3924 = vsel %vm3914, %v3921, %v3923
    %v3925 = vsel %vm3913, %v3903, %v3906
    %v3926 = vsel %vm3916, %v3912, 1326507024
    %v3927 = vsel %vm3915, %v3909, %v3926
    %v3928 = vsel %vm3914, %v3925, %v3927
    %v3929 = vshll.u32 %v3889, 8
    %v3930 = vmul.u32.u64.compose %v3929, %v3928
    %v3931 = vextract.low.u32 %v3930
    %v3932 = vextract.high.u32 %v3930
    %v3933 = vmul.u32.u64.compose %v3929, %v3924
    %v3934 = vextract.low.u32 %v3933
    %v3935 = vextract.high.u32 %v3933
    %v3936 = vmul.u32 %v3929, %v3920
    %v3937 = vadd.s32 %v3932, %v3934
    %vm3938 = vc.u32 %v3932, %v3934
    %v3939 = vadd.s32 %v3935, 1
    %v3940 = vsel %vm3938, %v3939, %v3935
    %v3941 = vadd.s32 %v3936, %v3940
    %v3942 = vadd.s32 %v3941, 536870912
    %v3943 = vshrl.u32 %v3942, 30
    %v3944 = vshll.u32 %v3943, 30
    %v3945 = vsub.s32 %v3941, %v3944
    %vm3946 = vcmp.lt.s32.totalorder %v3945, 0
    %v3947 = vsub.s32 0, %v3945
    %v3948 = vsel %vm3946, %v3947, %v3945
    %v3949 = vclz %v3948
    %v3950 = vsub.s32 %v3949, 2
    %vm3951 = vcmp.gt.s32.totalorder 0, %v3950
    %v3952 = vsel %vm3951, 0, %v3950
    %v3953 = vsub.s32 32, %v3952
    %v3954 = vshll.u32 %v3945, %v3952
    %v3955 = vshrl.u32 %v3937, %v3953
    %v3956 = vor.u32 %v3954, %v3955
    %v3957 = vsub.s32 4294967266, %v3952
    %v3958 = vadd.s32 %v3957, 127
    %v3959 = vshll.u32 %v3958, 23
    %v3960 = vor.u32 4788187, %v3959
    %v3961 = vand.u32 2147483647, %v3960
    %v3963 = vcvt.s32.f32 %v3956
    %v3964 = vmul.f32 %v3963, %v3961
    %v3965 = vxor.u32 %v3964, 2147483648
    %v3966 = vsel %vm3883, %v3965, %v3964
    %v3967 = vsub.s32 4, %v3943
    %v3968 = vsel %vm3883, %v3967, %v3943
    %v3969 = vsel %vm3882, %v1197, %v3966
    %v3970 = vsel %vm3882, 0, %v3968
    %v3971 = vcosq.f32.pop %v3969
    %v3972 = vsinq.f32.pop %v3969
    %vm3973 = vweird.f32 %v1197
    %v3974 = vand.u32 %v3970, 3
    %vm3975 = vcmp.lt.s32.totalorder %v3974, 2
    %vm3976 = vcmp.eq.s32.totalorder %v3974, 0
    %v3977 = vxor.u32 %v3972, 2147483648
    %v3978 = vsel %vm3976, %v3971, %v3977
    %vm3979 = vcmp.eq.s32.totalorder %v3974, 2
    %v3980 = vxor.u32 %v3971, 2147483648
    %v3981 = vsel %vm3979, %v3980, %v3972
    %v3982 = vsel %vm3975, %v3978, %v3981
    %v3983 = vsel %vm3973, nan, %v3982
    %v3984 = vand.u32 2147483647, %v1198
    %vm3985 = vcmp.le.f32.partialorder %v3984, 0.7853982
    %vm3986 = vcmp.lt.s32.totalorder %v1198, 0
    %v3987 = vand.u32 %v1198, 2139095040
    %v3988 = vshrl.u32 %v3987, 23
    %v3989 = vsub.s32 %v3988, 127
    %v3990 = vand.u32 2147483647, %v1198
    %v3991 = vand.u32 %v3990, 8388607
    %v3992 = vor.u32 %v3991, 8388608
    %v3993 = vsub.s32 0, %v3992
    %v3994 = vadd.s32 %v3989, 1
    %vm3995 = vcmp.gt.s32.totalorder %v3994, 0
    %v3996 = vsel %vm3995, %v3994, 0
    %v3997 = vshrl.u32 %v3996, 5
    %v3998 = vand.u32 %v3996, 31
    %v3999 = vsub.s32 32, %v3998
    %v4000 = vshrl.u32 683565275, %v3999
    %v4001 = vshll.u32 683565275, %v3998
    %v4002 = vshrl.u32 2475754826, %v3999
    %v4003 = vor.u32 %v4001, %v4002
    %v4004 = vshll.u32 2475754826, %v3998
    %v4005 = vshrl.u32 2131351028, %v3999
    %v4006 = vor.u32 %v4004, %v4005
    %v4007 = vshll.u32 2131351028, %v3998
    %v4008 = vshrl.u32 2102212464, %v3999
    %v4009 = vor.u32 %v4007, %v4008
    %v4010 = vshll.u32 2102212464, %v3998
    %v4011 = vshrl.u32 920167782, %v3999
    %v4012 = vor.u32 %v4010, %v4011
    %v4013 = vshll.u32 920167782, %v3998
    %v4014 = vshrl.u32 1326507024, %v3999
    %v4015 = vor.u32 %v4013, %v4014
    %vm4016 = vcmp.lt.s32.totalorder %v3997, 1
    %vm4017 = vcmp.lt.s32.totalorder %v3997, 2
    %vm4018 = vcmp.lt.s32.totalorder %v3997, 3
    %vm4019 = vcmp.lt.s32.totalorder %v3997, 4
    %v4020 = vsel %vm4016, %v4000, %v4003
    %v4021 = vsel %vm4019, %v4009, 2102212464
    %v4022 = vsel %vm4018, %v4006, %v4021
    %v4023 = vsel %vm4017, %v4020, %v4022
    %v4024 = vsel %vm4016, %v4003, %v4006
    %v4025 = vsel %vm4019, %v4012, 920167782
    %v4026 = vsel %vm4018, %v4009, %v4025
    %v4027 = vsel %vm4017, %v4024, %v4026
    %v4028 = vsel %vm4016, %v4006, %v4009
    %v4029 = vsel %vm4019, %v4015, 1326507024
    %v4030 = vsel %vm4018, %v4012, %v4029
    %v4031 = vsel %vm4017, %v4028, %v4030
    %v4032 = vshll.u32 %v3992, 8
    %v4033 = vmul.u32.u64.compose %v4032, %v4031
    %v4034 = vextract.low.u32 %v4033
    %v4035 = vextract.high.u32 %v4033
    %v4036 = vmul.u32.u64.compose %v4032, %v4027
    %v4037 = vextract.low.u32 %v4036
    %v4038 = vextract.high.u32 %v4036
    %v4039 = vmul.u32 %v4032, %v4023
    %v4040 = vadd.s32 %v4035, %v4037
    %vm4041 = vc.u32 %v4035, %v4037
    %v4042 = vadd.s32 %v4038, 1
    %v4043 = vsel %vm4041, %v4042, %v4038
    %v4044 = vadd.s32 %v4039, %v4043
    %v4045 = vadd.s32 %v4044, 536870912
    %v4046 = vshrl.u32 %v4045, 30
    %v4047 = vshll.u32 %v4046, 30
    %v4048 = vsub.s32 %v4044, %v4047
    %vm4049 = vcmp.lt.s32.totalorder %v4048, 0
    %v4050 = vsub.s32 0, %v4048
    %v4051 = vsel %vm4049, %v4050, %v4048
    %v4052 = vclz %v4051
    %v4053 = vsub.s32 %v4052, 2
    %vm4054 = vcmp.gt.s32.totalorder 0, %v4053
    %v4055 = vsel %vm4054, 0, %v4053
    %v4056 = vsub.s32 32, %v4055
    %v4057 = vshll.u32 %v4048, %v4055
    %v4058 = vshrl.u32 %v4040, %v4056
    %v4059 = vor.u32 %v4057, %v4058
    %v4060 = vsub.s32 4294967266, %v4055
    %v4061 = vadd.s32 %v4060, 127
    %v4062 = vshll.u32 %v4061, 23
    %v4063 = vor.u32 4788187, %v4062
    %v4064 = vand.u32 2147483647, %v4063
    %v4066 = vcvt.s32.f32 %v4059
    %v4067 = vmul.f32 %v4066, %v4064
    %v4068 = vxor.u32 %v4067, 2147483648
    %v4069 = vsel %vm3986, %v4068, %v4067
    %v4070 = vsub.s32 4, %v4046
    %v4071 = vsel %vm3986, %v4070, %v4046
    %v4072 = vsel %vm3985, %v1198, %v4069
    %v4073 = vsel %vm3985, 0, %v4071
    %v4074 = vcosq.f32.pop %v4072
    %v4075 = vsinq.f32.pop %v4072
    %vm4076 = vweird.f32 %v1198
    %v4077 = vand.u32 %v4073, 3
    %vm4078 = vcmp.lt.s32.totalorder %v4077, 2
    %vm4079 = vcmp.eq.s32.totalorder %v4077, 0
    %v4080 = vxor.u32 %v4075, 2147483648
    %v4081 = vsel %vm4079, %v4074, %v4080
    %vm4082 = vcmp.eq.s32.totalorder %v4077, 2
    %v4083 = vxor.u32 %v4074, 2147483648
    %v4084 = vsel %vm4082, %v4083, %v4075
    %v4085 = vsel %vm4078, %v4081, %v4084
    %v4086 = vsel %vm4076, nan, %v4085
    %v4087 = vand.u32 2147483647, %v1199
    %vm4088 = vcmp.le.f32.partialorder %v4087, 0.7853982
    %vm4089 = vcmp.lt.s32.totalorder %v1199, 0
    %v4090 = vand.u32 %v1199, 2139095040
    %v4091 = vshrl.u32 %v4090, 23
    %v4092 = vsub.s32 %v4091, 127
    %v4093 = vand.u32 2147483647, %v1199
    %v4094 = vand.u32 %v4093, 8388607
    %v4095 = vor.u32 %v4094, 8388608
    %v4096 = vsub.s32 0, %v4095
    %v4097 = vadd.s32 %v4092, 1
    %vm4098 = vcmp.gt.s32.totalorder %v4097, 0
    %v4099 = vsel %vm4098, %v4097, 0
    %v4100 = vshrl.u32 %v4099, 5
    %v4101 = vand.u32 %v4099, 31
    %v4102 = vsub.s32 32, %v4101
    %v4103 = vshrl.u32 683565275, %v4102
    %v4104 = vshll.u32 683565275, %v4101
    %v4105 = vshrl.u32 2475754826, %v4102
    %v4106 = vor.u32 %v4104, %v4105
    %v4107 = vshll.u32 2475754826, %v4101
    %v4108 = vshrl.u32 2131351028, %v4102
    %v4109 = vor.u32 %v4107, %v4108
    %v4110 = vshll.u32 2131351028, %v4101
    %v4111 = vshrl.u32 2102212464, %v4102
    %v4112 = vor.u32 %v4110, %v4111
    %v4113 = vshll.u32 2102212464, %v4101
    %v4114 = vshrl.u32 920167782, %v4102
    %v4115 = vor.u32 %v4113, %v4114
    %v4116 = vshll.u32 920167782, %v4101
    %v4117 = vshrl.u32 1326507024, %v4102
    %v4118 = vor.u32 %v4116, %v4117
    %vm4119 = vcmp.lt.s32.totalorder %v4100, 1
    %vm4120 = vcmp.lt.s32.totalorder %v4100, 2
    %vm4121 = vcmp.lt.s32.totalorder %v4100, 3
    %vm4122 = vcmp.lt.s32.totalorder %v4100, 4
    %v4123 = vsel %vm4119, %v4103, %v4106
    %v4124 = vsel %vm4122, %v4112, 2102212464
    %v4125 = vsel %vm4121, %v4109, %v4124
    %v4126 = vsel %vm4120, %v4123, %v4125
    %v4127 = vsel %vm4119, %v4106, %v4109
    %v4128 = vsel %vm4122, %v4115, 920167782
    %v4129 = vsel %vm4121, %v4112, %v4128
    %v4130 = vsel %vm4120, %v4127, %v4129
    %v4131 = vsel %vm4119, %v4109, %v4112
    %v4132 = vsel %vm4122, %v4118, 1326507024
    %v4133 = vsel %vm4121, %v4115, %v4132
    %v4134 = vsel %vm4120, %v4131, %v4133
    %v4135 = vshll.u32 %v4095, 8
    %v4136 = vmul.u32.u64.compose %v4135, %v4134
    %v4137 = vextract.low.u32 %v4136
    %v4138 = vextract.high.u32 %v4136
    %v4139 = vmul.u32.u64.compose %v4135, %v4130
    %v4140 = vextract.low.u32 %v4139
    %v4141 = vextract.high.u32 %v4139
    %v4142 = vmul.u32 %v4135, %v4126
    %v4143 = vadd.s32 %v4138, %v4140
    %vm4144 = vc.u32 %v4138, %v4140
    %v4145 = vadd.s32 %v4141, 1
    %v4146 = vsel %vm4144, %v4145, %v4141
    %v4147 = vadd.s32 %v4142, %v4146
    %v4148 = vadd.s32 %v4147, 536870912
    %v4149 = vshrl.u32 %v4148, 30
    %v4150 = vshll.u32 %v4149, 30
    %v4151 = vsub.s32 %v4147, %v4150
    %vm4152 = vcmp.lt.s32.totalorder %v4151, 0
    %v4153 = vsub.s32 0, %v4151
    %v4154 = vsel %vm4152, %v4153, %v4151
    %v4155 = vclz %v4154
    %v4156 = vsub.s32 %v4155, 2
    %vm4157 = vcmp.gt.s32.totalorder 0, %v4156
    %v4158 = vsel %vm4157, 0, %v4156
    %v4159 = vsub.s32 32, %v4158
    %v4160 = vshll.u32 %v4151, %v4158
    %v4161 = vshrl.u32 %v4143, %v4159
    %v4162 = vor.u32 %v4160, %v4161
    %v4163 = vsub.s32 4294967266, %v4158
    %v4164 = vadd.s32 %v4163, 127
    %v4165 = vshll.u32 %v4164, 23
    %v4166 = vor.u32 4788187, %v4165
    %v4167 = vand.u32 2147483647, %v4166
    %v4169 = vcvt.s32.f32 %v4162
    %v4170 = vmul.f32 %v4169, %v4167
    %v4171 = vxor.u32 %v4170, 2147483648
    %v4172 = vsel %vm4089, %v4171, %v4170
    %v4173 = vsub.s32 4, %v4149
    %v4174 = vsel %vm4089, %v4173, %v4149
    %v4175 = vsel %vm4088, %v1199, %v4172
    %v4176 = vsel %vm4088, 0, %v4174
    %v4177 = vcosq.f32.pop %v4175
    %v4178 = vsinq.f32.pop %v4175
    %vm4179 = vweird.f32 %v1199
    %v4180 = vand.u32 %v4176, 3
    %vm4181 = vcmp.lt.s32.totalorder %v4180, 2
    %vm4182 = vcmp.eq.s32.totalorder %v4180, 0
    %v4183 = vxor.u32 %v4178, 2147483648
    %v4184 = vsel %vm4182, %v4177, %v4183
    %vm4185 = vcmp.eq.s32.totalorder %v4180, 2
    %v4186 = vxor.u32 %v4177, 2147483648
    %v4187 = vsel %vm4185, %v4186, %v4178
    %v4188 = vsel %vm4181, %v4184, %v4187
    %v4189 = vsel %vm4179, nan, %v4188
    %v4190 = vand.u32 2147483647, %v1200
    %vm4191 = vcmp.le.f32.partialorder %v4190, 0.7853982
    %vm4192 = vcmp.lt.s32.totalorder %v1200, 0
    %v4193 = vand.u32 %v1200, 2139095040
    %v4194 = vshrl.u32 %v4193, 23
    %v4195 = vsub.s32 %v4194, 127
    %v4196 = vand.u32 2147483647, %v1200
    %v4197 = vand.u32 %v4196, 8388607
    %v4198 = vor.u32 %v4197, 8388608
    %v4199 = vsub.s32 0, %v4198
    %v4200 = vadd.s32 %v4195, 1
    %vm4201 = vcmp.gt.s32.totalorder %v4200, 0
    %v4202 = vsel %vm4201, %v4200, 0
    %v4203 = vshrl.u32 %v4202, 5
    %v4204 = vand.u32 %v4202, 31
    %v4205 = vsub.s32 32, %v4204
    %v4206 = vshrl.u32 683565275, %v4205
    %v4207 = vshll.u32 683565275, %v4204
    %v4208 = vshrl.u32 2475754826, %v4205
    %v4209 = vor.u32 %v4207, %v4208
    %v4210 = vshll.u32 2475754826, %v4204
    %v4211 = vshrl.u32 2131351028, %v4205
    %v4212 = vor.u32 %v4210, %v4211
    %v4213 = vshll.u32 2131351028, %v4204
    %v4214 = vshrl.u32 2102212464, %v4205
    %v4215 = vor.u32 %v4213, %v4214
    %v4216 = vshll.u32 2102212464, %v4204
    %v4217 = vshrl.u32 920167782, %v4205
    %v4218 = vor.u32 %v4216, %v4217
    %v4219 = vshll.u32 920167782, %v4204
    %v4220 = vshrl.u32 1326507024, %v4205
    %v4221 = vor.u32 %v4219, %v4220
    %vm4222 = vcmp.lt.s32.totalorder %v4203, 1
    %vm4223 = vcmp.lt.s32.totalorder %v4203, 2
    %vm4224 = vcmp.lt.s32.totalorder %v4203, 3
    %vm4225 = vcmp.lt.s32.totalorder %v4203, 4
    %v4226 = vsel %vm4222, %v4206, %v4209
    %v4227 = vsel %vm4225, %v4215, 2102212464
    %v4228 = vsel %vm4224, %v4212, %v4227
    %v4229 = vsel %vm4223, %v4226, %v4228
    %v4230 = vsel %vm4222, %v4209, %v4212
    %v4231 = vsel %vm4225, %v4218, 920167782
    %v4232 = vsel %vm4224, %v4215, %v4231
    %v4233 = vsel %vm4223, %v4230, %v4232
    %v4234 = vsel %vm4222, %v4212, %v4215
    %v4235 = vsel %vm4225, %v4221, 1326507024
    %v4236 = vsel %vm4224, %v4218, %v4235
    %v4237 = vsel %vm4223, %v4234, %v4236
    %v4238 = vshll.u32 %v4198, 8
    %v4239 = vmul.u32.u64.compose %v4238, %v4237
    %v4240 = vextract.low.u32 %v4239
    %v4241 = vextract.high.u32 %v4239
    %v4242 = vmul.u32.u64.compose %v4238, %v4233
    %v4243 = vextract.low.u32 %v4242
    %v4244 = vextract.high.u32 %v4242
    %v4245 = vmul.u32 %v4238, %v4229
    %v4246 = vadd.s32 %v4241, %v4243
    %vm4247 = vc.u32 %v4241, %v4243
    %v4248 = vadd.s32 %v4244, 1
    %v4249 = vsel %vm4247, %v4248, %v4244
    %v4250 = vadd.s32 %v4245, %v4249
    %v4251 = vadd.s32 %v4250, 536870912
    %v4252 = vshrl.u32 %v4251, 30
    %v4253 = vshll.u32 %v4252, 30
    %v4254 = vsub.s32 %v4250, %v4253
    %vm4255 = vcmp.lt.s32.totalorder %v4254, 0
    %v4256 = vsub.s32 0, %v4254
    %v4257 = vsel %vm4255, %v4256, %v4254
    %v4258 = vclz %v4257
    %v4259 = vsub.s32 %v4258, 2
    %vm4260 = vcmp.gt.s32.totalorder 0, %v4259
    %v4261 = vsel %vm4260, 0, %v4259
    %v4262 = vsub.s32 32, %v4261
    %v4263 = vshll.u32 %v4254, %v4261
    %v4264 = vshrl.u32 %v4246, %v4262
    %v4265 = vor.u32 %v4263, %v4264
    %v4266 = vsub.s32 4294967266, %v4261
    %v4267 = vadd.s32 %v4266, 127
    %v4268 = vshll.u32 %v4267, 23
    %v4269 = vor.u32 4788187, %v4268
    %v4270 = vand.u32 2147483647, %v4269
    %v4272 = vcvt.s32.f32 %v4265
    %v4273 = vmul.f32 %v4272, %v4270
    %v4274 = vxor.u32 %v4273, 2147483648
    %v4275 = vsel %vm4192, %v4274, %v4273
    %v4276 = vsub.s32 4, %v4252
    %v4277 = vsel %vm4192, %v4276, %v4252
    %v4278 = vsel %vm4191, %v1200, %v4275
    %v4279 = vsel %vm4191, 0, %v4277
    %v4280 = vcosq.f32.pop %v4278
    %v4281 = vsinq.f32.pop %v4278
    %vm4282 = vweird.f32 %v1200
    %v4283 = vand.u32 %v4279, 3
    %vm4284 = vcmp.lt.s32.totalorder %v4283, 2
    %vm4285 = vcmp.eq.s32.totalorder %v4283, 0
    %v4286 = vxor.u32 %v4281, 2147483648
    %v4287 = vsel %vm4285, %v4280, %v4286
    %vm4288 = vcmp.eq.s32.totalorder %v4283, 2
    %v4289 = vxor.u32 %v4280, 2147483648
    %v4290 = vsel %vm4288, %v4289, %v4281
    %v4291 = vsel %vm4284, %v4287, %v4290
    %v4292 = vsel %vm4282, nan, %v4291
    %v4293 = vand.u32 2147483647, %v1201
    %vm4294 = vcmp.le.f32.partialorder %v4293, 0.7853982
    %vm4295 = vcmp.lt.s32.totalorder %v1201, 0
    %v4296 = vand.u32 %v1201, 2139095040
    %v4297 = vshrl.u32 %v4296, 23
    %v4298 = vsub.s32 %v4297, 127
    %v4299 = vand.u32 2147483647, %v1201
    %v4300 = vand.u32 %v4299, 8388607
    %v4301 = vor.u32 %v4300, 8388608
    %v4302 = vsub.s32 0, %v4301
    %v4303 = vadd.s32 %v4298, 1
    %vm4304 = vcmp.gt.s32.totalorder %v4303, 0
    %v4305 = vsel %vm4304, %v4303, 0
    %v4306 = vshrl.u32 %v4305, 5
    %v4307 = vand.u32 %v4305, 31
    %v4308 = vsub.s32 32, %v4307
    %v4309 = vshrl.u32 683565275, %v4308
    %v4310 = vshll.u32 683565275, %v4307
    %v4311 = vshrl.u32 2475754826, %v4308
    %v4312 = vor.u32 %v4310, %v4311
    %v4313 = vshll.u32 2475754826, %v4307
    %v4314 = vshrl.u32 2131351028, %v4308
    %v4315 = vor.u32 %v4313, %v4314
    %v4316 = vshll.u32 2131351028, %v4307
    %v4317 = vshrl.u32 2102212464, %v4308
    %v4318 = vor.u32 %v4316, %v4317
    %v4319 = vshll.u32 2102212464, %v4307
    %v4320 = vshrl.u32 920167782, %v4308
    %v4321 = vor.u32 %v4319, %v4320
    %v4322 = vshll.u32 920167782, %v4307
    %v4323 = vshrl.u32 1326507024, %v4308
    %v4324 = vor.u32 %v4322, %v4323
    %vm4325 = vcmp.lt.s32.totalorder %v4306, 1
    %vm4326 = vcmp.lt.s32.totalorder %v4306, 2
    %vm4327 = vcmp.lt.s32.totalorder %v4306, 3
    %vm4328 = vcmp.lt.s32.totalorder %v4306, 4
    %v4329 = vsel %vm4325, %v4309, %v4312
    %v4330 = vsel %vm4328, %v4318, 2102212464
    %v4331 = vsel %vm4327, %v4315, %v4330
    %v4332 = vsel %vm4326, %v4329, %v4331
    %v4333 = vsel %vm4325, %v4312, %v4315
    %v4334 = vsel %vm4328, %v4321, 920167782
    %v4335 = vsel %vm4327, %v4318, %v4334
    %v4336 = vsel %vm4326, %v4333, %v4335
    %v4337 = vsel %vm4325, %v4315, %v4318
    %v4338 = vsel %vm4328, %v4324, 1326507024
    %v4339 = vsel %vm4327, %v4321, %v4338
    %v4340 = vsel %vm4326, %v4337, %v4339
    %v4341 = vshll.u32 %v4301, 8
    %v4342 = vmul.u32.u64.compose %v4341, %v4340
    %v4343 = vextract.low.u32 %v4342
    %v4344 = vextract.high.u32 %v4342
    %v4345 = vmul.u32.u64.compose %v4341, %v4336
    %v4346 = vextract.low.u32 %v4345
    %v4347 = vextract.high.u32 %v4345
    %v4348 = vmul.u32 %v4341, %v4332
    %v4349 = vadd.s32 %v4344, %v4346
    %vm4350 = vc.u32 %v4344, %v4346
    %v4351 = vadd.s32 %v4347, 1
    %v4352 = vsel %vm4350, %v4351, %v4347
    %v4353 = vadd.s32 %v4348, %v4352
    %v4354 = vadd.s32 %v4353, 536870912
    %v4355 = vshrl.u32 %v4354, 30
    %v4356 = vshll.u32 %v4355, 30
    %v4357 = vsub.s32 %v4353, %v4356
    %vm4358 = vcmp.lt.s32.totalorder %v4357, 0
    %v4359 = vsub.s32 0, %v4357
    %v4360 = vsel %vm4358, %v4359, %v4357
    %v4361 = vclz %v4360
    %v4362 = vsub.s32 %v4361, 2
    %vm4363 = vcmp.gt.s32.totalorder 0, %v4362
    %v4364 = vsel %vm4363, 0, %v4362
    %v4365 = vsub.s32 32, %v4364
    %v4366 = vshll.u32 %v4357, %v4364
    %v4367 = vshrl.u32 %v4349, %v4365
    %v4368 = vor.u32 %v4366, %v4367
    %v4369 = vsub.s32 4294967266, %v4364
    %v4370 = vadd.s32 %v4369, 127
    %v4371 = vshll.u32 %v4370, 23
    %v4372 = vor.u32 4788187, %v4371
    %v4373 = vand.u32 2147483647, %v4372
    %v4375 = vcvt.s32.f32 %v4368
    %v4376 = vmul.f32 %v4375, %v4373
    %v4377 = vxor.u32 %v4376, 2147483648
    %v4378 = vsel %vm4295, %v4377, %v4376
    %v4379 = vsub.s32 4, %v4355
    %v4380 = vsel %vm4295, %v4379, %v4355
    %v4381 = vsel %vm4294, %v1201, %v4378
    %v4382 = vsel %vm4294, 0, %v4380
    %v4383 = vcosq.f32.pop %v4381
    %v4384 = vsinq.f32.pop %v4381
    %vm4385 = vweird.f32 %v1201
    %v4386 = vand.u32 %v4382, 3
    %vm4387 = vcmp.lt.s32.totalorder %v4386, 2
    %vm4388 = vcmp.eq.s32.totalorder %v4386, 0
    %v4389 = vxor.u32 %v4384, 2147483648
    %v4390 = vsel %vm4388, %v4383, %v4389
    %vm4391 = vcmp.eq.s32.totalorder %v4386, 2
    %v4392 = vxor.u32 %v4383, 2147483648
    %v4393 = vsel %vm4391, %v4392, %v4384
    %v4394 = vsel %vm4387, %v4390, %v4393
    %v4395 = vsel %vm4385, nan, %v4394
    %v4396 = vand.u32 2147483647, %v1202
    %vm4397 = vcmp.le.f32.partialorder %v4396, 0.7853982
    %vm4398 = vcmp.lt.s32.totalorder %v1202, 0
    %v4399 = vand.u32 %v1202, 2139095040
    %v4400 = vshrl.u32 %v4399, 23
    %v4401 = vsub.s32 %v4400, 127
    %v4402 = vand.u32 2147483647, %v1202
    %v4403 = vand.u32 %v4402, 8388607
    %v4404 = vor.u32 %v4403, 8388608
    %v4405 = vsub.s32 0, %v4404
    %v4406 = vadd.s32 %v4401, 1
    %vm4407 = vcmp.gt.s32.totalorder %v4406, 0
    %v4408 = vsel %vm4407, %v4406, 0
    %v4409 = vshrl.u32 %v4408, 5
    %v4410 = vand.u32 %v4408, 31
    %v4411 = vsub.s32 32, %v4410
    %v4412 = vshrl.u32 683565275, %v4411
    %v4413 = vshll.u32 683565275, %v4410
    %v4414 = vshrl.u32 2475754826, %v4411
    %v4415 = vor.u32 %v4413, %v4414
    %v4416 = vshll.u32 2475754826, %v4410
    %v4417 = vshrl.u32 2131351028, %v4411
    %v4418 = vor.u32 %v4416, %v4417
    %v4419 = vshll.u32 2131351028, %v4410
    %v4420 = vshrl.u32 2102212464, %v4411
    %v4421 = vor.u32 %v4419, %v4420
    %v4422 = vshll.u32 2102212464, %v4410
    %v4423 = vshrl.u32 920167782, %v4411
    %v4424 = vor.u32 %v4422, %v4423
    %v4425 = vshll.u32 920167782, %v4410
    %v4426 = vshrl.u32 1326507024, %v4411
    %v4427 = vor.u32 %v4425, %v4426
    %vm4428 = vcmp.lt.s32.totalorder %v4409, 1
    %vm4429 = vcmp.lt.s32.totalorder %v4409, 2
    %vm4430 = vcmp.lt.s32.totalorder %v4409, 3
    %vm4431 = vcmp.lt.s32.totalorder %v4409, 4
    %v4432 = vsel %vm4428, %v4412, %v4415
    %v4433 = vsel %vm4431, %v4421, 2102212464
    %v4434 = vsel %vm4430, %v4418, %v4433
    %v4435 = vsel %vm4429, %v4432, %v4434
    %v4436 = vsel %vm4428, %v4415, %v4418
    %v4437 = vsel %vm4431, %v4424, 920167782
    %v4438 = vsel %vm4430, %v4421, %v4437
    %v4439 = vsel %vm4429, %v4436, %v4438
    %v4440 = vsel %vm4428, %v4418, %v4421
    %v4441 = vsel %vm4431, %v4427, 1326507024
    %v4442 = vsel %vm4430, %v4424, %v4441
    %v4443 = vsel %vm4429, %v4440, %v4442
    %v4444 = vshll.u32 %v4404, 8
    %v4445 = vmul.u32.u64.compose %v4444, %v4443
    %v4446 = vextract.low.u32 %v4445
    %v4447 = vextract.high.u32 %v4445
    %v4448 = vmul.u32.u64.compose %v4444, %v4439
    %v4449 = vextract.low.u32 %v4448
    %v4450 = vextract.high.u32 %v4448
    %v4451 = vmul.u32 %v4444, %v4435
    %v4452 = vadd.s32 %v4447, %v4449
    %vm4453 = vc.u32 %v4447, %v4449
    %v4454 = vadd.s32 %v4450, 1
    %v4455 = vsel %vm4453, %v4454, %v4450
    %v4456 = vadd.s32 %v4451, %v4455
    %v4457 = vadd.s32 %v4456, 536870912
    %v4458 = vshrl.u32 %v4457, 30
    %v4459 = vshll.u32 %v4458, 30
    %v4460 = vsub.s32 %v4456, %v4459
    %vm4461 = vcmp.lt.s32.totalorder %v4460, 0
    %v4462 = vsub.s32 0, %v4460
    %v4463 = vsel %vm4461, %v4462, %v4460
    %v4464 = vclz %v4463
    %v4465 = vsub.s32 %v4464, 2
    %vm4466 = vcmp.gt.s32.totalorder 0, %v4465
    %v4467 = vsel %vm4466, 0, %v4465
    %v4468 = vsub.s32 32, %v4467
    %v4469 = vshll.u32 %v4460, %v4467
    %v4470 = vshrl.u32 %v4452, %v4468
    %v4471 = vor.u32 %v4469, %v4470
    %v4472 = vsub.s32 4294967266, %v4467
    %v4473 = vadd.s32 %v4472, 127
    %v4474 = vshll.u32 %v4473, 23
    %v4475 = vor.u32 4788187, %v4474
    %v4476 = vand.u32 2147483647, %v4475
    %v4478 = vcvt.s32.f32 %v4471
    %v4479 = vmul.f32 %v4478, %v4476
    %v4480 = vxor.u32 %v4479, 2147483648
    %v4481 = vsel %vm4398, %v4480, %v4479
    %v4482 = vsub.s32 4, %v4458
    %v4483 = vsel %vm4398, %v4482, %v4458
    %v4484 = vsel %vm4397, %v1202, %v4481
    %v4485 = vsel %vm4397, 0, %v4483
    %v4486 = vcosq.f32.pop %v4484
    %v4487 = vsinq.f32.pop %v4484
    %vm4488 = vweird.f32 %v1202
    %v4489 = vand.u32 %v4485, 3
    %vm4490 = vcmp.lt.s32.totalorder %v4489, 2
    %vm4491 = vcmp.eq.s32.totalorder %v4489, 0
    %v4492 = vxor.u32 %v4487, 2147483648
    %v4493 = vsel %vm4491, %v4486, %v4492
    %vm4494 = vcmp.eq.s32.totalorder %v4489, 2
    %v4495 = vxor.u32 %v4486, 2147483648
    %v4496 = vsel %vm4494, %v4495, %v4487
    %v4497 = vsel %vm4490, %v4493, %v4496
    %v4498 = vsel %vm4488, nan, %v4497
    %v4499 = vmul.f32 %v1075, %v1305
    %v4500 = vmul.f32 %v1077, %v1408
    %v4501 = vmul.f32 %v1079, %v1511
    %v4502 = vmul.f32 %v1081, %v1614
    %v4503 = vmul.f32 %v1083, %v1717
    %v4504 = vmul.f32 %v1085, %v1820
    %v4505 = vmul.f32 %v1087, %v1923
    %v4506 = vmul.f32 %v1089, %v2026
    %v4507 = vmul.f32 %v1091, %v2129
    %v4508 = vmul.f32 %v1093, %v2232
    %v4509 = vmul.f32 %v1095, %v2335
    %v4510 = vmul.f32 %v1097, %v2438
    %v4511 = vmul.f32 %v1099, %v2541
    %v4512 = vmul.f32 %v1101, %v2644
    %v4513 = vmul.f32 %v1103, %v2747
    %v4514 = vmul.f32 %v1105, %v2850
    %v4515 = vmul.f32 %v1107, %v2953
    %v4516 = vmul.f32 %v1109, %v3056
    %v4517 = vmul.f32 %v1111, %v3159
    %v4518 = vmul.f32 %v1113, %v3262
    %v4519 = vmul.f32 %v1115, %v3365
    %v4520 = vmul.f32 %v1117, %v3468
    %v4521 = vmul.f32 %v1119, %v3571
    %v4522 = vmul.f32 %v1121, %v3674
    %v4523 = vmul.f32 %v1123, %v3777
    %v4524 = vmul.f32 %v1125, %v3880
    %v4525 = vmul.f32 %v1127, %v3983
    %v4526 = vmul.f32 %v1129, %v4086
    %v4527 = vmul.f32 %v1131, %v4189
    %v4528 = vmul.f32 %v1133, %v4292
    %v4529 = vmul.f32 %v1135, %v4395
    %v4530 = vmul.f32 %v1137, %v4498
    %v4531 = vpack.c.bf16 %v4500, %v4499
    %v4532 = vpack.c.bf16 %v4502, %v4501
    %v4533 = vpack.c.bf16 %v4504, %v4503
    %v4534 = vpack.c.bf16 %v4506, %v4505
    %v4535 = vpack.c.bf16 %v4508, %v4507
    %v4536 = vpack.c.bf16 %v4510, %v4509
    %v4537 = vpack.c.bf16 %v4512, %v4511
    %v4538 = vpack.c.bf16 %v4514, %v4513
    %v4539 = vpack.c.bf16 %v4516, %v4515
    %v4540 = vpack.c.bf16 %v4518, %v4517
    %v4541 = vpack.c.bf16 %v4520, %v4519
    %v4542 = vpack.c.bf16 %v4522, %v4521
    %v4543 = vpack.c.bf16 %v4524, %v4523
    %v4544 = vpack.c.bf16 %v4526, %v4525
    %v4545 = vpack.c.bf16 %v4528, %v4527
    %v4546 = vpack.c.bf16 %v4530, %v4529
    %v4547 = vand.u32 2147483647, %v1171
    %vm4548 = vcmp.le.f32.partialorder %v4547, 0.7853982
    %vm4549 = vcmp.lt.s32.totalorder %v1171, 0
    %v4550 = vand.u32 %v1171, 2139095040
    %v4551 = vshrl.u32 %v4550, 23
    %v4552 = vsub.s32 %v4551, 127
    %v4553 = vand.u32 2147483647, %v1171
    %v4554 = vand.u32 %v4553, 8388607
    %v4555 = vor.u32 %v4554, 8388608
    %v4556 = vsub.s32 0, %v4555
    %v4557 = vadd.s32 %v4552, 1
    %vm4558 = vcmp.gt.s32.totalorder %v4557, 0
    %v4559 = vsel %vm4558, %v4557, 0
    %v4560 = vshrl.u32 %v4559, 5
    %v4561 = vand.u32 %v4559, 31
    %v4562 = vsub.s32 32, %v4561
    %v4563 = vshrl.u32 683565275, %v4562
    %v4564 = vshll.u32 683565275, %v4561
    %v4565 = vshrl.u32 2475754826, %v4562
    %v4566 = vor.u32 %v4564, %v4565
    %v4567 = vshll.u32 2475754826, %v4561
    %v4568 = vshrl.u32 2131351028, %v4562
    %v4569 = vor.u32 %v4567, %v4568
    %v4570 = vshll.u32 2131351028, %v4561
    %v4571 = vshrl.u32 2102212464, %v4562
    %v4572 = vor.u32 %v4570, %v4571
    %v4573 = vshll.u32 2102212464, %v4561
    %v4574 = vshrl.u32 920167782, %v4562
    %v4575 = vor.u32 %v4573, %v4574
    %v4576 = vshll.u32 920167782, %v4561
    %v4577 = vshrl.u32 1326507024, %v4562
    %v4578 = vor.u32 %v4576, %v4577
    %vm4579 = vcmp.lt.s32.totalorder %v4560, 1
    %vm4580 = vcmp.lt.s32.totalorder %v4560, 2
    %vm4581 = vcmp.lt.s32.totalorder %v4560, 3
    %vm4582 = vcmp.lt.s32.totalorder %v4560, 4
    %v4583 = vsel %vm4579, %v4563, %v4566
    %v4584 = vsel %vm4582, %v4572, 2102212464
    %v4585 = vsel %vm4581, %v4569, %v4584
    %v4586 = vsel %vm4580, %v4583, %v4585
    %v4587 = vsel %vm4579, %v4566, %v4569
    %v4588 = vsel %vm4582, %v4575, 920167782
    %v4589 = vsel %vm4581, %v4572, %v4588
    %v4590 = vsel %vm4580, %v4587, %v4589
    %v4591 = vsel %vm4579, %v4569, %v4572
    %v4592 = vsel %vm4582, %v4578, 1326507024
    %v4593 = vsel %vm4581, %v4575, %v4592
    %v4594 = vsel %vm4580, %v4591, %v4593
    %v4595 = vshll.u32 %v4555, 8
    %v4596 = vmul.u32.u64.compose %v4595, %v4594
    %v4597 = vextract.low.u32 %v4596
    %v4598 = vextract.high.u32 %v4596
    %v4599 = vmul.u32.u64.compose %v4595, %v4590
    %v4600 = vextract.low.u32 %v4599
    %v4601 = vextract.high.u32 %v4599
    %v4602 = vmul.u32 %v4595, %v4586
    %v4603 = vadd.s32 %v4598, %v4600
    %vm4604 = vc.u32 %v4598, %v4600
    %v4605 = vadd.s32 %v4601, 1
    %v4606 = vsel %vm4604, %v4605, %v4601
    %v4607 = vadd.s32 %v4602, %v4606
    %v4608 = vadd.s32 %v4607, 536870912
    %v4609 = vshrl.u32 %v4608, 30
    %v4610 = vshll.u32 %v4609, 30
    %v4611 = vsub.s32 %v4607, %v4610
    %vm4612 = vcmp.lt.s32.totalorder %v4611, 0
    %v4613 = vsub.s32 0, %v4611
    %v4614 = vsel %vm4612, %v4613, %v4611
    %v4615 = vclz %v4614
    %v4616 = vsub.s32 %v4615, 2
    %vm4617 = vcmp.gt.s32.totalorder 0, %v4616
    %v4618 = vsel %vm4617, 0, %v4616
    %v4619 = vsub.s32 32, %v4618
    %v4620 = vshll.u32 %v4611, %v4618
    %v4621 = vshrl.u32 %v4603, %v4619
    %v4622 = vor.u32 %v4620, %v4621
    %v4623 = vsub.s32 4294967266, %v4618
    %v4624 = vadd.s32 %v4623, 127
    %v4625 = vshll.u32 %v4624, 23
    %v4626 = vor.u32 4788187, %v4625
    %v4627 = vand.u32 2147483647, %v4626
    %v4629 = vcvt.s32.f32 %v4622
    %v4630 = vmul.f32 %v4629, %v4627
    %v4631 = vxor.u32 %v4630, 2147483648
    %v4632 = vsel %vm4549, %v4631, %v4630
    %v4633 = vsub.s32 4, %v4609
    %v4634 = vsel %vm4549, %v4633, %v4609
    %v4635 = vsel %vm4548, %v1171, %v4632
    %v4636 = vsel %vm4548, 0, %v4634
    %v4637 = vcosq.f32.pop %v4635
    %v4638 = vsinq.f32.pop %v4635
    %vm4639 = vweird.f32 %v1171
    %v4640 = vadd.s32 %v4636, 3
    %v4641 = vand.u32 %v4640, 3
    %vm4642 = vcmp.lt.s32.totalorder %v4641, 2
    %vm4643 = vcmp.eq.s32.totalorder %v4641, 0
    %v4644 = vxor.u32 %v4638, 2147483648
    %v4645 = vsel %vm4643, %v4637, %v4644
    %vm4646 = vcmp.eq.s32.totalorder %v4641, 2
    %v4647 = vxor.u32 %v4637, 2147483648
    %v4648 = vsel %vm4646, %v4647, %v4638
    %v4649 = vsel %vm4642, %v4645, %v4648
    %v4650 = vsel %vm4639, nan, %v4649
    %v4651 = vand.u32 2147483647, %v1172
    %vm4652 = vcmp.le.f32.partialorder %v4651, 0.7853982
    %vm4653 = vcmp.lt.s32.totalorder %v1172, 0
    %v4654 = vand.u32 %v1172, 2139095040
    %v4655 = vshrl.u32 %v4654, 23
    %v4656 = vsub.s32 %v4655, 127
    %v4657 = vand.u32 2147483647, %v1172
    %v4658 = vand.u32 %v4657, 8388607
    %v4659 = vor.u32 %v4658, 8388608
    %v4660 = vsub.s32 0, %v4659
    %v4661 = vadd.s32 %v4656, 1
    %vm4662 = vcmp.gt.s32.totalorder %v4661, 0
    %v4663 = vsel %vm4662, %v4661, 0
    %v4664 = vshrl.u32 %v4663, 5
    %v4665 = vand.u32 %v4663, 31
    %v4666 = vsub.s32 32, %v4665
    %v4667 = vshrl.u32 683565275, %v4666
    %v4668 = vshll.u32 683565275, %v4665
    %v4669 = vshrl.u32 2475754826, %v4666
    %v4670 = vor.u32 %v4668, %v4669
    %v4671 = vshll.u32 2475754826, %v4665
    %v4672 = vshrl.u32 2131351028, %v4666
    %v4673 = vor.u32 %v4671, %v4672
    %v4674 = vshll.u32 2131351028, %v4665
    %v4675 = vshrl.u32 2102212464, %v4666
    %v4676 = vor.u32 %v4674, %v4675
    %v4677 = vshll.u32 2102212464, %v4665
    %v4678 = vshrl.u32 920167782, %v4666
    %v4679 = vor.u32 %v4677, %v4678
    %v4680 = vshll.u32 920167782, %v4665
    %v4681 = vshrl.u32 1326507024, %v4666
    %v4682 = vor.u32 %v4680, %v4681
    %vm4683 = vcmp.lt.s32.totalorder %v4664, 1
    %vm4684 = vcmp.lt.s32.totalorder %v4664, 2
    %vm4685 = vcmp.lt.s32.totalorder %v4664, 3
    %vm4686 = vcmp.lt.s32.totalorder %v4664, 4
    %v4687 = vsel %vm4683, %v4667, %v4670
    %v4688 = vsel %vm4686, %v4676, 2102212464
    %v4689 = vsel %vm4685, %v4673, %v4688
    %v4690 = vsel %vm4684, %v4687, %v4689
    %v4691 = vsel %vm4683, %v4670, %v4673
    %v4692 = vsel %vm4686, %v4679, 920167782
    %v4693 = vsel %vm4685, %v4676, %v4692
    %v4694 = vsel %vm4684, %v4691, %v4693
    %v4695 = vsel %vm4683, %v4673, %v4676
    %v4696 = vsel %vm4686, %v4682, 1326507024
    %v4697 = vsel %vm4685, %v4679, %v4696
    %v4698 = vsel %vm4684, %v4695, %v4697
    %v4699 = vshll.u32 %v4659, 8
    %v4700 = vmul.u32.u64.compose %v4699, %v4698
    %v4701 = vextract.low.u32 %v4700
    %v4702 = vextract.high.u32 %v4700
    %v4703 = vmul.u32.u64.compose %v4699, %v4694
    %v4704 = vextract.low.u32 %v4703
    %v4705 = vextract.high.u32 %v4703
    %v4706 = vmul.u32 %v4699, %v4690
    %v4707 = vadd.s32 %v4702, %v4704
    %vm4708 = vc.u32 %v4702, %v4704
    %v4709 = vadd.s32 %v4705, 1
    %v4710 = vsel %vm4708, %v4709, %v4705
    %v4711 = vadd.s32 %v4706, %v4710
    %v4712 = vadd.s32 %v4711, 536870912
    %v4713 = vshrl.u32 %v4712, 30
    %v4714 = vshll.u32 %v4713, 30
    %v4715 = vsub.s32 %v4711, %v4714
    %vm4716 = vcmp.lt.s32.totalorder %v4715, 0
    %v4717 = vsub.s32 0, %v4715
    %v4718 = vsel %vm4716, %v4717, %v4715
    %v4719 = vclz %v4718
    %v4720 = vsub.s32 %v4719, 2
    %vm4721 = vcmp.gt.s32.totalorder 0, %v4720
    %v4722 = vsel %vm4721, 0, %v4720
    %v4723 = vsub.s32 32, %v4722
    %v4724 = vshll.u32 %v4715, %v4722
    %v4725 = vshrl.u32 %v4707, %v4723
    %v4726 = vor.u32 %v4724, %v4725
    %v4727 = vsub.s32 4294967266, %v4722
    %v4728 = vadd.s32 %v4727, 127
    %v4729 = vshll.u32 %v4728, 23
    %v4730 = vor.u32 4788187, %v4729
    %v4731 = vand.u32 2147483647, %v4730
    %v4733 = vcvt.s32.f32 %v4726
    %v4734 = vmul.f32 %v4733, %v4731
    %v4735 = vxor.u32 %v4734, 2147483648
    %v4736 = vsel %vm4653, %v4735, %v4734
    %v4737 = vsub.s32 4, %v4713
    %v4738 = vsel %vm4653, %v4737, %v4713
    %v4739 = vsel %vm4652, %v1172, %v4736
    %v4740 = vsel %vm4652, 0, %v4738
    %v4741 = vcosq.f32.pop %v4739
    %v4742 = vsinq.f32.pop %v4739
    %vm4743 = vweird.f32 %v1172
    %v4744 = vadd.s32 %v4740, 3
    %v4745 = vand.u32 %v4744, 3
    %vm4746 = vcmp.lt.s32.totalorder %v4745, 2
    %vm4747 = vcmp.eq.s32.totalorder %v4745, 0
    %v4748 = vxor.u32 %v4742, 2147483648
    %v4749 = vsel %vm4747, %v4741, %v4748
    %vm4750 = vcmp.eq.s32.totalorder %v4745, 2
    %v4751 = vxor.u32 %v4741, 2147483648
    %v4752 = vsel %vm4750, %v4751, %v4742
    %v4753 = vsel %vm4746, %v4749, %v4752
    %v4754 = vsel %vm4743, nan, %v4753
    %v4755 = vand.u32 2147483647, %v1173
    %vm4756 = vcmp.le.f32.partialorder %v4755, 0.7853982
    %vm4757 = vcmp.lt.s32.totalorder %v1173, 0
    %v4758 = vand.u32 %v1173, 2139095040
    %v4759 = vshrl.u32 %v4758, 23
    %v4760 = vsub.s32 %v4759, 127
    %v4761 = vand.u32 2147483647, %v1173
    %v4762 = vand.u32 %v4761, 8388607
    %v4763 = vor.u32 %v4762, 8388608
    %v4764 = vsub.s32 0, %v4763
    %v4765 = vadd.s32 %v4760, 1
    %vm4766 = vcmp.gt.s32.totalorder %v4765, 0
    %v4767 = vsel %vm4766, %v4765, 0
    %v4768 = vshrl.u32 %v4767, 5
    %v4769 = vand.u32 %v4767, 31
    %v4770 = vsub.s32 32, %v4769
    %v4771 = vshrl.u32 683565275, %v4770
    %v4772 = vshll.u32 683565275, %v4769
    %v4773 = vshrl.u32 2475754826, %v4770
    %v4774 = vor.u32 %v4772, %v4773
    %v4775 = vshll.u32 2475754826, %v4769
    %v4776 = vshrl.u32 2131351028, %v4770
    %v4777 = vor.u32 %v4775, %v4776
    %v4778 = vshll.u32 2131351028, %v4769
    %v4779 = vshrl.u32 2102212464, %v4770
    %v4780 = vor.u32 %v4778, %v4779
    %v4781 = vshll.u32 2102212464, %v4769
    %v4782 = vshrl.u32 920167782, %v4770
    %v4783 = vor.u32 %v4781, %v4782
    %v4784 = vshll.u32 920167782, %v4769
    %v4785 = vshrl.u32 1326507024, %v4770
    %v4786 = vor.u32 %v4784, %v4785
    %vm4787 = vcmp.lt.s32.totalorder %v4768, 1
    %vm4788 = vcmp.lt.s32.totalorder %v4768, 2
    %vm4789 = vcmp.lt.s32.totalorder %v4768, 3
    %vm4790 = vcmp.lt.s32.totalorder %v4768, 4
    %v4791 = vsel %vm4787, %v4771, %v4774
    %v4792 = vsel %vm4790, %v4780, 2102212464
    %v4793 = vsel %vm4789, %v4777, %v4792
    %v4794 = vsel %vm4788, %v4791, %v4793
    %v4795 = vsel %vm4787, %v4774, %v4777
    %v4796 = vsel %vm4790, %v4783, 920167782
    %v4797 = vsel %vm4789, %v4780, %v4796
    %v4798 = vsel %vm4788, %v4795, %v4797
    %v4799 = vsel %vm4787, %v4777, %v4780
    %v4800 = vsel %vm4790, %v4786, 1326507024
    %v4801 = vsel %vm4789, %v4783, %v4800
    %v4802 = vsel %vm4788, %v4799, %v4801
    %v4803 = vshll.u32 %v4763, 8
    %v4804 = vmul.u32.u64.compose %v4803, %v4802
    %v4805 = vextract.low.u32 %v4804
    %v4806 = vextract.high.u32 %v4804
    %v4807 = vmul.u32.u64.compose %v4803, %v4798
    %v4808 = vextract.low.u32 %v4807
    %v4809 = vextract.high.u32 %v4807
    %v4810 = vmul.u32 %v4803, %v4794
    %v4811 = vadd.s32 %v4806, %v4808
    %vm4812 = vc.u32 %v4806, %v4808
    %v4813 = vadd.s32 %v4809, 1
    %v4814 = vsel %vm4812, %v4813, %v4809
    %v4815 = vadd.s32 %v4810, %v4814
    %v4816 = vadd.s32 %v4815, 536870912
    %v4817 = vshrl.u32 %v4816, 30
    %v4818 = vshll.u32 %v4817, 30
    %v4819 = vsub.s32 %v4815, %v4818
    %vm4820 = vcmp.lt.s32.totalorder %v4819, 0
    %v4821 = vsub.s32 0, %v4819
    %v4822 = vsel %vm4820, %v4821, %v4819
    %v4823 = vclz %v4822
    %v4824 = vsub.s32 %v4823, 2
    %vm4825 = vcmp.gt.s32.totalorder 0, %v4824
    %v4826 = vsel %vm4825, 0, %v4824
    %v4827 = vsub.s32 32, %v4826
    %v4828 = vshll.u32 %v4819, %v4826
    %v4829 = vshrl.u32 %v4811, %v4827
    %v4830 = vor.u32 %v4828, %v4829
    %v4831 = vsub.s32 4294967266, %v4826
    %v4832 = vadd.s32 %v4831, 127
    %v4833 = vshll.u32 %v4832, 23
    %v4834 = vor.u32 4788187, %v4833
    %v4835 = vand.u32 2147483647, %v4834
    %v4837 = vcvt.s32.f32 %v4830
    %v4838 = vmul.f32 %v4837, %v4835
    %v4839 = vxor.u32 %v4838, 2147483648
    %v4840 = vsel %vm4757, %v4839, %v4838
    %v4841 = vsub.s32 4, %v4817
    %v4842 = vsel %vm4757, %v4841, %v4817
    %v4843 = vsel %vm4756, %v1173, %v4840
    %v4844 = vsel %vm4756, 0, %v4842
    %v4845 = vcosq.f32.pop %v4843
    %v4846 = vsinq.f32.pop %v4843
    %vm4847 = vweird.f32 %v1173
    %v4848 = vadd.s32 %v4844, 3
    %v4849 = vand.u32 %v4848, 3
    %vm4850 = vcmp.lt.s32.totalorder %v4849, 2
    %vm4851 = vcmp.eq.s32.totalorder %v4849, 0
    %v4852 = vxor.u32 %v4846, 2147483648
    %v4853 = vsel %vm4851, %v4845, %v4852
    %vm4854 = vcmp.eq.s32.totalorder %v4849, 2
    %v4855 = vxor.u32 %v4845, 2147483648
    %v4856 = vsel %vm4854, %v4855, %v4846
    %v4857 = vsel %vm4850, %v4853, %v4856
    %v4858 = vsel %vm4847, nan, %v4857
    %v4859 = vand.u32 2147483647, %v1174
    %vm4860 = vcmp.le.f32.partialorder %v4859, 0.7853982
    %vm4861 = vcmp.lt.s32.totalorder %v1174, 0
    %v4862 = vand.u32 %v1174, 2139095040
    %v4863 = vshrl.u32 %v4862, 23
    %v4864 = vsub.s32 %v4863, 127
    %v4865 = vand.u32 2147483647, %v1174
    %v4866 = vand.u32 %v4865, 8388607
    %v4867 = vor.u32 %v4866, 8388608
    %v4868 = vsub.s32 0, %v4867
    %v4869 = vadd.s32 %v4864, 1
    %vm4870 = vcmp.gt.s32.totalorder %v4869, 0
    %v4871 = vsel %vm4870, %v4869, 0
    %v4872 = vshrl.u32 %v4871, 5
    %v4873 = vand.u32 %v4871, 31
    %v4874 = vsub.s32 32, %v4873
    %v4875 = vshrl.u32 683565275, %v4874
    %v4876 = vshll.u32 683565275, %v4873
    %v4877 = vshrl.u32 2475754826, %v4874
    %v4878 = vor.u32 %v4876, %v4877
    %v4879 = vshll.u32 2475754826, %v4873
    %v4880 = vshrl.u32 2131351028, %v4874
    %v4881 = vor.u32 %v4879, %v4880
    %v4882 = vshll.u32 2131351028, %v4873
    %v4883 = vshrl.u32 2102212464, %v4874
    %v4884 = vor.u32 %v4882, %v4883
    %v4885 = vshll.u32 2102212464, %v4873
    %v4886 = vshrl.u32 920167782, %v4874
    %v4887 = vor.u32 %v4885, %v4886
    %v4888 = vshll.u32 920167782, %v4873
    %v4889 = vshrl.u32 1326507024, %v4874
    %v4890 = vor.u32 %v4888, %v4889
    %vm4891 = vcmp.lt.s32.totalorder %v4872, 1
    %vm4892 = vcmp.lt.s32.totalorder %v4872, 2
    %vm4893 = vcmp.lt.s32.totalorder %v4872, 3
    %vm4894 = vcmp.lt.s32.totalorder %v4872, 4
    %v4895 = vsel %vm4891, %v4875, %v4878
    %v4896 = vsel %vm4894, %v4884, 2102212464
    %v4897 = vsel %vm4893, %v4881, %v4896
    %v4898 = vsel %vm4892, %v4895, %v4897
    %v4899 = vsel %vm4891, %v4878, %v4881
    %v4900 = vsel %vm4894, %v4887, 920167782
    %v4901 = vsel %vm4893, %v4884, %v4900
    %v4902 = vsel %vm4892, %v4899, %v4901
    %v4903 = vsel %vm4891, %v4881, %v4884
    %v4904 = vsel %vm4894, %v4890, 1326507024
    %v4905 = vsel %vm4893, %v4887, %v4904
    %v4906 = vsel %vm4892, %v4903, %v4905
    %v4907 = vshll.u32 %v4867, 8
    %v4908 = vmul.u32.u64.compose %v4907, %v4906
    %v4909 = vextract.low.u32 %v4908
    %v4910 = vextract.high.u32 %v4908
    %v4911 = vmul.u32.u64.compose %v4907, %v4902
    %v4912 = vextract.low.u32 %v4911
    %v4913 = vextract.high.u32 %v4911
    %v4914 = vmul.u32 %v4907, %v4898
    %v4915 = vadd.s32 %v4910, %v4912
    %vm4916 = vc.u32 %v4910, %v4912
    %v4917 = vadd.s32 %v4913, 1
    %v4918 = vsel %vm4916, %v4917, %v4913
    %v4919 = vadd.s32 %v4914, %v4918
    %v4920 = vadd.s32 %v4919, 536870912
    %v4921 = vshrl.u32 %v4920, 30
    %v4922 = vshll.u32 %v4921, 30
    %v4923 = vsub.s32 %v4919, %v4922
    %vm4924 = vcmp.lt.s32.totalorder %v4923, 0
    %v4925 = vsub.s32 0, %v4923
    %v4926 = vsel %vm4924, %v4925, %v4923
    %v4927 = vclz %v4926
    %v4928 = vsub.s32 %v4927, 2
    %vm4929 = vcmp.gt.s32.totalorder 0, %v4928
    %v4930 = vsel %vm4929, 0, %v4928
    %v4931 = vsub.s32 32, %v4930
    %v4932 = vshll.u32 %v4923, %v4930
    %v4933 = vshrl.u32 %v4915, %v4931
    %v4934 = vor.u32 %v4932, %v4933
    %v4935 = vsub.s32 4294967266, %v4930
    %v4936 = vadd.s32 %v4935, 127
    %v4937 = vshll.u32 %v4936, 23
    %v4938 = vor.u32 4788187, %v4937
    %v4939 = vand.u32 2147483647, %v4938
    %v4941 = vcvt.s32.f32 %v4934
    %v4942 = vmul.f32 %v4941, %v4939
    %v4943 = vxor.u32 %v4942, 2147483648
    %v4944 = vsel %vm4861, %v4943, %v4942
    %v4945 = vsub.s32 4, %v4921
    %v4946 = vsel %vm4861, %v4945, %v4921
    %v4947 = vsel %vm4860, %v1174, %v4944
    %v4948 = vsel %vm4860, 0, %v4946
    %v4949 = vcosq.f32.pop %v4947
    %v4950 = vsinq.f32.pop %v4947
    %vm4951 = vweird.f32 %v1174
    %v4952 = vadd.s32 %v4948, 3
    %v4953 = vand.u32 %v4952, 3
    %vm4954 = vcmp.lt.s32.totalorder %v4953, 2
    %vm4955 = vcmp.eq.s32.totalorder %v4953, 0
    %v4956 = vxor.u32 %v4950, 2147483648
    %v4957 = vsel %vm4955, %v4949, %v4956
    %vm4958 = vcmp.eq.s32.totalorder %v4953, 2
    %v4959 = vxor.u32 %v4949, 2147483648
    %v4960 = vsel %vm4958, %v4959, %v4950
    %v4961 = vsel %vm4954, %v4957, %v4960
    %v4962 = vsel %vm4951, nan, %v4961
    %v4963 = vand.u32 2147483647, %v1175
    %vm4964 = vcmp.le.f32.partialorder %v4963, 0.7853982
    %vm4965 = vcmp.lt.s32.totalorder %v1175, 0
    %v4966 = vand.u32 %v1175, 2139095040
    %v4967 = vshrl.u32 %v4966, 23
    %v4968 = vsub.s32 %v4967, 127
    %v4969 = vand.u32 2147483647, %v1175
    %v4970 = vand.u32 %v4969, 8388607
    %v4971 = vor.u32 %v4970, 8388608
    %v4972 = vsub.s32 0, %v4971
    %v4973 = vadd.s32 %v4968, 1
    %vm4974 = vcmp.gt.s32.totalorder %v4973, 0
    %v4975 = vsel %vm4974, %v4973, 0
    %v4976 = vshrl.u32 %v4975, 5
    %v4977 = vand.u32 %v4975, 31
    %v4978 = vsub.s32 32, %v4977
    %v4979 = vshrl.u32 683565275, %v4978
    %v4980 = vshll.u32 683565275, %v4977
    %v4981 = vshrl.u32 2475754826, %v4978
    %v4982 = vor.u32 %v4980, %v4981
    %v4983 = vshll.u32 2475754826, %v4977
    %v4984 = vshrl.u32 2131351028, %v4978
    %v4985 = vor.u32 %v4983, %v4984
    %v4986 = vshll.u32 2131351028, %v4977
    %v4987 = vshrl.u32 2102212464, %v4978
    %v4988 = vor.u32 %v4986, %v4987
    %v4989 = vshll.u32 2102212464, %v4977
    %v4990 = vshrl.u32 920167782, %v4978
    %v4991 = vor.u32 %v4989, %v4990
    %v4992 = vshll.u32 920167782, %v4977
    %v4993 = vshrl.u32 1326507024, %v4978
    %v4994 = vor.u32 %v4992, %v4993
    %vm4995 = vcmp.lt.s32.totalorder %v4976, 1
    %vm4996 = vcmp.lt.s32.totalorder %v4976, 2
    %vm4997 = vcmp.lt.s32.totalorder %v4976, 3
    %vm4998 = vcmp.lt.s32.totalorder %v4976, 4
    %v4999 = vsel %vm4995, %v4979, %v4982
    %v5000 = vsel %vm4998, %v4988, 2102212464
    %v5001 = vsel %vm4997, %v4985, %v5000
    %v5002 = vsel %vm4996, %v4999, %v5001
    %v5003 = vsel %vm4995, %v4982, %v4985
    %v5004 = vsel %vm4998, %v4991, 920167782
    %v5005 = vsel %vm4997, %v4988, %v5004
    %v5006 = vsel %vm4996, %v5003, %v5005
    %v5007 = vsel %vm4995, %v4985, %v4988
    %v5008 = vsel %vm4998, %v4994, 1326507024
    %v5009 = vsel %vm4997, %v4991, %v5008
    %v5010 = vsel %vm4996, %v5007, %v5009
    %v5011 = vshll.u32 %v4971, 8
    %v5012 = vmul.u32.u64.compose %v5011, %v5010
    %v5013 = vextract.low.u32 %v5012
    %v5014 = vextract.high.u32 %v5012
    %v5015 = vmul.u32.u64.compose %v5011, %v5006
    %v5016 = vextract.low.u32 %v5015
    %v5017 = vextract.high.u32 %v5015
    %v5018 = vmul.u32 %v5011, %v5002
    %v5019 = vadd.s32 %v5014, %v5016
    %vm5020 = vc.u32 %v5014, %v5016
    %v5021 = vadd.s32 %v5017, 1
    %v5022 = vsel %vm5020, %v5021, %v5017
    %v5023 = vadd.s32 %v5018, %v5022
    %v5024 = vadd.s32 %v5023, 536870912
    %v5025 = vshrl.u32 %v5024, 30
    %v5026 = vshll.u32 %v5025, 30
    %v5027 = vsub.s32 %v5023, %v5026
    %vm5028 = vcmp.lt.s32.totalorder %v5027, 0
    %v5029 = vsub.s32 0, %v5027
    %v5030 = vsel %vm5028, %v5029, %v5027
    %v5031 = vclz %v5030
    %v5032 = vsub.s32 %v5031, 2
    %vm5033 = vcmp.gt.s32.totalorder 0, %v5032
    %v5034 = vsel %vm5033, 0, %v5032
    %v5035 = vsub.s32 32, %v5034
    %v5036 = vshll.u32 %v5027, %v5034
    %v5037 = vshrl.u32 %v5019, %v5035
    %v5038 = vor.u32 %v5036, %v5037
    %v5039 = vsub.s32 4294967266, %v5034
    %v5040 = vadd.s32 %v5039, 127
    %v5041 = vshll.u32 %v5040, 23
    %v5042 = vor.u32 4788187, %v5041
    %v5043 = vand.u32 2147483647, %v5042
    %v5045 = vcvt.s32.f32 %v5038
    %v5046 = vmul.f32 %v5045, %v5043
    %v5047 = vxor.u32 %v5046, 2147483648
    %v5048 = vsel %vm4965, %v5047, %v5046
    %v5049 = vsub.s32 4, %v5025
    %v5050 = vsel %vm4965, %v5049, %v5025
    %v5051 = vsel %vm4964, %v1175, %v5048
    %v5052 = vsel %vm4964, 0, %v5050
    %v5053 = vcosq.f32.pop %v5051
    %v5054 = vsinq.f32.pop %v5051
    %vm5055 = vweird.f32 %v1175
    %v5056 = vadd.s32 %v5052, 3
    %v5057 = vand.u32 %v5056, 3
    %vm5058 = vcmp.lt.s32.totalorder %v5057, 2
    %vm5059 = vcmp.eq.s32.totalorder %v5057, 0
    %v5060 = vxor.u32 %v5054, 2147483648
    %v5061 = vsel %vm5059, %v5053, %v5060
    %vm5062 = vcmp.eq.s32.totalorder %v5057, 2
    %v5063 = vxor.u32 %v5053, 2147483648
    %v5064 = vsel %vm5062, %v5063, %v5054
    %v5065 = vsel %vm5058, %v5061, %v5064
    %v5066 = vsel %vm5055, nan, %v5065
    %v5067 = vand.u32 2147483647, %v1176
    %vm5068 = vcmp.le.f32.partialorder %v5067, 0.7853982
    %vm5069 = vcmp.lt.s32.totalorder %v1176, 0
    %v5070 = vand.u32 %v1176, 2139095040
    %v5071 = vshrl.u32 %v5070, 23
    %v5072 = vsub.s32 %v5071, 127
    %v5073 = vand.u32 2147483647, %v1176
    %v5074 = vand.u32 %v5073, 8388607
    %v5075 = vor.u32 %v5074, 8388608
    %v5076 = vsub.s32 0, %v5075
    %v5077 = vadd.s32 %v5072, 1
    %vm5078 = vcmp.gt.s32.totalorder %v5077, 0
    %v5079 = vsel %vm5078, %v5077, 0
    %v5080 = vshrl.u32 %v5079, 5
    %v5081 = vand.u32 %v5079, 31
    %v5082 = vsub.s32 32, %v5081
    %v5083 = vshrl.u32 683565275, %v5082
    %v5084 = vshll.u32 683565275, %v5081
    %v5085 = vshrl.u32 2475754826, %v5082
    %v5086 = vor.u32 %v5084, %v5085
    %v5087 = vshll.u32 2475754826, %v5081
    %v5088 = vshrl.u32 2131351028, %v5082
    %v5089 = vor.u32 %v5087, %v5088
    %v5090 = vshll.u32 2131351028, %v5081
    %v5091 = vshrl.u32 2102212464, %v5082
    %v5092 = vor.u32 %v5090, %v5091
    %v5093 = vshll.u32 2102212464, %v5081
    %v5094 = vshrl.u32 920167782, %v5082
    %v5095 = vor.u32 %v5093, %v5094
    %v5096 = vshll.u32 920167782, %v5081
    %v5097 = vshrl.u32 1326507024, %v5082
    %v5098 = vor.u32 %v5096, %v5097
    %vm5099 = vcmp.lt.s32.totalorder %v5080, 1
    %vm5100 = vcmp.lt.s32.totalorder %v5080, 2
    %vm5101 = vcmp.lt.s32.totalorder %v5080, 3
    %vm5102 = vcmp.lt.s32.totalorder %v5080, 4
    %v5103 = vsel %vm5099, %v5083, %v5086
    %v5104 = vsel %vm5102, %v5092, 2102212464
    %v5105 = vsel %vm5101, %v5089, %v5104
    %v5106 = vsel %vm5100, %v5103, %v5105
    %v5107 = vsel %vm5099, %v5086, %v5089
    %v5108 = vsel %vm5102, %v5095, 920167782
    %v5109 = vsel %vm5101, %v5092, %v5108
    %v5110 = vsel %vm5100, %v5107, %v5109
    %v5111 = vsel %vm5099, %v5089, %v5092
    %v5112 = vsel %vm5102, %v5098, 1326507024
    %v5113 = vsel %vm5101, %v5095, %v5112
    %v5114 = vsel %vm5100, %v5111, %v5113
    %v5115 = vshll.u32 %v5075, 8
    %v5116 = vmul.u32.u64.compose %v5115, %v5114
    %v5117 = vextract.low.u32 %v5116
    %v5118 = vextract.high.u32 %v5116
    %v5119 = vmul.u32.u64.compose %v5115, %v5110
    %v5120 = vextract.low.u32 %v5119
    %v5121 = vextract.high.u32 %v5119
    %v5122 = vmul.u32 %v5115, %v5106
    %v5123 = vadd.s32 %v5118, %v5120
    %vm5124 = vc.u32 %v5118, %v5120
    %v5125 = vadd.s32 %v5121, 1
    %v5126 = vsel %vm5124, %v5125, %v5121
    %v5127 = vadd.s32 %v5122, %v5126
    %v5128 = vadd.s32 %v5127, 536870912
    %v5129 = vshrl.u32 %v5128, 30
    %v5130 = vshll.u32 %v5129, 30
    %v5131 = vsub.s32 %v5127, %v5130
    %vm5132 = vcmp.lt.s32.totalorder %v5131, 0
    %v5133 = vsub.s32 0, %v5131
    %v5134 = vsel %vm5132, %v5133, %v5131
    %v5135 = vclz %v5134
    %v5136 = vsub.s32 %v5135, 2
    %vm5137 = vcmp.gt.s32.totalorder 0, %v5136
    %v5138 = vsel %vm5137, 0, %v5136
    %v5139 = vsub.s32 32, %v5138
    %v5140 = vshll.u32 %v5131, %v5138
    %v5141 = vshrl.u32 %v5123, %v5139
    %v5142 = vor.u32 %v5140, %v5141
    %v5143 = vsub.s32 4294967266, %v5138
    %v5144 = vadd.s32 %v5143, 127
    %v5145 = vshll.u32 %v5144, 23
    %v5146 = vor.u32 4788187, %v5145
    %v5147 = vand.u32 2147483647, %v5146
    %v5149 = vcvt.s32.f32 %v5142
    %v5150 = vmul.f32 %v5149, %v5147
    %v5151 = vxor.u32 %v5150, 2147483648
    %v5152 = vsel %vm5069, %v5151, %v5150
    %v5153 = vsub.s32 4, %v5129
    %v5154 = vsel %vm5069, %v5153, %v5129
    %v5155 = vsel %vm5068, %v1176, %v5152
    %v5156 = vsel %vm5068, 0, %v5154
    %v5157 = vcosq.f32.pop %v5155
    %v5158 = vsinq.f32.pop %v5155
    %vm5159 = vweird.f32 %v1176
    %v5160 = vadd.s32 %v5156, 3
    %v5161 = vand.u32 %v5160, 3
    %vm5162 = vcmp.lt.s32.totalorder %v5161, 2
    %vm5163 = vcmp.eq.s32.totalorder %v5161, 0
    %v5164 = vxor.u32 %v5158, 2147483648
    %v5165 = vsel %vm5163, %v5157, %v5164
    %vm5166 = vcmp.eq.s32.totalorder %v5161, 2
    %v5167 = vxor.u32 %v5157, 2147483648
    %v5168 = vsel %vm5166, %v5167, %v5158
    %v5169 = vsel %vm5162, %v5165, %v5168
    %v5170 = vsel %vm5159, nan, %v5169
    %v5171 = vand.u32 2147483647, %v1177
    %vm5172 = vcmp.le.f32.partialorder %v5171, 0.7853982
    %vm5173 = vcmp.lt.s32.totalorder %v1177, 0
    %v5174 = vand.u32 %v1177, 2139095040
    %v5175 = vshrl.u32 %v5174, 23
    %v5176 = vsub.s32 %v5175, 127
    %v5177 = vand.u32 2147483647, %v1177
    %v5178 = vand.u32 %v5177, 8388607
    %v5179 = vor.u32 %v5178, 8388608
    %v5180 = vsub.s32 0, %v5179
    %v5181 = vadd.s32 %v5176, 1
    %vm5182 = vcmp.gt.s32.totalorder %v5181, 0
    %v5183 = vsel %vm5182, %v5181, 0
    %v5184 = vshrl.u32 %v5183, 5
    %v5185 = vand.u32 %v5183, 31
    %v5186 = vsub.s32 32, %v5185
    %v5187 = vshrl.u32 683565275, %v5186
    %v5188 = vshll.u32 683565275, %v5185
    %v5189 = vshrl.u32 2475754826, %v5186
    %v5190 = vor.u32 %v5188, %v5189
    %v5191 = vshll.u32 2475754826, %v5185
    %v5192 = vshrl.u32 2131351028, %v5186
    %v5193 = vor.u32 %v5191, %v5192
    %v5194 = vshll.u32 2131351028, %v5185
    %v5195 = vshrl.u32 2102212464, %v5186
    %v5196 = vor.u32 %v5194, %v5195
    %v5197 = vshll.u32 2102212464, %v5185
    %v5198 = vshrl.u32 920167782, %v5186
    %v5199 = vor.u32 %v5197, %v5198
    %v5200 = vshll.u32 920167782, %v5185
    %v5201 = vshrl.u32 1326507024, %v5186
    %v5202 = vor.u32 %v5200, %v5201
    %vm5203 = vcmp.lt.s32.totalorder %v5184, 1
    %vm5204 = vcmp.lt.s32.totalorder %v5184, 2
    %vm5205 = vcmp.lt.s32.totalorder %v5184, 3
    %vm5206 = vcmp.lt.s32.totalorder %v5184, 4
    %v5207 = vsel %vm5203, %v5187, %v5190
    %v5208 = vsel %vm5206, %v5196, 2102212464
    %v5209 = vsel %vm5205, %v5193, %v5208
    %v5210 = vsel %vm5204, %v5207, %v5209
    %v5211 = vsel %vm5203, %v5190, %v5193
    %v5212 = vsel %vm5206, %v5199, 920167782
    %v5213 = vsel %vm5205, %v5196, %v5212
    %v5214 = vsel %vm5204, %v5211, %v5213
    %v5215 = vsel %vm5203, %v5193, %v5196
    %v5216 = vsel %vm5206, %v5202, 1326507024
    %v5217 = vsel %vm5205, %v5199, %v5216
    %v5218 = vsel %vm5204, %v5215, %v5217
    %v5219 = vshll.u32 %v5179, 8
    %v5220 = vmul.u32.u64.compose %v5219, %v5218
    %v5221 = vextract.low.u32 %v5220
    %v5222 = vextract.high.u32 %v5220
    %v5223 = vmul.u32.u64.compose %v5219, %v5214
    %v5224 = vextract.low.u32 %v5223
    %v5225 = vextract.high.u32 %v5223
    %v5226 = vmul.u32 %v5219, %v5210
    %v5227 = vadd.s32 %v5222, %v5224
    %vm5228 = vc.u32 %v5222, %v5224
    %v5229 = vadd.s32 %v5225, 1
    %v5230 = vsel %vm5228, %v5229, %v5225
    %v5231 = vadd.s32 %v5226, %v5230
    %v5232 = vadd.s32 %v5231, 536870912
    %v5233 = vshrl.u32 %v5232, 30
    %v5234 = vshll.u32 %v5233, 30
    %v5235 = vsub.s32 %v5231, %v5234
    %vm5236 = vcmp.lt.s32.totalorder %v5235, 0
    %v5237 = vsub.s32 0, %v5235
    %v5238 = vsel %vm5236, %v5237, %v5235
    %v5239 = vclz %v5238
    %v5240 = vsub.s32 %v5239, 2
    %vm5241 = vcmp.gt.s32.totalorder 0, %v5240
    %v5242 = vsel %vm5241, 0, %v5240
    %v5243 = vsub.s32 32, %v5242
    %v5244 = vshll.u32 %v5235, %v5242
    %v5245 = vshrl.u32 %v5227, %v5243
    %v5246 = vor.u32 %v5244, %v5245
    %v5247 = vsub.s32 4294967266, %v5242
    %v5248 = vadd.s32 %v5247, 127
    %v5249 = vshll.u32 %v5248, 23
    %v5250 = vor.u32 4788187, %v5249
    %v5251 = vand.u32 2147483647, %v5250
    %v5253 = vcvt.s32.f32 %v5246
    %v5254 = vmul.f32 %v5253, %v5251
    %v5255 = vxor.u32 %v5254, 2147483648
    %v5256 = vsel %vm5173, %v5255, %v5254
    %v5257 = vsub.s32 4, %v5233
    %v5258 = vsel %vm5173, %v5257, %v5233
    %v5259 = vsel %vm5172, %v1177, %v5256
    %v5260 = vsel %vm5172, 0, %v5258
    %v5261 = vcosq.f32.pop %v5259
    %v5262 = vsinq.f32.pop %v5259
    %vm5263 = vweird.f32 %v1177
    %v5264 = vadd.s32 %v5260, 3
    %v5265 = vand.u32 %v5264, 3
    %vm5266 = vcmp.lt.s32.totalorder %v5265, 2
    %vm5267 = vcmp.eq.s32.totalorder %v5265, 0
    %v5268 = vxor.u32 %v5262, 2147483648
    %v5269 = vsel %vm5267, %v5261, %v5268
    %vm5270 = vcmp.eq.s32.totalorder %v5265, 2
    %v5271 = vxor.u32 %v5261, 2147483648
    %v5272 = vsel %vm5270, %v5271, %v5262
    %v5273 = vsel %vm5266, %v5269, %v5272
    %v5274 = vsel %vm5263, nan, %v5273
    %v5275 = vand.u32 2147483647, %v1178
    %vm5276 = vcmp.le.f32.partialorder %v5275, 0.7853982
    %vm5277 = vcmp.lt.s32.totalorder %v1178, 0
    %v5278 = vand.u32 %v1178, 2139095040
    %v5279 = vshrl.u32 %v5278, 23
    %v5280 = vsub.s32 %v5279, 127
    %v5281 = vand.u32 2147483647, %v1178
    %v5282 = vand.u32 %v5281, 8388607
    %v5283 = vor.u32 %v5282, 8388608
    %v5284 = vsub.s32 0, %v5283
    %v5285 = vadd.s32 %v5280, 1
    %vm5286 = vcmp.gt.s32.totalorder %v5285, 0
    %v5287 = vsel %vm5286, %v5285, 0
    %v5288 = vshrl.u32 %v5287, 5
    %v5289 = vand.u32 %v5287, 31
    %v5290 = vsub.s32 32, %v5289
    %v5291 = vshrl.u32 683565275, %v5290
    %v5292 = vshll.u32 683565275, %v5289
    %v5293 = vshrl.u32 2475754826, %v5290
    %v5294 = vor.u32 %v5292, %v5293
    %v5295 = vshll.u32 2475754826, %v5289
    %v5296 = vshrl.u32 2131351028, %v5290
    %v5297 = vor.u32 %v5295, %v5296
    %v5298 = vshll.u32 2131351028, %v5289
    %v5299 = vshrl.u32 2102212464, %v5290
    %v5300 = vor.u32 %v5298, %v5299
    %v5301 = vshll.u32 2102212464, %v5289
    %v5302 = vshrl.u32 920167782, %v5290
    %v5303 = vor.u32 %v5301, %v5302
    %v5304 = vshll.u32 920167782, %v5289
    %v5305 = vshrl.u32 1326507024, %v5290
    %v5306 = vor.u32 %v5304, %v5305
    %vm5307 = vcmp.lt.s32.totalorder %v5288, 1
    %vm5308 = vcmp.lt.s32.totalorder %v5288, 2
    %vm5309 = vcmp.lt.s32.totalorder %v5288, 3
    %vm5310 = vcmp.lt.s32.totalorder %v5288, 4
    %v5311 = vsel %vm5307, %v5291, %v5294
    %v5312 = vsel %vm5310, %v5300, 2102212464
    %v5313 = vsel %vm5309, %v5297, %v5312
    %v5314 = vsel %vm5308, %v5311, %v5313
    %v5315 = vsel %vm5307, %v5294, %v5297
    %v5316 = vsel %vm5310, %v5303, 920167782
    %v5317 = vsel %vm5309, %v5300, %v5316
    %v5318 = vsel %vm5308, %v5315, %v5317
    %v5319 = vsel %vm5307, %v5297, %v5300
    %v5320 = vsel %vm5310, %v5306, 1326507024
    %v5321 = vsel %vm5309, %v5303, %v5320
    %v5322 = vsel %vm5308, %v5319, %v5321
    %v5323 = vshll.u32 %v5283, 8
    %v5324 = vmul.u32.u64.compose %v5323, %v5322
    %v5325 = vextract.low.u32 %v5324
    %v5326 = vextract.high.u32 %v5324
    %v5327 = vmul.u32.u64.compose %v5323, %v5318
    %v5328 = vextract.low.u32 %v5327
    %v5329 = vextract.high.u32 %v5327
    %v5330 = vmul.u32 %v5323, %v5314
    %v5331 = vadd.s32 %v5326, %v5328
    %vm5332 = vc.u32 %v5326, %v5328
    %v5333 = vadd.s32 %v5329, 1
    %v5334 = vsel %vm5332, %v5333, %v5329
    %v5335 = vadd.s32 %v5330, %v5334
    %v5336 = vadd.s32 %v5335, 536870912
    %v5337 = vshrl.u32 %v5336, 30
    %v5338 = vshll.u32 %v5337, 30
    %v5339 = vsub.s32 %v5335, %v5338
    %vm5340 = vcmp.lt.s32.totalorder %v5339, 0
    %v5341 = vsub.s32 0, %v5339
    %v5342 = vsel %vm5340, %v5341, %v5339
    %v5343 = vclz %v5342
    %v5344 = vsub.s32 %v5343, 2
    %vm5345 = vcmp.gt.s32.totalorder 0, %v5344
    %v5346 = vsel %vm5345, 0, %v5344
    %v5347 = vsub.s32 32, %v5346
    %v5348 = vshll.u32 %v5339, %v5346
    %v5349 = vshrl.u32 %v5331, %v5347
    %v5350 = vor.u32 %v5348, %v5349
    %v5351 = vsub.s32 4294967266, %v5346
    %v5352 = vadd.s32 %v5351, 127
    %v5353 = vshll.u32 %v5352, 23
    %v5354 = vor.u32 4788187, %v5353
    %v5355 = vand.u32 2147483647, %v5354
    %v5357 = vcvt.s32.f32 %v5350
    %v5358 = vmul.f32 %v5357, %v5355
    %v5359 = vxor.u32 %v5358, 2147483648
    %v5360 = vsel %vm5277, %v5359, %v5358
    %v5361 = vsub.s32 4, %v5337
    %v5362 = vsel %vm5277, %v5361, %v5337
    %v5363 = vsel %vm5276, %v1178, %v5360
    %v5364 = vsel %vm5276, 0, %v5362
    %v5365 = vcosq.f32.pop %v5363
    %v5366 = vsinq.f32.pop %v5363
    %vm5367 = vweird.f32 %v1178
    %v5368 = vadd.s32 %v5364, 3
    %v5369 = vand.u32 %v5368, 3
    %vm5370 = vcmp.lt.s32.totalorder %v5369, 2
    %vm5371 = vcmp.eq.s32.totalorder %v5369, 0
    %v5372 = vxor.u32 %v5366, 2147483648
    %v5373 = vsel %vm5371, %v5365, %v5372
    %vm5374 = vcmp.eq.s32.totalorder %v5369, 2
    %v5375 = vxor.u32 %v5365, 2147483648
    %v5376 = vsel %vm5374, %v5375, %v5366
    %v5377 = vsel %vm5370, %v5373, %v5376
    %v5378 = vsel %vm5367, nan, %v5377
    %v5379 = vand.u32 2147483647, %v1179
    %vm5380 = vcmp.le.f32.partialorder %v5379, 0.7853982
    %vm5381 = vcmp.lt.s32.totalorder %v1179, 0
    %v5382 = vand.u32 %v1179, 2139095040
    %v5383 = vshrl.u32 %v5382, 23
    %v5384 = vsub.s32 %v5383, 127
    %v5385 = vand.u32 2147483647, %v1179
    %v5386 = vand.u32 %v5385, 8388607
    %v5387 = vor.u32 %v5386, 8388608
    %v5388 = vsub.s32 0, %v5387
    %v5389 = vadd.s32 %v5384, 1
    %vm5390 = vcmp.gt.s32.totalorder %v5389, 0
    %v5391 = vsel %vm5390, %v5389, 0
    %v5392 = vshrl.u32 %v5391, 5
    %v5393 = vand.u32 %v5391, 31
    %v5394 = vsub.s32 32, %v5393
    %v5395 = vshrl.u32 683565275, %v5394
    %v5396 = vshll.u32 683565275, %v5393
    %v5397 = vshrl.u32 2475754826, %v5394
    %v5398 = vor.u32 %v5396, %v5397
    %v5399 = vshll.u32 2475754826, %v5393
    %v5400 = vshrl.u32 2131351028, %v5394
    %v5401 = vor.u32 %v5399, %v5400
    %v5402 = vshll.u32 2131351028, %v5393
    %v5403 = vshrl.u32 2102212464, %v5394
    %v5404 = vor.u32 %v5402, %v5403
    %v5405 = vshll.u32 2102212464, %v5393
    %v5406 = vshrl.u32 920167782, %v5394
    %v5407 = vor.u32 %v5405, %v5406
    %v5408 = vshll.u32 920167782, %v5393
    %v5409 = vshrl.u32 1326507024, %v5394
    %v5410 = vor.u32 %v5408, %v5409
    %vm5411 = vcmp.lt.s32.totalorder %v5392, 1
    %vm5412 = vcmp.lt.s32.totalorder %v5392, 2
    %vm5413 = vcmp.lt.s32.totalorder %v5392, 3
    %vm5414 = vcmp.lt.s32.totalorder %v5392, 4
    %v5415 = vsel %vm5411, %v5395, %v5398
    %v5416 = vsel %vm5414, %v5404, 2102212464
    %v5417 = vsel %vm5413, %v5401, %v5416
    %v5418 = vsel %vm5412, %v5415, %v5417
    %v5419 = vsel %vm5411, %v5398, %v5401
    %v5420 = vsel %vm5414, %v5407, 920167782
    %v5421 = vsel %vm5413, %v5404, %v5420
    %v5422 = vsel %vm5412, %v5419, %v5421
    %v5423 = vsel %vm5411, %v5401, %v5404
    %v5424 = vsel %vm5414, %v5410, 1326507024
    %v5425 = vsel %vm5413, %v5407, %v5424
    %v5426 = vsel %vm5412, %v5423, %v5425
    %v5427 = vshll.u32 %v5387, 8
    %v5428 = vmul.u32.u64.compose %v5427, %v5426
    %v5429 = vextract.low.u32 %v5428
    %v5430 = vextract.high.u32 %v5428
    %v5431 = vmul.u32.u64.compose %v5427, %v5422
    %v5432 = vextract.low.u32 %v5431
    %v5433 = vextract.high.u32 %v5431
    %v5434 = vmul.u32 %v5427, %v5418
    %v5435 = vadd.s32 %v5430, %v5432
    %vm5436 = vc.u32 %v5430, %v5432
    %v5437 = vadd.s32 %v5433, 1
    %v5438 = vsel %vm5436, %v5437, %v5433
    %v5439 = vadd.s32 %v5434, %v5438
    %v5440 = vadd.s32 %v5439, 536870912
    %v5441 = vshrl.u32 %v5440, 30
    %v5442 = vshll.u32 %v5441, 30
    %v5443 = vsub.s32 %v5439, %v5442
    %vm5444 = vcmp.lt.s32.totalorder %v5443, 0
    %v5445 = vsub.s32 0, %v5443
    %v5446 = vsel %vm5444, %v5445, %v5443
    %v5447 = vclz %v5446
    %v5448 = vsub.s32 %v5447, 2
    %vm5449 = vcmp.gt.s32.totalorder 0, %v5448
    %v5450 = vsel %vm5449, 0, %v5448
    %v5451 = vsub.s32 32, %v5450
    %v5452 = vshll.u32 %v5443, %v5450
    %v5453 = vshrl.u32 %v5435, %v5451
    %v5454 = vor.u32 %v5452, %v5453
    %v5455 = vsub.s32 4294967266, %v5450
    %v5456 = vadd.s32 %v5455, 127
    %v5457 = vshll.u32 %v5456, 23
    %v5458 = vor.u32 4788187, %v5457
    %v5459 = vand.u32 2147483647, %v5458
    %v5461 = vcvt.s32.f32 %v5454
    %v5462 = vmul.f32 %v5461, %v5459
    %v5463 = vxor.u32 %v5462, 2147483648
    %v5464 = vsel %vm5381, %v5463, %v5462
    %v5465 = vsub.s32 4, %v5441
    %v5466 = vsel %vm5381, %v5465, %v5441
    %v5467 = vsel %vm5380, %v1179, %v5464
    %v5468 = vsel %vm5380, 0, %v5466
    %v5469 = vcosq.f32.pop %v5467
    %v5470 = vsinq.f32.pop %v5467
    %vm5471 = vweird.f32 %v1179
    %v5472 = vadd.s32 %v5468, 3
    %v5473 = vand.u32 %v5472, 3
    %vm5474 = vcmp.lt.s32.totalorder %v5473, 2
    %vm5475 = vcmp.eq.s32.totalorder %v5473, 0
    %v5476 = vxor.u32 %v5470, 2147483648
    %v5477 = vsel %vm5475, %v5469, %v5476
    %vm5478 = vcmp.eq.s32.totalorder %v5473, 2
    %v5479 = vxor.u32 %v5469, 2147483648
    %v5480 = vsel %vm5478, %v5479, %v5470
    %v5481 = vsel %vm5474, %v5477, %v5480
    %v5482 = vsel %vm5471, nan, %v5481
    %v5483 = vand.u32 2147483647, %v1180
    %vm5484 = vcmp.le.f32.partialorder %v5483, 0.7853982
    %vm5485 = vcmp.lt.s32.totalorder %v1180, 0
    %v5486 = vand.u32 %v1180, 2139095040
    %v5487 = vshrl.u32 %v5486, 23
    %v5488 = vsub.s32 %v5487, 127
    %v5489 = vand.u32 2147483647, %v1180
    %v5490 = vand.u32 %v5489, 8388607
    %v5491 = vor.u32 %v5490, 8388608
    %v5492 = vsub.s32 0, %v5491
    %v5493 = vadd.s32 %v5488, 1
    %vm5494 = vcmp.gt.s32.totalorder %v5493, 0
    %v5495 = vsel %vm5494, %v5493, 0
    %v5496 = vshrl.u32 %v5495, 5
    %v5497 = vand.u32 %v5495, 31
    %v5498 = vsub.s32 32, %v5497
    %v5499 = vshrl.u32 683565275, %v5498
    %v5500 = vshll.u32 683565275, %v5497
    %v5501 = vshrl.u32 2475754826, %v5498
    %v5502 = vor.u32 %v5500, %v5501
    %v5503 = vshll.u32 2475754826, %v5497
    %v5504 = vshrl.u32 2131351028, %v5498
    %v5505 = vor.u32 %v5503, %v5504
    %v5506 = vshll.u32 2131351028, %v5497
    %v5507 = vshrl.u32 2102212464, %v5498
    %v5508 = vor.u32 %v5506, %v5507
    %v5509 = vshll.u32 2102212464, %v5497
    %v5510 = vshrl.u32 920167782, %v5498
    %v5511 = vor.u32 %v5509, %v5510
    %v5512 = vshll.u32 920167782, %v5497
    %v5513 = vshrl.u32 1326507024, %v5498
    %v5514 = vor.u32 %v5512, %v5513
    %vm5515 = vcmp.lt.s32.totalorder %v5496, 1
    %vm5516 = vcmp.lt.s32.totalorder %v5496, 2
    %vm5517 = vcmp.lt.s32.totalorder %v5496, 3
    %vm5518 = vcmp.lt.s32.totalorder %v5496, 4
    %v5519 = vsel %vm5515, %v5499, %v5502
    %v5520 = vsel %vm5518, %v5508, 2102212464
    %v5521 = vsel %vm5517, %v5505, %v5520
    %v5522 = vsel %vm5516, %v5519, %v5521
    %v5523 = vsel %vm5515, %v5502, %v5505
    %v5524 = vsel %vm5518, %v5511, 920167782
    %v5525 = vsel %vm5517, %v5508, %v5524
    %v5526 = vsel %vm5516, %v5523, %v5525
    %v5527 = vsel %vm5515, %v5505, %v5508
    %v5528 = vsel %vm5518, %v5514, 1326507024
    %v5529 = vsel %vm5517, %v5511, %v5528
    %v5530 = vsel %vm5516, %v5527, %v5529
    %v5531 = vshll.u32 %v5491, 8
    %v5532 = vmul.u32.u64.compose %v5531, %v5530
    %v5533 = vextract.low.u32 %v5532
    %v5534 = vextract.high.u32 %v5532
    %v5535 = vmul.u32.u64.compose %v5531, %v5526
    %v5536 = vextract.low.u32 %v5535
    %v5537 = vextract.high.u32 %v5535
    %v5538 = vmul.u32 %v5531, %v5522
    %v5539 = vadd.s32 %v5534, %v5536
    %vm5540 = vc.u32 %v5534, %v5536
    %v5541 = vadd.s32 %v5537, 1
    %v5542 = vsel %vm5540, %v5541, %v5537
    %v5543 = vadd.s32 %v5538, %v5542
    %v5544 = vadd.s32 %v5543, 536870912
    %v5545 = vshrl.u32 %v5544, 30
    %v5546 = vshll.u32 %v5545, 30
    %v5547 = vsub.s32 %v5543, %v5546
    %vm5548 = vcmp.lt.s32.totalorder %v5547, 0
    %v5549 = vsub.s32 0, %v5547
    %v5550 = vsel %vm5548, %v5549, %v5547
    %v5551 = vclz %v5550
    %v5552 = vsub.s32 %v5551, 2
    %vm5553 = vcmp.gt.s32.totalorder 0, %v5552
    %v5554 = vsel %vm5553, 0, %v5552
    %v5555 = vsub.s32 32, %v5554
    %v5556 = vshll.u32 %v5547, %v5554
    %v5557 = vshrl.u32 %v5539, %v5555
    %v5558 = vor.u32 %v5556, %v5557
    %v5559 = vsub.s32 4294967266, %v5554
    %v5560 = vadd.s32 %v5559, 127
    %v5561 = vshll.u32 %v5560, 23
    %v5562 = vor.u32 4788187, %v5561
    %v5563 = vand.u32 2147483647, %v5562
    %v5565 = vcvt.s32.f32 %v5558
    %v5566 = vmul.f32 %v5565, %v5563
    %v5567 = vxor.u32 %v5566, 2147483648
    %v5568 = vsel %vm5485, %v5567, %v5566
    %v5569 = vsub.s32 4, %v5545
    %v5570 = vsel %vm5485, %v5569, %v5545
    %v5571 = vsel %vm5484, %v1180, %v5568
    %v5572 = vsel %vm5484, 0, %v5570
    %v5573 = vcosq.f32.pop %v5571
    %v5574 = vsinq.f32.pop %v5571
    %vm5575 = vweird.f32 %v1180
    %v5576 = vadd.s32 %v5572, 3
    %v5577 = vand.u32 %v5576, 3
    %vm5578 = vcmp.lt.s32.totalorder %v5577, 2
    %vm5579 = vcmp.eq.s32.totalorder %v5577, 0
    %v5580 = vxor.u32 %v5574, 2147483648
    %v5581 = vsel %vm5579, %v5573, %v5580
    %vm5582 = vcmp.eq.s32.totalorder %v5577, 2
    %v5583 = vxor.u32 %v5573, 2147483648
    %v5584 = vsel %vm5582, %v5583, %v5574
    %v5585 = vsel %vm5578, %v5581, %v5584
    %v5586 = vsel %vm5575, nan, %v5585
    %v5587 = vand.u32 2147483647, %v1181
    %vm5588 = vcmp.le.f32.partialorder %v5587, 0.7853982
    %vm5589 = vcmp.lt.s32.totalorder %v1181, 0
    %v5590 = vand.u32 %v1181, 2139095040
    %v5591 = vshrl.u32 %v5590, 23
    %v5592 = vsub.s32 %v5591, 127
    %v5593 = vand.u32 2147483647, %v1181
    %v5594 = vand.u32 %v5593, 8388607
    %v5595 = vor.u32 %v5594, 8388608
    %v5596 = vsub.s32 0, %v5595
    %v5597 = vadd.s32 %v5592, 1
    %vm5598 = vcmp.gt.s32.totalorder %v5597, 0
    %v5599 = vsel %vm5598, %v5597, 0
    %v5600 = vshrl.u32 %v5599, 5
    %v5601 = vand.u32 %v5599, 31
    %v5602 = vsub.s32 32, %v5601
    %v5603 = vshrl.u32 683565275, %v5602
    %v5604 = vshll.u32 683565275, %v5601
    %v5605 = vshrl.u32 2475754826, %v5602
    %v5606 = vor.u32 %v5604, %v5605
    %v5607 = vshll.u32 2475754826, %v5601
    %v5608 = vshrl.u32 2131351028, %v5602
    %v5609 = vor.u32 %v5607, %v5608
    %v5610 = vshll.u32 2131351028, %v5601
    %v5611 = vshrl.u32 2102212464, %v5602
    %v5612 = vor.u32 %v5610, %v5611
    %v5613 = vshll.u32 2102212464, %v5601
    %v5614 = vshrl.u32 920167782, %v5602
    %v5615 = vor.u32 %v5613, %v5614
    %v5616 = vshll.u32 920167782, %v5601
    %v5617 = vshrl.u32 1326507024, %v5602
    %v5618 = vor.u32 %v5616, %v5617
    %vm5619 = vcmp.lt.s32.totalorder %v5600, 1
    %vm5620 = vcmp.lt.s32.totalorder %v5600, 2
    %vm5621 = vcmp.lt.s32.totalorder %v5600, 3
    %vm5622 = vcmp.lt.s32.totalorder %v5600, 4
    %v5623 = vsel %vm5619, %v5603, %v5606
    %v5624 = vsel %vm5622, %v5612, 2102212464
    %v5625 = vsel %vm5621, %v5609, %v5624
    %v5626 = vsel %vm5620, %v5623, %v5625
    %v5627 = vsel %vm5619, %v5606, %v5609
    %v5628 = vsel %vm5622, %v5615, 920167782
    %v5629 = vsel %vm5621, %v5612, %v5628
    %v5630 = vsel %vm5620, %v5627, %v5629
    %v5631 = vsel %vm5619, %v5609, %v5612
    %v5632 = vsel %vm5622, %v5618, 1326507024
    %v5633 = vsel %vm5621, %v5615, %v5632
    %v5634 = vsel %vm5620, %v5631, %v5633
    %v5635 = vshll.u32 %v5595, 8
    %v5636 = vmul.u32.u64.compose %v5635, %v5634
    %v5637 = vextract.low.u32 %v5636
    %v5638 = vextract.high.u32 %v5636
    %v5639 = vmul.u32.u64.compose %v5635, %v5630
    %v5640 = vextract.low.u32 %v5639
    %v5641 = vextract.high.u32 %v5639
    %v5642 = vmul.u32 %v5635, %v5626
    %v5643 = vadd.s32 %v5638, %v5640
    %vm5644 = vc.u32 %v5638, %v5640
    %v5645 = vadd.s32 %v5641, 1
    %v5646 = vsel %vm5644, %v5645, %v5641
    %v5647 = vadd.s32 %v5642, %v5646
    %v5648 = vadd.s32 %v5647, 536870912
    %v5649 = vshrl.u32 %v5648, 30
    %v5650 = vshll.u32 %v5649, 30
    %v5651 = vsub.s32 %v5647, %v5650
    %vm5652 = vcmp.lt.s32.totalorder %v5651, 0
    %v5653 = vsub.s32 0, %v5651
    %v5654 = vsel %vm5652, %v5653, %v5651
    %v5655 = vclz %v5654
    %v5656 = vsub.s32 %v5655, 2
    %vm5657 = vcmp.gt.s32.totalorder 0, %v5656
    %v5658 = vsel %vm5657, 0, %v5656
    %v5659 = vsub.s32 32, %v5658
    %v5660 = vshll.u32 %v5651, %v5658
    %v5661 = vshrl.u32 %v5643, %v5659
    %v5662 = vor.u32 %v5660, %v5661
    %v5663 = vsub.s32 4294967266, %v5658
    %v5664 = vadd.s32 %v5663, 127
    %v5665 = vshll.u32 %v5664, 23
    %v5666 = vor.u32 4788187, %v5665
    %v5667 = vand.u32 2147483647, %v5666
    %v5669 = vcvt.s32.f32 %v5662
    %v5670 = vmul.f32 %v5669, %v5667
    %v5671 = vxor.u32 %v5670, 2147483648
    %v5672 = vsel %vm5589, %v5671, %v5670
    %v5673 = vsub.s32 4, %v5649
    %v5674 = vsel %vm5589, %v5673, %v5649
    %v5675 = vsel %vm5588, %v1181, %v5672
    %v5676 = vsel %vm5588, 0, %v5674
    %v5677 = vcosq.f32.pop %v5675
    %v5678 = vsinq.f32.pop %v5675
    %vm5679 = vweird.f32 %v1181
    %v5680 = vadd.s32 %v5676, 3
    %v5681 = vand.u32 %v5680, 3
    %vm5682 = vcmp.lt.s32.totalorder %v5681, 2
    %vm5683 = vcmp.eq.s32.totalorder %v5681, 0
    %v5684 = vxor.u32 %v5678, 2147483648
    %v5685 = vsel %vm5683, %v5677, %v5684
    %vm5686 = vcmp.eq.s32.totalorder %v5681, 2
    %v5687 = vxor.u32 %v5677, 2147483648
    %v5688 = vsel %vm5686, %v5687, %v5678
    %v5689 = vsel %vm5682, %v5685, %v5688
    %v5690 = vsel %vm5679, nan, %v5689
    %v5691 = vand.u32 2147483647, %v1182
    %vm5692 = vcmp.le.f32.partialorder %v5691, 0.7853982
    %vm5693 = vcmp.lt.s32.totalorder %v1182, 0
    %v5694 = vand.u32 %v1182, 2139095040
    %v5695 = vshrl.u32 %v5694, 23
    %v5696 = vsub.s32 %v5695, 127
    %v5697 = vand.u32 2147483647, %v1182
    %v5698 = vand.u32 %v5697, 8388607
    %v5699 = vor.u32 %v5698, 8388608
    %v5700 = vsub.s32 0, %v5699
    %v5701 = vadd.s32 %v5696, 1
    %vm5702 = vcmp.gt.s32.totalorder %v5701, 0
    %v5703 = vsel %vm5702, %v5701, 0
    %v5704 = vshrl.u32 %v5703, 5
    %v5705 = vand.u32 %v5703, 31
    %v5706 = vsub.s32 32, %v5705
    %v5707 = vshrl.u32 683565275, %v5706
    %v5708 = vshll.u32 683565275, %v5705
    %v5709 = vshrl.u32 2475754826, %v5706
    %v5710 = vor.u32 %v5708, %v5709
    %v5711 = vshll.u32 2475754826, %v5705
    %v5712 = vshrl.u32 2131351028, %v5706
    %v5713 = vor.u32 %v5711, %v5712
    %v5714 = vshll.u32 2131351028, %v5705
    %v5715 = vshrl.u32 2102212464, %v5706
    %v5716 = vor.u32 %v5714, %v5715
    %v5717 = vshll.u32 2102212464, %v5705
    %v5718 = vshrl.u32 920167782, %v5706
    %v5719 = vor.u32 %v5717, %v5718
    %v5720 = vshll.u32 920167782, %v5705
    %v5721 = vshrl.u32 1326507024, %v5706
    %v5722 = vor.u32 %v5720, %v5721
    %vm5723 = vcmp.lt.s32.totalorder %v5704, 1
    %vm5724 = vcmp.lt.s32.totalorder %v5704, 2
    %vm5725 = vcmp.lt.s32.totalorder %v5704, 3
    %vm5726 = vcmp.lt.s32.totalorder %v5704, 4
    %v5727 = vsel %vm5723, %v5707, %v5710
    %v5728 = vsel %vm5726, %v5716, 2102212464
    %v5729 = vsel %vm5725, %v5713, %v5728
    %v5730 = vsel %vm5724, %v5727, %v5729
    %v5731 = vsel %vm5723, %v5710, %v5713
    %v5732 = vsel %vm5726, %v5719, 920167782
    %v5733 = vsel %vm5725, %v5716, %v5732
    %v5734 = vsel %vm5724, %v5731, %v5733
    %v5735 = vsel %vm5723, %v5713, %v5716
    %v5736 = vsel %vm5726, %v5722, 1326507024
    %v5737 = vsel %vm5725, %v5719, %v5736
    %v5738 = vsel %vm5724, %v5735, %v5737
    %v5739 = vshll.u32 %v5699, 8
    %v5740 = vmul.u32.u64.compose %v5739, %v5738
    %v5741 = vextract.low.u32 %v5740
    %v5742 = vextract.high.u32 %v5740
    %v5743 = vmul.u32.u64.compose %v5739, %v5734
    %v5744 = vextract.low.u32 %v5743
    %v5745 = vextract.high.u32 %v5743
    %v5746 = vmul.u32 %v5739, %v5730
    %v5747 = vadd.s32 %v5742, %v5744
    %vm5748 = vc.u32 %v5742, %v5744
    %v5749 = vadd.s32 %v5745, 1
    %v5750 = vsel %vm5748, %v5749, %v5745
    %v5751 = vadd.s32 %v5746, %v5750
    %v5752 = vadd.s32 %v5751, 536870912
    %v5753 = vshrl.u32 %v5752, 30
    %v5754 = vshll.u32 %v5753, 30
    %v5755 = vsub.s32 %v5751, %v5754
    %vm5756 = vcmp.lt.s32.totalorder %v5755, 0
    %v5757 = vsub.s32 0, %v5755
    %v5758 = vsel %vm5756, %v5757, %v5755
    %v5759 = vclz %v5758
    %v5760 = vsub.s32 %v5759, 2
    %vm5761 = vcmp.gt.s32.totalorder 0, %v5760
    %v5762 = vsel %vm5761, 0, %v5760
    %v5763 = vsub.s32 32, %v5762
    %v5764 = vshll.u32 %v5755, %v5762
    %v5765 = vshrl.u32 %v5747, %v5763
    %v5766 = vor.u32 %v5764, %v5765
    %v5767 = vsub.s32 4294967266, %v5762
    %v5768 = vadd.s32 %v5767, 127
    %v5769 = vshll.u32 %v5768, 23
    %v5770 = vor.u32 4788187, %v5769
    %v5771 = vand.u32 2147483647, %v5770
    %v5773 = vcvt.s32.f32 %v5766
    %v5774 = vmul.f32 %v5773, %v5771
    %v5775 = vxor.u32 %v5774, 2147483648
    %v5776 = vsel %vm5693, %v5775, %v5774
    %v5777 = vsub.s32 4, %v5753
    %v5778 = vsel %vm5693, %v5777, %v5753
    %v5779 = vsel %vm5692, %v1182, %v5776
    %v5780 = vsel %vm5692, 0, %v5778
    %v5781 = vcosq.f32.pop %v5779
    %v5782 = vsinq.f32.pop %v5779
    %vm5783 = vweird.f32 %v1182
    %v5784 = vadd.s32 %v5780, 3
    %v5785 = vand.u32 %v5784, 3
    %vm5786 = vcmp.lt.s32.totalorder %v5785, 2
    %vm5787 = vcmp.eq.s32.totalorder %v5785, 0
    %v5788 = vxor.u32 %v5782, 2147483648
    %v5789 = vsel %vm5787, %v5781, %v5788
    %vm5790 = vcmp.eq.s32.totalorder %v5785, 2
    %v5791 = vxor.u32 %v5781, 2147483648
    %v5792 = vsel %vm5790, %v5791, %v5782
    %v5793 = vsel %vm5786, %v5789, %v5792
    %v5794 = vsel %vm5783, nan, %v5793
    %v5795 = vand.u32 2147483647, %v1183
    %vm5796 = vcmp.le.f32.partialorder %v5795, 0.7853982
    %vm5797 = vcmp.lt.s32.totalorder %v1183, 0
    %v5798 = vand.u32 %v1183, 2139095040
    %v5799 = vshrl.u32 %v5798, 23
    %v5800 = vsub.s32 %v5799, 127
    %v5801 = vand.u32 2147483647, %v1183
    %v5802 = vand.u32 %v5801, 8388607
    %v5803 = vor.u32 %v5802, 8388608
    %v5804 = vsub.s32 0, %v5803
    %v5805 = vadd.s32 %v5800, 1
    %vm5806 = vcmp.gt.s32.totalorder %v5805, 0
    %v5807 = vsel %vm5806, %v5805, 0
    %v5808 = vshrl.u32 %v5807, 5
    %v5809 = vand.u32 %v5807, 31
    %v5810 = vsub.s32 32, %v5809
    %v5811 = vshrl.u32 683565275, %v5810
    %v5812 = vshll.u32 683565275, %v5809
    %v5813 = vshrl.u32 2475754826, %v5810
    %v5814 = vor.u32 %v5812, %v5813
    %v5815 = vshll.u32 2475754826, %v5809
    %v5816 = vshrl.u32 2131351028, %v5810
    %v5817 = vor.u32 %v5815, %v5816
    %v5818 = vshll.u32 2131351028, %v5809
    %v5819 = vshrl.u32 2102212464, %v5810
    %v5820 = vor.u32 %v5818, %v5819
    %v5821 = vshll.u32 2102212464, %v5809
    %v5822 = vshrl.u32 920167782, %v5810
    %v5823 = vor.u32 %v5821, %v5822
    %v5824 = vshll.u32 920167782, %v5809
    %v5825 = vshrl.u32 1326507024, %v5810
    %v5826 = vor.u32 %v5824, %v5825
    %vm5827 = vcmp.lt.s32.totalorder %v5808, 1
    %vm5828 = vcmp.lt.s32.totalorder %v5808, 2
    %vm5829 = vcmp.lt.s32.totalorder %v5808, 3
    %vm5830 = vcmp.lt.s32.totalorder %v5808, 4
    %v5831 = vsel %vm5827, %v5811, %v5814
    %v5832 = vsel %vm5830, %v5820, 2102212464
    %v5833 = vsel %vm5829, %v5817, %v5832
    %v5834 = vsel %vm5828, %v5831, %v5833
    %v5835 = vsel %vm5827, %v5814, %v5817
    %v5836 = vsel %vm5830, %v5823, 920167782
    %v5837 = vsel %vm5829, %v5820, %v5836
    %v5838 = vsel %vm5828, %v5835, %v5837
    %v5839 = vsel %vm5827, %v5817, %v5820
    %v5840 = vsel %vm5830, %v5826, 1326507024
    %v5841 = vsel %vm5829, %v5823, %v5840
    %v5842 = vsel %vm5828, %v5839, %v5841
    %v5843 = vshll.u32 %v5803, 8
    %v5844 = vmul.u32.u64.compose %v5843, %v5842
    %v5845 = vextract.low.u32 %v5844
    %v5846 = vextract.high.u32 %v5844
    %v5847 = vmul.u32.u64.compose %v5843, %v5838
    %v5848 = vextract.low.u32 %v5847
    %v5849 = vextract.high.u32 %v5847
    %v5850 = vmul.u32 %v5843, %v5834
    %v5851 = vadd.s32 %v5846, %v5848
    %vm5852 = vc.u32 %v5846, %v5848
    %v5853 = vadd.s32 %v5849, 1
    %v5854 = vsel %vm5852, %v5853, %v5849
    %v5855 = vadd.s32 %v5850, %v5854
    %v5856 = vadd.s32 %v5855, 536870912
    %v5857 = vshrl.u32 %v5856, 30
    %v5858 = vshll.u32 %v5857, 30
    %v5859 = vsub.s32 %v5855, %v5858
    %vm5860 = vcmp.lt.s32.totalorder %v5859, 0
    %v5861 = vsub.s32 0, %v5859
    %v5862 = vsel %vm5860, %v5861, %v5859
    %v5863 = vclz %v5862
    %v5864 = vsub.s32 %v5863, 2
    %vm5865 = vcmp.gt.s32.totalorder 0, %v5864
    %v5866 = vsel %vm5865, 0, %v5864
    %v5867 = vsub.s32 32, %v5866
    %v5868 = vshll.u32 %v5859, %v5866
    %v5869 = vshrl.u32 %v5851, %v5867
    %v5870 = vor.u32 %v5868, %v5869
    %v5871 = vsub.s32 4294967266, %v5866
    %v5872 = vadd.s32 %v5871, 127
    %v5873 = vshll.u32 %v5872, 23
    %v5874 = vor.u32 4788187, %v5873
    %v5875 = vand.u32 2147483647, %v5874
    %v5877 = vcvt.s32.f32 %v5870
    %v5878 = vmul.f32 %v5877, %v5875
    %v5879 = vxor.u32 %v5878, 2147483648
    %v5880 = vsel %vm5797, %v5879, %v5878
    %v5881 = vsub.s32 4, %v5857
    %v5882 = vsel %vm5797, %v5881, %v5857
    %v5883 = vsel %vm5796, %v1183, %v5880
    %v5884 = vsel %vm5796, 0, %v5882
    %v5885 = vcosq.f32.pop %v5883
    %v5886 = vsinq.f32.pop %v5883
    %vm5887 = vweird.f32 %v1183
    %v5888 = vadd.s32 %v5884, 3
    %v5889 = vand.u32 %v5888, 3
    %vm5890 = vcmp.lt.s32.totalorder %v5889, 2
    %vm5891 = vcmp.eq.s32.totalorder %v5889, 0
    %v5892 = vxor.u32 %v5886, 2147483648
    %v5893 = vsel %vm5891, %v5885, %v5892
    %vm5894 = vcmp.eq.s32.totalorder %v5889, 2
    %v5895 = vxor.u32 %v5885, 2147483648
    %v5896 = vsel %vm5894, %v5895, %v5886
    %v5897 = vsel %vm5890, %v5893, %v5896
    %v5898 = vsel %vm5887, nan, %v5897
    %v5899 = vand.u32 2147483647, %v1184
    %vm5900 = vcmp.le.f32.partialorder %v5899, 0.7853982
    %vm5901 = vcmp.lt.s32.totalorder %v1184, 0
    %v5902 = vand.u32 %v1184, 2139095040
    %v5903 = vshrl.u32 %v5902, 23
    %v5904 = vsub.s32 %v5903, 127
    %v5905 = vand.u32 2147483647, %v1184
    %v5906 = vand.u32 %v5905, 8388607
    %v5907 = vor.u32 %v5906, 8388608
    %v5908 = vsub.s32 0, %v5907
    %v5909 = vadd.s32 %v5904, 1
    %vm5910 = vcmp.gt.s32.totalorder %v5909, 0
    %v5911 = vsel %vm5910, %v5909, 0
    %v5912 = vshrl.u32 %v5911, 5
    %v5913 = vand.u32 %v5911, 31
    %v5914 = vsub.s32 32, %v5913
    %v5915 = vshrl.u32 683565275, %v5914
    %v5916 = vshll.u32 683565275, %v5913
    %v5917 = vshrl.u32 2475754826, %v5914
    %v5918 = vor.u32 %v5916, %v5917
    %v5919 = vshll.u32 2475754826, %v5913
    %v5920 = vshrl.u32 2131351028, %v5914
    %v5921 = vor.u32 %v5919, %v5920
    %v5922 = vshll.u32 2131351028, %v5913
    %v5923 = vshrl.u32 2102212464, %v5914
    %v5924 = vor.u32 %v5922, %v5923
    %v5925 = vshll.u32 2102212464, %v5913
    %v5926 = vshrl.u32 920167782, %v5914
    %v5927 = vor.u32 %v5925, %v5926
    %v5928 = vshll.u32 920167782, %v5913
    %v5929 = vshrl.u32 1326507024, %v5914
    %v5930 = vor.u32 %v5928, %v5929
    %vm5931 = vcmp.lt.s32.totalorder %v5912, 1
    %vm5932 = vcmp.lt.s32.totalorder %v5912, 2
    %vm5933 = vcmp.lt.s32.totalorder %v5912, 3
    %vm5934 = vcmp.lt.s32.totalorder %v5912, 4
    %v5935 = vsel %vm5931, %v5915, %v5918
    %v5936 = vsel %vm5934, %v5924, 2102212464
    %v5937 = vsel %vm5933, %v5921, %v5936
    %v5938 = vsel %vm5932, %v5935, %v5937
    %v5939 = vsel %vm5931, %v5918, %v5921
    %v5940 = vsel %vm5934, %v5927, 920167782
    %v5941 = vsel %vm5933, %v5924, %v5940
    %v5942 = vsel %vm5932, %v5939, %v5941
    %v5943 = vsel %vm5931, %v5921, %v5924
    %v5944 = vsel %vm5934, %v5930, 1326507024
    %v5945 = vsel %vm5933, %v5927, %v5944
    %v5946 = vsel %vm5932, %v5943, %v5945
    %v5947 = vshll.u32 %v5907, 8
    %v5948 = vmul.u32.u64.compose %v5947, %v5946
    %v5949 = vextract.low.u32 %v5948
    %v5950 = vextract.high.u32 %v5948
    %v5951 = vmul.u32.u64.compose %v5947, %v5942
    %v5952 = vextract.low.u32 %v5951
    %v5953 = vextract.high.u32 %v5951
    %v5954 = vmul.u32 %v5947, %v5938
    %v5955 = vadd.s32 %v5950, %v5952
    %vm5956 = vc.u32 %v5950, %v5952
    %v5957 = vadd.s32 %v5953, 1
    %v5958 = vsel %vm5956, %v5957, %v5953
    %v5959 = vadd.s32 %v5954, %v5958
    %v5960 = vadd.s32 %v5959, 536870912
    %v5961 = vshrl.u32 %v5960, 30
    %v5962 = vshll.u32 %v5961, 30
    %v5963 = vsub.s32 %v5959, %v5962
    %vm5964 = vcmp.lt.s32.totalorder %v5963, 0
    %v5965 = vsub.s32 0, %v5963
    %v5966 = vsel %vm5964, %v5965, %v5963
    %v5967 = vclz %v5966
    %v5968 = vsub.s32 %v5967, 2
    %vm5969 = vcmp.gt.s32.totalorder 0, %v5968
    %v5970 = vsel %vm5969, 0, %v5968
    %v5971 = vsub.s32 32, %v5970
    %v5972 = vshll.u32 %v5963, %v5970
    %v5973 = vshrl.u32 %v5955, %v5971
    %v5974 = vor.u32 %v5972, %v5973
    %v5975 = vsub.s32 4294967266, %v5970
    %v5976 = vadd.s32 %v5975, 127
    %v5977 = vshll.u32 %v5976, 23
    %v5978 = vor.u32 4788187, %v5977
    %v5979 = vand.u32 2147483647, %v5978
    %v5981 = vcvt.s32.f32 %v5974
    %v5982 = vmul.f32 %v5981, %v5979
    %v5983 = vxor.u32 %v5982, 2147483648
    %v5984 = vsel %vm5901, %v5983, %v5982
    %v5985 = vsub.s32 4, %v5961
    %v5986 = vsel %vm5901, %v5985, %v5961
    %v5987 = vsel %vm5900, %v1184, %v5984
    %v5988 = vsel %vm5900, 0, %v5986
    %v5989 = vcosq.f32.pop %v5987
    %v5990 = vsinq.f32.pop %v5987
    %vm5991 = vweird.f32 %v1184
    %v5992 = vadd.s32 %v5988, 3
    %v5993 = vand.u32 %v5992, 3
    %vm5994 = vcmp.lt.s32.totalorder %v5993, 2
    %vm5995 = vcmp.eq.s32.totalorder %v5993, 0
    %v5996 = vxor.u32 %v5990, 2147483648
    %v5997 = vsel %vm5995, %v5989, %v5996
    %vm5998 = vcmp.eq.s32.totalorder %v5993, 2
    %v5999 = vxor.u32 %v5989, 2147483648
    %v6000 = vsel %vm5998, %v5999, %v5990
    %v6001 = vsel %vm5994, %v5997, %v6000
    %v6002 = vsel %vm5991, nan, %v6001
    %v6003 = vand.u32 2147483647, %v1185
    %vm6004 = vcmp.le.f32.partialorder %v6003, 0.7853982
    %vm6005 = vcmp.lt.s32.totalorder %v1185, 0
    %v6006 = vand.u32 %v1185, 2139095040
    %v6007 = vshrl.u32 %v6006, 23
    %v6008 = vsub.s32 %v6007, 127
    %v6009 = vand.u32 2147483647, %v1185
    %v6010 = vand.u32 %v6009, 8388607
    %v6011 = vor.u32 %v6010, 8388608
    %v6012 = vsub.s32 0, %v6011
    %v6013 = vadd.s32 %v6008, 1
    %vm6014 = vcmp.gt.s32.totalorder %v6013, 0
    %v6015 = vsel %vm6014, %v6013, 0
    %v6016 = vshrl.u32 %v6015, 5
    %v6017 = vand.u32 %v6015, 31
    %v6018 = vsub.s32 32, %v6017
    %v6019 = vshrl.u32 683565275, %v6018
    %v6020 = vshll.u32 683565275, %v6017
    %v6021 = vshrl.u32 2475754826, %v6018
    %v6022 = vor.u32 %v6020, %v6021
    %v6023 = vshll.u32 2475754826, %v6017
    %v6024 = vshrl.u32 2131351028, %v6018
    %v6025 = vor.u32 %v6023, %v6024
    %v6026 = vshll.u32 2131351028, %v6017
    %v6027 = vshrl.u32 2102212464, %v6018
    %v6028 = vor.u32 %v6026, %v6027
    %v6029 = vshll.u32 2102212464, %v6017
    %v6030 = vshrl.u32 920167782, %v6018
    %v6031 = vor.u32 %v6029, %v6030
    %v6032 = vshll.u32 920167782, %v6017
    %v6033 = vshrl.u32 1326507024, %v6018
    %v6034 = vor.u32 %v6032, %v6033
    %vm6035 = vcmp.lt.s32.totalorder %v6016, 1
    %vm6036 = vcmp.lt.s32.totalorder %v6016, 2
    %vm6037 = vcmp.lt.s32.totalorder %v6016, 3
    %vm6038 = vcmp.lt.s32.totalorder %v6016, 4
    %v6039 = vsel %vm6035, %v6019, %v6022
    %v6040 = vsel %vm6038, %v6028, 2102212464
    %v6041 = vsel %vm6037, %v6025, %v6040
    %v6042 = vsel %vm6036, %v6039, %v6041
    %v6043 = vsel %vm6035, %v6022, %v6025
    %v6044 = vsel %vm6038, %v6031, 920167782
    %v6045 = vsel %vm6037, %v6028, %v6044
    %v6046 = vsel %vm6036, %v6043, %v6045
    %v6047 = vsel %vm6035, %v6025, %v6028
    %v6048 = vsel %vm6038, %v6034, 1326507024
    %v6049 = vsel %vm6037, %v6031, %v6048
    %v6050 = vsel %vm6036, %v6047, %v6049
    %v6051 = vshll.u32 %v6011, 8
    %v6052 = vmul.u32.u64.compose %v6051, %v6050
    %v6053 = vextract.low.u32 %v6052
    %v6054 = vextract.high.u32 %v6052
    %v6055 = vmul.u32.u64.compose %v6051, %v6046
    %v6056 = vextract.low.u32 %v6055
    %v6057 = vextract.high.u32 %v6055
    %v6058 = vmul.u32 %v6051, %v6042
    %v6059 = vadd.s32 %v6054, %v6056
    %vm6060 = vc.u32 %v6054, %v6056
    %v6061 = vadd.s32 %v6057, 1
    %v6062 = vsel %vm6060, %v6061, %v6057
    %v6063 = vadd.s32 %v6058, %v6062
    %v6064 = vadd.s32 %v6063, 536870912
    %v6065 = vshrl.u32 %v6064, 30
    %v6066 = vshll.u32 %v6065, 30
    %v6067 = vsub.s32 %v6063, %v6066
    %vm6068 = vcmp.lt.s32.totalorder %v6067, 0
    %v6069 = vsub.s32 0, %v6067
    %v6070 = vsel %vm6068, %v6069, %v6067
    %v6071 = vclz %v6070
    %v6072 = vsub.s32 %v6071, 2
    %vm6073 = vcmp.gt.s32.totalorder 0, %v6072
    %v6074 = vsel %vm6073, 0, %v6072
    %v6075 = vsub.s32 32, %v6074
    %v6076 = vshll.u32 %v6067, %v6074
    %v6077 = vshrl.u32 %v6059, %v6075
    %v6078 = vor.u32 %v6076, %v6077
    %v6079 = vsub.s32 4294967266, %v6074
    %v6080 = vadd.s32 %v6079, 127
    %v6081 = vshll.u32 %v6080, 23
    %v6082 = vor.u32 4788187, %v6081
    %v6083 = vand.u32 2147483647, %v6082
    %v6085 = vcvt.s32.f32 %v6078
    %v6086 = vmul.f32 %v6085, %v6083
    %v6087 = vxor.u32 %v6086, 2147483648
    %v6088 = vsel %vm6005, %v6087, %v6086
    %v6089 = vsub.s32 4, %v6065
    %v6090 = vsel %vm6005, %v6089, %v6065
    %v6091 = vsel %vm6004, %v1185, %v6088
    %v6092 = vsel %vm6004, 0, %v6090
    %v6093 = vcosq.f32.pop %v6091
    %v6094 = vsinq.f32.pop %v6091
    %vm6095 = vweird.f32 %v1185
    %v6096 = vadd.s32 %v6092, 3
    %v6097 = vand.u32 %v6096, 3
    %vm6098 = vcmp.lt.s32.totalorder %v6097, 2
    %vm6099 = vcmp.eq.s32.totalorder %v6097, 0
    %v6100 = vxor.u32 %v6094, 2147483648
    %v6101 = vsel %vm6099, %v6093, %v6100
    %vm6102 = vcmp.eq.s32.totalorder %v6097, 2
    %v6103 = vxor.u32 %v6093, 2147483648
    %v6104 = vsel %vm6102, %v6103, %v6094
    %v6105 = vsel %vm6098, %v6101, %v6104
    %v6106 = vsel %vm6095, nan, %v6105
    %v6107 = vand.u32 2147483647, %v1186
    %vm6108 = vcmp.le.f32.partialorder %v6107, 0.7853982
    %vm6109 = vcmp.lt.s32.totalorder %v1186, 0
    %v6110 = vand.u32 %v1186, 2139095040
    %v6111 = vshrl.u32 %v6110, 23
    %v6112 = vsub.s32 %v6111, 127
    %v6113 = vand.u32 2147483647, %v1186
    %v6114 = vand.u32 %v6113, 8388607
    %v6115 = vor.u32 %v6114, 8388608
    %v6116 = vsub.s32 0, %v6115
    %v6117 = vadd.s32 %v6112, 1
    %vm6118 = vcmp.gt.s32.totalorder %v6117, 0
    %v6119 = vsel %vm6118, %v6117, 0
    %v6120 = vshrl.u32 %v6119, 5
    %v6121 = vand.u32 %v6119, 31
    %v6122 = vsub.s32 32, %v6121
    %v6123 = vshrl.u32 683565275, %v6122
    %v6124 = vshll.u32 683565275, %v6121
    %v6125 = vshrl.u32 2475754826, %v6122
    %v6126 = vor.u32 %v6124, %v6125
    %v6127 = vshll.u32 2475754826, %v6121
    %v6128 = vshrl.u32 2131351028, %v6122
    %v6129 = vor.u32 %v6127, %v6128
    %v6130 = vshll.u32 2131351028, %v6121
    %v6131 = vshrl.u32 2102212464, %v6122
    %v6132 = vor.u32 %v6130, %v6131
    %v6133 = vshll.u32 2102212464, %v6121
    %v6134 = vshrl.u32 920167782, %v6122
    %v6135 = vor.u32 %v6133, %v6134
    %v6136 = vshll.u32 920167782, %v6121
    %v6137 = vshrl.u32 1326507024, %v6122
    %v6138 = vor.u32 %v6136, %v6137
    %vm6139 = vcmp.lt.s32.totalorder %v6120, 1
    %vm6140 = vcmp.lt.s32.totalorder %v6120, 2
    %vm6141 = vcmp.lt.s32.totalorder %v6120, 3
    %vm6142 = vcmp.lt.s32.totalorder %v6120, 4
    %v6143 = vsel %vm6139, %v6123, %v6126
    %v6144 = vsel %vm6142, %v6132, 2102212464
    %v6145 = vsel %vm6141, %v6129, %v6144
    %v6146 = vsel %vm6140, %v6143, %v6145
    %v6147 = vsel %vm6139, %v6126, %v6129
    %v6148 = vsel %vm6142, %v6135, 920167782
    %v6149 = vsel %vm6141, %v6132, %v6148
    %v6150 = vsel %vm6140, %v6147, %v6149
    %v6151 = vsel %vm6139, %v6129, %v6132
    %v6152 = vsel %vm6142, %v6138, 1326507024
    %v6153 = vsel %vm6141, %v6135, %v6152
    %v6154 = vsel %vm6140, %v6151, %v6153
    %v6155 = vshll.u32 %v6115, 8
    %v6156 = vmul.u32.u64.compose %v6155, %v6154
    %v6157 = vextract.low.u32 %v6156
    %v6158 = vextract.high.u32 %v6156
    %v6159 = vmul.u32.u64.compose %v6155, %v6150
    %v6160 = vextract.low.u32 %v6159
    %v6161 = vextract.high.u32 %v6159
    %v6162 = vmul.u32 %v6155, %v6146
    %v6163 = vadd.s32 %v6158, %v6160
    %vm6164 = vc.u32 %v6158, %v6160
    %v6165 = vadd.s32 %v6161, 1
    %v6166 = vsel %vm6164, %v6165, %v6161
    %v6167 = vadd.s32 %v6162, %v6166
    %v6168 = vadd.s32 %v6167, 536870912
    %v6169 = vshrl.u32 %v6168, 30
    %v6170 = vshll.u32 %v6169, 30
    %v6171 = vsub.s32 %v6167, %v6170
    %vm6172 = vcmp.lt.s32.totalorder %v6171, 0
    %v6173 = vsub.s32 0, %v6171
    %v6174 = vsel %vm6172, %v6173, %v6171
    %v6175 = vclz %v6174
    %v6176 = vsub.s32 %v6175, 2
    %vm6177 = vcmp.gt.s32.totalorder 0, %v6176
    %v6178 = vsel %vm6177, 0, %v6176
    %v6179 = vsub.s32 32, %v6178
    %v6180 = vshll.u32 %v6171, %v6178
    %v6181 = vshrl.u32 %v6163, %v6179
    %v6182 = vor.u32 %v6180, %v6181
    %v6183 = vsub.s32 4294967266, %v6178
    %v6184 = vadd.s32 %v6183, 127
    %v6185 = vshll.u32 %v6184, 23
    %v6186 = vor.u32 4788187, %v6185
    %v6187 = vand.u32 2147483647, %v6186
    %v6189 = vcvt.s32.f32 %v6182
    %v6190 = vmul.f32 %v6189, %v6187
    %v6191 = vxor.u32 %v6190, 2147483648
    %v6192 = vsel %vm6109, %v6191, %v6190
    %v6193 = vsub.s32 4, %v6169
    %v6194 = vsel %vm6109, %v6193, %v6169
    %v6195 = vsel %vm6108, %v1186, %v6192
    %v6196 = vsel %vm6108, 0, %v6194
    %v6197 = vcosq.f32.pop %v6195
    %v6198 = vsinq.f32.pop %v6195
    %vm6199 = vweird.f32 %v1186
    %v6200 = vadd.s32 %v6196, 3
    %v6201 = vand.u32 %v6200, 3
    %vm6202 = vcmp.lt.s32.totalorder %v6201, 2
    %vm6203 = vcmp.eq.s32.totalorder %v6201, 0
    %v6204 = vxor.u32 %v6198, 2147483648
    %v6205 = vsel %vm6203, %v6197, %v6204
    %vm6206 = vcmp.eq.s32.totalorder %v6201, 2
    %v6207 = vxor.u32 %v6197, 2147483648
    %v6208 = vsel %vm6206, %v6207, %v6198
    %v6209 = vsel %vm6202, %v6205, %v6208
    %v6210 = vsel %vm6199, nan, %v6209
    %v6211 = vand.u32 2147483647, %v1187
    %vm6212 = vcmp.le.f32.partialorder %v6211, 0.7853982
    %vm6213 = vcmp.lt.s32.totalorder %v1187, 0
    %v6214 = vand.u32 %v1187, 2139095040
    %v6215 = vshrl.u32 %v6214, 23
    %v6216 = vsub.s32 %v6215, 127
    %v6217 = vand.u32 2147483647, %v1187
    %v6218 = vand.u32 %v6217, 8388607
    %v6219 = vor.u32 %v6218, 8388608
    %v6220 = vsub.s32 0, %v6219
    %v6221 = vadd.s32 %v6216, 1
    %vm6222 = vcmp.gt.s32.totalorder %v6221, 0
    %v6223 = vsel %vm6222, %v6221, 0
    %v6224 = vshrl.u32 %v6223, 5
    %v6225 = vand.u32 %v6223, 31
    %v6226 = vsub.s32 32, %v6225
    %v6227 = vshrl.u32 683565275, %v6226
    %v6228 = vshll.u32 683565275, %v6225
    %v6229 = vshrl.u32 2475754826, %v6226
    %v6230 = vor.u32 %v6228, %v6229
    %v6231 = vshll.u32 2475754826, %v6225
    %v6232 = vshrl.u32 2131351028, %v6226
    %v6233 = vor.u32 %v6231, %v6232
    %v6234 = vshll.u32 2131351028, %v6225
    %v6235 = vshrl.u32 2102212464, %v6226
    %v6236 = vor.u32 %v6234, %v6235
    %v6237 = vshll.u32 2102212464, %v6225
    %v6238 = vshrl.u32 920167782, %v6226
    %v6239 = vor.u32 %v6237, %v6238
    %v6240 = vshll.u32 920167782, %v6225
    %v6241 = vshrl.u32 1326507024, %v6226
    %v6242 = vor.u32 %v6240, %v6241
    %vm6243 = vcmp.lt.s32.totalorder %v6224, 1
    %vm6244 = vcmp.lt.s32.totalorder %v6224, 2
    %vm6245 = vcmp.lt.s32.totalorder %v6224, 3
    %vm6246 = vcmp.lt.s32.totalorder %v6224, 4
    %v6247 = vsel %vm6243, %v6227, %v6230
    %v6248 = vsel %vm6246, %v6236, 2102212464
    %v6249 = vsel %vm6245, %v6233, %v6248
    %v6250 = vsel %vm6244, %v6247, %v6249
    %v6251 = vsel %vm6243, %v6230, %v6233
    %v6252 = vsel %vm6246, %v6239, 920167782
    %v6253 = vsel %vm6245, %v6236, %v6252
    %v6254 = vsel %vm6244, %v6251, %v6253
    %v6255 = vsel %vm6243, %v6233, %v6236
    %v6256 = vsel %vm6246, %v6242, 1326507024
    %v6257 = vsel %vm6245, %v6239, %v6256
    %v6258 = vsel %vm6244, %v6255, %v6257
    %v6259 = vshll.u32 %v6219, 8
    %v6260 = vmul.u32.u64.compose %v6259, %v6258
    %v6261 = vextract.low.u32 %v6260
    %v6262 = vextract.high.u32 %v6260
    %v6263 = vmul.u32.u64.compose %v6259, %v6254
    %v6264 = vextract.low.u32 %v6263
    %v6265 = vextract.high.u32 %v6263
    %v6266 = vmul.u32 %v6259, %v6250
    %v6267 = vadd.s32 %v6262, %v6264
    %vm6268 = vc.u32 %v6262, %v6264
    %v6269 = vadd.s32 %v6265, 1
    %v6270 = vsel %vm6268, %v6269, %v6265
    %v6271 = vadd.s32 %v6266, %v6270
    %v6272 = vadd.s32 %v6271, 536870912
    %v6273 = vshrl.u32 %v6272, 30
    %v6274 = vshll.u32 %v6273, 30
    %v6275 = vsub.s32 %v6271, %v6274
    %vm6276 = vcmp.lt.s32.totalorder %v6275, 0
    %v6277 = vsub.s32 0, %v6275
    %v6278 = vsel %vm6276, %v6277, %v6275
    %v6279 = vclz %v6278
    %v6280 = vsub.s32 %v6279, 2
    %vm6281 = vcmp.gt.s32.totalorder 0, %v6280
    %v6282 = vsel %vm6281, 0, %v6280
    %v6283 = vsub.s32 32, %v6282
    %v6284 = vshll.u32 %v6275, %v6282
    %v6285 = vshrl.u32 %v6267, %v6283
    %v6286 = vor.u32 %v6284, %v6285
    %v6287 = vsub.s32 4294967266, %v6282
    %v6288 = vadd.s32 %v6287, 127
    %v6289 = vshll.u32 %v6288, 23
    %v6290 = vor.u32 4788187, %v6289
    %v6291 = vand.u32 2147483647, %v6290
    %v6293 = vcvt.s32.f32 %v6286
    %v6294 = vmul.f32 %v6293, %v6291
    %v6295 = vxor.u32 %v6294, 2147483648
    %v6296 = vsel %vm6213, %v6295, %v6294
    %v6297 = vsub.s32 4, %v6273
    %v6298 = vsel %vm6213, %v6297, %v6273
    %v6299 = vsel %vm6212, %v1187, %v6296
    %v6300 = vsel %vm6212, 0, %v6298
    %v6301 = vcosq.f32.pop %v6299
    %v6302 = vsinq.f32.pop %v6299
    %vm6303 = vweird.f32 %v1187
    %v6304 = vadd.s32 %v6300, 3
    %v6305 = vand.u32 %v6304, 3
    %vm6306 = vcmp.lt.s32.totalorder %v6305, 2
    %vm6307 = vcmp.eq.s32.totalorder %v6305, 0
    %v6308 = vxor.u32 %v6302, 2147483648
    %v6309 = vsel %vm6307, %v6301, %v6308
    %vm6310 = vcmp.eq.s32.totalorder %v6305, 2
    %v6311 = vxor.u32 %v6301, 2147483648
    %v6312 = vsel %vm6310, %v6311, %v6302
    %v6313 = vsel %vm6306, %v6309, %v6312
    %v6314 = vsel %vm6303, nan, %v6313
    %v6315 = vand.u32 2147483647, %v1188
    %vm6316 = vcmp.le.f32.partialorder %v6315, 0.7853982
    %vm6317 = vcmp.lt.s32.totalorder %v1188, 0
    %v6318 = vand.u32 %v1188, 2139095040
    %v6319 = vshrl.u32 %v6318, 23
    %v6320 = vsub.s32 %v6319, 127
    %v6321 = vand.u32 2147483647, %v1188
    %v6322 = vand.u32 %v6321, 8388607
    %v6323 = vor.u32 %v6322, 8388608
    %v6324 = vsub.s32 0, %v6323
    %v6325 = vadd.s32 %v6320, 1
    %vm6326 = vcmp.gt.s32.totalorder %v6325, 0
    %v6327 = vsel %vm6326, %v6325, 0
    %v6328 = vshrl.u32 %v6327, 5
    %v6329 = vand.u32 %v6327, 31
    %v6330 = vsub.s32 32, %v6329
    %v6331 = vshrl.u32 683565275, %v6330
    %v6332 = vshll.u32 683565275, %v6329
    %v6333 = vshrl.u32 2475754826, %v6330
    %v6334 = vor.u32 %v6332, %v6333
    %v6335 = vshll.u32 2475754826, %v6329
    %v6336 = vshrl.u32 2131351028, %v6330
    %v6337 = vor.u32 %v6335, %v6336
    %v6338 = vshll.u32 2131351028, %v6329
    %v6339 = vshrl.u32 2102212464, %v6330
    %v6340 = vor.u32 %v6338, %v6339
    %v6341 = vshll.u32 2102212464, %v6329
    %v6342 = vshrl.u32 920167782, %v6330
    %v6343 = vor.u32 %v6341, %v6342
    %v6344 = vshll.u32 920167782, %v6329
    %v6345 = vshrl.u32 1326507024, %v6330
    %v6346 = vor.u32 %v6344, %v6345
    %vm6347 = vcmp.lt.s32.totalorder %v6328, 1
    %vm6348 = vcmp.lt.s32.totalorder %v6328, 2
    %vm6349 = vcmp.lt.s32.totalorder %v6328, 3
    %vm6350 = vcmp.lt.s32.totalorder %v6328, 4
    %v6351 = vsel %vm6347, %v6331, %v6334
    %v6352 = vsel %vm6350, %v6340, 2102212464
    %v6353 = vsel %vm6349, %v6337, %v6352
    %v6354 = vsel %vm6348, %v6351, %v6353
    %v6355 = vsel %vm6347, %v6334, %v6337
    %v6356 = vsel %vm6350, %v6343, 920167782
    %v6357 = vsel %vm6349, %v6340, %v6356
    %v6358 = vsel %vm6348, %v6355, %v6357
    %v6359 = vsel %vm6347, %v6337, %v6340
    %v6360 = vsel %vm6350, %v6346, 1326507024
    %v6361 = vsel %vm6349, %v6343, %v6360
    %v6362 = vsel %vm6348, %v6359, %v6361
    %v6363 = vshll.u32 %v6323, 8
    %v6364 = vmul.u32.u64.compose %v6363, %v6362
    %v6365 = vextract.low.u32 %v6364
    %v6366 = vextract.high.u32 %v6364
    %v6367 = vmul.u32.u64.compose %v6363, %v6358
    %v6368 = vextract.low.u32 %v6367
    %v6369 = vextract.high.u32 %v6367
    %v6370 = vmul.u32 %v6363, %v6354
    %v6371 = vadd.s32 %v6366, %v6368
    %vm6372 = vc.u32 %v6366, %v6368
    %v6373 = vadd.s32 %v6369, 1
    %v6374 = vsel %vm6372, %v6373, %v6369
    %v6375 = vadd.s32 %v6370, %v6374
    %v6376 = vadd.s32 %v6375, 536870912
    %v6377 = vshrl.u32 %v6376, 30
    %v6378 = vshll.u32 %v6377, 30
    %v6379 = vsub.s32 %v6375, %v6378
    %vm6380 = vcmp.lt.s32.totalorder %v6379, 0
    %v6381 = vsub.s32 0, %v6379
    %v6382 = vsel %vm6380, %v6381, %v6379
    %v6383 = vclz %v6382
    %v6384 = vsub.s32 %v6383, 2
    %vm6385 = vcmp.gt.s32.totalorder 0, %v6384
    %v6386 = vsel %vm6385, 0, %v6384
    %v6387 = vsub.s32 32, %v6386
    %v6388 = vshll.u32 %v6379, %v6386
    %v6389 = vshrl.u32 %v6371, %v6387
    %v6390 = vor.u32 %v6388, %v6389
    %v6391 = vsub.s32 4294967266, %v6386
    %v6392 = vadd.s32 %v6391, 127
    %v6393 = vshll.u32 %v6392, 23
    %v6394 = vor.u32 4788187, %v6393
    %v6395 = vand.u32 2147483647, %v6394
    %v6397 = vcvt.s32.f32 %v6390
    %v6398 = vmul.f32 %v6397, %v6395
    %v6399 = vxor.u32 %v6398, 2147483648
    %v6400 = vsel %vm6317, %v6399, %v6398
    %v6401 = vsub.s32 4, %v6377
    %v6402 = vsel %vm6317, %v6401, %v6377
    %v6403 = vsel %vm6316, %v1188, %v6400
    %v6404 = vsel %vm6316, 0, %v6402
    %v6405 = vcosq.f32.pop %v6403
    %v6406 = vsinq.f32.pop %v6403
    %vm6407 = vweird.f32 %v1188
    %v6408 = vadd.s32 %v6404, 3
    %v6409 = vand.u32 %v6408, 3
    %vm6410 = vcmp.lt.s32.totalorder %v6409, 2
    %vm6411 = vcmp.eq.s32.totalorder %v6409, 0
    %v6412 = vxor.u32 %v6406, 2147483648
    %v6413 = vsel %vm6411, %v6405, %v6412
    %vm6414 = vcmp.eq.s32.totalorder %v6409, 2
    %v6415 = vxor.u32 %v6405, 2147483648
    %v6416 = vsel %vm6414, %v6415, %v6406
    %v6417 = vsel %vm6410, %v6413, %v6416
    %v6418 = vsel %vm6407, nan, %v6417
    %v6419 = vand.u32 2147483647, %v1189
    %vm6420 = vcmp.le.f32.partialorder %v6419, 0.7853982
    %vm6421 = vcmp.lt.s32.totalorder %v1189, 0
    %v6422 = vand.u32 %v1189, 2139095040
    %v6423 = vshrl.u32 %v6422, 23
    %v6424 = vsub.s32 %v6423, 127
    %v6425 = vand.u32 2147483647, %v1189
    %v6426 = vand.u32 %v6425, 8388607
    %v6427 = vor.u32 %v6426, 8388608
    %v6428 = vsub.s32 0, %v6427
    %v6429 = vadd.s32 %v6424, 1
    %vm6430 = vcmp.gt.s32.totalorder %v6429, 0
    %v6431 = vsel %vm6430, %v6429, 0
    %v6432 = vshrl.u32 %v6431, 5
    %v6433 = vand.u32 %v6431, 31
    %v6434 = vsub.s32 32, %v6433
    %v6435 = vshrl.u32 683565275, %v6434
    %v6436 = vshll.u32 683565275, %v6433
    %v6437 = vshrl.u32 2475754826, %v6434
    %v6438 = vor.u32 %v6436, %v6437
    %v6439 = vshll.u32 2475754826, %v6433
    %v6440 = vshrl.u32 2131351028, %v6434
    %v6441 = vor.u32 %v6439, %v6440
    %v6442 = vshll.u32 2131351028, %v6433
    %v6443 = vshrl.u32 2102212464, %v6434
    %v6444 = vor.u32 %v6442, %v6443
    %v6445 = vshll.u32 2102212464, %v6433
    %v6446 = vshrl.u32 920167782, %v6434
    %v6447 = vor.u32 %v6445, %v6446
    %v6448 = vshll.u32 920167782, %v6433
    %v6449 = vshrl.u32 1326507024, %v6434
    %v6450 = vor.u32 %v6448, %v6449
    %vm6451 = vcmp.lt.s32.totalorder %v6432, 1
    %vm6452 = vcmp.lt.s32.totalorder %v6432, 2
    %vm6453 = vcmp.lt.s32.totalorder %v6432, 3
    %vm6454 = vcmp.lt.s32.totalorder %v6432, 4
    %v6455 = vsel %vm6451, %v6435, %v6438
    %v6456 = vsel %vm6454, %v6444, 2102212464
    %v6457 = vsel %vm6453, %v6441, %v6456
    %v6458 = vsel %vm6452, %v6455, %v6457
    %v6459 = vsel %vm6451, %v6438, %v6441
    %v6460 = vsel %vm6454, %v6447, 920167782
    %v6461 = vsel %vm6453, %v6444, %v6460
    %v6462 = vsel %vm6452, %v6459, %v6461
    %v6463 = vsel %vm6451, %v6441, %v6444
    %v6464 = vsel %vm6454, %v6450, 1326507024
    %v6465 = vsel %vm6453, %v6447, %v6464
    %v6466 = vsel %vm6452, %v6463, %v6465
    %v6467 = vshll.u32 %v6427, 8
    %v6468 = vmul.u32.u64.compose %v6467, %v6466
    %v6469 = vextract.low.u32 %v6468
    %v6470 = vextract.high.u32 %v6468
    %v6471 = vmul.u32.u64.compose %v6467, %v6462
    %v6472 = vextract.low.u32 %v6471
    %v6473 = vextract.high.u32 %v6471
    %v6474 = vmul.u32 %v6467, %v6458
    %v6475 = vadd.s32 %v6470, %v6472
    %vm6476 = vc.u32 %v6470, %v6472
    %v6477 = vadd.s32 %v6473, 1
    %v6478 = vsel %vm6476, %v6477, %v6473
    %v6479 = vadd.s32 %v6474, %v6478
    %v6480 = vadd.s32 %v6479, 536870912
    %v6481 = vshrl.u32 %v6480, 30
    %v6482 = vshll.u32 %v6481, 30
    %v6483 = vsub.s32 %v6479, %v6482
    %vm6484 = vcmp.lt.s32.totalorder %v6483, 0
    %v6485 = vsub.s32 0, %v6483
    %v6486 = vsel %vm6484, %v6485, %v6483
    %v6487 = vclz %v6486
    %v6488 = vsub.s32 %v6487, 2
    %vm6489 = vcmp.gt.s32.totalorder 0, %v6488
    %v6490 = vsel %vm6489, 0, %v6488
    %v6491 = vsub.s32 32, %v6490
    %v6492 = vshll.u32 %v6483, %v6490
    %v6493 = vshrl.u32 %v6475, %v6491
    %v6494 = vor.u32 %v6492, %v6493
    %v6495 = vsub.s32 4294967266, %v6490
    %v6496 = vadd.s32 %v6495, 127
    %v6497 = vshll.u32 %v6496, 23
    %v6498 = vor.u32 4788187, %v6497
    %v6499 = vand.u32 2147483647, %v6498
    %v6501 = vcvt.s32.f32 %v6494
    %v6502 = vmul.f32 %v6501, %v6499
    %v6503 = vxor.u32 %v6502, 2147483648
    %v6504 = vsel %vm6421, %v6503, %v6502
    %v6505 = vsub.s32 4, %v6481
    %v6506 = vsel %vm6421, %v6505, %v6481
    %v6507 = vsel %vm6420, %v1189, %v6504
    %v6508 = vsel %vm6420, 0, %v6506
    %v6509 = vcosq.f32.pop %v6507
    %v6510 = vsinq.f32.pop %v6507
    %vm6511 = vweird.f32 %v1189
    %v6512 = vadd.s32 %v6508, 3
    %v6513 = vand.u32 %v6512, 3
    %vm6514 = vcmp.lt.s32.totalorder %v6513, 2
    %vm6515 = vcmp.eq.s32.totalorder %v6513, 0
    %v6516 = vxor.u32 %v6510, 2147483648
    %v6517 = vsel %vm6515, %v6509, %v6516
    %vm6518 = vcmp.eq.s32.totalorder %v6513, 2
    %v6519 = vxor.u32 %v6509, 2147483648
    %v6520 = vsel %vm6518, %v6519, %v6510
    %v6521 = vsel %vm6514, %v6517, %v6520
    %v6522 = vsel %vm6511, nan, %v6521
    %v6523 = vand.u32 2147483647, %v1190
    %vm6524 = vcmp.le.f32.partialorder %v6523, 0.7853982
    %vm6525 = vcmp.lt.s32.totalorder %v1190, 0
    %v6526 = vand.u32 %v1190, 2139095040
    %v6527 = vshrl.u32 %v6526, 23
    %v6528 = vsub.s32 %v6527, 127
    %v6529 = vand.u32 2147483647, %v1190
    %v6530 = vand.u32 %v6529, 8388607
    %v6531 = vor.u32 %v6530, 8388608
    %v6532 = vsub.s32 0, %v6531
    %v6533 = vadd.s32 %v6528, 1
    %vm6534 = vcmp.gt.s32.totalorder %v6533, 0
    %v6535 = vsel %vm6534, %v6533, 0
    %v6536 = vshrl.u32 %v6535, 5
    %v6537 = vand.u32 %v6535, 31
    %v6538 = vsub.s32 32, %v6537
    %v6539 = vshrl.u32 683565275, %v6538
    %v6540 = vshll.u32 683565275, %v6537
    %v6541 = vshrl.u32 2475754826, %v6538
    %v6542 = vor.u32 %v6540, %v6541
    %v6543 = vshll.u32 2475754826, %v6537
    %v6544 = vshrl.u32 2131351028, %v6538
    %v6545 = vor.u32 %v6543, %v6544
    %v6546 = vshll.u32 2131351028, %v6537
    %v6547 = vshrl.u32 2102212464, %v6538
    %v6548 = vor.u32 %v6546, %v6547
    %v6549 = vshll.u32 2102212464, %v6537
    %v6550 = vshrl.u32 920167782, %v6538
    %v6551 = vor.u32 %v6549, %v6550
    %v6552 = vshll.u32 920167782, %v6537
    %v6553 = vshrl.u32 1326507024, %v6538
    %v6554 = vor.u32 %v6552, %v6553
    %vm6555 = vcmp.lt.s32.totalorder %v6536, 1
    %vm6556 = vcmp.lt.s32.totalorder %v6536, 2
    %vm6557 = vcmp.lt.s32.totalorder %v6536, 3
    %vm6558 = vcmp.lt.s32.totalorder %v6536, 4
    %v6559 = vsel %vm6555, %v6539, %v6542
    %v6560 = vsel %vm6558, %v6548, 2102212464
    %v6561 = vsel %vm6557, %v6545, %v6560
    %v6562 = vsel %vm6556, %v6559, %v6561
    %v6563 = vsel %vm6555, %v6542, %v6545
    %v6564 = vsel %vm6558, %v6551, 920167782
    %v6565 = vsel %vm6557, %v6548, %v6564
    %v6566 = vsel %vm6556, %v6563, %v6565
    %v6567 = vsel %vm6555, %v6545, %v6548
    %v6568 = vsel %vm6558, %v6554, 1326507024
    %v6569 = vsel %vm6557, %v6551, %v6568
    %v6570 = vsel %vm6556, %v6567, %v6569
    %v6571 = vshll.u32 %v6531, 8
    %v6572 = vmul.u32.u64.compose %v6571, %v6570
    %v6573 = vextract.low.u32 %v6572
    %v6574 = vextract.high.u32 %v6572
    %v6575 = vmul.u32.u64.compose %v6571, %v6566
    %v6576 = vextract.low.u32 %v6575
    %v6577 = vextract.high.u32 %v6575
    %v6578 = vmul.u32 %v6571, %v6562
    %v6579 = vadd.s32 %v6574, %v6576
    %vm6580 = vc.u32 %v6574, %v6576
    %v6581 = vadd.s32 %v6577, 1
    %v6582 = vsel %vm6580, %v6581, %v6577
    %v6583 = vadd.s32 %v6578, %v6582
    %v6584 = vadd.s32 %v6583, 536870912
    %v6585 = vshrl.u32 %v6584, 30
    %v6586 = vshll.u32 %v6585, 30
    %v6587 = vsub.s32 %v6583, %v6586
    %vm6588 = vcmp.lt.s32.totalorder %v6587, 0
    %v6589 = vsub.s32 0, %v6587
    %v6590 = vsel %vm6588, %v6589, %v6587
    %v6591 = vclz %v6590
    %v6592 = vsub.s32 %v6591, 2
    %vm6593 = vcmp.gt.s32.totalorder 0, %v6592
    %v6594 = vsel %vm6593, 0, %v6592
    %v6595 = vsub.s32 32, %v6594
    %v6596 = vshll.u32 %v6587, %v6594
    %v6597 = vshrl.u32 %v6579, %v6595
    %v6598 = vor.u32 %v6596, %v6597
    %v6599 = vsub.s32 4294967266, %v6594
    %v6600 = vadd.s32 %v6599, 127
    %v6601 = vshll.u32 %v6600, 23
    %v6602 = vor.u32 4788187, %v6601
    %v6603 = vand.u32 2147483647, %v6602
    %v6605 = vcvt.s32.f32 %v6598
    %v6606 = vmul.f32 %v6605, %v6603
    %v6607 = vxor.u32 %v6606, 2147483648
    %v6608 = vsel %vm6525, %v6607, %v6606
    %v6609 = vsub.s32 4, %v6585
    %v6610 = vsel %vm6525, %v6609, %v6585
    %v6611 = vsel %vm6524, %v1190, %v6608
    %v6612 = vsel %vm6524, 0, %v6610
    %v6613 = vcosq.f32.pop %v6611
    %v6614 = vsinq.f32.pop %v6611
    %vm6615 = vweird.f32 %v1190
    %v6616 = vadd.s32 %v6612, 3
    %v6617 = vand.u32 %v6616, 3
    %vm6618 = vcmp.lt.s32.totalorder %v6617, 2
    %vm6619 = vcmp.eq.s32.totalorder %v6617, 0
    %v6620 = vxor.u32 %v6614, 2147483648
    %v6621 = vsel %vm6619, %v6613, %v6620
    %vm6622 = vcmp.eq.s32.totalorder %v6617, 2
    %v6623 = vxor.u32 %v6613, 2147483648
    %v6624 = vsel %vm6622, %v6623, %v6614
    %v6625 = vsel %vm6618, %v6621, %v6624
    %v6626 = vsel %vm6615, nan, %v6625
    %v6627 = vand.u32 2147483647, %v1191
    %vm6628 = vcmp.le.f32.partialorder %v6627, 0.7853982
    %vm6629 = vcmp.lt.s32.totalorder %v1191, 0
    %v6630 = vand.u32 %v1191, 2139095040
    %v6631 = vshrl.u32 %v6630, 23
    %v6632 = vsub.s32 %v6631, 127
    %v6633 = vand.u32 2147483647, %v1191
    %v6634 = vand.u32 %v6633, 8388607
    %v6635 = vor.u32 %v6634, 8388608
    %v6636 = vsub.s32 0, %v6635
    %v6637 = vadd.s32 %v6632, 1
    %vm6638 = vcmp.gt.s32.totalorder %v6637, 0
    %v6639 = vsel %vm6638, %v6637, 0
    %v6640 = vshrl.u32 %v6639, 5
    %v6641 = vand.u32 %v6639, 31
    %v6642 = vsub.s32 32, %v6641
    %v6643 = vshrl.u32 683565275, %v6642
    %v6644 = vshll.u32 683565275, %v6641
    %v6645 = vshrl.u32 2475754826, %v6642
    %v6646 = vor.u32 %v6644, %v6645
    %v6647 = vshll.u32 2475754826, %v6641
    %v6648 = vshrl.u32 2131351028, %v6642
    %v6649 = vor.u32 %v6647, %v6648
    %v6650 = vshll.u32 2131351028, %v6641
    %v6651 = vshrl.u32 2102212464, %v6642
    %v6652 = vor.u32 %v6650, %v6651
    %v6653 = vshll.u32 2102212464, %v6641
    %v6654 = vshrl.u32 920167782, %v6642
    %v6655 = vor.u32 %v6653, %v6654
    %v6656 = vshll.u32 920167782, %v6641
    %v6657 = vshrl.u32 1326507024, %v6642
    %v6658 = vor.u32 %v6656, %v6657
    %vm6659 = vcmp.lt.s32.totalorder %v6640, 1
    %vm6660 = vcmp.lt.s32.totalorder %v6640, 2
    %vm6661 = vcmp.lt.s32.totalorder %v6640, 3
    %vm6662 = vcmp.lt.s32.totalorder %v6640, 4
    %v6663 = vsel %vm6659, %v6643, %v6646
    %v6664 = vsel %vm6662, %v6652, 2102212464
    %v6665 = vsel %vm6661, %v6649, %v6664
    %v6666 = vsel %vm6660, %v6663, %v6665
    %v6667 = vsel %vm6659, %v6646, %v6649
    %v6668 = vsel %vm6662, %v6655, 920167782
    %v6669 = vsel %vm6661, %v6652, %v6668
    %v6670 = vsel %vm6660, %v6667, %v6669
    %v6671 = vsel %vm6659, %v6649, %v6652
    %v6672 = vsel %vm6662, %v6658, 1326507024
    %v6673 = vsel %vm6661, %v6655, %v6672
    %v6674 = vsel %vm6660, %v6671, %v6673
    %v6675 = vshll.u32 %v6635, 8
    %v6676 = vmul.u32.u64.compose %v6675, %v6674
    %v6677 = vextract.low.u32 %v6676
    %v6678 = vextract.high.u32 %v6676
    %v6679 = vmul.u32.u64.compose %v6675, %v6670
    %v6680 = vextract.low.u32 %v6679
    %v6681 = vextract.high.u32 %v6679
    %v6682 = vmul.u32 %v6675, %v6666
    %v6683 = vadd.s32 %v6678, %v6680
    %vm6684 = vc.u32 %v6678, %v6680
    %v6685 = vadd.s32 %v6681, 1
    %v6686 = vsel %vm6684, %v6685, %v6681
    %v6687 = vadd.s32 %v6682, %v6686
    %v6688 = vadd.s32 %v6687, 536870912
    %v6689 = vshrl.u32 %v6688, 30
    %v6690 = vshll.u32 %v6689, 30
    %v6691 = vsub.s32 %v6687, %v6690
    %vm6692 = vcmp.lt.s32.totalorder %v6691, 0
    %v6693 = vsub.s32 0, %v6691
    %v6694 = vsel %vm6692, %v6693, %v6691
    %v6695 = vclz %v6694
    %v6696 = vsub.s32 %v6695, 2
    %vm6697 = vcmp.gt.s32.totalorder 0, %v6696
    %v6698 = vsel %vm6697, 0, %v6696
    %v6699 = vsub.s32 32, %v6698
    %v6700 = vshll.u32 %v6691, %v6698
    %v6701 = vshrl.u32 %v6683, %v6699
    %v6702 = vor.u32 %v6700, %v6701
    %v6703 = vsub.s32 4294967266, %v6698
    %v6704 = vadd.s32 %v6703, 127
    %v6705 = vshll.u32 %v6704, 23
    %v6706 = vor.u32 4788187, %v6705
    %v6707 = vand.u32 2147483647, %v6706
    %v6709 = vcvt.s32.f32 %v6702
    %v6710 = vmul.f32 %v6709, %v6707
    %v6711 = vxor.u32 %v6710, 2147483648
    %v6712 = vsel %vm6629, %v6711, %v6710
    %v6713 = vsub.s32 4, %v6689
    %v6714 = vsel %vm6629, %v6713, %v6689
    %v6715 = vsel %vm6628, %v1191, %v6712
    %v6716 = vsel %vm6628, 0, %v6714
    %v6717 = vcosq.f32.pop %v6715
    %v6718 = vsinq.f32.pop %v6715
    %vm6719 = vweird.f32 %v1191
    %v6720 = vadd.s32 %v6716, 3
    %v6721 = vand.u32 %v6720, 3
    %vm6722 = vcmp.lt.s32.totalorder %v6721, 2
    %vm6723 = vcmp.eq.s32.totalorder %v6721, 0
    %v6724 = vxor.u32 %v6718, 2147483648
    %v6725 = vsel %vm6723, %v6717, %v6724
    %vm6726 = vcmp.eq.s32.totalorder %v6721, 2
    %v6727 = vxor.u32 %v6717, 2147483648
    %v6728 = vsel %vm6726, %v6727, %v6718
    %v6729 = vsel %vm6722, %v6725, %v6728
    %v6730 = vsel %vm6719, nan, %v6729
    %v6731 = vand.u32 2147483647, %v1192
    %vm6732 = vcmp.le.f32.partialorder %v6731, 0.7853982
    %vm6733 = vcmp.lt.s32.totalorder %v1192, 0
    %v6734 = vand.u32 %v1192, 2139095040
    %v6735 = vshrl.u32 %v6734, 23
    %v6736 = vsub.s32 %v6735, 127
    %v6737 = vand.u32 2147483647, %v1192
    %v6738 = vand.u32 %v6737, 8388607
    %v6739 = vor.u32 %v6738, 8388608
    %v6740 = vsub.s32 0, %v6739
    %v6741 = vadd.s32 %v6736, 1
    %vm6742 = vcmp.gt.s32.totalorder %v6741, 0
    %v6743 = vsel %vm6742, %v6741, 0
    %v6744 = vshrl.u32 %v6743, 5
    %v6745 = vand.u32 %v6743, 31
    %v6746 = vsub.s32 32, %v6745
    %v6747 = vshrl.u32 683565275, %v6746
    %v6748 = vshll.u32 683565275, %v6745
    %v6749 = vshrl.u32 2475754826, %v6746
    %v6750 = vor.u32 %v6748, %v6749
    %v6751 = vshll.u32 2475754826, %v6745
    %v6752 = vshrl.u32 2131351028, %v6746
    %v6753 = vor.u32 %v6751, %v6752
    %v6754 = vshll.u32 2131351028, %v6745
    %v6755 = vshrl.u32 2102212464, %v6746
    %v6756 = vor.u32 %v6754, %v6755
    %v6757 = vshll.u32 2102212464, %v6745
    %v6758 = vshrl.u32 920167782, %v6746
    %v6759 = vor.u32 %v6757, %v6758
    %v6760 = vshll.u32 920167782, %v6745
    %v6761 = vshrl.u32 1326507024, %v6746
    %v6762 = vor.u32 %v6760, %v6761
    %vm6763 = vcmp.lt.s32.totalorder %v6744, 1
    %vm6764 = vcmp.lt.s32.totalorder %v6744, 2
    %vm6765 = vcmp.lt.s32.totalorder %v6744, 3
    %vm6766 = vcmp.lt.s32.totalorder %v6744, 4
    %v6767 = vsel %vm6763, %v6747, %v6750
    %v6768 = vsel %vm6766, %v6756, 2102212464
    %v6769 = vsel %vm6765, %v6753, %v6768
    %v6770 = vsel %vm6764, %v6767, %v6769
    %v6771 = vsel %vm6763, %v6750, %v6753
    %v6772 = vsel %vm6766, %v6759, 920167782
    %v6773 = vsel %vm6765, %v6756, %v6772
    %v6774 = vsel %vm6764, %v6771, %v6773
    %v6775 = vsel %vm6763, %v6753, %v6756
    %v6776 = vsel %vm6766, %v6762, 1326507024
    %v6777 = vsel %vm6765, %v6759, %v6776
    %v6778 = vsel %vm6764, %v6775, %v6777
    %v6779 = vshll.u32 %v6739, 8
    %v6780 = vmul.u32.u64.compose %v6779, %v6778
    %v6781 = vextract.low.u32 %v6780
    %v6782 = vextract.high.u32 %v6780
    %v6783 = vmul.u32.u64.compose %v6779, %v6774
    %v6784 = vextract.low.u32 %v6783
    %v6785 = vextract.high.u32 %v6783
    %v6786 = vmul.u32 %v6779, %v6770
    %v6787 = vadd.s32 %v6782, %v6784
    %vm6788 = vc.u32 %v6782, %v6784
    %v6789 = vadd.s32 %v6785, 1
    %v6790 = vsel %vm6788, %v6789, %v6785
    %v6791 = vadd.s32 %v6786, %v6790
    %v6792 = vadd.s32 %v6791, 536870912
    %v6793 = vshrl.u32 %v6792, 30
    %v6794 = vshll.u32 %v6793, 30
    %v6795 = vsub.s32 %v6791, %v6794
    %vm6796 = vcmp.lt.s32.totalorder %v6795, 0
    %v6797 = vsub.s32 0, %v6795
    %v6798 = vsel %vm6796, %v6797, %v6795
    %v6799 = vclz %v6798
    %v6800 = vsub.s32 %v6799, 2
    %vm6801 = vcmp.gt.s32.totalorder 0, %v6800
    %v6802 = vsel %vm6801, 0, %v6800
    %v6803 = vsub.s32 32, %v6802
    %v6804 = vshll.u32 %v6795, %v6802
    %v6805 = vshrl.u32 %v6787, %v6803
    %v6806 = vor.u32 %v6804, %v6805
    %v6807 = vsub.s32 4294967266, %v6802
    %v6808 = vadd.s32 %v6807, 127
    %v6809 = vshll.u32 %v6808, 23
    %v6810 = vor.u32 4788187, %v6809
    %v6811 = vand.u32 2147483647, %v6810
    %v6813 = vcvt.s32.f32 %v6806
    %v6814 = vmul.f32 %v6813, %v6811
    %v6815 = vxor.u32 %v6814, 2147483648
    %v6816 = vsel %vm6733, %v6815, %v6814
    %v6817 = vsub.s32 4, %v6793
    %v6818 = vsel %vm6733, %v6817, %v6793
    %v6819 = vsel %vm6732, %v1192, %v6816
    %v6820 = vsel %vm6732, 0, %v6818
    %v6821 = vcosq.f32.pop %v6819
    %v6822 = vsinq.f32.pop %v6819
    %vm6823 = vweird.f32 %v1192
    %v6824 = vadd.s32 %v6820, 3
    %v6825 = vand.u32 %v6824, 3
    %vm6826 = vcmp.lt.s32.totalorder %v6825, 2
    %vm6827 = vcmp.eq.s32.totalorder %v6825, 0
    %v6828 = vxor.u32 %v6822, 2147483648
    %v6829 = vsel %vm6827, %v6821, %v6828
    %vm6830 = vcmp.eq.s32.totalorder %v6825, 2
    %v6831 = vxor.u32 %v6821, 2147483648
    %v6832 = vsel %vm6830, %v6831, %v6822
    %v6833 = vsel %vm6826, %v6829, %v6832
    %v6834 = vsel %vm6823, nan, %v6833
    %v6835 = vand.u32 2147483647, %v1193
    %vm6836 = vcmp.le.f32.partialorder %v6835, 0.7853982
    %vm6837 = vcmp.lt.s32.totalorder %v1193, 0
    %v6838 = vand.u32 %v1193, 2139095040
    %v6839 = vshrl.u32 %v6838, 23
    %v6840 = vsub.s32 %v6839, 127
    %v6841 = vand.u32 2147483647, %v1193
    %v6842 = vand.u32 %v6841, 8388607
    %v6843 = vor.u32 %v6842, 8388608
    %v6844 = vsub.s32 0, %v6843
    %v6845 = vadd.s32 %v6840, 1
    %vm6846 = vcmp.gt.s32.totalorder %v6845, 0
    %v6847 = vsel %vm6846, %v6845, 0
    %v6848 = vshrl.u32 %v6847, 5
    %v6849 = vand.u32 %v6847, 31
    %v6850 = vsub.s32 32, %v6849
    %v6851 = vshrl.u32 683565275, %v6850
    %v6852 = vshll.u32 683565275, %v6849
    %v6853 = vshrl.u32 2475754826, %v6850
    %v6854 = vor.u32 %v6852, %v6853
    %v6855 = vshll.u32 2475754826, %v6849
    %v6856 = vshrl.u32 2131351028, %v6850
    %v6857 = vor.u32 %v6855, %v6856
    %v6858 = vshll.u32 2131351028, %v6849
    %v6859 = vshrl.u32 2102212464, %v6850
    %v6860 = vor.u32 %v6858, %v6859
    %v6861 = vshll.u32 2102212464, %v6849
    %v6862 = vshrl.u32 920167782, %v6850
    %v6863 = vor.u32 %v6861, %v6862
    %v6864 = vshll.u32 920167782, %v6849
    %v6865 = vshrl.u32 1326507024, %v6850
    %v6866 = vor.u32 %v6864, %v6865
    %vm6867 = vcmp.lt.s32.totalorder %v6848, 1
    %vm6868 = vcmp.lt.s32.totalorder %v6848, 2
    %vm6869 = vcmp.lt.s32.totalorder %v6848, 3
    %vm6870 = vcmp.lt.s32.totalorder %v6848, 4
    %v6871 = vsel %vm6867, %v6851, %v6854
    %v6872 = vsel %vm6870, %v6860, 2102212464
    %v6873 = vsel %vm6869, %v6857, %v6872
    %v6874 = vsel %vm6868, %v6871, %v6873
    %v6875 = vsel %vm6867, %v6854, %v6857
    %v6876 = vsel %vm6870, %v6863, 920167782
    %v6877 = vsel %vm6869, %v6860, %v6876
    %v6878 = vsel %vm6868, %v6875, %v6877
    %v6879 = vsel %vm6867, %v6857, %v6860
    %v6880 = vsel %vm6870, %v6866, 1326507024
    %v6881 = vsel %vm6869, %v6863, %v6880
    %v6882 = vsel %vm6868, %v6879, %v6881
    %v6883 = vshll.u32 %v6843, 8
    %v6884 = vmul.u32.u64.compose %v6883, %v6882
    %v6885 = vextract.low.u32 %v6884
    %v6886 = vextract.high.u32 %v6884
    %v6887 = vmul.u32.u64.compose %v6883, %v6878
    %v6888 = vextract.low.u32 %v6887
    %v6889 = vextract.high.u32 %v6887
    %v6890 = vmul.u32 %v6883, %v6874
    %v6891 = vadd.s32 %v6886, %v6888
    %vm6892 = vc.u32 %v6886, %v6888
    %v6893 = vadd.s32 %v6889, 1
    %v6894 = vsel %vm6892, %v6893, %v6889
    %v6895 = vadd.s32 %v6890, %v6894
    %v6896 = vadd.s32 %v6895, 536870912
    %v6897 = vshrl.u32 %v6896, 30
    %v6898 = vshll.u32 %v6897, 30
    %v6899 = vsub.s32 %v6895, %v6898
    %vm6900 = vcmp.lt.s32.totalorder %v6899, 0
    %v6901 = vsub.s32 0, %v6899
    %v6902 = vsel %vm6900, %v6901, %v6899
    %v6903 = vclz %v6902
    %v6904 = vsub.s32 %v6903, 2
    %vm6905 = vcmp.gt.s32.totalorder 0, %v6904
    %v6906 = vsel %vm6905, 0, %v6904
    %v6907 = vsub.s32 32, %v6906
    %v6908 = vshll.u32 %v6899, %v6906
    %v6909 = vshrl.u32 %v6891, %v6907
    %v6910 = vor.u32 %v6908, %v6909
    %v6911 = vsub.s32 4294967266, %v6906
    %v6912 = vadd.s32 %v6911, 127
    %v6913 = vshll.u32 %v6912, 23
    %v6914 = vor.u32 4788187, %v6913
    %v6915 = vand.u32 2147483647, %v6914
    %v6917 = vcvt.s32.f32 %v6910
    %v6918 = vmul.f32 %v6917, %v6915
    %v6919 = vxor.u32 %v6918, 2147483648
    %v6920 = vsel %vm6837, %v6919, %v6918
    %v6921 = vsub.s32 4, %v6897
    %v6922 = vsel %vm6837, %v6921, %v6897
    %v6923 = vsel %vm6836, %v1193, %v6920
    %v6924 = vsel %vm6836, 0, %v6922
    %v6925 = vcosq.f32.pop %v6923
    %v6926 = vsinq.f32.pop %v6923
    %vm6927 = vweird.f32 %v1193
    %v6928 = vadd.s32 %v6924, 3
    %v6929 = vand.u32 %v6928, 3
    %vm6930 = vcmp.lt.s32.totalorder %v6929, 2
    %vm6931 = vcmp.eq.s32.totalorder %v6929, 0
    %v6932 = vxor.u32 %v6926, 2147483648
    %v6933 = vsel %vm6931, %v6925, %v6932
    %vm6934 = vcmp.eq.s32.totalorder %v6929, 2
    %v6935 = vxor.u32 %v6925, 2147483648
    %v6936 = vsel %vm6934, %v6935, %v6926
    %v6937 = vsel %vm6930, %v6933, %v6936
    %v6938 = vsel %vm6927, nan, %v6937
    %v6939 = vand.u32 2147483647, %v1194
    %vm6940 = vcmp.le.f32.partialorder %v6939, 0.7853982
    %vm6941 = vcmp.lt.s32.totalorder %v1194, 0
    %v6942 = vand.u32 %v1194, 2139095040
    %v6943 = vshrl.u32 %v6942, 23
    %v6944 = vsub.s32 %v6943, 127
    %v6945 = vand.u32 2147483647, %v1194
    %v6946 = vand.u32 %v6945, 8388607
    %v6947 = vor.u32 %v6946, 8388608
    %v6948 = vsub.s32 0, %v6947
    %v6949 = vadd.s32 %v6944, 1
    %vm6950 = vcmp.gt.s32.totalorder %v6949, 0
    %v6951 = vsel %vm6950, %v6949, 0
    %v6952 = vshrl.u32 %v6951, 5
    %v6953 = vand.u32 %v6951, 31
    %v6954 = vsub.s32 32, %v6953
    %v6955 = vshrl.u32 683565275, %v6954
    %v6956 = vshll.u32 683565275, %v6953
    %v6957 = vshrl.u32 2475754826, %v6954
    %v6958 = vor.u32 %v6956, %v6957
    %v6959 = vshll.u32 2475754826, %v6953
    %v6960 = vshrl.u32 2131351028, %v6954
    %v6961 = vor.u32 %v6959, %v6960
    %v6962 = vshll.u32 2131351028, %v6953
    %v6963 = vshrl.u32 2102212464, %v6954
    %v6964 = vor.u32 %v6962, %v6963
    %v6965 = vshll.u32 2102212464, %v6953
    %v6966 = vshrl.u32 920167782, %v6954
    %v6967 = vor.u32 %v6965, %v6966
    %v6968 = vshll.u32 920167782, %v6953
    %v6969 = vshrl.u32 1326507024, %v6954
    %v6970 = vor.u32 %v6968, %v6969
    %vm6971 = vcmp.lt.s32.totalorder %v6952, 1
    %vm6972 = vcmp.lt.s32.totalorder %v6952, 2
    %vm6973 = vcmp.lt.s32.totalorder %v6952, 3
    %vm6974 = vcmp.lt.s32.totalorder %v6952, 4
    %v6975 = vsel %vm6971, %v6955, %v6958
    %v6976 = vsel %vm6974, %v6964, 2102212464
    %v6977 = vsel %vm6973, %v6961, %v6976
    %v6978 = vsel %vm6972, %v6975, %v6977
    %v6979 = vsel %vm6971, %v6958, %v6961
    %v6980 = vsel %vm6974, %v6967, 920167782
    %v6981 = vsel %vm6973, %v6964, %v6980
    %v6982 = vsel %vm6972, %v6979, %v6981
    %v6983 = vsel %vm6971, %v6961, %v6964
    %v6984 = vsel %vm6974, %v6970, 1326507024
    %v6985 = vsel %vm6973, %v6967, %v6984
    %v6986 = vsel %vm6972, %v6983, %v6985
    %v6987 = vshll.u32 %v6947, 8
    %v6988 = vmul.u32.u64.compose %v6987, %v6986
    %v6989 = vextract.low.u32 %v6988
    %v6990 = vextract.high.u32 %v6988
    %v6991 = vmul.u32.u64.compose %v6987, %v6982
    %v6992 = vextract.low.u32 %v6991
    %v6993 = vextract.high.u32 %v6991
    %v6994 = vmul.u32 %v6987, %v6978
    %v6995 = vadd.s32 %v6990, %v6992
    %vm6996 = vc.u32 %v6990, %v6992
    %v6997 = vadd.s32 %v6993, 1
    %v6998 = vsel %vm6996, %v6997, %v6993
    %v6999 = vadd.s32 %v6994, %v6998
    %v7000 = vadd.s32 %v6999, 536870912
    %v7001 = vshrl.u32 %v7000, 30
    %v7002 = vshll.u32 %v7001, 30
    %v7003 = vsub.s32 %v6999, %v7002
    %vm7004 = vcmp.lt.s32.totalorder %v7003, 0
    %v7005 = vsub.s32 0, %v7003
    %v7006 = vsel %vm7004, %v7005, %v7003
    %v7007 = vclz %v7006
    %v7008 = vsub.s32 %v7007, 2
    %vm7009 = vcmp.gt.s32.totalorder 0, %v7008
    %v7010 = vsel %vm7009, 0, %v7008
    %v7011 = vsub.s32 32, %v7010
    %v7012 = vshll.u32 %v7003, %v7010
    %v7013 = vshrl.u32 %v6995, %v7011
    %v7014 = vor.u32 %v7012, %v7013
    %v7015 = vsub.s32 4294967266, %v7010
    %v7016 = vadd.s32 %v7015, 127
    %v7017 = vshll.u32 %v7016, 23
    %v7018 = vor.u32 4788187, %v7017
    %v7019 = vand.u32 2147483647, %v7018
    %v7021 = vcvt.s32.f32 %v7014
    %v7022 = vmul.f32 %v7021, %v7019
    %v7023 = vxor.u32 %v7022, 2147483648
    %v7024 = vsel %vm6941, %v7023, %v7022
    %v7025 = vsub.s32 4, %v7001
    %v7026 = vsel %vm6941, %v7025, %v7001
    %v7027 = vsel %vm6940, %v1194, %v7024
    %v7028 = vsel %vm6940, 0, %v7026
    %v7029 = vcosq.f32.pop %v7027
    %v7030 = vsinq.f32.pop %v7027
    %vm7031 = vweird.f32 %v1194
    %v7032 = vadd.s32 %v7028, 3
    %v7033 = vand.u32 %v7032, 3
    %vm7034 = vcmp.lt.s32.totalorder %v7033, 2
    %vm7035 = vcmp.eq.s32.totalorder %v7033, 0
    %v7036 = vxor.u32 %v7030, 2147483648
    %v7037 = vsel %vm7035, %v7029, %v7036
    %vm7038 = vcmp.eq.s32.totalorder %v7033, 2
    %v7039 = vxor.u32 %v7029, 2147483648
    %v7040 = vsel %vm7038, %v7039, %v7030
    %v7041 = vsel %vm7034, %v7037, %v7040
    %v7042 = vsel %vm7031, nan, %v7041
    %v7043 = vand.u32 2147483647, %v1195
    %vm7044 = vcmp.le.f32.partialorder %v7043, 0.7853982
    %vm7045 = vcmp.lt.s32.totalorder %v1195, 0
    %v7046 = vand.u32 %v1195, 2139095040
    %v7047 = vshrl.u32 %v7046, 23
    %v7048 = vsub.s32 %v7047, 127
    %v7049 = vand.u32 2147483647, %v1195
    %v7050 = vand.u32 %v7049, 8388607
    %v7051 = vor.u32 %v7050, 8388608
    %v7052 = vsub.s32 0, %v7051
    %v7053 = vadd.s32 %v7048, 1
    %vm7054 = vcmp.gt.s32.totalorder %v7053, 0
    %v7055 = vsel %vm7054, %v7053, 0
    %v7056 = vshrl.u32 %v7055, 5
    %v7057 = vand.u32 %v7055, 31
    %v7058 = vsub.s32 32, %v7057
    %v7059 = vshrl.u32 683565275, %v7058
    %v7060 = vshll.u32 683565275, %v7057
    %v7061 = vshrl.u32 2475754826, %v7058
    %v7062 = vor.u32 %v7060, %v7061
    %v7063 = vshll.u32 2475754826, %v7057
    %v7064 = vshrl.u32 2131351028, %v7058
    %v7065 = vor.u32 %v7063, %v7064
    %v7066 = vshll.u32 2131351028, %v7057
    %v7067 = vshrl.u32 2102212464, %v7058
    %v7068 = vor.u32 %v7066, %v7067
    %v7069 = vshll.u32 2102212464, %v7057
    %v7070 = vshrl.u32 920167782, %v7058
    %v7071 = vor.u32 %v7069, %v7070
    %v7072 = vshll.u32 920167782, %v7057
    %v7073 = vshrl.u32 1326507024, %v7058
    %v7074 = vor.u32 %v7072, %v7073
    %vm7075 = vcmp.lt.s32.totalorder %v7056, 1
    %vm7076 = vcmp.lt.s32.totalorder %v7056, 2
    %vm7077 = vcmp.lt.s32.totalorder %v7056, 3
    %vm7078 = vcmp.lt.s32.totalorder %v7056, 4
    %v7079 = vsel %vm7075, %v7059, %v7062
    %v7080 = vsel %vm7078, %v7068, 2102212464
    %v7081 = vsel %vm7077, %v7065, %v7080
    %v7082 = vsel %vm7076, %v7079, %v7081
    %v7083 = vsel %vm7075, %v7062, %v7065
    %v7084 = vsel %vm7078, %v7071, 920167782
    %v7085 = vsel %vm7077, %v7068, %v7084
    %v7086 = vsel %vm7076, %v7083, %v7085
    %v7087 = vsel %vm7075, %v7065, %v7068
    %v7088 = vsel %vm7078, %v7074, 1326507024
    %v7089 = vsel %vm7077, %v7071, %v7088
    %v7090 = vsel %vm7076, %v7087, %v7089
    %v7091 = vshll.u32 %v7051, 8
    %v7092 = vmul.u32.u64.compose %v7091, %v7090
    %v7093 = vextract.low.u32 %v7092
    %v7094 = vextract.high.u32 %v7092
    %v7095 = vmul.u32.u64.compose %v7091, %v7086
    %v7096 = vextract.low.u32 %v7095
    %v7097 = vextract.high.u32 %v7095
    %v7098 = vmul.u32 %v7091, %v7082
    %v7099 = vadd.s32 %v7094, %v7096
    %vm7100 = vc.u32 %v7094, %v7096
    %v7101 = vadd.s32 %v7097, 1
    %v7102 = vsel %vm7100, %v7101, %v7097
    %v7103 = vadd.s32 %v7098, %v7102
    %v7104 = vadd.s32 %v7103, 536870912
    %v7105 = vshrl.u32 %v7104, 30
    %v7106 = vshll.u32 %v7105, 30
    %v7107 = vsub.s32 %v7103, %v7106
    %vm7108 = vcmp.lt.s32.totalorder %v7107, 0
    %v7109 = vsub.s32 0, %v7107
    %v7110 = vsel %vm7108, %v7109, %v7107
    %v7111 = vclz %v7110
    %v7112 = vsub.s32 %v7111, 2
    %vm7113 = vcmp.gt.s32.totalorder 0, %v7112
    %v7114 = vsel %vm7113, 0, %v7112
    %v7115 = vsub.s32 32, %v7114
    %v7116 = vshll.u32 %v7107, %v7114
    %v7117 = vshrl.u32 %v7099, %v7115
    %v7118 = vor.u32 %v7116, %v7117
    %v7119 = vsub.s32 4294967266, %v7114
    %v7120 = vadd.s32 %v7119, 127
    %v7121 = vshll.u32 %v7120, 23
    %v7122 = vor.u32 4788187, %v7121
    %v7123 = vand.u32 2147483647, %v7122
    %v7125 = vcvt.s32.f32 %v7118
    %v7126 = vmul.f32 %v7125, %v7123
    %v7127 = vxor.u32 %v7126, 2147483648
    %v7128 = vsel %vm7045, %v7127, %v7126
    %v7129 = vsub.s32 4, %v7105
    %v7130 = vsel %vm7045, %v7129, %v7105
    %v7131 = vsel %vm7044, %v1195, %v7128
    %v7132 = vsel %vm7044, 0, %v7130
    %v7133 = vcosq.f32.pop %v7131
    %v7134 = vsinq.f32.pop %v7131
    %vm7135 = vweird.f32 %v1195
    %v7136 = vadd.s32 %v7132, 3
    %v7137 = vand.u32 %v7136, 3
    %vm7138 = vcmp.lt.s32.totalorder %v7137, 2
    %vm7139 = vcmp.eq.s32.totalorder %v7137, 0
    %v7140 = vxor.u32 %v7134, 2147483648
    %v7141 = vsel %vm7139, %v7133, %v7140
    %vm7142 = vcmp.eq.s32.totalorder %v7137, 2
    %v7143 = vxor.u32 %v7133, 2147483648
    %v7144 = vsel %vm7142, %v7143, %v7134
    %v7145 = vsel %vm7138, %v7141, %v7144
    %v7146 = vsel %vm7135, nan, %v7145
    %v7147 = vand.u32 2147483647, %v1196
    %vm7148 = vcmp.le.f32.partialorder %v7147, 0.7853982
    %vm7149 = vcmp.lt.s32.totalorder %v1196, 0
    %v7150 = vand.u32 %v1196, 2139095040
    %v7151 = vshrl.u32 %v7150, 23
    %v7152 = vsub.s32 %v7151, 127
    %v7153 = vand.u32 2147483647, %v1196
    %v7154 = vand.u32 %v7153, 8388607
    %v7155 = vor.u32 %v7154, 8388608
    %v7156 = vsub.s32 0, %v7155
    %v7157 = vadd.s32 %v7152, 1
    %vm7158 = vcmp.gt.s32.totalorder %v7157, 0
    %v7159 = vsel %vm7158, %v7157, 0
    %v7160 = vshrl.u32 %v7159, 5
    %v7161 = vand.u32 %v7159, 31
    %v7162 = vsub.s32 32, %v7161
    %v7163 = vshrl.u32 683565275, %v7162
    %v7164 = vshll.u32 683565275, %v7161
    %v7165 = vshrl.u32 2475754826, %v7162
    %v7166 = vor.u32 %v7164, %v7165
    %v7167 = vshll.u32 2475754826, %v7161
    %v7168 = vshrl.u32 2131351028, %v7162
    %v7169 = vor.u32 %v7167, %v7168
    %v7170 = vshll.u32 2131351028, %v7161
    %v7171 = vshrl.u32 2102212464, %v7162
    %v7172 = vor.u32 %v7170, %v7171
    %v7173 = vshll.u32 2102212464, %v7161
    %v7174 = vshrl.u32 920167782, %v7162
    %v7175 = vor.u32 %v7173, %v7174
    %v7176 = vshll.u32 920167782, %v7161
    %v7177 = vshrl.u32 1326507024, %v7162
    %v7178 = vor.u32 %v7176, %v7177
    %vm7179 = vcmp.lt.s32.totalorder %v7160, 1
    %vm7180 = vcmp.lt.s32.totalorder %v7160, 2
    %vm7181 = vcmp.lt.s32.totalorder %v7160, 3
    %vm7182 = vcmp.lt.s32.totalorder %v7160, 4
    %v7183 = vsel %vm7179, %v7163, %v7166
    %v7184 = vsel %vm7182, %v7172, 2102212464
    %v7185 = vsel %vm7181, %v7169, %v7184
    %v7186 = vsel %vm7180, %v7183, %v7185
    %v7187 = vsel %vm7179, %v7166, %v7169
    %v7188 = vsel %vm7182, %v7175, 920167782
    %v7189 = vsel %vm7181, %v7172, %v7188
    %v7190 = vsel %vm7180, %v7187, %v7189
    %v7191 = vsel %vm7179, %v7169, %v7172
    %v7192 = vsel %vm7182, %v7178, 1326507024
    %v7193 = vsel %vm7181, %v7175, %v7192
    %v7194 = vsel %vm7180, %v7191, %v7193
    %v7195 = vshll.u32 %v7155, 8
    %v7196 = vmul.u32.u64.compose %v7195, %v7194
    %v7197 = vextract.low.u32 %v7196
    %v7198 = vextract.high.u32 %v7196
    %v7199 = vmul.u32.u64.compose %v7195, %v7190
    %v7200 = vextract.low.u32 %v7199
    %v7201 = vextract.high.u32 %v7199
    %v7202 = vmul.u32 %v7195, %v7186
    %v7203 = vadd.s32 %v7198, %v7200
    %vm7204 = vc.u32 %v7198, %v7200
    %v7205 = vadd.s32 %v7201, 1
    %v7206 = vsel %vm7204, %v7205, %v7201
    %v7207 = vadd.s32 %v7202, %v7206
    %v7208 = vadd.s32 %v7207, 536870912
    %v7209 = vshrl.u32 %v7208, 30
    %v7210 = vshll.u32 %v7209, 30
    %v7211 = vsub.s32 %v7207, %v7210
    %vm7212 = vcmp.lt.s32.totalorder %v7211, 0
    %v7213 = vsub.s32 0, %v7211
    %v7214 = vsel %vm7212, %v7213, %v7211
    %v7215 = vclz %v7214
    %v7216 = vsub.s32 %v7215, 2
    %vm7217 = vcmp.gt.s32.totalorder 0, %v7216
    %v7218 = vsel %vm7217, 0, %v7216
    %v7219 = vsub.s32 32, %v7218
    %v7220 = vshll.u32 %v7211, %v7218
    %v7221 = vshrl.u32 %v7203, %v7219
    %v7222 = vor.u32 %v7220, %v7221
    %v7223 = vsub.s32 4294967266, %v7218
    %v7224 = vadd.s32 %v7223, 127
    %v7225 = vshll.u32 %v7224, 23
    %v7226 = vor.u32 4788187, %v7225
    %v7227 = vand.u32 2147483647, %v7226
    %v7229 = vcvt.s32.f32 %v7222
    %v7230 = vmul.f32 %v7229, %v7227
    %v7231 = vxor.u32 %v7230, 2147483648
    %v7232 = vsel %vm7149, %v7231, %v7230
    %v7233 = vsub.s32 4, %v7209
    %v7234 = vsel %vm7149, %v7233, %v7209
    %v7235 = vsel %vm7148, %v1196, %v7232
    %v7236 = vsel %vm7148, 0, %v7234
    %v7237 = vcosq.f32.pop %v7235
    %v7238 = vsinq.f32.pop %v7235
    %vm7239 = vweird.f32 %v1196
    %v7240 = vadd.s32 %v7236, 3
    %v7241 = vand.u32 %v7240, 3
    %vm7242 = vcmp.lt.s32.totalorder %v7241, 2
    %vm7243 = vcmp.eq.s32.totalorder %v7241, 0
    %v7244 = vxor.u32 %v7238, 2147483648
    %v7245 = vsel %vm7243, %v7237, %v7244
    %vm7246 = vcmp.eq.s32.totalorder %v7241, 2
    %v7247 = vxor.u32 %v7237, 2147483648
    %v7248 = vsel %vm7246, %v7247, %v7238
    %v7249 = vsel %vm7242, %v7245, %v7248
    %v7250 = vsel %vm7239, nan, %v7249
    %v7251 = vand.u32 2147483647, %v1197
    %vm7252 = vcmp.le.f32.partialorder %v7251, 0.7853982
    %vm7253 = vcmp.lt.s32.totalorder %v1197, 0
    %v7254 = vand.u32 %v1197, 2139095040
    %v7255 = vshrl.u32 %v7254, 23
    %v7256 = vsub.s32 %v7255, 127
    %v7257 = vand.u32 2147483647, %v1197
    %v7258 = vand.u32 %v7257, 8388607
    %v7259 = vor.u32 %v7258, 8388608
    %v7260 = vsub.s32 0, %v7259
    %v7261 = vadd.s32 %v7256, 1
    %vm7262 = vcmp.gt.s32.totalorder %v7261, 0
    %v7263 = vsel %vm7262, %v7261, 0
    %v7264 = vshrl.u32 %v7263, 5
    %v7265 = vand.u32 %v7263, 31
    %v7266 = vsub.s32 32, %v7265
    %v7267 = vshrl.u32 683565275, %v7266
    %v7268 = vshll.u32 683565275, %v7265
    %v7269 = vshrl.u32 2475754826, %v7266
    %v7270 = vor.u32 %v7268, %v7269
    %v7271 = vshll.u32 2475754826, %v7265
    %v7272 = vshrl.u32 2131351028, %v7266
    %v7273 = vor.u32 %v7271, %v7272
    %v7274 = vshll.u32 2131351028, %v7265
    %v7275 = vshrl.u32 2102212464, %v7266
    %v7276 = vor.u32 %v7274, %v7275
    %v7277 = vshll.u32 2102212464, %v7265
    %v7278 = vshrl.u32 920167782, %v7266
    %v7279 = vor.u32 %v7277, %v7278
    %v7280 = vshll.u32 920167782, %v7265
    %v7281 = vshrl.u32 1326507024, %v7266
    %v7282 = vor.u32 %v7280, %v7281
    %vm7283 = vcmp.lt.s32.totalorder %v7264, 1
    %vm7284 = vcmp.lt.s32.totalorder %v7264, 2
    %vm7285 = vcmp.lt.s32.totalorder %v7264, 3
    %vm7286 = vcmp.lt.s32.totalorder %v7264, 4
    %v7287 = vsel %vm7283, %v7267, %v7270
    %v7288 = vsel %vm7286, %v7276, 2102212464
    %v7289 = vsel %vm7285, %v7273, %v7288
    %v7290 = vsel %vm7284, %v7287, %v7289
    %v7291 = vsel %vm7283, %v7270, %v7273
    %v7292 = vsel %vm7286, %v7279, 920167782
    %v7293 = vsel %vm7285, %v7276, %v7292
    %v7294 = vsel %vm7284, %v7291, %v7293
    %v7295 = vsel %vm7283, %v7273, %v7276
    %v7296 = vsel %vm7286, %v7282, 1326507024
    %v7297 = vsel %vm7285, %v7279, %v7296
    %v7298 = vsel %vm7284, %v7295, %v7297
    %v7299 = vshll.u32 %v7259, 8
    %v7300 = vmul.u32.u64.compose %v7299, %v7298
    %v7301 = vextract.low.u32 %v7300
    %v7302 = vextract.high.u32 %v7300
    %v7303 = vmul.u32.u64.compose %v7299, %v7294
    %v7304 = vextract.low.u32 %v7303
    %v7305 = vextract.high.u32 %v7303
    %v7306 = vmul.u32 %v7299, %v7290
    %v7307 = vadd.s32 %v7302, %v7304
    %vm7308 = vc.u32 %v7302, %v7304
    %v7309 = vadd.s32 %v7305, 1
    %v7310 = vsel %vm7308, %v7309, %v7305
    %v7311 = vadd.s32 %v7306, %v7310
    %v7312 = vadd.s32 %v7311, 536870912
    %v7313 = vshrl.u32 %v7312, 30
    %v7314 = vshll.u32 %v7313, 30
    %v7315 = vsub.s32 %v7311, %v7314
    %vm7316 = vcmp.lt.s32.totalorder %v7315, 0
    %v7317 = vsub.s32 0, %v7315
    %v7318 = vsel %vm7316, %v7317, %v7315
    %v7319 = vclz %v7318
    %v7320 = vsub.s32 %v7319, 2
    %vm7321 = vcmp.gt.s32.totalorder 0, %v7320
    %v7322 = vsel %vm7321, 0, %v7320
    %v7323 = vsub.s32 32, %v7322
    %v7324 = vshll.u32 %v7315, %v7322
    %v7325 = vshrl.u32 %v7307, %v7323
    %v7326 = vor.u32 %v7324, %v7325
    %v7327 = vsub.s32 4294967266, %v7322
    %v7328 = vadd.s32 %v7327, 127
    %v7329 = vshll.u32 %v7328, 23
    %v7330 = vor.u32 4788187, %v7329
    %v7331 = vand.u32 2147483647, %v7330
    %v7333 = vcvt.s32.f32 %v7326
    %v7334 = vmul.f32 %v7333, %v7331
    %v7335 = vxor.u32 %v7334, 2147483648
    %v7336 = vsel %vm7253, %v7335, %v7334
    %v7337 = vsub.s32 4, %v7313
    %v7338 = vsel %vm7253, %v7337, %v7313
    %v7339 = vsel %vm7252, %v1197, %v7336
    %v7340 = vsel %vm7252, 0, %v7338
    %v7341 = vcosq.f32.pop %v7339
    %v7342 = vsinq.f32.pop %v7339
    %vm7343 = vweird.f32 %v1197
    %v7344 = vadd.s32 %v7340, 3
    %v7345 = vand.u32 %v7344, 3
    %vm7346 = vcmp.lt.s32.totalorder %v7345, 2
    %vm7347 = vcmp.eq.s32.totalorder %v7345, 0
    %v7348 = vxor.u32 %v7342, 2147483648
    %v7349 = vsel %vm7347, %v7341, %v7348
    %vm7350 = vcmp.eq.s32.totalorder %v7345, 2
    %v7351 = vxor.u32 %v7341, 2147483648
    %v7352 = vsel %vm7350, %v7351, %v7342
    %v7353 = vsel %vm7346, %v7349, %v7352
    %v7354 = vsel %vm7343, nan, %v7353
    %v7355 = vand.u32 2147483647, %v1198
    %vm7356 = vcmp.le.f32.partialorder %v7355, 0.7853982
    %vm7357 = vcmp.lt.s32.totalorder %v1198, 0
    %v7358 = vand.u32 %v1198, 2139095040
    %v7359 = vshrl.u32 %v7358, 23
    %v7360 = vsub.s32 %v7359, 127
    %v7361 = vand.u32 2147483647, %v1198
    %v7362 = vand.u32 %v7361, 8388607
    %v7363 = vor.u32 %v7362, 8388608
    %v7364 = vsub.s32 0, %v7363
    %v7365 = vadd.s32 %v7360, 1
    %vm7366 = vcmp.gt.s32.totalorder %v7365, 0
    %v7367 = vsel %vm7366, %v7365, 0
    %v7368 = vshrl.u32 %v7367, 5
    %v7369 = vand.u32 %v7367, 31
    %v7370 = vsub.s32 32, %v7369
    %v7371 = vshrl.u32 683565275, %v7370
    %v7372 = vshll.u32 683565275, %v7369
    %v7373 = vshrl.u32 2475754826, %v7370
    %v7374 = vor.u32 %v7372, %v7373
    %v7375 = vshll.u32 2475754826, %v7369
    %v7376 = vshrl.u32 2131351028, %v7370
    %v7377 = vor.u32 %v7375, %v7376
    %v7378 = vshll.u32 2131351028, %v7369
    %v7379 = vshrl.u32 2102212464, %v7370
    %v7380 = vor.u32 %v7378, %v7379
    %v7381 = vshll.u32 2102212464, %v7369
    %v7382 = vshrl.u32 920167782, %v7370
    %v7383 = vor.u32 %v7381, %v7382
    %v7384 = vshll.u32 920167782, %v7369
    %v7385 = vshrl.u32 1326507024, %v7370
    %v7386 = vor.u32 %v7384, %v7385
    %vm7387 = vcmp.lt.s32.totalorder %v7368, 1
    %vm7388 = vcmp.lt.s32.totalorder %v7368, 2
    %vm7389 = vcmp.lt.s32.totalorder %v7368, 3
    %vm7390 = vcmp.lt.s32.totalorder %v7368, 4
    %v7391 = vsel %vm7387, %v7371, %v7374
    %v7392 = vsel %vm7390, %v7380, 2102212464
    %v7393 = vsel %vm7389, %v7377, %v7392
    %v7394 = vsel %vm7388, %v7391, %v7393
    %v7395 = vsel %vm7387, %v7374, %v7377
    %v7396 = vsel %vm7390, %v7383, 920167782
    %v7397 = vsel %vm7389, %v7380, %v7396
    %v7398 = vsel %vm7388, %v7395, %v7397
    %v7399 = vsel %vm7387, %v7377, %v7380
    %v7400 = vsel %vm7390, %v7386, 1326507024
    %v7401 = vsel %vm7389, %v7383, %v7400
    %v7402 = vsel %vm7388, %v7399, %v7401
    %v7403 = vshll.u32 %v7363, 8
    %v7404 = vmul.u32.u64.compose %v7403, %v7402
    %v7405 = vextract.low.u32 %v7404
    %v7406 = vextract.high.u32 %v7404
    %v7407 = vmul.u32.u64.compose %v7403, %v7398
    %v7408 = vextract.low.u32 %v7407
    %v7409 = vextract.high.u32 %v7407
    %v7410 = vmul.u32 %v7403, %v7394
    %v7411 = vadd.s32 %v7406, %v7408
    %vm7412 = vc.u32 %v7406, %v7408
    %v7413 = vadd.s32 %v7409, 1
    %v7414 = vsel %vm7412, %v7413, %v7409
    %v7415 = vadd.s32 %v7410, %v7414
    %v7416 = vadd.s32 %v7415, 536870912
    %v7417 = vshrl.u32 %v7416, 30
    %v7418 = vshll.u32 %v7417, 30
    %v7419 = vsub.s32 %v7415, %v7418
    %vm7420 = vcmp.lt.s32.totalorder %v7419, 0
    %v7421 = vsub.s32 0, %v7419
    %v7422 = vsel %vm7420, %v7421, %v7419
    %v7423 = vclz %v7422
    %v7424 = vsub.s32 %v7423, 2
    %vm7425 = vcmp.gt.s32.totalorder 0, %v7424
    %v7426 = vsel %vm7425, 0, %v7424
    %v7427 = vsub.s32 32, %v7426
    %v7428 = vshll.u32 %v7419, %v7426
    %v7429 = vshrl.u32 %v7411, %v7427
    %v7430 = vor.u32 %v7428, %v7429
    %v7431 = vsub.s32 4294967266, %v7426
    %v7432 = vadd.s32 %v7431, 127
    %v7433 = vshll.u32 %v7432, 23
    %v7434 = vor.u32 4788187, %v7433
    %v7435 = vand.u32 2147483647, %v7434
    %v7437 = vcvt.s32.f32 %v7430
    %v7438 = vmul.f32 %v7437, %v7435
    %v7439 = vxor.u32 %v7438, 2147483648
    %v7440 = vsel %vm7357, %v7439, %v7438
    %v7441 = vsub.s32 4, %v7417
    %v7442 = vsel %vm7357, %v7441, %v7417
    %v7443 = vsel %vm7356, %v1198, %v7440
    %v7444 = vsel %vm7356, 0, %v7442
    %v7445 = vcosq.f32.pop %v7443
    %v7446 = vsinq.f32.pop %v7443
    %vm7447 = vweird.f32 %v1198
    %v7448 = vadd.s32 %v7444, 3
    %v7449 = vand.u32 %v7448, 3
    %vm7450 = vcmp.lt.s32.totalorder %v7449, 2
    %vm7451 = vcmp.eq.s32.totalorder %v7449, 0
    %v7452 = vxor.u32 %v7446, 2147483648
    %v7453 = vsel %vm7451, %v7445, %v7452
    %vm7454 = vcmp.eq.s32.totalorder %v7449, 2
    %v7455 = vxor.u32 %v7445, 2147483648
    %v7456 = vsel %vm7454, %v7455, %v7446
    %v7457 = vsel %vm7450, %v7453, %v7456
    %v7458 = vsel %vm7447, nan, %v7457
    %v7459 = vand.u32 2147483647, %v1199
    %vm7460 = vcmp.le.f32.partialorder %v7459, 0.7853982
    %vm7461 = vcmp.lt.s32.totalorder %v1199, 0
    %v7462 = vand.u32 %v1199, 2139095040
    %v7463 = vshrl.u32 %v7462, 23
    %v7464 = vsub.s32 %v7463, 127
    %v7465 = vand.u32 2147483647, %v1199
    %v7466 = vand.u32 %v7465, 8388607
    %v7467 = vor.u32 %v7466, 8388608
    %v7468 = vsub.s32 0, %v7467
    %v7469 = vadd.s32 %v7464, 1
    %vm7470 = vcmp.gt.s32.totalorder %v7469, 0
    %v7471 = vsel %vm7470, %v7469, 0
    %v7472 = vshrl.u32 %v7471, 5
    %v7473 = vand.u32 %v7471, 31
    %v7474 = vsub.s32 32, %v7473
    %v7475 = vshrl.u32 683565275, %v7474
    %v7476 = vshll.u32 683565275, %v7473
    %v7477 = vshrl.u32 2475754826, %v7474
    %v7478 = vor.u32 %v7476, %v7477
    %v7479 = vshll.u32 2475754826, %v7473
    %v7480 = vshrl.u32 2131351028, %v7474
    %v7481 = vor.u32 %v7479, %v7480
    %v7482 = vshll.u32 2131351028, %v7473
    %v7483 = vshrl.u32 2102212464, %v7474
    %v7484 = vor.u32 %v7482, %v7483
    %v7485 = vshll.u32 2102212464, %v7473
    %v7486 = vshrl.u32 920167782, %v7474
    %v7487 = vor.u32 %v7485, %v7486
    %v7488 = vshll.u32 920167782, %v7473
    %v7489 = vshrl.u32 1326507024, %v7474
    %v7490 = vor.u32 %v7488, %v7489
    %vm7491 = vcmp.lt.s32.totalorder %v7472, 1
    %vm7492 = vcmp.lt.s32.totalorder %v7472, 2
    %vm7493 = vcmp.lt.s32.totalorder %v7472, 3
    %vm7494 = vcmp.lt.s32.totalorder %v7472, 4
    %v7495 = vsel %vm7491, %v7475, %v7478
    %v7496 = vsel %vm7494, %v7484, 2102212464
    %v7497 = vsel %vm7493, %v7481, %v7496
    %v7498 = vsel %vm7492, %v7495, %v7497
    %v7499 = vsel %vm7491, %v7478, %v7481
    %v7500 = vsel %vm7494, %v7487, 920167782
    %v7501 = vsel %vm7493, %v7484, %v7500
    %v7502 = vsel %vm7492, %v7499, %v7501
    %v7503 = vsel %vm7491, %v7481, %v7484
    %v7504 = vsel %vm7494, %v7490, 1326507024
    %v7505 = vsel %vm7493, %v7487, %v7504
    %v7506 = vsel %vm7492, %v7503, %v7505
    %v7507 = vshll.u32 %v7467, 8
    %v7508 = vmul.u32.u64.compose %v7507, %v7506
    %v7509 = vextract.low.u32 %v7508
    %v7510 = vextract.high.u32 %v7508
    %v7511 = vmul.u32.u64.compose %v7507, %v7502
    %v7512 = vextract.low.u32 %v7511
    %v7513 = vextract.high.u32 %v7511
    %v7514 = vmul.u32 %v7507, %v7498
    %v7515 = vadd.s32 %v7510, %v7512
    %vm7516 = vc.u32 %v7510, %v7512
    %v7517 = vadd.s32 %v7513, 1
    %v7518 = vsel %vm7516, %v7517, %v7513
    %v7519 = vadd.s32 %v7514, %v7518
    %v7520 = vadd.s32 %v7519, 536870912
    %v7521 = vshrl.u32 %v7520, 30
    %v7522 = vshll.u32 %v7521, 30
    %v7523 = vsub.s32 %v7519, %v7522
    %vm7524 = vcmp.lt.s32.totalorder %v7523, 0
    %v7525 = vsub.s32 0, %v7523
    %v7526 = vsel %vm7524, %v7525, %v7523
    %v7527 = vclz %v7526
    %v7528 = vsub.s32 %v7527, 2
    %vm7529 = vcmp.gt.s32.totalorder 0, %v7528
    %v7530 = vsel %vm7529, 0, %v7528
    %v7531 = vsub.s32 32, %v7530
    %v7532 = vshll.u32 %v7523, %v7530
    %v7533 = vshrl.u32 %v7515, %v7531
    %v7534 = vor.u32 %v7532, %v7533
    %v7535 = vsub.s32 4294967266, %v7530
    %v7536 = vadd.s32 %v7535, 127
    %v7537 = vshll.u32 %v7536, 23
    %v7538 = vor.u32 4788187, %v7537
    %v7539 = vand.u32 2147483647, %v7538
    %v7541 = vcvt.s32.f32 %v7534
    %v7542 = vmul.f32 %v7541, %v7539
    %v7543 = vxor.u32 %v7542, 2147483648
    %v7544 = vsel %vm7461, %v7543, %v7542
    %v7545 = vsub.s32 4, %v7521
    %v7546 = vsel %vm7461, %v7545, %v7521
    %v7547 = vsel %vm7460, %v1199, %v7544
    %v7548 = vsel %vm7460, 0, %v7546
    %v7549 = vcosq.f32.pop %v7547
    %v7550 = vsinq.f32.pop %v7547
    %vm7551 = vweird.f32 %v1199
    %v7552 = vadd.s32 %v7548, 3
    %v7553 = vand.u32 %v7552, 3
    %vm7554 = vcmp.lt.s32.totalorder %v7553, 2
    %vm7555 = vcmp.eq.s32.totalorder %v7553, 0
    %v7556 = vxor.u32 %v7550, 2147483648
    %v7557 = vsel %vm7555, %v7549, %v7556
    %vm7558 = vcmp.eq.s32.totalorder %v7553, 2
    %v7559 = vxor.u32 %v7549, 2147483648
    %v7560 = vsel %vm7558, %v7559, %v7550
    %v7561 = vsel %vm7554, %v7557, %v7560
    %v7562 = vsel %vm7551, nan, %v7561
    %v7563 = vand.u32 2147483647, %v1200
    %vm7564 = vcmp.le.f32.partialorder %v7563, 0.7853982
    %vm7565 = vcmp.lt.s32.totalorder %v1200, 0
    %v7566 = vand.u32 %v1200, 2139095040
    %v7567 = vshrl.u32 %v7566, 23
    %v7568 = vsub.s32 %v7567, 127
    %v7569 = vand.u32 2147483647, %v1200
    %v7570 = vand.u32 %v7569, 8388607
    %v7571 = vor.u32 %v7570, 8388608
    %v7572 = vsub.s32 0, %v7571
    %v7573 = vadd.s32 %v7568, 1
    %vm7574 = vcmp.gt.s32.totalorder %v7573, 0
    %v7575 = vsel %vm7574, %v7573, 0
    %v7576 = vshrl.u32 %v7575, 5
    %v7577 = vand.u32 %v7575, 31
    %v7578 = vsub.s32 32, %v7577
    %v7579 = vshrl.u32 683565275, %v7578
    %v7580 = vshll.u32 683565275, %v7577
    %v7581 = vshrl.u32 2475754826, %v7578
    %v7582 = vor.u32 %v7580, %v7581
    %v7583 = vshll.u32 2475754826, %v7577
    %v7584 = vshrl.u32 2131351028, %v7578
    %v7585 = vor.u32 %v7583, %v7584
    %v7586 = vshll.u32 2131351028, %v7577
    %v7587 = vshrl.u32 2102212464, %v7578
    %v7588 = vor.u32 %v7586, %v7587
    %v7589 = vshll.u32 2102212464, %v7577
    %v7590 = vshrl.u32 920167782, %v7578
    %v7591 = vor.u32 %v7589, %v7590
    %v7592 = vshll.u32 920167782, %v7577
    %v7593 = vshrl.u32 1326507024, %v7578
    %v7594 = vor.u32 %v7592, %v7593
    %vm7595 = vcmp.lt.s32.totalorder %v7576, 1
    %vm7596 = vcmp.lt.s32.totalorder %v7576, 2
    %vm7597 = vcmp.lt.s32.totalorder %v7576, 3
    %vm7598 = vcmp.lt.s32.totalorder %v7576, 4
    %v7599 = vsel %vm7595, %v7579, %v7582
    %v7600 = vsel %vm7598, %v7588, 2102212464
    %v7601 = vsel %vm7597, %v7585, %v7600
    %v7602 = vsel %vm7596, %v7599, %v7601
    %v7603 = vsel %vm7595, %v7582, %v7585
    %v7604 = vsel %vm7598, %v7591, 920167782
    %v7605 = vsel %vm7597, %v7588, %v7604
    %v7606 = vsel %vm7596, %v7603, %v7605
    %v7607 = vsel %vm7595, %v7585, %v7588
    %v7608 = vsel %vm7598, %v7594, 1326507024
    %v7609 = vsel %vm7597, %v7591, %v7608
    %v7610 = vsel %vm7596, %v7607, %v7609
    %v7611 = vshll.u32 %v7571, 8
    %v7612 = vmul.u32.u64.compose %v7611, %v7610
    %v7613 = vextract.low.u32 %v7612
    %v7614 = vextract.high.u32 %v7612
    %v7615 = vmul.u32.u64.compose %v7611, %v7606
    %v7616 = vextract.low.u32 %v7615
    %v7617 = vextract.high.u32 %v7615
    %v7618 = vmul.u32 %v7611, %v7602
    %v7619 = vadd.s32 %v7614, %v7616
    %vm7620 = vc.u32 %v7614, %v7616
    %v7621 = vadd.s32 %v7617, 1
    %v7622 = vsel %vm7620, %v7621, %v7617
    %v7623 = vadd.s32 %v7618, %v7622
    %v7624 = vadd.s32 %v7623, 536870912
    %v7625 = vshrl.u32 %v7624, 30
    %v7626 = vshll.u32 %v7625, 30
    %v7627 = vsub.s32 %v7623, %v7626
    %vm7628 = vcmp.lt.s32.totalorder %v7627, 0
    %v7629 = vsub.s32 0, %v7627
    %v7630 = vsel %vm7628, %v7629, %v7627
    %v7631 = vclz %v7630
    %v7632 = vsub.s32 %v7631, 2
    %vm7633 = vcmp.gt.s32.totalorder 0, %v7632
    %v7634 = vsel %vm7633, 0, %v7632
    %v7635 = vsub.s32 32, %v7634
    %v7636 = vshll.u32 %v7627, %v7634
    %v7637 = vshrl.u32 %v7619, %v7635
    %v7638 = vor.u32 %v7636, %v7637
    %v7639 = vsub.s32 4294967266, %v7634
    %v7640 = vadd.s32 %v7639, 127
    %v7641 = vshll.u32 %v7640, 23
    %v7642 = vor.u32 4788187, %v7641
    %v7643 = vand.u32 2147483647, %v7642
    %v7645 = vcvt.s32.f32 %v7638
    %v7646 = vmul.f32 %v7645, %v7643
    %v7647 = vxor.u32 %v7646, 2147483648
    %v7648 = vsel %vm7565, %v7647, %v7646
    %v7649 = vsub.s32 4, %v7625
    %v7650 = vsel %vm7565, %v7649, %v7625
    %v7651 = vsel %vm7564, %v1200, %v7648
    %v7652 = vsel %vm7564, 0, %v7650
    %v7653 = vcosq.f32.pop %v7651
    %v7654 = vsinq.f32.pop %v7651
    %vm7655 = vweird.f32 %v1200
    %v7656 = vadd.s32 %v7652, 3
    %v7657 = vand.u32 %v7656, 3
    %vm7658 = vcmp.lt.s32.totalorder %v7657, 2
    %vm7659 = vcmp.eq.s32.totalorder %v7657, 0
    %v7660 = vxor.u32 %v7654, 2147483648
    %v7661 = vsel %vm7659, %v7653, %v7660
    %vm7662 = vcmp.eq.s32.totalorder %v7657, 2
    %v7663 = vxor.u32 %v7653, 2147483648
    %v7664 = vsel %vm7662, %v7663, %v7654
    %v7665 = vsel %vm7658, %v7661, %v7664
    %v7666 = vsel %vm7655, nan, %v7665
    %v7667 = vand.u32 2147483647, %v1201
    %vm7668 = vcmp.le.f32.partialorder %v7667, 0.7853982
    %vm7669 = vcmp.lt.s32.totalorder %v1201, 0
    %v7670 = vand.u32 %v1201, 2139095040
    %v7671 = vshrl.u32 %v7670, 23
    %v7672 = vsub.s32 %v7671, 127
    %v7673 = vand.u32 2147483647, %v1201
    %v7674 = vand.u32 %v7673, 8388607
    %v7675 = vor.u32 %v7674, 8388608
    %v7676 = vsub.s32 0, %v7675
    %v7677 = vadd.s32 %v7672, 1
    %vm7678 = vcmp.gt.s32.totalorder %v7677, 0
    %v7679 = vsel %vm7678, %v7677, 0
    %v7680 = vshrl.u32 %v7679, 5
    %v7681 = vand.u32 %v7679, 31
    %v7682 = vsub.s32 32, %v7681
    %v7683 = vshrl.u32 683565275, %v7682
    %v7684 = vshll.u32 683565275, %v7681
    %v7685 = vshrl.u32 2475754826, %v7682
    %v7686 = vor.u32 %v7684, %v7685
    %v7687 = vshll.u32 2475754826, %v7681
    %v7688 = vshrl.u32 2131351028, %v7682
    %v7689 = vor.u32 %v7687, %v7688
    %v7690 = vshll.u32 2131351028, %v7681
    %v7691 = vshrl.u32 2102212464, %v7682
    %v7692 = vor.u32 %v7690, %v7691
    %v7693 = vshll.u32 2102212464, %v7681
    %v7694 = vshrl.u32 920167782, %v7682
    %v7695 = vor.u32 %v7693, %v7694
    %v7696 = vshll.u32 920167782, %v7681
    %v7697 = vshrl.u32 1326507024, %v7682
    %v7698 = vor.u32 %v7696, %v7697
    %vm7699 = vcmp.lt.s32.totalorder %v7680, 1
    %vm7700 = vcmp.lt.s32.totalorder %v7680, 2
    %vm7701 = vcmp.lt.s32.totalorder %v7680, 3
    %vm7702 = vcmp.lt.s32.totalorder %v7680, 4
    %v7703 = vsel %vm7699, %v7683, %v7686
    %v7704 = vsel %vm7702, %v7692, 2102212464
    %v7705 = vsel %vm7701, %v7689, %v7704
    %v7706 = vsel %vm7700, %v7703, %v7705
    %v7707 = vsel %vm7699, %v7686, %v7689
    %v7708 = vsel %vm7702, %v7695, 920167782
    %v7709 = vsel %vm7701, %v7692, %v7708
    %v7710 = vsel %vm7700, %v7707, %v7709
    %v7711 = vsel %vm7699, %v7689, %v7692
    %v7712 = vsel %vm7702, %v7698, 1326507024
    %v7713 = vsel %vm7701, %v7695, %v7712
    %v7714 = vsel %vm7700, %v7711, %v7713
    %v7715 = vshll.u32 %v7675, 8
    %v7716 = vmul.u32.u64.compose %v7715, %v7714
    %v7717 = vextract.low.u32 %v7716
    %v7718 = vextract.high.u32 %v7716
    %v7719 = vmul.u32.u64.compose %v7715, %v7710
    %v7720 = vextract.low.u32 %v7719
    %v7721 = vextract.high.u32 %v7719
    %v7722 = vmul.u32 %v7715, %v7706
    %v7723 = vadd.s32 %v7718, %v7720
    %vm7724 = vc.u32 %v7718, %v7720
    %v7725 = vadd.s32 %v7721, 1
    %v7726 = vsel %vm7724, %v7725, %v7721
    %v7727 = vadd.s32 %v7722, %v7726
    %v7728 = vadd.s32 %v7727, 536870912
    %v7729 = vshrl.u32 %v7728, 30
    %v7730 = vshll.u32 %v7729, 30
    %v7731 = vsub.s32 %v7727, %v7730
    %vm7732 = vcmp.lt.s32.totalorder %v7731, 0
    %v7733 = vsub.s32 0, %v7731
    %v7734 = vsel %vm7732, %v7733, %v7731
    %v7735 = vclz %v7734
    %v7736 = vsub.s32 %v7735, 2
    %vm7737 = vcmp.gt.s32.totalorder 0, %v7736
    %v7738 = vsel %vm7737, 0, %v7736
    %v7739 = vsub.s32 32, %v7738
    %v7740 = vshll.u32 %v7731, %v7738
    %v7741 = vshrl.u32 %v7723, %v7739
    %v7742 = vor.u32 %v7740, %v7741
    %v7743 = vsub.s32 4294967266, %v7738
    %v7744 = vadd.s32 %v7743, 127
    %v7745 = vshll.u32 %v7744, 23
    %v7746 = vor.u32 4788187, %v7745
    %v7747 = vand.u32 2147483647, %v7746
    %v7749 = vcvt.s32.f32 %v7742
    %v7750 = vmul.f32 %v7749, %v7747
    %v7751 = vxor.u32 %v7750, 2147483648
    %v7752 = vsel %vm7669, %v7751, %v7750
    %v7753 = vsub.s32 4, %v7729
    %v7754 = vsel %vm7669, %v7753, %v7729
    %v7755 = vsel %vm7668, %v1201, %v7752
    %v7756 = vsel %vm7668, 0, %v7754
    %v7757 = vcosq.f32.pop %v7755
    %v7758 = vsinq.f32.pop %v7755
    %vm7759 = vweird.f32 %v1201
    %v7760 = vadd.s32 %v7756, 3
    %v7761 = vand.u32 %v7760, 3
    %vm7762 = vcmp.lt.s32.totalorder %v7761, 2
    %vm7763 = vcmp.eq.s32.totalorder %v7761, 0
    %v7764 = vxor.u32 %v7758, 2147483648
    %v7765 = vsel %vm7763, %v7757, %v7764
    %vm7766 = vcmp.eq.s32.totalorder %v7761, 2
    %v7767 = vxor.u32 %v7757, 2147483648
    %v7768 = vsel %vm7766, %v7767, %v7758
    %v7769 = vsel %vm7762, %v7765, %v7768
    %v7770 = vsel %vm7759, nan, %v7769
    %v7771 = vand.u32 2147483647, %v1202
    %vm7772 = vcmp.le.f32.partialorder %v7771, 0.7853982
    %vm7773 = vcmp.lt.s32.totalorder %v1202, 0
    %v7774 = vand.u32 %v1202, 2139095040
    %v7775 = vshrl.u32 %v7774, 23
    %v7776 = vsub.s32 %v7775, 127
    %v7777 = vand.u32 2147483647, %v1202
    %v7778 = vand.u32 %v7777, 8388607
    %v7779 = vor.u32 %v7778, 8388608
    %v7780 = vsub.s32 0, %v7779
    %v7781 = vadd.s32 %v7776, 1
    %vm7782 = vcmp.gt.s32.totalorder %v7781, 0
    %v7783 = vsel %vm7782, %v7781, 0
    %v7784 = vshrl.u32 %v7783, 5
    %v7785 = vand.u32 %v7783, 31
    %v7786 = vsub.s32 32, %v7785
    %v7787 = vshrl.u32 683565275, %v7786
    %v7788 = vshll.u32 683565275, %v7785
    %v7789 = vshrl.u32 2475754826, %v7786
    %v7790 = vor.u32 %v7788, %v7789
    %v7791 = vshll.u32 2475754826, %v7785
    %v7792 = vshrl.u32 2131351028, %v7786
    %v7793 = vor.u32 %v7791, %v7792
    %v7794 = vshll.u32 2131351028, %v7785
    %v7795 = vshrl.u32 2102212464, %v7786
    %v7796 = vor.u32 %v7794, %v7795
    %v7797 = vshll.u32 2102212464, %v7785
    %v7798 = vshrl.u32 920167782, %v7786
    %v7799 = vor.u32 %v7797, %v7798
    %v7800 = vshll.u32 920167782, %v7785
    %v7801 = vshrl.u32 1326507024, %v7786
    %v7802 = vor.u32 %v7800, %v7801
    %vm7803 = vcmp.lt.s32.totalorder %v7784, 1
    %vm7804 = vcmp.lt.s32.totalorder %v7784, 2
    %vm7805 = vcmp.lt.s32.totalorder %v7784, 3
    %vm7806 = vcmp.lt.s32.totalorder %v7784, 4
    %v7807 = vsel %vm7803, %v7787, %v7790
    %v7808 = vsel %vm7806, %v7796, 2102212464
    %v7809 = vsel %vm7805, %v7793, %v7808
    %v7810 = vsel %vm7804, %v7807, %v7809
    %v7811 = vsel %vm7803, %v7790, %v7793
    %v7812 = vsel %vm7806, %v7799, 920167782
    %v7813 = vsel %vm7805, %v7796, %v7812
    %v7814 = vsel %vm7804, %v7811, %v7813
    %v7815 = vsel %vm7803, %v7793, %v7796
    %v7816 = vsel %vm7806, %v7802, 1326507024
    %v7817 = vsel %vm7805, %v7799, %v7816
    %v7818 = vsel %vm7804, %v7815, %v7817
    %v7819 = vshll.u32 %v7779, 8
    %v7820 = vmul.u32.u64.compose %v7819, %v7818
    %v7821 = vextract.low.u32 %v7820
    %v7822 = vextract.high.u32 %v7820
    %v7823 = vmul.u32.u64.compose %v7819, %v7814
    %v7824 = vextract.low.u32 %v7823
    %v7825 = vextract.high.u32 %v7823
    %v7826 = vmul.u32 %v7819, %v7810
    %v7827 = vadd.s32 %v7822, %v7824
    %vm7828 = vc.u32 %v7822, %v7824
    %v7829 = vadd.s32 %v7825, 1
    %v7830 = vsel %vm7828, %v7829, %v7825
    %v7831 = vadd.s32 %v7826, %v7830
    %v7832 = vadd.s32 %v7831, 536870912
    %v7833 = vshrl.u32 %v7832, 30
    %v7834 = vshll.u32 %v7833, 30
    %v7835 = vsub.s32 %v7831, %v7834
    %vm7836 = vcmp.lt.s32.totalorder %v7835, 0
    %v7837 = vsub.s32 0, %v7835
    %v7838 = vsel %vm7836, %v7837, %v7835
    %v7839 = vclz %v7838
    %v7840 = vsub.s32 %v7839, 2
    %vm7841 = vcmp.gt.s32.totalorder 0, %v7840
    %v7842 = vsel %vm7841, 0, %v7840
    %v7843 = vsub.s32 32, %v7842
    %v7844 = vshll.u32 %v7835, %v7842
    %v7845 = vshrl.u32 %v7827, %v7843
    %v7846 = vor.u32 %v7844, %v7845
    %v7847 = vsub.s32 4294967266, %v7842
    %v7848 = vadd.s32 %v7847, 127
    %v7849 = vshll.u32 %v7848, 23
    %v7850 = vor.u32 4788187, %v7849
    %v7851 = vand.u32 2147483647, %v7850
    %v7853 = vcvt.s32.f32 %v7846
    %v7854 = vmul.f32 %v7853, %v7851
    %v7855 = vxor.u32 %v7854, 2147483648
    %v7856 = vsel %vm7773, %v7855, %v7854
    %v7857 = vsub.s32 4, %v7833
    %v7858 = vsel %vm7773, %v7857, %v7833
    %v7859 = vsel %vm7772, %v1202, %v7856
    %v7860 = vsel %vm7772, 0, %v7858
    %v7861 = vcosq.f32.pop %v7859
    %v7862 = vsinq.f32.pop %v7859
    %vm7863 = vweird.f32 %v1202
    %v7864 = vadd.s32 %v7860, 3
    %v7865 = vand.u32 %v7864, 3
    %vm7866 = vcmp.lt.s32.totalorder %v7865, 2
    %vm7867 = vcmp.eq.s32.totalorder %v7865, 0
    %v7868 = vxor.u32 %v7862, 2147483648
    %v7869 = vsel %vm7867, %v7861, %v7868
    %vm7870 = vcmp.eq.s32.totalorder %v7865, 2
    %v7871 = vxor.u32 %v7861, 2147483648
    %v7872 = vsel %vm7870, %v7871, %v7862
    %v7873 = vsel %vm7866, %v7869, %v7872
    %v7874 = vsel %vm7863, nan, %v7873
    %v7875 = vmul.f32 %v1075, %v4650
    %v7876 = vmul.f32 %v1077, %v4754
    %v7877 = vmul.f32 %v1079, %v4858
    %v7878 = vmul.f32 %v1081, %v4962
    %v7879 = vmul.f32 %v1083, %v5066
    %v7880 = vmul.f32 %v1085, %v5170
    %v7881 = vmul.f32 %v1087, %v5274
    %v7882 = vmul.f32 %v1089, %v5378
    %v7883 = vmul.f32 %v1091, %v5482
    %v7884 = vmul.f32 %v1093, %v5586
    %v7885 = vmul.f32 %v1095, %v5690
    %v7886 = vmul.f32 %v1097, %v5794
    %v7887 = vmul.f32 %v1099, %v5898
    %v7888 = vmul.f32 %v1101, %v6002
    %v7889 = vmul.f32 %v1103, %v6106
    %v7890 = vmul.f32 %v1105, %v6210
    %v7891 = vmul.f32 %v1107, %v6314
    %v7892 = vmul.f32 %v1109, %v6418
    %v7893 = vmul.f32 %v1111, %v6522
    %v7894 = vmul.f32 %v1113, %v6626
    %v7895 = vmul.f32 %v1115, %v6730
    %v7896 = vmul.f32 %v1117, %v6834
    %v7897 = vmul.f32 %v1119, %v6938
    %v7898 = vmul.f32 %v1121, %v7042
    %v7899 = vmul.f32 %v1123, %v7146
    %v7900 = vmul.f32 %v1125, %v7250
    %v7901 = vmul.f32 %v1127, %v7354
    %v7902 = vmul.f32 %v1129, %v7458
    %v7903 = vmul.f32 %v1131, %v7562
    %v7904 = vmul.f32 %v1133, %v7666
    %v7905 = vmul.f32 %v1135, %v7770
    %v7906 = vmul.f32 %v1137, %v7874
    %v7907 = vpack.c.bf16 %v7876, %v7875
    %v7908 = vpack.c.bf16 %v7878, %v7877
    %v7909 = vpack.c.bf16 %v7880, %v7879
    %v7910 = vpack.c.bf16 %v7882, %v7881
    %v7911 = vpack.c.bf16 %v7884, %v7883
    %v7912 = vpack.c.bf16 %v7886, %v7885
    %v7913 = vpack.c.bf16 %v7888, %v7887
    %v7914 = vpack.c.bf16 %v7890, %v7889
    %v7915 = vpack.c.bf16 %v7892, %v7891
    %v7916 = vpack.c.bf16 %v7894, %v7893
    %v7917 = vpack.c.bf16 %v7896, %v7895
    %v7918 = vpack.c.bf16 %v7898, %v7897
    %v7919 = vpack.c.bf16 %v7900, %v7899
    %v7920 = vpack.c.bf16 %v7902, %v7901
    %v7921 = vpack.c.bf16 %v7904, %v7903
    %v7922 = vpack.c.bf16 %v7906, %v7905
    %v7924 = vunpack.c.l.b16 %v319
    %v7925 = vunpack.c.h.b16 %v319
    %v7926 = vpack.c.b16 %v7924, %v7924
    %v7927 = vpack.c.b16 %v7925, %v7925
    %7930 = vmatprep.subr.bf16.mxu0 0
    %7931 = vmatpush1.bf16.msra.mxu0 %v4531
    %7932 = vmatprep.subr.bf16.mxu0 0
    %7933 = vmatpush1.bf16.msra.mxu0 %v4532
    %7934 = vmatprep.subr.bf16.mxu0 0
    %7935 = vmatpush1.bf16.msra.mxu0 %v4533
    %7936 = vmatprep.subr.bf16.mxu0 0
    %7937 = vmatpush1.bf16.msra.mxu0 %v4534
    %7938 = vmatprep.subr.bf16.mxu0 0
    %7939 = vmatpush1.bf16.msra.mxu0 %v4535
    %7940 = vmatprep.subr.bf16.mxu0 0
    %7941 = vmatpush1.bf16.msra.mxu0 %v4536
    %7942 = vmatprep.subr.bf16.mxu0 0
    %7943 = vmatpush1.bf16.msra.mxu0 %v4537
    %7944 = vmatprep.subr.bf16.mxu0 0
    %7945 = vmatpush1.bf16.msra.mxu0 %v4538
    %7946 = vmatprep.subr.bf16.mxu0 0
    %7947 = vmatpush1.bf16.msra.mxu0 %v4539
    %7948 = vmatprep.subr.bf16.mxu0 0
    %7949 = vmatpush1.bf16.msra.mxu0 %v4540
    %7950 = vmatprep.subr.bf16.mxu0 0
    %7951 = vmatpush1.bf16.msra.mxu0 %v4541
    %7952 = vmatprep.subr.bf16.mxu0 0
    %7953 = vmatpush1.bf16.msra.mxu0 %v4542
    %7954 = vmatprep.subr.bf16.mxu0 0
    %7955 = vmatpush1.bf16.msra.mxu0 %v4543
    %7956 = vmatprep.subr.bf16.mxu0 0
    %7957 = vmatpush1.bf16.msra.mxu0 %v4544
    %7958 = vmatprep.subr.bf16.mxu0 0
    %7959 = vmatpush1.bf16.msra.mxu0 %v4545
    %7960 = vmatprep.subr.bf16.mxu0 0
    %7961 = vmatpush1.bf16.msra.mxu0 %v4546
    %7962 = vmatprep.mubr.bf16.mxu0 %v7927
    %7963 = vmatmul.mubr.bf16.gmra.mrb[0].mxu0 %v7926
    %v7964 = vpop.f32.mrb[0].mxu0
    %v7965 = vadd.f32 0.0, %v7964
    %v7966 = vpop.f32.mrb[0].mxu0
    %v7967 = vpop.f32.mrb[0].mxu0
    %v7968 = vpop.f32.mrb[0].mxu0
    %7969 = vdwg.mxu0
    %7970 = vmatprep.subr.bf16.mxu0 0
    %7971 = vmatpush1.bf16.msra.mxu0 %v7907
    %7972 = vmatprep.subr.bf16.mxu0 0
    %7973 = vmatpush1.bf16.msra.mxu0 %v7908
    %7974 = vmatprep.subr.bf16.mxu0 0
    %7975 = vmatpush1.bf16.msra.mxu0 %v7909
    %7976 = vmatprep.subr.bf16.mxu0 0
    %7977 = vmatpush1.bf16.msra.mxu0 %v7910
    %7978 = vmatprep.subr.bf16.mxu0 0
    %7979 = vmatpush1.bf16.msra.mxu0 %v7911
    %7980 = vmatprep.subr.bf16.mxu0 0
    %7981 = vmatpush1.bf16.msra.mxu0 %v7912
    %7982 = vmatprep.subr.bf16.mxu0 0
    %7983 = vmatpush1.bf16.msra.mxu0 %v7913
    %7984 = vmatprep.subr.bf16.mxu0 0
    %7985 = vmatpush1.bf16.msra.mxu0 %v7914
    %7986 = vmatprep.subr.bf16.mxu0 0
    %7987 = vmatpush1.bf16.msra.mxu0 %v7915
    %7988 = vmatprep.subr.bf16.mxu0 0
    %7989 = vmatpush1.bf16.msra.mxu0 %v7916
    %7990 = vmatprep.subr.bf16.mxu0 0
    %7991 = vmatpush1.bf16.msra.mxu0 %v7917
    %7992 = vmatprep.subr.bf16.mxu0 0
    %7993 = vmatpush1.bf16.msra.mxu0 %v7918
    %7994 = vmatprep.subr.bf16.mxu0 0
    %7995 = vmatpush1.bf16.msra.mxu0 %v7919
    %7996 = vmatprep.subr.bf16.mxu0 0
    %7997 = vmatpush1.bf16.msra.mxu0 %v7920
    %7998 = vmatprep.subr.bf16.mxu0 0
    %7999 = vmatpush1.bf16.msra.mxu0 %v7921
    %8000 = vmatprep.subr.bf16.mxu0 0
    %8001 = vmatpush1.bf16.msra.mxu0 %v7922
    %8002 = vmatprep.mubr.bf16.mxu0 %v7927
    %8003 = vmatmul.mubr.bf16.gmra.mrb[0].mxu0 %v7926
    %v8004 = vpop.f32.mrb[0].mxu0
    %v8005 = vadd.f32 0.0, %v8004
    %v8006 = vpop.f32.mrb[0].mxu0
    %v8007 = vpop.f32.mrb[0].mxu0
    %v8008 = vpop.f32.mrb[0].mxu0
    %8009 = vdwg.mxu0
    %v8010 = vmul.f32 %v7965, %v7965
    %v8011 = vmul.f32 %v8005, %v8005
    %v8012 = vadd.f32 %v8010, %v8011
    %v8013 = vrsqrt.pop %v8012
    %v8014 = vmul.f32 %v8012, %v8013
    %vm8015 = vcmp.eq.f32.partialorder %v8012, inf
    %v8016 = vsel %vm8015, %v8012, %v8014
    %vm8017 = vcmp.eq.f32.partialorder %v8012, 0.0
    %v8018 = vand.u32 %v8012, 2147483648
    %v8019 = vsel %vm8017, %v8018, %v8016
    %v8020 = vlaneseq
    %v8021 = vshrl.u32 %v8020, 7
    %v8022 = vsub.s32 0, %v8021
    %v8023 = vrot.slane %v40, %v8022
    %v8024 = vmul.f32 %v8023, %v8019
    %v8025 = vlaneseq
    %v8026 = vshrl.u32 %v8025, 7
    %v8027 = vsub.s32 0, %v8026
    %v8028 = vrot.slane %v41, %v8027
    %v8029 = vadd.f32 %v8024, %v8028
    %8030 = vst [vmem:[%s5] sm:$0xff] %v8029
    // Predicated region
    $region26: #{energy_model_forward.1} parent=1 // pred_check
      _
    $region27: #{energy_model_forward.1} parent=1 // pred_check_branch
      %8032 = sbr.rel (0) target = $region29
    $region28: #{energy_model_forward.1} parent=1 // pred_region
      _
    $region29: #{energy_model_forward.1} parent=1 // pred_fallthru
      _
    // Predicated region
    $region30: #{energy_model_forward.1} parent=1 // pred_check
      _
    $region31: #{energy_model_forward.1} parent=1 // pred_check_branch
      %8034 = sbr.rel (0) target = $region33
    $region32: #{energy_model_forward.1} parent=1 // pred_region
      _
    $region33: #{energy_model_forward.1} parent=1 // pred_fallthru
      _
    %8035 = vsyncpa [#allocation3], 1

</llo_original>
